<compile_context>
chip_gen: v5e
topology: v5e:2x2
jax: 0.10.0
libtpu: 0.0.40
codegen_flags: <defaults>
</compile_context>

<pallas_src>
import jax
import jax.numpy as jnp
from jax.experimental import pallas as pl
from jax.experimental.pallas import tpu as pltpu


LANES = 128   # lane width: output channels are zero-padded to this
PADW = 8      # zero columns on each side of W (>= max a-trous dilation = 8)
FRONT = 16    # zero rows before the canvas (>= max dilation; 16 keeps bf16 stores tile-aligned)
EXTRA = 8     # extra acc rows so the +dilation pool partner is always in range

LAYER_CFG = [  # (kh, kw, pad_h, pad_w) — stride 1; MaxPool(1,2) follows each block
    (3, 3, 0, 1),
    (1, 3, 0, 1),
    (3, 3, 0, 1),
    (1, 3, 0, 1),
]
DILATIONS = (1, 2, 4, 8)  # a-trous W-dilation of layer l = 2**(l-1)


# ---------------------------------------------------------------------------
# Fused Pallas kernel: 4 x (conv + folded-BN + ReLU + MaxPool(1,2)), one image
# per grid step, all inter-layer activations resident in a bf16 VMEM canvas.
# ---------------------------------------------------------------------------
def _make_fused_kernel(mt, wc, khs, kpad, rows, max_taps):
    n_layers = len(khs)

    def kernel(z0_ref, mask_ref,
               w1_ref, b1_ref, w2_ref, b2_ref, w3_ref, b3_ref, w4_ref, b4_ref,
               out_ref, z_scr, wbank):
        w_refs = (w1_ref, w2_ref, w3_ref, w4_ref)
        b_refs = (b1_ref, b2_ref, b3_ref, b4_ref)

        # --- per-tile init: zero the canvas halo + weight bank, copy input in ---
        z_scr[...] = jnp.zeros((rows, LANES), jnp.bfloat16)
        z_scr[FRONT:FRONT + mt, 0:kpad] = z0_ref[...]
        wbank[...] = jnp.zeros((max_taps, LANES, LANES), jnp.bfloat16)

        # (mt,1) -> (mt,128) lane broadcast, hoisted out of the unrolled layer loop.
        maskb = jnp.broadcast_to(mask_ref[...], (mt, LANES))

        for li, (kh, dil) in enumerate(zip(khs, DILATIONS)):
            ntaps = kh * 3
            # Pad this layer's compact bf16 taps into the 128x128 weight bank
            # (K sublanes >= kpad were zeroed once and are never written).
            wbank[0:ntaps, 0:kpad, :] = w_refs[li][...]

            acc = jnp.zeros((mt + EXTRA, LANES), jnp.float32)
            # One MXU matmul per conv tap: lhs is a row-shifted load of the
            # bf16 canvas, rhs a (128,128) bf16 BN-folded tap; f32 accumulate.
            for dy in range(kh):
                for dx in range(3):                 # kw == 3 for every layer
                    shift = dy * wc + (dx - 1) * dil
                    start = FRONT + shift
                    xs = z_scr[start:start + mt + EXTRA, :]
                    acc = acc + jnp.dot(xs, wbank[dy * 3 + dx],
                                        preferred_element_type=jnp.float32)

            # MaxPool2d((1,2),(1,2)) == max of the two a-trous phases; bias and
            # ReLU commute with the max, so they come after (f32 epilogue).
            pooled = jnp.maximum(acc[0:mt, :], acc[dil:dil + mt, :])
            z = jnp.maximum(pooled + b_refs[li][...], 0.0) * maskb

            if li + 1 < n_layers:
                # write the layer output back into the canvas (in place, bf16)
                z_scr[FRONT:FRONT + mt, :] = z.astype(jnp.bfloat16)
            else:
                out_ref[...] = z                    # lane-dense (mt, 128) f32 store

    return kernel


# ---------------------------------------------------------------------------
# Parameter prep: fold BN scale into the conv weights, keep them compact:
# K (c_in) padded only to `kpad` (16 here), N (c_out) lane-padded to 128, bf16.
# ---------------------------------------------------------------------------
def _prep_params(params, kpad):
    flat = []
    for (w, scale, bias), (kh, kw, _, _) in zip(params, LAYER_CFG):
        c_out, c_in = w.shape[0], w.shape[1]
        wf = w * scale[:, None, None, None]                       # fold BN scale
        taps = jnp.transpose(wf, (2, 3, 1, 0)).reshape(kh * kw, c_in, c_out)
        taps = jnp.pad(taps, ((0, 0), (0, kpad - c_in), (0, LANES - c_out)))
        b = jnp.pad(bias, (0, LANES - c_out)).reshape(1, LANES)
        flat += [taps.astype(jnp.bfloat16), b.astype(jnp.float32)]
    return flat


# ---------------------------------------------------------------------------
# Full RasterCNN forward (single fused pallas_call, batch-parallel grid).
# ---------------------------------------------------------------------------
def raster_cnn_forward(x, params):
    n, c_in, h, w = x.shape
    assert w % 16 == 0, "W must be divisible by 16 (four (1,2) max-pools)"
    assert h >= 5, "need H >= 5 for the two valid 3x3 convs in H"
    c_ins = [p[0].shape[1] for p in params]
    c_outs = [p[0].shape[0] for p in params]
    assert max(c_outs) <= LANES
    kpad = max(16, -(-max(c_ins) // 16) * 16)     # K padding of the taps (multiple of 16)
    assert kpad <= LANES

    wc = w + 2 * PADW
    mt = h * wc                                   # canvas rows per image (= per grid step)
    rows = FRONT + mt + 2 * wc + 16               # scratch canvas rows (front + canvas + back halo)
    max_taps = max(cfg[0] for cfg in LAYER_CFG) * 3

    # Input canvas (tiny host-side prep): NHWC, W zero-padded by 8 each side,
    # C zero-padded only to kpad (not 128), flattened to (N*mt, kpad) bf16.
    xc = jnp.transpose(x, (0, 2, 3, 1))
    xc = jnp.pad(xc, ((0, 0), (0, 0), (PADW, PADW), (0, kpad - c_in)))
    z0 = xc.reshape(n * mt, kpad).astype(jnp.bfloat16)

    # (mt, 1) mask: 1 on real W columns, 0 on the pad columns of each canvas row.
    col = jnp.arange(mt, dtype=jnp.int32) % wc
    mask = ((col >= PADW) & (col < PADW + w)).astype(jnp.float32).reshape(mt, 1)

    flat_params = _prep_params(params, kpad)

    # Weights / biases: constant index_maps -> fetched once, stay VMEM-resident.
    param_specs = []
    for wt, b in zip(flat_params[0::2], flat_params[1::2]):
        param_specs.append(pl.BlockSpec(wt.shape, lambda i: (0, 0, 0)))
        param_specs.append(pl.BlockSpec(b.shape, lambda i: (0, 0)))

    kernel = _make_fused_kernel(mt, wc, tuple(cfg[0] for cfg in LAYER_CFG),
                                kpad, rows, max_taps)

    canvas = pl.pallas_call(
        kernel,
        out_shape=jax.ShapeDtypeStruct((n * mt, LANES), jnp.float32),
        grid_spec=pltpu.PrefetchScalarGridSpec(
            num_scalar_prefetch=0,
            grid=(n,),                                     # one image per step
            in_specs=[pl.BlockSpec((mt, kpad), lambda i: (i, 0)),   # input canvas tile
                      pl.BlockSpec((mt, 1), lambda i: (0, 0))]      # shared W-pad mask
                     + param_specs,
            out_specs=pl.BlockSpec((mt, LANES), lambda i: (i, 0)),
            scratch_shapes=[pltpu.VMEM((rows, LANES), jnp.bfloat16),           # canvas
                            pltpu.VMEM((max_taps, LANES, LANES), jnp.bfloat16)]),  # weight bank
        compiler_params=pltpu.CompilerParams(
            dimension_semantics=("parallel",)),            # v7x: 2 TCs split the batch
    )(z0, mask, *flat_params)

    # Pick the valid a-trous sample points out of the canvas (tiny XLA slice).
    h_out = h - 4          # two valid 3x3 convs in H
    stride = 16            # 2**4 after four (1,2) pools
    c_out = c_outs[-1]
    out = canvas.reshape(n, h, wc, LANES)[:, :h_out, PADW:PADW + w:stride, :c_out]
    # TODO(synk): Dropout(p=0.1) is identity in eval mode; train-mode masking
    # (pltpu.prng_*) not implemented.
    return jnp.transpose(out, (0, 3, 1, 2))   # back to NCHW like the PyTorch module


# ---------------------------------------------------------------------------
# Deterministic parameter init (Conv2d weight + folded BatchNorm2d).
# ---------------------------------------------------------------------------
def init_params(key, cnn_channels, in_planes=3, eps=1e-5):
    params = []
    c_in = in_planes
    for c_out, (kh, kw, _, _) in zip(cnn_channels, LAYER_CFG):
        key, kw_, kg, kb, km, kv = jax.random.split(key, 6)
        fan_in = c_in * kh * kw
        w = jax.random.normal(kw_, (c_out, c_in, kh, kw), jnp.float32) / jnp.sqrt(fan_in)
        gamma = 0.5 + jax.random.uniform(kg, (c_out,), jnp.float32)
        beta = 0.1 * jax.random.normal(kb, (c_out,), jnp.float32)
        mean = 0.1 * jax.random.normal(km, (c_out,), jnp.float32)
        var = 0.5 + jax.random.uniform(kv, (c_out,), jnp.float32)
        scale = gamma / jnp.sqrt(var + eps)
        bias = beta - mean * scale
        params.append((w, scale, bias))
        c_in = c_out
    return params


# ---------------------------------------------------------------------------
# Pure-JAX f32 reference (for correctness check).
# ---------------------------------------------------------------------------
def raster_cnn_reference(x, params):
    out = x
    for (w, scale, bias), (kh, kw, ph, pw) in zip(params, LAYER_CFG):
        out = jax.lax.conv_general_dilated(
            out, w, window_strides=(1, 1), padding=((ph, ph), (pw, pw)),
            dimension_numbers=("NCHW", "OIHW", "NCHW"),
            precision=jax.lax.Precision.HIGHEST)
        out = out * scale[None, :, None, None] + bias[None, :, None, None]
        out = jnp.maximum(out, 0.0)
        out = jax.lax.reduce_window(out, -jnp.inf, jax.lax.max,
                                    (1, 1, 1, 2), (1, 1, 1, 2), "VALID")
    return out


if __name__ == "__main__":
    cnn_channels = [8, 16, 16, 32]
    key = jax.random.PRNGKey(0)
    key, kx = jax.random.split(key)
    # Input: batch=2, RGB, H=7, W=32  (H >= 5 needed by the two 3x3 valid-H convs)
    x = jax.random.normal(kx, (2, 3, 7, 32), jnp.float32)
    params = init_params(key, cnn_channels)

    out = jax.block_until_ready(raster_cnn_forward(x, params))
    ref = jax.block_until_ready(raster_cnn_reference(x, params))

    assert out.shape == ref.shape == (2, cnn_channels[-1], 3, 2), out.shape
    # bf16 matmul operands + bf16 inter-layer activations (f32 accumulate /
    # epilogue): tolerance loosened from 2e-3 to 3e-2 per the perf review.
    max_err = float(jnp.max(jnp.abs(out - ref)))
    assert jnp.allclose(out, ref, atol=3e-2, rtol=3e-2), max_err

    print("KERNEL_OK")
</pallas_src>

<mosaic_0001>
module attributes {stable_mosaic.version = 11 : i64} {
  func.func @kernel(%arg0: i32, %arg1: memref<336x16xbf16, #tpu.memory_space<vmem>>, %arg2: memref<336x1xf32, #tpu.memory_space<vmem>>, %arg3: memref<9x16x128xbf16, #tpu.memory_space<vmem>>, %arg4: memref<1x128xf32, #tpu.memory_space<vmem>>, %arg5: memref<3x16x128xbf16, #tpu.memory_space<vmem>>, %arg6: memref<1x128xf32, #tpu.memory_space<vmem>>, %arg7: memref<9x16x128xbf16, #tpu.memory_space<vmem>>, %arg8: memref<1x128xf32, #tpu.memory_space<vmem>>, %arg9: memref<3x16x128xbf16, #tpu.memory_space<vmem>>, %arg10: memref<1x128xf32, #tpu.memory_space<vmem>>, %arg11: memref<336x128xf32, #tpu.memory_space<vmem>>, %arg12: memref<464x128xbf16, #tpu.memory_space<vmem>>, %arg13: memref<9x128x128xbf16, #tpu.memory_space<vmem>>) attributes {dimension_semantics = [#tpu.dimension_semantics<parallel>], iteration_bounds = array<i64: 2>, scalar_prefetch = 0 : i64, scratch_operands = 2 : i64, tpu.core_type = #tpu.core_type<tc>, window_params = [{transform_indices = @transform_0, window_bounds = array<i64: 336, 16>}, {pipeline_mode = #tpu.pipeline_mode<synchronous>, transform_indices = @transform_1, window_bounds = array<i64: 336, 1>}, {pipeline_mode = #tpu.pipeline_mode<synchronous>, transform_indices = @transform_2, window_bounds = array<i64: 9, 16, 128>}, {pipeline_mode = #tpu.pipeline_mode<synchronous>, transform_indices = @transform_3, window_bounds = array<i64: 1, 128>}, {pipeline_mode = #tpu.pipeline_mode<synchronous>, transform_indices = @transform_4, window_bounds = array<i64: 3, 16, 128>}, {pipeline_mode = #tpu.pipeline_mode<synchronous>, transform_indices = @transform_5, window_bounds = array<i64: 1, 128>}, {pipeline_mode = #tpu.pipeline_mode<synchronous>, transform_indices = @transform_6, window_bounds = array<i64: 9, 16, 128>}, {pipeline_mode = #tpu.pipeline_mode<synchronous>, transform_indices = @transform_7, window_bounds = array<i64: 1, 128>}, {pipeline_mode = #tpu.pipeline_mode<synchronous>, transform_indices = @transform_8, window_bounds = array<i64: 3, 16, 128>}, {pipeline_mode = #tpu.pipeline_mode<synchronous>, transform_indices = @transform_9, window_bounds = array<i64: 1, 128>}, {transform_indices = @transform_10, window_bounds = array<i64: 336, 128>}]} {
    %cst = arith.constant 0.000000e+00 : bf16
    %0 = vector.broadcast %cst : bf16 to vector<464x128xbf16>
    %c0 = arith.constant 0 : index
    %c0_0 = arith.constant 0 : index
    %1 = vector.load %arg12[%c0, %c0_0] : memref<464x128xbf16, #tpu.memory_space<vmem>>, vector<464x128xbf16>
    tpu.vector_store %arg12[%c0, %c0_0], %0 {strides = array<i32>} : memref<464x128xbf16, #tpu.memory_space<vmem>>, vector<464x128xbf16>,
    %c0_1 = arith.constant 0 : index
    %c0_2 = arith.constant 0 : index
    %2 = vector.load %arg1[%c0_1, %c0_2] : memref<336x16xbf16, #tpu.memory_space<vmem>>, vector<336x16xbf16>
    %c16 = arith.constant 16 : index
    %c0_3 = arith.constant 0 : index
    %3 = vector.load %arg12[%c16, %c0_3] : memref<464x128xbf16, #tpu.memory_space<vmem>>, vector<336x16xbf16>
    tpu.vector_store %arg12[%c16, %c0_3], %2 {strides = array<i32>} : memref<464x128xbf16, #tpu.memory_space<vmem>>, vector<336x16xbf16>,
    %cst_4 = arith.constant 0.000000e+00 : bf16
    %4 = vector.broadcast %cst_4 : bf16 to vector<9x128x128xbf16>
    %c0_5 = arith.constant 0 : index
    %c0_6 = arith.constant 0 : index
    %c0_7 = arith.constant 0 : index
    %5 = vector.load %arg13[%c0_5, %c0_6, %c0_7] : memref<9x128x128xbf16, #tpu.memory_space<vmem>>, vector<9x128x128xbf16>
    tpu.vector_store %arg13[%c0_5, %c0_6, %c0_7], %4 {strides = array<i32>} : memref<9x128x128xbf16, #tpu.memory_space<vmem>>, vector<9x128x128xbf16>,
    %c0_8 = arith.constant 0 : index
    %c0_9 = arith.constant 0 : index
    %6 = vector.load %arg2[%c0_8, %c0_9] : memref<336x1xf32, #tpu.memory_space<vmem>>, vector<336x1xf32>
    %7 = vector.shape_cast %6 : vector<336x1xf32> to vector<336x1xf32>
    %8 = vector.broadcast %7 : vector<336x1xf32> to vector<336x128xf32>
    %c0_10 = arith.constant 0 : index
    %c0_11 = arith.constant 0 : index
    %c0_12 = arith.constant 0 : index
    %9 = vector.load %arg3[%c0_10, %c0_11, %c0_12] : memref<9x16x128xbf16, #tpu.memory_space<vmem>>, vector<9x16x128xbf16>
    %c0_13 = arith.constant 0 : index
    %c0_14 = arith.constant 0 : index
    %c0_15 = arith.constant 0 : index
    %10 = vector.load %arg13[%c0_13, %c0_14, %c0_15] : memref<9x128x128xbf16, #tpu.memory_space<vmem>>, vector<9x16x128xbf16>
    tpu.vector_store %arg13[%c0_13, %c0_14, %c0_15], %9 {strides = array<i32>} : memref<9x128x128xbf16, #tpu.memory_space<vmem>>, vector<9x16x128xbf16>,
    %cst_16 = arith.constant 0.000000e+00 : f32
    %11 = vector.broadcast %cst_16 : f32 to vector<344x128xf32>
    %c15 = arith.constant 15 : index
    %c0_17 = arith.constant 0 : index
    %12 = vector.load %arg12[%c15, %c0_17] : memref<464x128xbf16, #tpu.memory_space<vmem>>, vector<344x128xbf16>
    %c0_18 = arith.constant 0 : index
    %c0_19 = arith.constant 0 : index
    %c0_20 = arith.constant 0 : index
    %13 = vector.load %arg13[%c0_18, %c0_19, %c0_20] : memref<9x128x128xbf16, #tpu.memory_space<vmem>>, vector<1x128x128xbf16>
    %14 = vector.shape_cast %13 : vector<1x128x128xbf16> to vector<128x128xbf16>
    %cst_21 = arith.constant dense<0.000000e+00> : vector<344x128xf32>
    %15 = tpu.matmul %12, %14, %cst_21 {dimension_numbers = #tpu.dot_dimension_numbers<[1], [0], [0], [1], [0, 0, 1, 1], [], []>} : vector<344x128xbf16>, vector<128x128xbf16>, vector<344x128xf32> -> vector<344x128xf32>
    %16 = arith.addf %11, %15 : vector<344x128xf32>
    %c16_22 = arith.constant 16 : index
    %c0_23 = arith.constant 0 : index
    %17 = vector.load %arg12[%c16_22, %c0_23] : memref<464x128xbf16, #tpu.memory_space<vmem>>, vector<344x128xbf16>
    %c1 = arith.constant 1 : index
    %c0_24 = arith.constant 0 : index
    %c0_25 = arith.constant 0 : index
    %18 = vector.load %arg13[%c1, %c0_24, %c0_25] : memref<9x128x128xbf16, #tpu.memory_space<vmem>>, vector<1x128x128xbf16>
    %19 = vector.shape_cast %18 : vector<1x128x128xbf16> to vector<128x128xbf16>
    %cst_26 = arith.constant dense<0.000000e+00> : vector<344x128xf32>
    %20 = tpu.matmul %17, %19, %cst_26 {dimension_numbers = #tpu.dot_dimension_numbers<[1], [0], [0], [1], [0, 0, 1, 1], [], []>} : vector<344x128xbf16>, vector<128x128xbf16>, vector<344x128xf32> -> vector<344x128xf32>
    %21 = arith.addf %16, %20 : vector<344x128xf32>
    %c17 = arith.constant 17 : index
    %c0_27 = arith.constant 0 : index
    %22 = vector.load %arg12[%c17, %c0_27] : memref<464x128xbf16, #tpu.memory_space<vmem>>, vector<344x128xbf16>
    %c2 = arith.constant 2 : index
    %c0_28 = arith.constant 0 : index
    %c0_29 = arith.constant 0 : index
    %23 = vector.load %arg13[%c2, %c0_28, %c0_29] : memref<9x128x128xbf16, #tpu.memory_space<vmem>>, vector<1x128x128xbf16>
    %24 = vector.shape_cast %23 : vector<1x128x128xbf16> to vector<128x128xbf16>
    %cst_30 = arith.constant dense<0.000000e+00> : vector<344x128xf32>
    %25 = tpu.matmul %22, %24, %cst_30 {dimension_numbers = #tpu.dot_dimension_numbers<[1], [0], [0], [1], [0, 0, 1, 1], [], []>} : vector<344x128xbf16>, vector<128x128xbf16>, vector<344x128xf32> -> vector<344x128xf32>
    %26 = arith.addf %21, %25 : vector<344x128xf32>
    %c63 = arith.constant 63 : index
    %c0_31 = arith.constant 0 : index
    %27 = vector.load %arg12[%c63, %c0_31] : memref<464x128xbf16, #tpu.memory_space<vmem>>, vector<344x128xbf16>
    %c3 = arith.constant 3 : index
    %c0_32 = arith.constant 0 : index
    %c0_33 = arith.constant 0 : index
    %28 = vector.load %arg13[%c3, %c0_32, %c0_33] : memref<9x128x128xbf16, #tpu.memory_space<vmem>>, vector<1x128x128xbf16>
    %29 = vector.shape_cast %28 : vector<1x128x128xbf16> to vector<128x128xbf16>
    %cst_34 = arith.constant dense<0.000000e+00> : vector<344x128xf32>
    %30 = tpu.matmul %27, %29, %cst_34 {dimension_numbers = #tpu.dot_dimension_numbers<[1], [0], [0], [1], [0, 0, 1, 1], [], []>} : vector<344x128xbf16>, vector<128x128xbf16>, vector<344x128xf32> -> vector<344x128xf32>
    %31 = arith.addf %26, %30 : vector<344x128xf32>
    %c64 = arith.constant 64 : index
    %c0_35 = arith.constant 0 : index
    %32 = vector.load %arg12[%c64, %c0_35] : memref<464x128xbf16, #tpu.memory_space<vmem>>, vector<344x128xbf16>
    %c4 = arith.constant 4 : index
    %c0_36 = arith.constant 0 : index
    %c0_37 = arith.constant 0 : index
    %33 = vector.load %arg13[%c4, %c0_36, %c0_37] : memref<9x128x128xbf16, #tpu.memory_space<vmem>>, vector<1x128x128xbf16>
    %34 = vector.shape_cast %33 : vector<1x128x128xbf16> to vector<128x128xbf16>
    %cst_38 = arith.constant dense<0.000000e+00> : vector<344x128xf32>
    %35 = tpu.matmul %32, %34, %cst_38 {dimension_numbers = #tpu.dot_dimension_numbers<[1], [0], [0], [1], [0, 0, 1, 1], [], []>} : vector<344x128xbf16>, vector<128x128xbf16>, vector<344x128xf32> -> vector<344x128xf32>
    %36 = arith.addf %31, %35 : vector<344x128xf32>
    %c65 = arith.constant 65 : index
    %c0_39 = arith.constant 0 : index
    %37 = vector.load %arg12[%c65, %c0_39] : memref<464x128xbf16, #tpu.memory_space<vmem>>, vector<344x128xbf16>
    %c5 = arith.constant 5 : index
    %c0_40 = arith.constant 0 : index
    %c0_41 = arith.constant 0 : index
    %38 = vector.load %arg13[%c5, %c0_40, %c0_41] : memref<9x128x128xbf16, #tpu.memory_space<vmem>>, vector<1x128x128xbf16>
    %39 = vector.shape_cast %38 : vector<1x128x128xbf16> to vector<128x128xbf16>
    %cst_42 = arith.constant dense<0.000000e+00> : vector<344x128xf32>
    %40 = tpu.matmul %37, %39, %cst_42 {dimension_numbers = #tpu.dot_dimension_numbers<[1], [0], [0], [1], [0, 0, 1, 1], [], []>} : vector<344x128xbf16>, vector<128x128xbf16>, vector<344x128xf32> -> vector<344x128xf32>
    %41 = arith.addf %36, %40 : vector<344x128xf32>
    %c111 = arith.constant 111 : index
    %c0_43 = arith.constant 0 : index
    %42 = vector.load %arg12[%c111, %c0_43] : memref<464x128xbf16, #tpu.memory_space<vmem>>, vector<344x128xbf16>
    %c6 = arith.constant 6 : index
    %c0_44 = arith.constant 0 : index
    %c0_45 = arith.constant 0 : index
    %43 = vector.load %arg13[%c6, %c0_44, %c0_45] : memref<9x128x128xbf16, #tpu.memory_space<vmem>>, vector<1x128x128xbf16>
    %44 = vector.shape_cast %43 : vector<1x128x128xbf16> to vector<128x128xbf16>
    %cst_46 = arith.constant dense<0.000000e+00> : vector<344x128xf32>
    %45 = tpu.matmul %42, %44, %cst_46 {dimension_numbers = #tpu.dot_dimension_numbers<[1], [0], [0], [1], [0, 0, 1, 1], [], []>} : vector<344x128xbf16>, vector<128x128xbf16>, vector<344x128xf32> -> vector<344x128xf32>
    %46 = arith.addf %41, %45 : vector<344x128xf32>
    %c112 = arith.constant 112 : index
    %c0_47 = arith.constant 0 : index
    %47 = vector.load %arg12[%c112, %c0_47] : memref<464x128xbf16, #tpu.memory_space<vmem>>, vector<344x128xbf16>
    %c7 = arith.constant 7 : index
    %c0_48 = arith.constant 0 : index
    %c0_49 = arith.constant 0 : index
    %48 = vector.load %arg13[%c7, %c0_48, %c0_49] : memref<9x128x128xbf16, #tpu.memory_space<vmem>>, vector<1x128x128xbf16>
    %49 = vector.shape_cast %48 : vector<1x128x128xbf16> to vector<128x128xbf16>
    %cst_50 = arith.constant dense<0.000000e+00> : vector<344x128xf32>
    %50 = tpu.matmul %47, %49, %cst_50 {dimension_numbers = #tpu.dot_dimension_numbers<[1], [0], [0], [1], [0, 0, 1, 1], [], []>} : vector<344x128xbf16>, vector<128x128xbf16>, vector<344x128xf32> -> vector<344x128xf32>
    %51 = arith.addf %46, %50 : vector<344x128xf32>
    %c113 = arith.constant 113 : index
    %c0_51 = arith.constant 0 : index
    %52 = vector.load %arg12[%c113, %c0_51] : memref<464x128xbf16, #tpu.memory_space<vmem>>, vector<344x128xbf16>
    %c8 = arith.constant 8 : index
    %c0_52 = arith.constant 0 : index
    %c0_53 = arith.constant 0 : index
    %53 = vector.load %arg13[%c8, %c0_52, %c0_53] : memref<9x128x128xbf16, #tpu.memory_space<vmem>>, vector<1x128x128xbf16>
    %54 = vector.shape_cast %53 : vector<1x128x128xbf16> to vector<128x128xbf16>
    %cst_54 = arith.constant dense<0.000000e+00> : vector<344x128xf32>
    %55 = tpu.matmul %52, %54, %cst_54 {dimension_numbers = #tpu.dot_dimension_numbers<[1], [0], [0], [1], [0, 0, 1, 1], [], []>} : vector<344x128xbf16>, vector<128x128xbf16>, vector<344x128xf32> -> vector<344x128xf32>
    %56 = arith.addf %51, %55 : vector<344x128xf32>
    %57 = vector.extract_strided_slice %56 {offsets = [0, 0], sizes = [336, 128], strides = [1, 1]} : vector<344x128xf32> to vector<336x128xf32>
    %58 = vector.extract_strided_slice %56 {offsets = [1, 0], sizes = [336, 128], strides = [1, 1]} : vector<344x128xf32> to vector<336x128xf32>
    %59 = arith.maximumf %57, %58 : vector<336x128xf32>
    %c0_55 = arith.constant 0 : index
    %c0_56 = arith.constant 0 : index
    %60 = vector.load %arg4[%c0_55, %c0_56] : memref<1x128xf32, #tpu.memory_space<vmem>>, vector<1x128xf32>
    %61 = vector.broadcast %60 : vector<1x128xf32> to vector<336x128xf32>
    %62 = arith.addf %59, %61 : vector<336x128xf32>
    %cst_57 = arith.constant 0.000000e+00 : f32
    %63 = vector.broadcast %cst_57 : f32 to vector<336x128xf32>
    %64 = arith.maximumf %62, %63 : vector<336x128xf32>
    %65 = arith.mulf %64, %8 : vector<336x128xf32>
    %66 = arith.truncf %65 : vector<336x128xf32> to vector<336x128xbf16>
    %c16_58 = arith.constant 16 : index
    %c0_59 = arith.constant 0 : index
    %67 = vector.load %arg12[%c16_58, %c0_59] : memref<464x128xbf16, #tpu.memory_space<vmem>>, vector<336x128xbf16>
    tpu.vector_store %arg12[%c16_58, %c0_59], %66 {strides = array<i32>} : memref<464x128xbf16, #tpu.memory_space<vmem>>, vector<336x128xbf16>,
    %c0_60 = arith.constant 0 : index
    %c0_61 = arith.constant 0 : index
    %c0_62 = arith.constant 0 : index
    %68 = vector.load %arg5[%c0_60, %c0_61, %c0_62] : memref<3x16x128xbf16, #tpu.memory_space<vmem>>, vector<3x16x128xbf16>
    %c0_63 = arith.constant 0 : index
    %c0_64 = arith.constant 0 : index
    %c0_65 = arith.constant 0 : index
    %69 = vector.load %arg13[%c0_63, %c0_64, %c0_65] : memref<9x128x128xbf16, #tpu.memory_space<vmem>>, vector<3x16x128xbf16>
    tpu.vector_store %arg13[%c0_63, %c0_64, %c0_65], %68 {strides = array<i32>} : memref<9x128x128xbf16, #tpu.memory_space<vmem>>, vector<3x16x128xbf16>,
    %cst_66 = arith.constant 0.000000e+00 : f32
    %70 = vector.broadcast %cst_66 : f32 to vector<344x128xf32>
    %c14 = arith.constant 14 : index
    %c0_67 = arith.constant 0 : index
    %71 = vector.load %arg12[%c14, %c0_67] : memref<464x128xbf16, #tpu.memory_space<vmem>>, vector<344x128xbf16>
    %c0_68 = arith.constant 0 : index
    %c0_69 = arith.constant 0 : index
    %c0_70 = arith.constant 0 : index
    %72 = vector.load %arg13[%c0_68, %c0_69, %c0_70] : memref<9x128x128xbf16, #tpu.memory_space<vmem>>, vector<1x128x128xbf16>
    %73 = vector.shape_cast %72 : vector<1x128x128xbf16> to vector<128x128xbf16>
    %cst_71 = arith.constant dense<0.000000e+00> : vector<344x128xf32>
    %74 = tpu.matmul %71, %73, %cst_71 {dimension_numbers = #tpu.dot_dimension_numbers<[1], [0], [0], [1], [0, 0, 1, 1], [], []>} : vector<344x128xbf16>, vector<128x128xbf16>, vector<344x128xf32> -> vector<344x128xf32>
    %75 = arith.addf %70, %74 : vector<344x128xf32>
    %c16_72 = arith.constant 16 : index
    %c0_73 = arith.constant 0 : index
    %76 = vector.load %arg12[%c16_72, %c0_73] : memref<464x128xbf16, #tpu.memory_space<vmem>>, vector<344x128xbf16>
    %c1_74 = arith.constant 1 : index
    %c0_75 = arith.constant 0 : index
    %c0_76 = arith.constant 0 : index
    %77 = vector.load %arg13[%c1_74, %c0_75, %c0_76] : memref<9x128x128xbf16, #tpu.memory_space<vmem>>, vector<1x128x128xbf16>
    %78 = vector.shape_cast %77 : vector<1x128x128xbf16> to vector<128x128xbf16>
    %cst_77 = arith.constant dense<0.000000e+00> : vector<344x128xf32>
    %79 = tpu.matmul %76, %78, %cst_77 {dimension_numbers = #tpu.dot_dimension_numbers<[1], [0], [0], [1], [0, 0, 1, 1], [], []>} : vector<344x128xbf16>, vector<128x128xbf16>, vector<344x128xf32> -> vector<344x128xf32>
    %80 = arith.addf %75, %79 : vector<344x128xf32>
    %c18 = arith.constant 18 : index
    %c0_78 = arith.constant 0 : index
    %81 = vector.load %arg12[%c18, %c0_78] : memref<464x128xbf16, #tpu.memory_space<vmem>>, vector<344x128xbf16>
    %c2_79 = arith.constant 2 : index
    %c0_80 = arith.constant 0 : index
    %c0_81 = arith.constant 0 : index
    %82 = vector.load %arg13[%c2_79, %c0_80, %c0_81] : memref<9x128x128xbf16, #tpu.memory_space<vmem>>, vector<1x128x128xbf16>
    %83 = vector.shape_cast %82 : vector<1x128x128xbf16> to vector<128x128xbf16>
    %cst_82 = arith.constant dense<0.000000e+00> : vector<344x128xf32>
    %84 = tpu.matmul %81, %83, %cst_82 {dimension_numbers = #tpu.dot_dimension_numbers<[1], [0], [0], [1], [0, 0, 1, 1], [], []>} : vector<344x128xbf16>, vector<128x128xbf16>, vector<344x128xf32> -> vector<344x128xf32>
    %85 = arith.addf %80, %84 : vector<344x128xf32>
    %86 = vector.extract_strided_slice %85 {offsets = [0, 0], sizes = [336, 128], strides = [1, 1]} : vector<344x128xf32> to vector<336x128xf32>
    %87 = vector.extract_strided_slice %85 {offsets = [2, 0], sizes = [336, 128], strides = [1, 1]} : vector<344x128xf32> to vector<336x128xf32>
    %88 = arith.maximumf %86, %87 : vector<336x128xf32>
    %c0_83 = arith.constant 0 : index
    %c0_84 = arith.constant 0 : index
    %89 = vector.load %arg6[%c0_83, %c0_84] : memref<1x128xf32, #tpu.memory_space<vmem>>, vector<1x128xf32>
    %90 = vector.broadcast %89 : vector<1x128xf32> to vector<336x128xf32>
    %91 = arith.addf %88, %90 : vector<336x128xf32>
    %cst_85 = arith.constant 0.000000e+00 : f32
    %92 = vector.broadcast %cst_85 : f32 to vector<336x128xf32>
    %93 = arith.maximumf %91, %92 : vector<336x128xf32>
    %94 = arith.mulf %93, %8 : vector<336x128xf32>
    %95 = arith.truncf %94 : vector<336x128xf32> to vector<336x128xbf16>
    %c16_86 = arith.constant 16 : index
    %c0_87 = arith.constant 0 : index
    %96 = vector.load %arg12[%c16_86, %c0_87] : memref<464x128xbf16, #tpu.memory_space<vmem>>, vector<336x128xbf16>
    tpu.vector_store %arg12[%c16_86, %c0_87], %95 {strides = array<i32>} : memref<464x128xbf16, #tpu.memory_space<vmem>>, vector<336x128xbf16>,
    %c0_88 = arith.constant 0 : index
    %c0_89 = arith.constant 0 : index
    %c0_90 = arith.constant 0 : index
    %97 = vector.load %arg7[%c0_88, %c0_89, %c0_90] : memref<9x16x128xbf16, #tpu.memory_space<vmem>>, vector<9x16x128xbf16>
    %c0_91 = arith.constant 0 : index
    %c0_92 = arith.constant 0 : index
    %c0_93 = arith.constant 0 : index
    %98 = vector.load %arg13[%c0_91, %c0_92, %c0_93] : memref<9x128x128xbf16, #tpu.memory_space<vmem>>, vector<9x16x128xbf16>
    tpu.vector_store %arg13[%c0_91, %c0_92, %c0_93], %97 {strides = array<i32>} : memref<9x128x128xbf16, #tpu.memory_space<vmem>>, vector<9x16x128xbf16>,
    %cst_94 = arith.constant 0.000000e+00 : f32
    %99 = vector.broadcast %cst_94 : f32 to vector<344x128xf32>
    %c12 = arith.constant 12 : index
    %c0_95 = arith.constant 0 : index
    %100 = vector.load %arg12[%c12, %c0_95] : memref<464x128xbf16, #tpu.memory_space<vmem>>, vector<344x128xbf16>
    %c0_96 = arith.constant 0 : index
    %c0_97 = arith.constant 0 : index
    %c0_98 = arith.constant 0 : index
    %101 = vector.load %arg13[%c0_96, %c0_97, %c0_98] : memref<9x128x128xbf16, #tpu.memory_space<vmem>>, vector<1x128x128xbf16>
    %102 = vector.shape_cast %101 : vector<1x128x128xbf16> to vector<128x128xbf16>
    %cst_99 = arith.constant dense<0.000000e+00> : vector<344x128xf32>
    %103 = tpu.matmul %100, %102, %cst_99 {dimension_numbers = #tpu.dot_dimension_numbers<[1], [0], [0], [1], [0, 0, 1, 1], [], []>} : vector<344x128xbf16>, vector<128x128xbf16>, vector<344x128xf32> -> vector<344x128xf32>
    %104 = arith.addf %99, %103 : vector<344x128xf32>
    %c16_100 = arith.constant 16 : index
    %c0_101 = arith.constant 0 : index
    %105 = vector.load %arg12[%c16_100, %c0_101] : memref<464x128xbf16, #tpu.memory_space<vmem>>, vector<344x128xbf16>
    %c1_102 = arith.constant 1 : index
    %c0_103 = arith.constant 0 : index
    %c0_104 = arith.constant 0 : index
    %106 = vector.load %arg13[%c1_102, %c0_103, %c0_104] : memref<9x128x128xbf16, #tpu.memory_space<vmem>>, vector<1x128x128xbf16>
    %107 = vector.shape_cast %106 : vector<1x128x128xbf16> to vector<128x128xbf16>
    %cst_105 = arith.constant dense<0.000000e+00> : vector<344x128xf32>
    %108 = tpu.matmul %105, %107, %cst_105 {dimension_numbers = #tpu.dot_dimension_numbers<[1], [0], [0], [1], [0, 0, 1, 1], [], []>} : vector<344x128xbf16>, vector<128x128xbf16>, vector<344x128xf32> -> vector<344x128xf32>
    %109 = arith.addf %104, %108 : vector<344x128xf32>
    %c20 = arith.constant 20 : index
    %c0_106 = arith.constant 0 : index
    %110 = vector.load %arg12[%c20, %c0_106] : memref<464x128xbf16, #tpu.memory_space<vmem>>, vector<344x128xbf16>
    %c2_107 = arith.constant 2 : index
    %c0_108 = arith.constant 0 : index
    %c0_109 = arith.constant 0 : index
    %111 = vector.load %arg13[%c2_107, %c0_108, %c0_109] : memref<9x128x128xbf16, #tpu.memory_space<vmem>>, vector<1x128x128xbf16>
    %112 = vector.shape_cast %111 : vector<1x128x128xbf16> to vector<128x128xbf16>
    %cst_110 = arith.constant dense<0.000000e+00> : vector<344x128xf32>
    %113 = tpu.matmul %110, %112, %cst_110 {dimension_numbers = #tpu.dot_dimension_numbers<[1], [0], [0], [1], [0, 0, 1, 1], [], []>} : vector<344x128xbf16>, vector<128x128xbf16>, vector<344x128xf32> -> vector<344x128xf32>
    %114 = arith.addf %109, %113 : vector<344x128xf32>
    %c60 = arith.constant 60 : index
    %c0_111 = arith.constant 0 : index
    %115 = vector.load %arg12[%c60, %c0_111] : memref<464x128xbf16, #tpu.memory_space<vmem>>, vector<344x128xbf16>
    %c3_112 = arith.constant 3 : index
    %c0_113 = arith.constant 0 : index
    %c0_114 = arith.constant 0 : index
    %116 = vector.load %arg13[%c3_112, %c0_113, %c0_114] : memref<9x128x128xbf16, #tpu.memory_space<vmem>>, vector<1x128x128xbf16>
    %117 = vector.shape_cast %116 : vector<1x128x128xbf16> to vector<128x128xbf16>
    %cst_115 = arith.constant dense<0.000000e+00> : vector<344x128xf32>
    %118 = tpu.matmul %115, %117, %cst_115 {dimension_numbers = #tpu.dot_dimension_numbers<[1], [0], [0], [1], [0, 0, 1, 1], [], []>} : vector<344x128xbf16>, vector<128x128xbf16>, vector<344x128xf32> -> vector<344x128xf32>
    %119 = arith.addf %114, %118 : vector<344x128xf32>
    %c64_116 = arith.constant 64 : index
    %c0_117 = arith.constant 0 : index
    %120 = vector.load %arg12[%c64_116, %c0_117] : memref<464x128xbf16, #tpu.memory_space<vmem>>, vector<344x128xbf16>
    %c4_118 = arith.constant 4 : index
    %c0_119 = arith.constant 0 : index
    %c0_120 = arith.constant 0 : index
    %121 = vector.load %arg13[%c4_118, %c0_119, %c0_120] : memref<9x128x128xbf16, #tpu.memory_space<vmem>>, vector<1x128x128xbf16>
    %122 = vector.shape_cast %121 : vector<1x128x128xbf16> to vector<128x128xbf16>
    %cst_121 = arith.constant dense<0.000000e+00> : vector<344x128xf32>
    %123 = tpu.matmul %120, %122, %cst_121 {dimension_numbers = #tpu.dot_dimension_numbers<[1], [0], [0], [1], [0, 0, 1, 1], [], []>} : vector<344x128xbf16>, vector<128x128xbf16>, vector<344x128xf32> -> vector<344x128xf32>
    %124 = arith.addf %119, %123 : vector<344x128xf32>
    %c68 = arith.constant 68 : index
    %c0_122 = arith.constant 0 : index
    %125 = vector.load %arg12[%c68, %c0_122] : memref<464x128xbf16, #tpu.memory_space<vmem>>, vector<344x128xbf16>
    %c5_123 = arith.constant 5 : index
    %c0_124 = arith.constant 0 : index
    %c0_125 = arith.constant 0 : index
    %126 = vector.load %arg13[%c5_123, %c0_124, %c0_125] : memref<9x128x128xbf16, #tpu.memory_space<vmem>>, vector<1x128x128xbf16>
    %127 = vector.shape_cast %126 : vector<1x128x128xbf16> to vector<128x128xbf16>
    %cst_126 = arith.constant dense<0.000000e+00> : vector<344x128xf32>
    %128 = tpu.matmul %125, %127, %cst_126 {dimension_numbers = #tpu.dot_dimension_numbers<[1], [0], [0], [1], [0, 0, 1, 1], [], []>} : vector<344x128xbf16>, vector<128x128xbf16>, vector<344x128xf32> -> vector<344x128xf32>
    %129 = arith.addf %124, %128 : vector<344x128xf32>
    %c108 = arith.constant 108 : index
    %c0_127 = arith.constant 0 : index
    %130 = vector.load %arg12[%c108, %c0_127] : memref<464x128xbf16, #tpu.memory_space<vmem>>, vector<344x128xbf16>
    %c6_128 = arith.constant 6 : index
    %c0_129 = arith.constant 0 : index
    %c0_130 = arith.constant 0 : index
    %131 = vector.load %arg13[%c6_128, %c0_129, %c0_130] : memref<9x128x128xbf16, #tpu.memory_space<vmem>>, vector<1x128x128xbf16>
    %132 = vector.shape_cast %131 : vector<1x128x128xbf16> to vector<128x128xbf16>
    %cst_131 = arith.constant dense<0.000000e+00> : vector<344x128xf32>
    %133 = tpu.matmul %130, %132, %cst_131 {dimension_numbers = #tpu.dot_dimension_numbers<[1], [0], [0], [1], [0, 0, 1, 1], [], []>} : vector<344x128xbf16>, vector<128x128xbf16>, vector<344x128xf32> -> vector<344x128xf32>
    %134 = arith.addf %129, %133 : vector<344x128xf32>
    %c112_132 = arith.constant 112 : index
    %c0_133 = arith.constant 0 : index
    %135 = vector.load %arg12[%c112_132, %c0_133] : memref<464x128xbf16, #tpu.memory_space<vmem>>, vector<344x128xbf16>
    %c7_134 = arith.constant 7 : index
    %c0_135 = arith.constant 0 : index
    %c0_136 = arith.constant 0 : index
    %136 = vector.load %arg13[%c7_134, %c0_135, %c0_136] : memref<9x128x128xbf16, #tpu.memory_space<vmem>>, vector<1x128x128xbf16>
    %137 = vector.shape_cast %136 : vector<1x128x128xbf16> to vector<128x128xbf16>
    %cst_137 = arith.constant dense<0.000000e+00> : vector<344x128xf32>
    %138 = tpu.matmul %135, %137, %cst_137 {dimension_numbers = #tpu.dot_dimension_numbers<[1], [0], [0], [1], [0, 0, 1, 1], [], []>} : vector<344x128xbf16>, vector<128x128xbf16>, vector<344x128xf32> -> vector<344x128xf32>
    %139 = arith.addf %134, %138 : vector<344x128xf32>
    %c116 = arith.constant 116 : index
    %c0_138 = arith.constant 0 : index
    %140 = vector.load %arg12[%c116, %c0_138] : memref<464x128xbf16, #tpu.memory_space<vmem>>, vector<344x128xbf16>
    %c8_139 = arith.constant 8 : index
    %c0_140 = arith.constant 0 : index
    %c0_141 = arith.constant 0 : index
    %141 = vector.load %arg13[%c8_139, %c0_140, %c0_141] : memref<9x128x128xbf16, #tpu.memory_space<vmem>>, vector<1x128x128xbf16>
    %142 = vector.shape_cast %141 : vector<1x128x128xbf16> to vector<128x128xbf16>
    %cst_142 = arith.constant dense<0.000000e+00> : vector<344x128xf32>
    %143 = tpu.matmul %140, %142, %cst_142 {dimension_numbers = #tpu.dot_dimension_numbers<[1], [0], [0], [1], [0, 0, 1, 1], [], []>} : vector<344x128xbf16>, vector<128x128xbf16>, vector<344x128xf32> -> vector<344x128xf32>
    %144 = arith.addf %139, %143 : vector<344x128xf32>
    %145 = vector.extract_strided_slice %144 {offsets = [0, 0], sizes = [336, 128], strides = [1, 1]} : vector<344x128xf32> to vector<336x128xf32>
    %146 = vector.extract_strided_slice %144 {offsets = [4, 0], sizes = [336, 128], strides = [1, 1]} : vector<344x128xf32> to vector<336x128xf32>
    %147 = arith.maximumf %145, %146 : vector<336x128xf32>
    %c0_143 = arith.constant 0 : index
    %c0_144 = arith.constant 0 : index
    %148 = vector.load %arg8[%c0_143, %c0_144] : memref<1x128xf32, #tpu.memory_space<vmem>>, vector<1x128xf32>
    %149 = vector.broadcast %148 : vector<1x128xf32> to vector<336x128xf32>
    %150 = arith.addf %147, %149 : vector<336x128xf32>
    %cst_145 = arith.constant 0.000000e+00 : f32
    %151 = vector.broadcast %cst_145 : f32 to vector<336x128xf32>
    %152 = arith.maximumf %150, %151 : vector<336x128xf32>
    %153 = arith.mulf %152, %8 : vector<336x128xf32>
    %154 = arith.truncf %153 : vector<336x128xf32> to vector<336x128xbf16>
    %c16_146 = arith.constant 16 : index
    %c0_147 = arith.constant 0 : index
    %155 = vector.load %arg12[%c16_146, %c0_147] : memref<464x128xbf16, #tpu.memory_space<vmem>>, vector<336x128xbf16>
    tpu.vector_store %arg12[%c16_146, %c0_147], %154 {strides = array<i32>} : memref<464x128xbf16, #tpu.memory_space<vmem>>, vector<336x128xbf16>,
    %c0_148 = arith.constant 0 : index
    %c0_149 = arith.constant 0 : index
    %c0_150 = arith.constant 0 : index
    %156 = vector.load %arg9[%c0_148, %c0_149, %c0_150] : memref<3x16x128xbf16, #tpu.memory_space<vmem>>, vector<3x16x128xbf16>
    %c0_151 = arith.constant 0 : index
    %c0_152 = arith.constant 0 : index
    %c0_153 = arith.constant 0 : index
    %157 = vector.load %arg13[%c0_151, %c0_152, %c0_153] : memref<9x128x128xbf16, #tpu.memory_space<vmem>>, vector<3x16x128xbf16>
    tpu.vector_store %arg13[%c0_151, %c0_152, %c0_153], %156 {strides = array<i32>} : memref<9x128x128xbf16, #tpu.memory_space<vmem>>, vector<3x16x128xbf16>,
    %cst_154 = arith.constant 0.000000e+00 : f32
    %158 = vector.broadcast %cst_154 : f32 to vector<344x128xf32>
    %c8_155 = arith.constant 8 : index
    %c0_156 = arith.constant 0 : index
    %159 = vector.load %arg12[%c8_155, %c0_156] : memref<464x128xbf16, #tpu.memory_space<vmem>>, vector<344x128xbf16>
    %c0_157 = arith.constant 0 : index
    %c0_158 = arith.constant 0 : index
    %c0_159 = arith.constant 0 : index
    %160 = vector.load %arg13[%c0_157, %c0_158, %c0_159] : memref<9x128x128xbf16, #tpu.memory_space<vmem>>, vector<1x128x128xbf16>
    %161 = vector.shape_cast %160 : vector<1x128x128xbf16> to vector<128x128xbf16>
    %cst_160 = arith.constant dense<0.000000e+00> : vector<344x128xf32>
    %162 = tpu.matmul %159, %161, %cst_160 {dimension_numbers = #tpu.dot_dimension_numbers<[1], [0], [0], [1], [0, 0, 1, 1], [], []>} : vector<344x128xbf16>, vector<128x128xbf16>, vector<344x128xf32> -> vector<344x128xf32>
    %163 = arith.addf %158, %162 : vector<344x128xf32>
    %c16_161 = arith.constant 16 : index
    %c0_162 = arith.constant 0 : index
    %164 = vector.load %arg12[%c16_161, %c0_162] : memref<464x128xbf16, #tpu.memory_space<vmem>>, vector<344x128xbf16>
    %c1_163 = arith.constant 1 : index
    %c0_164 = arith.constant 0 : index
    %c0_165 = arith.constant 0 : index
    %165 = vector.load %arg13[%c1_163, %c0_164, %c0_165] : memref<9x128x128xbf16, #tpu.memory_space<vmem>>, vector<1x128x128xbf16>
    %166 = vector.shape_cast %165 : vector<1x128x128xbf16> to vector<128x128xbf16>
    %cst_166 = arith.constant dense<0.000000e+00> : vector<344x128xf32>
    %167 = tpu.matmul %164, %166, %cst_166 {dimension_numbers = #tpu.dot_dimension_numbers<[1], [0], [0], [1], [0, 0, 1, 1], [], []>} : vector<344x128xbf16>, vector<128x128xbf16>, vector<344x128xf32> -> vector<344x128xf32>
    %168 = arith.addf %163, %167 : vector<344x128xf32>
    %c24 = arith.constant 24 : index
    %c0_167 = arith.constant 0 : index
    %169 = vector.load %arg12[%c24, %c0_167] : memref<464x128xbf16, #tpu.memory_space<vmem>>, vector<344x128xbf16>
    %c2_168 = arith.constant 2 : index
    %c0_169 = arith.constant 0 : index
    %c0_170 = arith.constant 0 : index
    %170 = vector.load %arg13[%c2_168, %c0_169, %c0_170] : memref<9x128x128xbf16, #tpu.memory_space<vmem>>, vector<1x128x128xbf16>
    %171 = vector.shape_cast %170 : vector<1x128x128xbf16> to vector<128x128xbf16>
    %cst_171 = arith.constant dense<0.000000e+00> : vector<344x128xf32>
    %172 = tpu.matmul %169, %171, %cst_171 {dimension_numbers = #tpu.dot_dimension_numbers<[1], [0], [0], [1], [0, 0, 1, 1], [], []>} : vector<344x128xbf16>, vector<128x128xbf16>, vector<344x128xf32> -> vector<344x128xf32>
    %173 = arith.addf %168, %172 : vector<344x128xf32>
    %174 = vector.extract_strided_slice %173 {offsets = [0, 0], sizes = [336, 128], strides = [1, 1]} : vector<344x128xf32> to vector<336x128xf32>
    %175 = vector.extract_strided_slice %173 {offsets = [8, 0], sizes = [336, 128], strides = [1, 1]} : vector<344x128xf32> to vector<336x128xf32>
    %176 = arith.maximumf %174, %175 : vector<336x128xf32>
    %c0_172 = arith.constant 0 : index
    %c0_173 = arith.constant 0 : index
    %177 = vector.load %arg10[%c0_172, %c0_173] : memref<1x128xf32, #tpu.memory_space<vmem>>, vector<1x128xf32>
    %178 = vector.broadcast %177 : vector<1x128xf32> to vector<336x128xf32>
    %179 = arith.addf %176, %178 : vector<336x128xf32>
    %cst_174 = arith.constant 0.000000e+00 : f32
    %180 = vector.broadcast %cst_174 : f32 to vector<336x128xf32>
    %181 = arith.maximumf %179, %180 : vector<336x128xf32>
    %182 = arith.mulf %181, %8 : vector<336x128xf32>
    %c0_175 = arith.constant 0 : index
    %c0_176 = arith.constant 0 : index
    %183 = vector.load %arg11[%c0_175, %c0_176] : memref<336x128xf32, #tpu.memory_space<vmem>>, vector<336x128xf32>
    tpu.vector_store %arg11[%c0_175, %c0_176], %182 {strides = array<i32>} : memref<336x128xf32, #tpu.memory_space<vmem>>, vector<336x128xf32>,
    return
  }
  func.func @transform_0(%arg0: i32) -> (i32, i32) {
    %c0_i32 = arith.constant 0 : i32
    %c0_i32_0 = arith.constant 0 : i32
    return %arg0, %c0_i32 : i32, i32
  }
  func.func @transform_1(%arg0: i32) -> (i32, i32) {
    %c0_i32 = arith.constant 0 : i32
    %c0_i32_0 = arith.constant 0 : i32
    %c0_i32_1 = arith.constant 0 : i32
    return %c0_i32, %c0_i32_0 : i32, i32
  }
  func.func @transform_2(%arg0: i32) -> (i32, i32, i32) {
    %c0_i32 = arith.constant 0 : i32
    %c0_i32_0 = arith.constant 0 : i32
    %c0_i32_1 = arith.constant 0 : i32
    %c0_i32_2 = arith.constant 0 : i32
    return %c0_i32, %c0_i32_0, %c0_i32_1 : i32, i32, i32
  }
  func.func @transform_3(%arg0: i32) -> (i32, i32) {
    %c0_i32 = arith.constant 0 : i32
    %c0_i32_0 = arith.constant 0 : i32
    %c0_i32_1 = arith.constant 0 : i32
    return %c0_i32, %c0_i32_0 : i32, i32
  }
  func.func @transform_4(%arg0: i32) -> (i32, i32, i32) {
    %c0_i32 = arith.constant 0 : i32
    %c0_i32_0 = arith.constant 0 : i32
    %c0_i32_1 = arith.constant 0 : i32
    %c0_i32_2 = arith.constant 0 : i32
    return %c0_i32, %c0_i32_0, %c0_i32_1 : i32, i32, i32
  }
  func.func @transform_5(%arg0: i32) -> (i32, i32) {
    %c0_i32 = arith.constant 0 : i32
    %c0_i32_0 = arith.constant 0 : i32
    %c0_i32_1 = arith.constant 0 : i32
    return %c0_i32, %c0_i32_0 : i32, i32
  }
  func.func @transform_6(%arg0: i32) -> (i32, i32, i32) {
    %c0_i32 = arith.constant 0 : i32
    %c0_i32_0 = arith.constant 0 : i32
    %c0_i32_1 = arith.constant 0 : i32
    %c0_i32_2 = arith.constant 0 : i32
    return %c0_i32, %c0_i32_0, %c0_i32_1 : i32, i32, i32
  }
  func.func @transform_7(%arg0: i32) -> (i32, i32) {
    %c0_i32 = arith.constant 0 : i32
    %c0_i32_0 = arith.constant 0 : i32
    %c0_i32_1 = arith.constant 0 : i32
    return %c0_i32, %c0_i32_0 : i32, i32
  }
  func.func @transform_8(%arg0: i32) -> (i32, i32, i32) {
    %c0_i32 = arith.constant 0 : i32
    %c0_i32_0 = arith.constant 0 : i32
    %c0_i32_1 = arith.constant 0 : i32
    %c0_i32_2 = arith.constant 0 : i32
    return %c0_i32, %c0_i32_0, %c0_i32_1 : i32, i32, i32
  }
  func.func @transform_9(%arg0: i32) -> (i32, i32) {
    %c0_i32 = arith.constant 0 : i32
    %c0_i32_0 = arith.constant 0 : i32
    %c0_i32_1 = arith.constant 0 : i32
    return %c0_i32, %c0_i32_0 : i32, i32
  }
  func.func @transform_10(%arg0: i32) -> (i32, i32) {
    %c0_i32 = arith.constant 0 : i32
    %c0_i32_0 = arith.constant 0 : i32
    return %arg0, %c0_i32 : i32, i32
  }
}

</mosaic_0001>

<llo_original>
// kernel: tpu_custom_call.1
$region0: #{tpu_custom_call.1}
  #allocation0 [shape = 'u32[]', space=smem, size = 0x4, offset = 0x4, fixed_abs, tag = 'smem constant byte address 0x4 - core index']
  #allocation1 [shape = 'u32[72,128]{1,0:T(1,128)}', space=vmem, size = 0x9000, scoped, tag = 'internal scratch']
  #allocation2 [shape = 'bf16[464,128]{1,0:T(8,128)(2,1)}', space=vmem, size = 0x1d000, scoped, tag = 'scratch operand']
  #allocation3 [shape = 'bf16[9,128,128]{2,1,0:T(8,128)(2,1)}', space=vmem, size = 0x48000, scoped, tag = 'scratch operand']
  %s0 = inlined_call_operand.vmem [shape: bf16[672,16], index: 0, kind: input, shape index: {}]
  %s1 = inlined_call_operand.vmem [shape: f32[336,1], index: 1, kind: input, shape index: {}]
  %s2 = inlined_call_operand.vmem [shape: bf16[9,16,128], index: 2, kind: input, shape index: {}]
  %s3 = inlined_call_operand.vmem [shape: f32[1,128], index: 3, kind: input, shape index: {}]
  %s4 = inlined_call_operand.vmem [shape: bf16[3,16,128], index: 4, kind: input, shape index: {}]
  %s5 = inlined_call_operand.vmem [shape: f32[1,128], index: 5, kind: input, shape index: {}]
  %s6 = inlined_call_operand.vmem [shape: bf16[9,16,128], index: 6, kind: input, shape index: {}]
  %s7 = inlined_call_operand.vmem [shape: f32[1,128], index: 7, kind: input, shape index: {}]
  %s8 = inlined_call_operand.vmem [shape: bf16[3,16,128], index: 8, kind: input, shape index: {}]
  %s9 = inlined_call_operand.vmem [shape: f32[1,128], index: 9, kind: input, shape index: {}]
  %s10 = inlined_call_operand.hbm [shape: f32[672,128], index: 10, kind: output, shape index: {}]
  %s11 = sld [smem:[#allocation0]]
  $region73: #{tpu_custom_call.1} parent=0
    _
  %s13 = ssub.s32 1, %s11
  %s14 = scalar_select 0, %s13, %s11
  $region1: #{tpu_custom_call.1} parent=0
    #allocation4 [shape = 'u8[344064]{0}', space=vmem, size = 0x54000, scoped, tag = 'output window, operand 0']
    #allocation5 [shape = 's32[2]{0}', space=sflag, size = 0x8, scoped, tag = 'scoped memory for tpu_custom_call.1']
    %15 = vsyncpa [#allocation5], 0
    %s16 = scalar_lea.sflag [#allocation5], 1
    %17 = vsyncpa %s16, 0
    loop: start=0, step=1, limit=4
    $region2: #{tpu_custom_call.1} parent=1 // loop_pre_header
      _
    $region3: #{tpu_custom_call.1} parent=1 // loop_header
      %s19 = sphi 0, %s23
      %p20 = scmp.ge.s32.totalorder %s19, 4
      %s29 = sphi 0, %s31
      %s32 = sphi 0, %s29
      %s33 = sphi 0, %s32
      %s49 = sphi 0, %s33
      %s53 = sphi 0, %s53
      %s55 = sphi 0, %s53
      %s56 = sphi 0, %s55
      %s70 = sphi 0, %s56
      %s74 = sphi 0, %s74
      %s76 = sphi 0, %s74
      %s77 = sphi 0, %s76
      %s91 = sphi 0, %s77
      %s95 = sphi 0, %s95
      %s97 = sphi 0, %s95
      %s98 = sphi 0, %s97
      %s112 = sphi 0, %s98
      %s116 = sphi 0, %s116
      %s118 = sphi 0, %s116
      %s119 = sphi 0, %s118
      %s133 = sphi 0, %s119
      %s137 = sphi 0, %s137
      %s139 = sphi 0, %s137
      %s140 = sphi 0, %s139
      %s154 = sphi 0, %s140
      %s158 = sphi 0, %s158
      %s160 = sphi 0, %s158
      %s161 = sphi 0, %s160
      %s175 = sphi 0, %s161
      %s179 = sphi 0, %s179
      %s181 = sphi 0, %s179
      %s182 = sphi 0, %s181
      %s196 = sphi 0, %s182
      %s200 = sphi 0, %s200
      %s202 = sphi 0, %s200
      %s203 = sphi 0, %s202
      %s217 = sphi 0, %s203
      %s221 = sphi 0, %s221
      %s223 = sphi 0, %s221
      %s224 = sphi 0, %s223
      %s238 = sphi 0, %s224
      %s244 = sphi 0, %s246
      %s247 = sphi 0, %s244
      %s248 = sphi 0, %s247
      %s264 = sphi 0, %s248
    $region4: #{tpu_custom_call.1} parent=1 // loop_header_branch
      %22 = sbr.rel (%p20) target = $region8
    $region5: #{tpu_custom_call.1} parent=1 // loop_body
      %s24 = ssub.s32 %s19, 1
      %s25 = ssub.s32 %s19, 2
      %s26 = sadd.s32 %s19, 1
      %s27 = ssub.s32 %s19, %s26
      %p28 = scmp.eq.s32.totalorder %s27, 0
      %s30 = sadd.s32 %s29, 1
      %s31 = scalar_select %p28, %s29, %s30
      %p34 = pneg %p28
      %p35 = scmp.eq.s32.totalorder %s19, 1
      %p36 = por %p34, %p35
      %p37 = scmp.ne.s32.totalorder %s29, %s32
      %p38 = scmp.eq.s32.totalorder %s19, 0
      %p39 = por %p37, %p38
      %p40 = scmp.ne.s32.totalorder %s29, %s32
      %p41 = scmp.eq.s32.totalorder %s24, 1
      %p42 = por %p40, %p41
      %p43 = scmp.ne.s32.totalorder %s32, %s33
      %p44 = scmp.eq.s32.totalorder %s24, 0
      %p45 = por %p43, %p44
      %p46 = scmp.ne.s32.totalorder %s32, %s33
      %p47 = scmp.eq.s32.totalorder %s25, 1
      %p48 = por %p46, %p47
      %p50 = scmp.ne.s32.totalorder %s33, %s49
      %p51 = scmp.eq.s32.totalorder %s25, 0
      %p52 = por %p50, %p51
      %s54 = sadd.s32 %s53, 1
      %p57 = scmp.eq.s32.totalorder %s19, 1
      %p58 = scmp.ne.s32.totalorder %s53, %s55
      %p59 = scmp.eq.s32.totalorder %s19, 0
      %p60 = por %p58, %p59
      %p61 = scmp.ne.s32.totalorder %s53, %s55
      %p62 = scmp.eq.s32.totalorder %s24, 1
      %p63 = por %p61, %p62
      %p64 = scmp.ne.s32.totalorder %s55, %s56
      %p65 = scmp.eq.s32.totalorder %s24, 0
      %p66 = por %p64, %p65
      %p67 = scmp.ne.s32.totalorder %s55, %s56
      %p68 = scmp.eq.s32.totalorder %s25, 1
      %p69 = por %p67, %p68
      %p71 = scmp.ne.s32.totalorder %s56, %s70
      %p72 = scmp.eq.s32.totalorder %s25, 0
      %p73 = por %p71, %p72
      %s75 = sadd.s32 %s74, 1
      %p78 = scmp.eq.s32.totalorder %s19, 1
      %p79 = scmp.ne.s32.totalorder %s74, %s76
      %p80 = scmp.eq.s32.totalorder %s19, 0
      %p81 = por %p79, %p80
      %p82 = scmp.ne.s32.totalorder %s74, %s76
      %p83 = scmp.eq.s32.totalorder %s24, 1
      %p84 = por %p82, %p83
      %p85 = scmp.ne.s32.totalorder %s76, %s77
      %p86 = scmp.eq.s32.totalorder %s24, 0
      %p87 = por %p85, %p86
      %p88 = scmp.ne.s32.totalorder %s76, %s77
      %p89 = scmp.eq.s32.totalorder %s25, 1
      %p90 = por %p88, %p89
      %p92 = scmp.ne.s32.totalorder %s77, %s91
      %p93 = scmp.eq.s32.totalorder %s25, 0
      %p94 = por %p92, %p93
      %s96 = sadd.s32 %s95, 1
      %p99 = scmp.eq.s32.totalorder %s19, 1
      %p100 = scmp.ne.s32.totalorder %s95, %s97
      %p101 = scmp.eq.s32.totalorder %s19, 0
      %p102 = por %p100, %p101
      %p103 = scmp.ne.s32.totalorder %s95, %s97
      %p104 = scmp.eq.s32.totalorder %s24, 1
      %p105 = por %p103, %p104
      %p106 = scmp.ne.s32.totalorder %s97, %s98
      %p107 = scmp.eq.s32.totalorder %s24, 0
      %p108 = por %p106, %p107
      %p109 = scmp.ne.s32.totalorder %s97, %s98
      %p110 = scmp.eq.s32.totalorder %s25, 1
      %p111 = por %p109, %p110
      %p113 = scmp.ne.s32.totalorder %s98, %s112
      %p114 = scmp.eq.s32.totalorder %s25, 0
      %p115 = por %p113, %p114
      %s117 = sadd.s32 %s116, 1
      %p120 = scmp.eq.s32.totalorder %s19, 1
      %p121 = scmp.ne.s32.totalorder %s116, %s118
      %p122 = scmp.eq.s32.totalorder %s19, 0
      %p123 = por %p121, %p122
      %p124 = scmp.ne.s32.totalorder %s116, %s118
      %p125 = scmp.eq.s32.totalorder %s24, 1
      %p126 = por %p124, %p125
      %p127 = scmp.ne.s32.totalorder %s118, %s119
      %p128 = scmp.eq.s32.totalorder %s24, 0
      %p129 = por %p127, %p128
      %p130 = scmp.ne.s32.totalorder %s118, %s119
      %p131 = scmp.eq.s32.totalorder %s25, 1
      %p132 = por %p130, %p131
      %p134 = scmp.ne.s32.totalorder %s119, %s133
      %p135 = scmp.eq.s32.totalorder %s25, 0
      %p136 = por %p134, %p135
      %s138 = sadd.s32 %s137, 1
      %p141 = scmp.eq.s32.totalorder %s19, 1
      %p142 = scmp.ne.s32.totalorder %s137, %s139
      %p143 = scmp.eq.s32.totalorder %s19, 0
      %p144 = por %p142, %p143
      %p145 = scmp.ne.s32.totalorder %s137, %s139
      %p146 = scmp.eq.s32.totalorder %s24, 1
      %p147 = por %p145, %p146
      %p148 = scmp.ne.s32.totalorder %s139, %s140
      %p149 = scmp.eq.s32.totalorder %s24, 0
      %p150 = por %p148, %p149
      %p151 = scmp.ne.s32.totalorder %s139, %s140
      %p152 = scmp.eq.s32.totalorder %s25, 1
      %p153 = por %p151, %p152
      %p155 = scmp.ne.s32.totalorder %s140, %s154
      %p156 = scmp.eq.s32.totalorder %s25, 0
      %p157 = por %p155, %p156
      %s159 = sadd.s32 %s158, 1
      %p162 = scmp.eq.s32.totalorder %s19, 1
      %p163 = scmp.ne.s32.totalorder %s158, %s160
      %p164 = scmp.eq.s32.totalorder %s19, 0
      %p165 = por %p163, %p164
      %p166 = scmp.ne.s32.totalorder %s158, %s160
      %p167 = scmp.eq.s32.totalorder %s24, 1
      %p168 = por %p166, %p167
      %p169 = scmp.ne.s32.totalorder %s160, %s161
      %p170 = scmp.eq.s32.totalorder %s24, 0
      %p171 = por %p169, %p170
      %p172 = scmp.ne.s32.totalorder %s160, %s161
      %p173 = scmp.eq.s32.totalorder %s25, 1
      %p174 = por %p172, %p173
      %p176 = scmp.ne.s32.totalorder %s161, %s175
      %p177 = scmp.eq.s32.totalorder %s25, 0
      %p178 = por %p176, %p177
      %s180 = sadd.s32 %s179, 1
      %p183 = scmp.eq.s32.totalorder %s19, 1
      %p184 = scmp.ne.s32.totalorder %s179, %s181
      %p185 = scmp.eq.s32.totalorder %s19, 0
      %p186 = por %p184, %p185
      %p187 = scmp.ne.s32.totalorder %s179, %s181
      %p188 = scmp.eq.s32.totalorder %s24, 1
      %p189 = por %p187, %p188
      %p190 = scmp.ne.s32.totalorder %s181, %s182
      %p191 = scmp.eq.s32.totalorder %s24, 0
      %p192 = por %p190, %p191
      %p193 = scmp.ne.s32.totalorder %s181, %s182
      %p194 = scmp.eq.s32.totalorder %s25, 1
      %p195 = por %p193, %p194
      %p197 = scmp.ne.s32.totalorder %s182, %s196
      %p198 = scmp.eq.s32.totalorder %s25, 0
      %p199 = por %p197, %p198
      %s201 = sadd.s32 %s200, 1
      %p204 = scmp.eq.s32.totalorder %s19, 1
      %p205 = scmp.ne.s32.totalorder %s200, %s202
      %p206 = scmp.eq.s32.totalorder %s19, 0
      %p207 = por %p205, %p206
      %p208 = scmp.ne.s32.totalorder %s200, %s202
      %p209 = scmp.eq.s32.totalorder %s24, 1
      %p210 = por %p208, %p209
      %p211 = scmp.ne.s32.totalorder %s202, %s203
      %p212 = scmp.eq.s32.totalorder %s24, 0
      %p213 = por %p211, %p212
      %p214 = scmp.ne.s32.totalorder %s202, %s203
      %p215 = scmp.eq.s32.totalorder %s25, 1
      %p216 = por %p214, %p215
      %p218 = scmp.ne.s32.totalorder %s203, %s217
      %p219 = scmp.eq.s32.totalorder %s25, 0
      %p220 = por %p218, %p219
      %s222 = sadd.s32 %s221, 1
      %p225 = scmp.eq.s32.totalorder %s19, 1
      %p226 = scmp.ne.s32.totalorder %s221, %s223
      %p227 = scmp.eq.s32.totalorder %s19, 0
      %p228 = por %p226, %p227
      %p229 = scmp.ne.s32.totalorder %s221, %s223
      %p230 = scmp.eq.s32.totalorder %s24, 1
      %p231 = por %p229, %p230
      %p232 = scmp.ne.s32.totalorder %s223, %s224
      %p233 = scmp.eq.s32.totalorder %s24, 0
      %p234 = por %p232, %p233
      %p235 = scmp.ne.s32.totalorder %s223, %s224
      %p236 = scmp.eq.s32.totalorder %s25, 1
      %p237 = por %p235, %p236
      %p239 = scmp.ne.s32.totalorder %s224, %s238
      %p240 = scmp.eq.s32.totalorder %s25, 0
      %p241 = por %p239, %p240
      %s242 = ssub.s32 %s19, %s26
      %p243 = scmp.eq.s32.totalorder %s242, 0
      %s245 = sadd.s32 %s244, 1
      %s246 = scalar_select %p243, %s244, %s245
      %p249 = pneg %p243
      %p250 = scmp.eq.s32.totalorder %s19, 1
      %p251 = por %p249, %p250
      %p252 = scmp.ne.s32.totalorder %s244, %s247
      %p253 = scmp.eq.s32.totalorder %s19, 0
      %p254 = por %p252, %p253
      %p255 = scmp.ne.s32.totalorder %s244, %s247
      %p256 = scmp.eq.s32.totalorder %s24, 1
      %p257 = por %p255, %p256
      %p258 = scmp.ne.s32.totalorder %s247, %s248
      %p259 = scmp.eq.s32.totalorder %s24, 0
      %p260 = por %p258, %p259
      %p261 = scmp.ne.s32.totalorder %s247, %s248
      %p262 = scmp.eq.s32.totalorder %s25, 1
      %p263 = por %p261, %p262
      %p265 = scmp.ne.s32.totalorder %s248, %s264
      %p266 = scmp.eq.s32.totalorder %s25, 0
      %p267 = por %p265, %p266
      %p268 = scmp.le.s32.totalorder 1, %s19
      %p269 = scmp.lt.s32.totalorder %s19, 3
      %p270 = pnand %p268, %p269
      %p271 = pneg %p270
      // Predicated region
      $region9: #{tpu_custom_call.1} parent=5 // pred_check
        _
      $region10: #{tpu_custom_call.1} parent=5 // pred_check_branch
        %273 = sbr.rel (%p270) target = $region12
      $region11: #{tpu_custom_call.1} parent=5 // pred_region
        %s274 = ssub.s32 %s19, 1
        // Predicated region
        $region13: #{tpu_custom_call.1} parent=11 // pred_check
          %p275 = pneg %p66
        $region14: #{tpu_custom_call.1} parent=11 // pred_check_branch
          %277 = sbr.rel (%p275) target = $region16
        $region15: #{tpu_custom_call.1} parent=11 // pred_region
          _
        $region16: #{tpu_custom_call.1} parent=11 // pred_fallthru
          _
        // Predicated region
        $region17: #{tpu_custom_call.1} parent=11 // pred_check
          %p278 = pneg %p87
        $region18: #{tpu_custom_call.1} parent=11 // pred_check_branch
          %280 = sbr.rel (%p278) target = $region20
        $region19: #{tpu_custom_call.1} parent=11 // pred_region
          _
        $region20: #{tpu_custom_call.1} parent=11 // pred_fallthru
          _
        // Predicated region
        $region21: #{tpu_custom_call.1} parent=11 // pred_check
          %p281 = pneg %p108
        $region22: #{tpu_custom_call.1} parent=11 // pred_check_branch
          %283 = sbr.rel (%p281) target = $region24
        $region23: #{tpu_custom_call.1} parent=11 // pred_region
          _
        $region24: #{tpu_custom_call.1} parent=11 // pred_fallthru
          _
        // Predicated region
        $region25: #{tpu_custom_call.1} parent=11 // pred_check
          %p284 = pneg %p129
        $region26: #{tpu_custom_call.1} parent=11 // pred_check_branch
          %286 = sbr.rel (%p284) target = $region28
        $region27: #{tpu_custom_call.1} parent=11 // pred_region
          _
        $region28: #{tpu_custom_call.1} parent=11 // pred_fallthru
          _
        // Predicated region
        $region29: #{tpu_custom_call.1} parent=11 // pred_check
          %p287 = pneg %p150
        $region30: #{tpu_custom_call.1} parent=11 // pred_check_branch
          %289 = sbr.rel (%p287) target = $region32
        $region31: #{tpu_custom_call.1} parent=11 // pred_region
          _
        $region32: #{tpu_custom_call.1} parent=11 // pred_fallthru
          _
        // Predicated region
        $region33: #{tpu_custom_call.1} parent=11 // pred_check
          %p290 = pneg %p171
        $region34: #{tpu_custom_call.1} parent=11 // pred_check_branch
          %292 = sbr.rel (%p290) target = $region36
        $region35: #{tpu_custom_call.1} parent=11 // pred_region
          _
        $region36: #{tpu_custom_call.1} parent=11 // pred_fallthru
          _
        // Predicated region
        $region37: #{tpu_custom_call.1} parent=11 // pred_check
          %p293 = pneg %p192
        $region38: #{tpu_custom_call.1} parent=11 // pred_check_branch
          %295 = sbr.rel (%p293) target = $region40
        $region39: #{tpu_custom_call.1} parent=11 // pred_region
          _
        $region40: #{tpu_custom_call.1} parent=11 // pred_fallthru
          _
        // Predicated region
        $region41: #{tpu_custom_call.1} parent=11 // pred_check
          %p296 = pneg %p213
        $region42: #{tpu_custom_call.1} parent=11 // pred_check_branch
          %298 = sbr.rel (%p296) target = $region44
        $region43: #{tpu_custom_call.1} parent=11 // pred_region
          _
        $region44: #{tpu_custom_call.1} parent=11 // pred_fallthru
          _
        // Predicated region
        $region45: #{tpu_custom_call.1} parent=11 // pred_check
          %p299 = pneg %p234
        $region46: #{tpu_custom_call.1} parent=11 // pred_check_branch
          %301 = sbr.rel (%p299) target = $region48
        $region47: #{tpu_custom_call.1} parent=11 // pred_region
          _
        $region48: #{tpu_custom_call.1} parent=11 // pred_fallthru
          _
      $region12: #{tpu_custom_call.1} parent=5 // pred_fallthru
        _
      %p302 = scmp.lt.s32.totalorder %s19, 2
      // Predicated region
      $region49: #{tpu_custom_call.1} parent=5 // pred_check
        %p303 = pneg %p302
      $region50: #{tpu_custom_call.1} parent=5 // pred_check_branch
        %305 = sbr.rel (%p303) target = $region52
      $region51: #{tpu_custom_call.1} parent=5 // pred_region
        // Predicated region
        $region53: #{tpu_custom_call.1} parent=51 // pred_check
          %p306 = pneg %p39
        $region54: #{tpu_custom_call.1} parent=51 // pred_check_branch
          %308 = sbr.rel (%p306) target = $region56
        $region55: #{tpu_custom_call.1} parent=51 // pred_region
          %s309 = smul.u32 42, %s19
          %p310 = scmp.lt.s32.totalorder %s309, 83
          %s311 = scalar_select %p310, %s309, 83
          %s312 = smul.addr %s311, 4
          %s313 = scalar_lea.vmem %s0, %s312
          %s314 = smul.u32 42, %s19
        $region56: #{tpu_custom_call.1} parent=51 // pred_fallthru
          _
      $region52: #{tpu_custom_call.1} parent=5 // pred_fallthru
        _
      %p315 = scmp.le.s32.totalorder 1, %s19
      %p316 = scmp.lt.s32.totalorder %s19, 3
      %p317 = pnand %p315, %p316
      %p318 = pneg %p317
      // Predicated region
      $region57: #{tpu_custom_call.1} parent=5 // pred_check
        _
      $region58: #{tpu_custom_call.1} parent=5 // pred_check_branch
        %320 = sbr.rel (%p317) target = $region60
      $region59: #{tpu_custom_call.1} parent=5 // pred_region
        %s321 = ssub.s32 %s19, 1
        %s322 = smul.u32 42, %s24
        %p323 = scmp.lt.s32.totalorder %s322, 83
        %s324 = scalar_select %p323, %s322, 83
        %s325 = smul.addr %s324, 4
        %s326 = scalar_lea.vmem %s0, %s325
        %p327 = pneg %p45
        %p328 = pneg %p42
        %p329 = pneg %p66
        %p330 = pneg %p63
        %p331 = pneg %p87
        %p332 = pneg %p84
        %p333 = pneg %p108
        %p334 = pneg %p105
        %p335 = pneg %p129
        %p336 = pneg %p126
        %p337 = pneg %p150
        %p338 = pneg %p147
        %p339 = pneg %p171
        %p340 = pneg %p168
        %p341 = pneg %p192
        %p342 = pneg %p189
        %p343 = pneg %p213
        %p344 = pneg %p210
        %p345 = pneg %p234
        %p346 = pneg %p231
        %p347 = pneg %p260
        %p348 = pneg %p257
        %s349 = sand.u32 %s247, 1
        %s350 = scalar_lea.sflag [#allocation5], %s349
        %s351 = sand.u32 %s247, 1
        %s352 = smul.addr %s351, 336
        %s353 = scalar_lea.vmem [#allocation4], %s352
        %s354 = smul.u32 42, %s24
        %p355 = scmp.lt.s32.totalorder %s354, 83
        %s356 = scalar_select %p355, %s354, 83
        %s357 = smul.addr %s356, 4
        %s358 = scalar_lea.vmem %s0, %s357
        %s359 = smul.u32 42, %s24
        %s360 = smul.u32 42, %s24
        %362 = vst [vmem:[#allocation2] sm:$0xf] 0
        %363 = vst [vmem:[#allocation2 + $0x4] sm:$0xf] 0
        %364 = vst [vmem:[#allocation2 + $0x8] sm:$0xf] 0
        %365 = vst [vmem:[#allocation2 + $0xc] sm:$0xf] 0
        %366 = vst [vmem:[#allocation2 + $0x10] sm:$0xf] 0
        %367 = vst [vmem:[#allocation2 + $0x14] sm:$0xf] 0
        %368 = vst [vmem:[#allocation2 + $0x18] sm:$0xf] 0
        %369 = vst [vmem:[#allocation2 + $0x1c] sm:$0xf] 0
        %370 = vst [vmem:[#allocation2 + $0x20] sm:$0xf] 0
        %371 = vst [vmem:[#allocation2 + $0x24] sm:$0xf] 0
        %372 = vst [vmem:[#allocation2 + $0x28] sm:$0xf] 0
        %373 = vst [vmem:[#allocation2 + $0x2c] sm:$0xf] 0
        %374 = vst [vmem:[#allocation2 + $0x30] sm:$0xf] 0
        %375 = vst [vmem:[#allocation2 + $0x34] sm:$0xf] 0
        %376 = vst [vmem:[#allocation2 + $0x38] sm:$0xf] 0
        %377 = vst [vmem:[#allocation2 + $0x3c] sm:$0xf] 0
        %378 = vst [vmem:[#allocation2 + $0x40] sm:$0xf] 0
        %379 = vst [vmem:[#allocation2 + $0x44] sm:$0xf] 0
        %380 = vst [vmem:[#allocation2 + $0x48] sm:$0xf] 0
        %381 = vst [vmem:[#allocation2 + $0x4c] sm:$0xf] 0
        %382 = vst [vmem:[#allocation2 + $0x50] sm:$0xf] 0
        %383 = vst [vmem:[#allocation2 + $0x54] sm:$0xf] 0
        %384 = vst [vmem:[#allocation2 + $0x58] sm:$0xf] 0
        %385 = vst [vmem:[#allocation2 + $0x5c] sm:$0xf] 0
        %386 = vst [vmem:[#allocation2 + $0x60] sm:$0xf] 0
        %387 = vst [vmem:[#allocation2 + $0x64] sm:$0xf] 0
        %388 = vst [vmem:[#allocation2 + $0x68] sm:$0xf] 0
        %389 = vst [vmem:[#allocation2 + $0x6c] sm:$0xf] 0
        %390 = vst [vmem:[#allocation2 + $0x70] sm:$0xf] 0
        %391 = vst [vmem:[#allocation2 + $0x74] sm:$0xf] 0
        %392 = vst [vmem:[#allocation2 + $0x78] sm:$0xf] 0
        %393 = vst [vmem:[#allocation2 + $0x7c] sm:$0xf] 0
        %394 = vst [vmem:[#allocation2 + $0x80] sm:$0xf] 0
        %395 = vst [vmem:[#allocation2 + $0x84] sm:$0xf] 0
        %396 = vst [vmem:[#allocation2 + $0x88] sm:$0xf] 0
        %397 = vst [vmem:[#allocation2 + $0x8c] sm:$0xf] 0
        %398 = vst [vmem:[#allocation2 + $0x90] sm:$0xf] 0
        %399 = vst [vmem:[#allocation2 + $0x94] sm:$0xf] 0
        %400 = vst [vmem:[#allocation2 + $0x98] sm:$0xf] 0
        %401 = vst [vmem:[#allocation2 + $0x9c] sm:$0xf] 0
        %402 = vst [vmem:[#allocation2 + $0xa0] sm:$0xf] 0
        %403 = vst [vmem:[#allocation2 + $0xa4] sm:$0xf] 0
        %404 = vst [vmem:[#allocation2 + $0xa8] sm:$0xf] 0
        %405 = vst [vmem:[#allocation2 + $0xac] sm:$0xf] 0
        %406 = vst [vmem:[#allocation2 + $0xb0] sm:$0xf] 0
        %407 = vst [vmem:[#allocation2 + $0xb4] sm:$0xf] 0
        %408 = vst [vmem:[#allocation2 + $0xb8] sm:$0xf] 0
        %409 = vst [vmem:[#allocation2 + $0xbc] sm:$0xf] 0
        %410 = vst [vmem:[#allocation2 + $0xc0] sm:$0xf] 0
        %411 = vst [vmem:[#allocation2 + $0xc4] sm:$0xf] 0
        %412 = vst [vmem:[#allocation2 + $0xc8] sm:$0xf] 0
        %413 = vst [vmem:[#allocation2 + $0xcc] sm:$0xf] 0
        %414 = vst [vmem:[#allocation2 + $0xd0] sm:$0xf] 0
        %415 = vst [vmem:[#allocation2 + $0xd4] sm:$0xf] 0
        %416 = vst [vmem:[#allocation2 + $0xd8] sm:$0xf] 0
        %417 = vst [vmem:[#allocation2 + $0xdc] sm:$0xf] 0
        %418 = vst [vmem:[#allocation2 + $0xe0] sm:$0xf] 0
        %419 = vst [vmem:[#allocation2 + $0xe4] sm:$0xf] 0
        %v420 = vld [vmem:[%s358] sm:$0xf]
        %v421 = vld [vmem:[%s358 + $0x4] sm:$0xf]
        %v422 = vld [vmem:[%s358 + $0x8] sm:$0xf]
        %v423 = vld [vmem:[%s358 + $0xc] sm:$0xf]
        %v424 = vld [vmem:[%s358 + $0x10] sm:$0xf]
        %v425 = vld [vmem:[%s358 + $0x14] sm:$0xf]
        %v426 = vld [vmem:[%s358 + $0x18] sm:$0xf]
        %v427 = vld [vmem:[%s358 + $0x1c] sm:$0xf]
        %v428 = vld [vmem:[%s358 + $0x20] sm:$0xf]
        %v429 = vld [vmem:[%s358 + $0x24] sm:$0xf]
        %v430 = vld [vmem:[%s358 + $0x28] sm:$0xf]
        %v431 = vld [vmem:[%s358 + $0x2c] sm:$0xf]
        %v432 = vld [vmem:[%s358 + $0x30] sm:$0xf]
        %v433 = vld [vmem:[%s358 + $0x34] sm:$0xf]
        %v434 = vld [vmem:[%s358 + $0x38] sm:$0xf]
        %v435 = vld [vmem:[%s358 + $0x3c] sm:$0xf]
        %v436 = vld [vmem:[%s358 + $0x40] sm:$0xf]
        %v437 = vld [vmem:[%s358 + $0x44] sm:$0xf]
        %v438 = vld [vmem:[%s358 + $0x48] sm:$0xf]
        %v439 = vld [vmem:[%s358 + $0x4c] sm:$0xf]
        %v440 = vld [vmem:[%s358 + $0x50] sm:$0xf]
        %v441 = vld [vmem:[%s358 + $0x54] sm:$0xf]
        %v442 = vld [vmem:[%s358 + $0x58] sm:$0xf]
        %v443 = vld [vmem:[%s358 + $0x5c] sm:$0xf]
        %v444 = vld [vmem:[%s358 + $0x60] sm:$0xf]
        %v445 = vld [vmem:[%s358 + $0x64] sm:$0xf]
        %v446 = vld [vmem:[%s358 + $0x68] sm:$0xf]
        %v447 = vld [vmem:[%s358 + $0x6c] sm:$0xf]
        %v448 = vld [vmem:[%s358 + $0x70] sm:$0xf]
        %v449 = vld [vmem:[%s358 + $0x74] sm:$0xf]
        %v450 = vld [vmem:[%s358 + $0x78] sm:$0xf]
        %v451 = vld [vmem:[%s358 + $0x7c] sm:$0xf]
        %v452 = vld [vmem:[%s358 + $0x80] sm:$0xf]
        %v453 = vld [vmem:[%s358 + $0x84] sm:$0xf]
        %v454 = vld [vmem:[%s358 + $0x88] sm:$0xf]
        %v455 = vld [vmem:[%s358 + $0x8c] sm:$0xf]
        %v456 = vld [vmem:[%s358 + $0x90] sm:$0xf]
        %v457 = vld [vmem:[%s358 + $0x94] sm:$0xf]
        %v458 = vld [vmem:[%s358 + $0x98] sm:$0xf]
        %v459 = vld [vmem:[%s358 + $0x9c] sm:$0xf]
        %v460 = vld [vmem:[%s358 + $0xa0] sm:$0xf]
        %v461 = vld [vmem:[%s358 + $0xa4] sm:$0xf]
        %vm462 = vcmask 125952
        %463 = vst.msk [vmem:[#allocation2 + $0x8] sm:$0xf] %vm462, %v420
        %464 = vst.msk [vmem:[#allocation2 + $0xc] sm:$0xf] %vm462, %v421
        %465 = vst.msk [vmem:[#allocation2 + $0x10] sm:$0xf] %vm462, %v422
        %466 = vst.msk [vmem:[#allocation2 + $0x14] sm:$0xf] %vm462, %v423
        %467 = vst.msk [vmem:[#allocation2 + $0x18] sm:$0xf] %vm462, %v424
        %468 = vst.msk [vmem:[#allocation2 + $0x1c] sm:$0xf] %vm462, %v425
        %469 = vst.msk [vmem:[#allocation2 + $0x20] sm:$0xf] %vm462, %v426
        %470 = vst.msk [vmem:[#allocation2 + $0x24] sm:$0xf] %vm462, %v427
        %471 = vst.msk [vmem:[#allocation2 + $0x28] sm:$0xf] %vm462, %v428
        %472 = vst.msk [vmem:[#allocation2 + $0x2c] sm:$0xf] %vm462, %v429
        %473 = vst.msk [vmem:[#allocation2 + $0x30] sm:$0xf] %vm462, %v430
        %474 = vst.msk [vmem:[#allocation2 + $0x34] sm:$0xf] %vm462, %v431
        %475 = vst.msk [vmem:[#allocation2 + $0x38] sm:$0xf] %vm462, %v432
        %476 = vst.msk [vmem:[#allocation2 + $0x3c] sm:$0xf] %vm462, %v433
        %477 = vst.msk [vmem:[#allocation2 + $0x40] sm:$0xf] %vm462, %v434
        %478 = vst.msk [vmem:[#allocation2 + $0x44] sm:$0xf] %vm462, %v435
        %479 = vst.msk [vmem:[#allocation2 + $0x48] sm:$0xf] %vm462, %v436
        %480 = vst.msk [vmem:[#allocation2 + $0x4c] sm:$0xf] %vm462, %v437
        %481 = vst.msk [vmem:[#allocation2 + $0x50] sm:$0xf] %vm462, %v438
        %482 = vst.msk [vmem:[#allocation2 + $0x54] sm:$0xf] %vm462, %v439
        %483 = vst.msk [vmem:[#allocation2 + $0x58] sm:$0xf] %vm462, %v440
        %484 = vst.msk [vmem:[#allocation2 + $0x5c] sm:$0xf] %vm462, %v441
        %485 = vst.msk [vmem:[#allocation2 + $0x60] sm:$0xf] %vm462, %v442
        %486 = vst.msk [vmem:[#allocation2 + $0x64] sm:$0xf] %vm462, %v443
        %487 = vst.msk [vmem:[#allocation2 + $0x68] sm:$0xf] %vm462, %v444
        %488 = vst.msk [vmem:[#allocation2 + $0x6c] sm:$0xf] %vm462, %v445
        %489 = vst.msk [vmem:[#allocation2 + $0x70] sm:$0xf] %vm462, %v446
        %490 = vst.msk [vmem:[#allocation2 + $0x74] sm:$0xf] %vm462, %v447
        %491 = vst.msk [vmem:[#allocation2 + $0x78] sm:$0xf] %vm462, %v448
        %492 = vst.msk [vmem:[#allocation2 + $0x7c] sm:$0xf] %vm462, %v449
        %493 = vst.msk [vmem:[#allocation2 + $0x80] sm:$0xf] %vm462, %v450
        %494 = vst.msk [vmem:[#allocation2 + $0x84] sm:$0xf] %vm462, %v451
        %495 = vst.msk [vmem:[#allocation2 + $0x88] sm:$0xf] %vm462, %v452
        %496 = vst.msk [vmem:[#allocation2 + $0x8c] sm:$0xf] %vm462, %v453
        %497 = vst.msk [vmem:[#allocation2 + $0x90] sm:$0xf] %vm462, %v454
        %498 = vst.msk [vmem:[#allocation2 + $0x94] sm:$0xf] %vm462, %v455
        %499 = vst.msk [vmem:[#allocation2 + $0x98] sm:$0xf] %vm462, %v456
        %500 = vst.msk [vmem:[#allocation2 + $0x9c] sm:$0xf] %vm462, %v457
        %501 = vst.msk [vmem:[#allocation2 + $0xa0] sm:$0xf] %vm462, %v458
        %502 = vst.msk [vmem:[#allocation2 + $0xa4] sm:$0xf] %vm462, %v459
        %503 = vst.msk [vmem:[#allocation2 + $0xa8] sm:$0xf] %vm462, %v460
        %504 = vst.msk [vmem:[#allocation2 + $0xac] sm:$0xf] %vm462, %v461
        %505 = vst [vmem:[#allocation3] sm:$0xf] 0
        %506 = vst [vmem:[#allocation3 + $0x4] sm:$0xf] 0
        %507 = vst [vmem:[#allocation3 + $0x8] sm:$0xf] 0
        %508 = vst [vmem:[#allocation3 + $0xc] sm:$0xf] 0
        %509 = vst [vmem:[#allocation3 + $0x10] sm:$0xf] 0
        %510 = vst [vmem:[#allocation3 + $0x14] sm:$0xf] 0
        %511 = vst [vmem:[#allocation3 + $0x18] sm:$0xf] 0
        %512 = vst [vmem:[#allocation3 + $0x1c] sm:$0xf] 0
        %513 = vst [vmem:[#allocation3 + $0x20] sm:$0xf] 0
        %514 = vst [vmem:[#allocation3 + $0x24] sm:$0xf] 0
        %515 = vst [vmem:[#allocation3 + $0x28] sm:$0xf] 0
        %516 = vst [vmem:[#allocation3 + $0x2c] sm:$0xf] 0
        %517 = vst [vmem:[#allocation3 + $0x30] sm:$0xf] 0
        %518 = vst [vmem:[#allocation3 + $0x34] sm:$0xf] 0
        %519 = vst [vmem:[#allocation3 + $0x38] sm:$0xf] 0
        %520 = vst [vmem:[#allocation3 + $0x3c] sm:$0xf] 0
        %521 = vst [vmem:[#allocation3 + $0x40] sm:$0xf] 0
        %522 = vst [vmem:[#allocation3 + $0x44] sm:$0xf] 0
        %523 = vst [vmem:[#allocation3 + $0x48] sm:$0xf] 0
        %524 = vst [vmem:[#allocation3 + $0x4c] sm:$0xf] 0
        %525 = vst [vmem:[#allocation3 + $0x50] sm:$0xf] 0
        %526 = vst [vmem:[#allocation3 + $0x54] sm:$0xf] 0
        %527 = vst [vmem:[#allocation3 + $0x58] sm:$0xf] 0
        %528 = vst [vmem:[#allocation3 + $0x5c] sm:$0xf] 0
        %529 = vst [vmem:[#allocation3 + $0x60] sm:$0xf] 0
        %530 = vst [vmem:[#allocation3 + $0x64] sm:$0xf] 0
        %531 = vst [vmem:[#allocation3 + $0x68] sm:$0xf] 0
        %532 = vst [vmem:[#allocation3 + $0x6c] sm:$0xf] 0
        %533 = vst [vmem:[#allocation3 + $0x70] sm:$0xf] 0
        %534 = vst [vmem:[#allocation3 + $0x74] sm:$0xf] 0
        %535 = vst [vmem:[#allocation3 + $0x78] sm:$0xf] 0
        %536 = vst [vmem:[#allocation3 + $0x7c] sm:$0xf] 0
        %537 = vst [vmem:[#allocation3 + $0x80] sm:$0xf] 0
        %538 = vst [vmem:[#allocation3 + $0x84] sm:$0xf] 0
        %539 = vst [vmem:[#allocation3 + $0x88] sm:$0xf] 0
        %540 = vst [vmem:[#allocation3 + $0x8c] sm:$0xf] 0
        %541 = vst [vmem:[#allocation3 + $0x90] sm:$0xf] 0
        %542 = vst [vmem:[#allocation3 + $0x94] sm:$0xf] 0
        %543 = vst [vmem:[#allocation3 + $0x98] sm:$0xf] 0
        %544 = vst [vmem:[#allocation3 + $0x9c] sm:$0xf] 0
        %545 = vst [vmem:[#allocation3 + $0xa0] sm:$0xf] 0
        %546 = vst [vmem:[#allocation3 + $0xa4] sm:$0xf] 0
        %547 = vst [vmem:[#allocation3 + $0xa8] sm:$0xf] 0
        %548 = vst [vmem:[#allocation3 + $0xac] sm:$0xf] 0
        %549 = vst [vmem:[#allocation3 + $0xb0] sm:$0xf] 0
        %550 = vst [vmem:[#allocation3 + $0xb4] sm:$0xf] 0
        %551 = vst [vmem:[#allocation3 + $0xb8] sm:$0xf] 0
        %552 = vst [vmem:[#allocation3 + $0xbc] sm:$0xf] 0
        %553 = vst [vmem:[#allocation3 + $0xc0] sm:$0xf] 0
        %554 = vst [vmem:[#allocation3 + $0xc4] sm:$0xf] 0
        %555 = vst [vmem:[#allocation3 + $0xc8] sm:$0xf] 0
        %556 = vst [vmem:[#allocation3 + $0xcc] sm:$0xf] 0
        %557 = vst [vmem:[#allocation3 + $0xd0] sm:$0xf] 0
        %558 = vst [vmem:[#allocation3 + $0xd4] sm:$0xf] 0
        %559 = vst [vmem:[#allocation3 + $0xd8] sm:$0xf] 0
        %560 = vst [vmem:[#allocation3 + $0xdc] sm:$0xf] 0
        %561 = vst [vmem:[#allocation3 + $0xe0] sm:$0xf] 0
        %562 = vst [vmem:[#allocation3 + $0xe4] sm:$0xf] 0
        %563 = vst [vmem:[#allocation3 + $0xe8] sm:$0xf] 0
        %564 = vst [vmem:[#allocation3 + $0xec] sm:$0xf] 0
        %565 = vst [vmem:[#allocation3 + $0xf0] sm:$0xf] 0
        %566 = vst [vmem:[#allocation3 + $0xf4] sm:$0xf] 0
        %567 = vst [vmem:[#allocation3 + $0xf8] sm:$0xf] 0
        %568 = vst [vmem:[#allocation3 + $0xfc] sm:$0xf] 0
        %569 = vst [vmem:[#allocation3 + $0x100] sm:$0xf] 0
        %570 = vst [vmem:[#allocation3 + $0x104] sm:$0xf] 0
        %571 = vst [vmem:[#allocation3 + $0x108] sm:$0xf] 0
        %572 = vst [vmem:[#allocation3 + $0x10c] sm:$0xf] 0
        %573 = vst [vmem:[#allocation3 + $0x110] sm:$0xf] 0
        %574 = vst [vmem:[#allocation3 + $0x114] sm:$0xf] 0
        %575 = vst [vmem:[#allocation3 + $0x118] sm:$0xf] 0
        %576 = vst [vmem:[#allocation3 + $0x11c] sm:$0xf] 0
        %577 = vst [vmem:[#allocation3 + $0x120] sm:$0xf] 0
        %578 = vst [vmem:[#allocation3 + $0x124] sm:$0xf] 0
        %579 = vst [vmem:[#allocation3 + $0x128] sm:$0xf] 0
        %580 = vst [vmem:[#allocation3 + $0x12c] sm:$0xf] 0
        %581 = vst [vmem:[#allocation3 + $0x130] sm:$0xf] 0
        %582 = vst [vmem:[#allocation3 + $0x134] sm:$0xf] 0
        %583 = vst [vmem:[#allocation3 + $0x138] sm:$0xf] 0
        %584 = vst [vmem:[#allocation3 + $0x13c] sm:$0xf] 0
        %585 = vst [vmem:[#allocation3 + $0x140] sm:$0xf] 0
        %586 = vst [vmem:[#allocation3 + $0x144] sm:$0xf] 0
        %587 = vst [vmem:[#allocation3 + $0x148] sm:$0xf] 0
        %588 = vst [vmem:[#allocation3 + $0x14c] sm:$0xf] 0
        %589 = vst [vmem:[#allocation3 + $0x150] sm:$0xf] 0
        %590 = vst [vmem:[#allocation3 + $0x154] sm:$0xf] 0
        %591 = vst [vmem:[#allocation3 + $0x158] sm:$0xf] 0
        %592 = vst [vmem:[#allocation3 + $0x15c] sm:$0xf] 0
        %593 = vst [vmem:[#allocation3 + $0x160] sm:$0xf] 0
        %594 = vst [vmem:[#allocation3 + $0x164] sm:$0xf] 0
        %595 = vst [vmem:[#allocation3 + $0x168] sm:$0xf] 0
        %596 = vst [vmem:[#allocation3 + $0x16c] sm:$0xf] 0
        %597 = vst [vmem:[#allocation3 + $0x170] sm:$0xf] 0
        %598 = vst [vmem:[#allocation3 + $0x174] sm:$0xf] 0
        %599 = vst [vmem:[#allocation3 + $0x178] sm:$0xf] 0
        %600 = vst [vmem:[#allocation3 + $0x17c] sm:$0xf] 0
        %601 = vst [vmem:[#allocation3 + $0x180] sm:$0xf] 0
        %602 = vst [vmem:[#allocation3 + $0x184] sm:$0xf] 0
        %603 = vst [vmem:[#allocation3 + $0x188] sm:$0xf] 0
        %604 = vst [vmem:[#allocation3 + $0x18c] sm:$0xf] 0
        %605 = vst [vmem:[#allocation3 + $0x190] sm:$0xf] 0
        %606 = vst [vmem:[#allocation3 + $0x194] sm:$0xf] 0
        %607 = vst [vmem:[#allocation3 + $0x198] sm:$0xf] 0
        %608 = vst [vmem:[#allocation3 + $0x19c] sm:$0xf] 0
        %609 = vst [vmem:[#allocation3 + $0x1a0] sm:$0xf] 0
        %610 = vst [vmem:[#allocation3 + $0x1a4] sm:$0xf] 0
        %611 = vst [vmem:[#allocation3 + $0x1a8] sm:$0xf] 0
        %612 = vst [vmem:[#allocation3 + $0x1ac] sm:$0xf] 0
        %613 = vst [vmem:[#allocation3 + $0x1b0] sm:$0xf] 0
        %614 = vst [vmem:[#allocation3 + $0x1b4] sm:$0xf] 0
        %615 = vst [vmem:[#allocation3 + $0x1b8] sm:$0xf] 0
        %616 = vst [vmem:[#allocation3 + $0x1bc] sm:$0xf] 0
        %617 = vst [vmem:[#allocation3 + $0x1c0] sm:$0xf] 0
        %618 = vst [vmem:[#allocation3 + $0x1c4] sm:$0xf] 0
        %619 = vst [vmem:[#allocation3 + $0x1c8] sm:$0xf] 0
        %620 = vst [vmem:[#allocation3 + $0x1cc] sm:$0xf] 0
        %621 = vst [vmem:[#allocation3 + $0x1d0] sm:$0xf] 0
        %622 = vst [vmem:[#allocation3 + $0x1d4] sm:$0xf] 0
        %623 = vst [vmem:[#allocation3 + $0x1d8] sm:$0xf] 0
        %624 = vst [vmem:[#allocation3 + $0x1dc] sm:$0xf] 0
        %625 = vst [vmem:[#allocation3 + $0x1e0] sm:$0xf] 0
        %626 = vst [vmem:[#allocation3 + $0x1e4] sm:$0xf] 0
        %627 = vst [vmem:[#allocation3 + $0x1e8] sm:$0xf] 0
        %628 = vst [vmem:[#allocation3 + $0x1ec] sm:$0xf] 0
        %629 = vst [vmem:[#allocation3 + $0x1f0] sm:$0xf] 0
        %630 = vst [vmem:[#allocation3 + $0x1f4] sm:$0xf] 0
        %631 = vst [vmem:[#allocation3 + $0x1f8] sm:$0xf] 0
        %632 = vst [vmem:[#allocation3 + $0x1fc] sm:$0xf] 0
        %633 = vst [vmem:[#allocation3 + $0x200] sm:$0xf] 0
        %634 = vst [vmem:[#allocation3 + $0x204] sm:$0xf] 0
        %635 = vst [vmem:[#allocation3 + $0x208] sm:$0xf] 0
        %636 = vst [vmem:[#allocation3 + $0x20c] sm:$0xf] 0
        %637 = vst [vmem:[#allocation3 + $0x210] sm:$0xf] 0
        %638 = vst [vmem:[#allocation3 + $0x214] sm:$0xf] 0
        %639 = vst [vmem:[#allocation3 + $0x218] sm:$0xf] 0
        %640 = vst [vmem:[#allocation3 + $0x21c] sm:$0xf] 0
        %641 = vst [vmem:[#allocation3 + $0x220] sm:$0xf] 0
        %642 = vst [vmem:[#allocation3 + $0x224] sm:$0xf] 0
        %643 = vst [vmem:[#allocation3 + $0x228] sm:$0xf] 0
        %644 = vst [vmem:[#allocation3 + $0x22c] sm:$0xf] 0
        %645 = vst [vmem:[#allocation3 + $0x230] sm:$0xf] 0
        %646 = vst [vmem:[#allocation3 + $0x234] sm:$0xf] 0
        %647 = vst [vmem:[#allocation3 + $0x238] sm:$0xf] 0
        %648 = vst [vmem:[#allocation3 + $0x23c] sm:$0xf] 0
        %v649 = vld [vmem:[%s1] sm:$0xff]
        %v650 = vld [vmem:[%s1 + $0x8] sm:$0xff]
        %v651 = vld [vmem:[%s1 + $0x10] sm:$0xff]
        %v652 = vld [vmem:[%s1 + $0x18] sm:$0xff]
        %v653 = vld [vmem:[%s1 + $0x20] sm:$0xff]
        %v654 = vld [vmem:[%s1 + $0x28] sm:$0xff]
        %v655 = vld [vmem:[%s1 + $0x30] sm:$0xff]
        %v656 = vld [vmem:[%s1 + $0x38] sm:$0xff]
        %v657 = vld [vmem:[%s1 + $0x40] sm:$0xff]
        %v658 = vld [vmem:[%s1 + $0x48] sm:$0xff]
        %v659 = vld [vmem:[%s1 + $0x50] sm:$0xff]
        %v660 = vld [vmem:[%s1 + $0x58] sm:$0xff]
        %v661 = vld [vmem:[%s1 + $0x60] sm:$0xff]
        %v662 = vld [vmem:[%s1 + $0x68] sm:$0xff]
        %v663 = vld [vmem:[%s1 + $0x70] sm:$0xff]
        %v664 = vld [vmem:[%s1 + $0x78] sm:$0xff]
        %v665 = vld [vmem:[%s1 + $0x80] sm:$0xff]
        %v666 = vld [vmem:[%s1 + $0x88] sm:$0xff]
        %v667 = vld [vmem:[%s1 + $0x90] sm:$0xff]
        %v668 = vld [vmem:[%s1 + $0x98] sm:$0xff]
        %v669 = vld [vmem:[%s1 + $0xa0] sm:$0xff]
        %v670 = vld [vmem:[%s1 + $0xa8] sm:$0xff]
        %v671 = vld [vmem:[%s1 + $0xb0] sm:$0xff]
        %v672 = vld [vmem:[%s1 + $0xb8] sm:$0xff]
        %v673 = vld [vmem:[%s1 + $0xc0] sm:$0xff]
        %v674 = vld [vmem:[%s1 + $0xc8] sm:$0xff]
        %v675 = vld [vmem:[%s1 + $0xd0] sm:$0xff]
        %v676 = vld [vmem:[%s1 + $0xd8] sm:$0xff]
        %v677 = vld [vmem:[%s1 + $0xe0] sm:$0xff]
        %v678 = vld [vmem:[%s1 + $0xe8] sm:$0xff]
        %v679 = vld [vmem:[%s1 + $0xf0] sm:$0xff]
        %v680 = vld [vmem:[%s1 + $0xf8] sm:$0xff]
        %v681 = vld [vmem:[%s1 + $0x100] sm:$0xff]
        %v682 = vld [vmem:[%s1 + $0x108] sm:$0xff]
        %v683 = vld [vmem:[%s1 + $0x110] sm:$0xff]
        %v684 = vld [vmem:[%s1 + $0x118] sm:$0xff]
        %v685 = vld [vmem:[%s1 + $0x120] sm:$0xff]
        %v686 = vld [vmem:[%s1 + $0x128] sm:$0xff]
        %v687 = vld [vmem:[%s1 + $0x130] sm:$0xff]
        %v688 = vld [vmem:[%s1 + $0x138] sm:$0xff]
        %v689 = vld [vmem:[%s1 + $0x140] sm:$0xff]
        %v690 = vld [vmem:[%s1 + $0x148] sm:$0xff]
        %692 = vset.pattern.permute.xlu0 0
        %693 = vperm.xlu0 %692, %v649
        %v694 = vpop.permute.xlu0 %693
        %697 = vset.pattern.permute.xlu0 0
        %698 = vperm.xlu0 %697, %v650
        %v699 = vpop.permute.xlu0 %698
        %702 = vset.pattern.permute.xlu0 0
        %703 = vperm.xlu0 %702, %v651
        %v704 = vpop.permute.xlu0 %703
        %707 = vset.pattern.permute.xlu0 0
        %708 = vperm.xlu0 %707, %v652
        %v709 = vpop.permute.xlu0 %708
        %712 = vset.pattern.permute.xlu0 0
        %713 = vperm.xlu0 %712, %v653
        %v714 = vpop.permute.xlu0 %713
        %717 = vset.pattern.permute.xlu0 0
        %718 = vperm.xlu0 %717, %v654
        %v719 = vpop.permute.xlu0 %718
        %722 = vset.pattern.permute.xlu0 0
        %723 = vperm.xlu0 %722, %v655
        %v724 = vpop.permute.xlu0 %723
        %727 = vset.pattern.permute.xlu0 0
        %728 = vperm.xlu0 %727, %v656
        %v729 = vpop.permute.xlu0 %728
        %732 = vset.pattern.permute.xlu0 0
        %733 = vperm.xlu0 %732, %v657
        %v734 = vpop.permute.xlu0 %733
        %737 = vset.pattern.permute.xlu0 0
        %738 = vperm.xlu0 %737, %v658
        %v739 = vpop.permute.xlu0 %738
        %742 = vset.pattern.permute.xlu0 0
        %743 = vperm.xlu0 %742, %v659
        %v744 = vpop.permute.xlu0 %743
        %747 = vset.pattern.permute.xlu0 0
        %748 = vperm.xlu0 %747, %v660
        %v749 = vpop.permute.xlu0 %748
        %752 = vset.pattern.permute.xlu0 0
        %753 = vperm.xlu0 %752, %v661
        %v754 = vpop.permute.xlu0 %753
        %757 = vset.pattern.permute.xlu0 0
        %758 = vperm.xlu0 %757, %v662
        %v759 = vpop.permute.xlu0 %758
        %762 = vset.pattern.permute.xlu0 0
        %763 = vperm.xlu0 %762, %v663
        %v764 = vpop.permute.xlu0 %763
        %767 = vset.pattern.permute.xlu0 0
        %768 = vperm.xlu0 %767, %v664
        %v769 = vpop.permute.xlu0 %768
        %772 = vset.pattern.permute.xlu0 0
        %773 = vperm.xlu0 %772, %v665
        %v774 = vpop.permute.xlu0 %773
        %777 = vset.pattern.permute.xlu0 0
        %778 = vperm.xlu0 %777, %v666
        %v779 = vpop.permute.xlu0 %778
        %782 = vset.pattern.permute.xlu0 0
        %783 = vperm.xlu0 %782, %v667
        %v784 = vpop.permute.xlu0 %783
        %787 = vset.pattern.permute.xlu0 0
        %788 = vperm.xlu0 %787, %v668
        %v789 = vpop.permute.xlu0 %788
        %792 = vset.pattern.permute.xlu0 0
        %793 = vperm.xlu0 %792, %v669
        %v794 = vpop.permute.xlu0 %793
        %797 = vset.pattern.permute.xlu0 0
        %798 = vperm.xlu0 %797, %v670
        %v799 = vpop.permute.xlu0 %798
        %802 = vset.pattern.permute.xlu0 0
        %803 = vperm.xlu0 %802, %v671
        %v804 = vpop.permute.xlu0 %803
        %807 = vset.pattern.permute.xlu0 0
        %808 = vperm.xlu0 %807, %v672
        %v809 = vpop.permute.xlu0 %808
        %812 = vset.pattern.permute.xlu0 0
        %813 = vperm.xlu0 %812, %v673
        %v814 = vpop.permute.xlu0 %813
        %817 = vset.pattern.permute.xlu0 0
        %818 = vperm.xlu0 %817, %v674
        %v819 = vpop.permute.xlu0 %818
        %822 = vset.pattern.permute.xlu0 0
        %823 = vperm.xlu0 %822, %v675
        %v824 = vpop.permute.xlu0 %823
        %827 = vset.pattern.permute.xlu0 0
        %828 = vperm.xlu0 %827, %v676
        %v829 = vpop.permute.xlu0 %828
        %832 = vset.pattern.permute.xlu0 0
        %833 = vperm.xlu0 %832, %v677
        %v834 = vpop.permute.xlu0 %833
        %837 = vset.pattern.permute.xlu0 0
        %838 = vperm.xlu0 %837, %v678
        %v839 = vpop.permute.xlu0 %838
        %842 = vset.pattern.permute.xlu0 0
        %843 = vperm.xlu0 %842, %v679
        %v844 = vpop.permute.xlu0 %843
        %847 = vset.pattern.permute.xlu0 0
        %848 = vperm.xlu0 %847, %v680
        %v849 = vpop.permute.xlu0 %848
        %852 = vset.pattern.permute.xlu0 0
        %853 = vperm.xlu0 %852, %v681
        %v854 = vpop.permute.xlu0 %853
        %857 = vset.pattern.permute.xlu0 0
        %858 = vperm.xlu0 %857, %v682
        %v859 = vpop.permute.xlu0 %858
        %862 = vset.pattern.permute.xlu0 0
        %863 = vperm.xlu0 %862, %v683
        %v864 = vpop.permute.xlu0 %863
        %867 = vset.pattern.permute.xlu0 0
        %868 = vperm.xlu0 %867, %v684
        %v869 = vpop.permute.xlu0 %868
        %872 = vset.pattern.permute.xlu0 0
        %873 = vperm.xlu0 %872, %v685
        %v874 = vpop.permute.xlu0 %873
        %877 = vset.pattern.permute.xlu0 0
        %878 = vperm.xlu0 %877, %v686
        %v879 = vpop.permute.xlu0 %878
        %882 = vset.pattern.permute.xlu0 0
        %883 = vperm.xlu0 %882, %v687
        %v884 = vpop.permute.xlu0 %883
        %887 = vset.pattern.permute.xlu0 0
        %888 = vperm.xlu0 %887, %v688
        %v889 = vpop.permute.xlu0 %888
        %892 = vset.pattern.permute.xlu0 0
        %893 = vperm.xlu0 %892, %v689
        %v894 = vpop.permute.xlu0 %893
        %897 = vset.pattern.permute.xlu0 0
        %898 = vperm.xlu0 %897, %v690
        %v899 = vpop.permute.xlu0 %898
        %v901 = vld [vmem:[%s2] sm:$0xf]
        %v902 = vld [vmem:[%s2 + $0x4] sm:$0xf]
        %v903 = vld [vmem:[%s2 + $0x8] sm:$0xf]
        %v904 = vld [vmem:[%s2 + $0xc] sm:$0xf]
        %v905 = vld [vmem:[%s2 + $0x10] sm:$0xf]
        %v906 = vld [vmem:[%s2 + $0x14] sm:$0xf]
        %v907 = vld [vmem:[%s2 + $0x18] sm:$0xf]
        %v908 = vld [vmem:[%s2 + $0x1c] sm:$0xf]
        %v909 = vld [vmem:[%s2 + $0x20] sm:$0xf]
        %v910 = vld [vmem:[%s2 + $0x24] sm:$0xf]
        %v911 = vld [vmem:[%s2 + $0x28] sm:$0xf]
        %v912 = vld [vmem:[%s2 + $0x2c] sm:$0xf]
        %v913 = vld [vmem:[%s2 + $0x30] sm:$0xf]
        %v914 = vld [vmem:[%s2 + $0x34] sm:$0xf]
        %v915 = vld [vmem:[%s2 + $0x38] sm:$0xf]
        %v916 = vld [vmem:[%s2 + $0x3c] sm:$0xf]
        %v917 = vld [vmem:[%s2 + $0x40] sm:$0xf]
        %v918 = vld [vmem:[%s2 + $0x44] sm:$0xf]
        %919 = vst [vmem:[#allocation3] sm:$0xf] %v901
        %920 = vst [vmem:[#allocation3 + $0x4] sm:$0xf] %v902
        %921 = vst [vmem:[#allocation3 + $0x40] sm:$0xf] %v903
        %922 = vst [vmem:[#allocation3 + $0x44] sm:$0xf] %v904
        %923 = vst [vmem:[#allocation3 + $0x80] sm:$0xf] %v905
        %924 = vst [vmem:[#allocation3 + $0x84] sm:$0xf] %v906
        %925 = vst [vmem:[#allocation3 + $0xc0] sm:$0xf] %v907
        %926 = vst [vmem:[#allocation3 + $0xc4] sm:$0xf] %v908
        %927 = vst [vmem:[#allocation3 + $0x100] sm:$0xf] %v909
        %928 = vst [vmem:[#allocation3 + $0x104] sm:$0xf] %v910
        %929 = vst [vmem:[#allocation3 + $0x140] sm:$0xf] %v911
        %930 = vst [vmem:[#allocation3 + $0x144] sm:$0xf] %v912
        %931 = vst [vmem:[#allocation3 + $0x180] sm:$0xf] %v913
        %932 = vst [vmem:[#allocation3 + $0x184] sm:$0xf] %v914
        %933 = vst [vmem:[#allocation3 + $0x1c0] sm:$0xf] %v915
        %934 = vst [vmem:[#allocation3 + $0x1c4] sm:$0xf] %v916
        %935 = vst [vmem:[#allocation3 + $0x200] sm:$0xf] %v917
        %936 = vst [vmem:[#allocation3 + $0x204] sm:$0xf] %v918
        %v937 = vld [vmem:[#allocation2 + $0x4] sm:$0x8]
        %v938 = vld [vmem:[#allocation2 + $0x8] sm:$0xf]
        %v939 = vld [vmem:[#allocation2 + $0xc] sm:$0xf]
        %v940 = vld [vmem:[#allocation2 + $0x10] sm:$0xf]
        %v941 = vld [vmem:[#allocation2 + $0x14] sm:$0xf]
        %v942 = vld [vmem:[#allocation2 + $0x18] sm:$0xf]
        %v943 = vld [vmem:[#allocation2 + $0x1c] sm:$0xf]
        %v944 = vld [vmem:[#allocation2 + $0x20] sm:$0xf]
        %v945 = vld [vmem:[#allocation2 + $0x24] sm:$0xf]
        %v946 = vld [vmem:[#allocation2 + $0x28] sm:$0xf]
        %v947 = vld [vmem:[#allocation2 + $0x2c] sm:$0xf]
        %v948 = vld [vmem:[#allocation2 + $0x30] sm:$0xf]
        %v949 = vld [vmem:[#allocation2 + $0x34] sm:$0xf]
        %v950 = vld [vmem:[#allocation2 + $0x38] sm:$0xf]
        %v951 = vld [vmem:[#allocation2 + $0x3c] sm:$0xf]
        %v952 = vld [vmem:[#allocation2 + $0x40] sm:$0xf]
        %v953 = vld [vmem:[#allocation2 + $0x44] sm:$0xf]
        %v954 = vld [vmem:[#allocation2 + $0x48] sm:$0xf]
        %v955 = vld [vmem:[#allocation2 + $0x4c] sm:$0xf]
        %v956 = vld [vmem:[#allocation2 + $0x50] sm:$0xf]
        %v957 = vld [vmem:[#allocation2 + $0x54] sm:$0xf]
        %v958 = vld [vmem:[#allocation2 + $0x58] sm:$0xf]
        %v959 = vld [vmem:[#allocation2 + $0x5c] sm:$0xf]
        %v960 = vld [vmem:[#allocation2 + $0x60] sm:$0xf]
        %v961 = vld [vmem:[#allocation2 + $0x64] sm:$0xf]
        %v962 = vld [vmem:[#allocation2 + $0x68] sm:$0xf]
        %v963 = vld [vmem:[#allocation2 + $0x6c] sm:$0xf]
        %v964 = vld [vmem:[#allocation2 + $0x70] sm:$0xf]
        %v965 = vld [vmem:[#allocation2 + $0x74] sm:$0xf]
        %v966 = vld [vmem:[#allocation2 + $0x78] sm:$0xf]
        %v967 = vld [vmem:[#allocation2 + $0x7c] sm:$0xf]
        %v968 = vld [vmem:[#allocation2 + $0x80] sm:$0xf]
        %v969 = vld [vmem:[#allocation2 + $0x84] sm:$0xf]
        %v970 = vld [vmem:[#allocation2 + $0x88] sm:$0xf]
        %v971 = vld [vmem:[#allocation2 + $0x8c] sm:$0xf]
        %v972 = vld [vmem:[#allocation2 + $0x90] sm:$0xf]
        %v973 = vld [vmem:[#allocation2 + $0x94] sm:$0xf]
        %v974 = vld [vmem:[#allocation2 + $0x98] sm:$0xf]
        %v975 = vld [vmem:[#allocation2 + $0x9c] sm:$0xf]
        %v976 = vld [vmem:[#allocation2 + $0xa0] sm:$0xf]
        %v977 = vld [vmem:[#allocation2 + $0xa4] sm:$0xf]
        %v978 = vld [vmem:[#allocation2 + $0xa8] sm:$0xf]
        %v979 = vld [vmem:[#allocation2 + $0xac] sm:$0xf]
        %v980 = vld [vmem:[#allocation2 + $0xb0] sm:$0xf]
        %v981 = vld [vmem:[#allocation3] sm:$0xf]
        %v982 = vld [vmem:[#allocation3 + $0x4] sm:$0xf]
        %v983 = vld [vmem:[#allocation3 + $0x8] sm:$0xf]
        %v984 = vld [vmem:[#allocation3 + $0xc] sm:$0xf]
        %v985 = vld [vmem:[#allocation3 + $0x10] sm:$0xf]
        %v986 = vld [vmem:[#allocation3 + $0x14] sm:$0xf]
        %v987 = vld [vmem:[#allocation3 + $0x18] sm:$0xf]
        %v988 = vld [vmem:[#allocation3 + $0x1c] sm:$0xf]
        %v989 = vld [vmem:[#allocation3 + $0x20] sm:$0xf]
        %v990 = vld [vmem:[#allocation3 + $0x24] sm:$0xf]
        %v991 = vld [vmem:[#allocation3 + $0x28] sm:$0xf]
        %v992 = vld [vmem:[#allocation3 + $0x2c] sm:$0xf]
        %v993 = vld [vmem:[#allocation3 + $0x30] sm:$0xf]
        %v994 = vld [vmem:[#allocation3 + $0x34] sm:$0xf]
        %v995 = vld [vmem:[#allocation3 + $0x38] sm:$0xf]
        %v996 = vld [vmem:[#allocation3 + $0x3c] sm:$0xf]
        %s997 = scalar_lea.vmem [#allocation3], 64
        %v998 = vld [vmem:[%s997] sm:$0xf]
        %v999 = vld [vmem:[%s997 + $0x4] sm:$0xf]
        %v1000 = vld [vmem:[%s997 + $0x8] sm:$0xf]
        %v1001 = vld [vmem:[%s997 + $0xc] sm:$0xf]
        %v1002 = vld [vmem:[%s997 + $0x10] sm:$0xf]
        %v1003 = vld [vmem:[%s997 + $0x14] sm:$0xf]
        %v1004 = vld [vmem:[%s997 + $0x18] sm:$0xf]
        %v1005 = vld [vmem:[%s997 + $0x1c] sm:$0xf]
        %v1006 = vld [vmem:[%s997 + $0x20] sm:$0xf]
        %v1007 = vld [vmem:[%s997 + $0x24] sm:$0xf]
        %v1008 = vld [vmem:[%s997 + $0x28] sm:$0xf]
        %v1009 = vld [vmem:[%s997 + $0x2c] sm:$0xf]
        %v1010 = vld [vmem:[%s997 + $0x30] sm:$0xf]
        %v1011 = vld [vmem:[%s997 + $0x34] sm:$0xf]
        %v1012 = vld [vmem:[%s997 + $0x38] sm:$0xf]
        %v1013 = vld [vmem:[%s997 + $0x3c] sm:$0xf]
        %v1057 = vunpack.c.l.b16 %v938
        %v1058 = vunpack.c.l.b16 %v939
        %v1059 = vunpack.c.l.b16 %v940
        %v1060 = vunpack.c.l.b16 %v941
        %v1061 = vunpack.c.l.b16 %v942
        %v1062 = vunpack.c.l.b16 %v943
        %v1063 = vunpack.c.l.b16 %v944
        %v1064 = vunpack.c.l.b16 %v945
        %v1065 = vunpack.c.l.b16 %v946
        %v1066 = vunpack.c.l.b16 %v947
        %v1067 = vunpack.c.l.b16 %v948
        %v1068 = vunpack.c.l.b16 %v949
        %v1069 = vunpack.c.l.b16 %v950
        %v1070 = vunpack.c.l.b16 %v951
        %v1071 = vunpack.c.l.b16 %v952
        %v1072 = vunpack.c.l.b16 %v953
        %v1073 = vunpack.c.l.b16 %v954
        %v1074 = vunpack.c.l.b16 %v955
        %v1075 = vunpack.c.l.b16 %v956
        %v1076 = vunpack.c.l.b16 %v957
        %v1077 = vunpack.c.l.b16 %v958
        %v1078 = vunpack.c.l.b16 %v959
        %v1079 = vunpack.c.l.b16 %v960
        %v1080 = vunpack.c.l.b16 %v961
        %v1081 = vunpack.c.l.b16 %v962
        %v1082 = vunpack.c.l.b16 %v963
        %v1083 = vunpack.c.l.b16 %v964
        %v1084 = vunpack.c.l.b16 %v965
        %v1085 = vunpack.c.l.b16 %v966
        %v1086 = vunpack.c.l.b16 %v967
        %v1087 = vunpack.c.l.b16 %v968
        %v1088 = vunpack.c.l.b16 %v969
        %v1089 = vunpack.c.l.b16 %v970
        %v1090 = vunpack.c.l.b16 %v971
        %v1091 = vunpack.c.l.b16 %v972
        %v1092 = vunpack.c.l.b16 %v973
        %v1093 = vunpack.c.l.b16 %v974
        %v1094 = vunpack.c.l.b16 %v975
        %v1095 = vunpack.c.l.b16 %v976
        %v1096 = vunpack.c.l.b16 %v977
        %v1097 = vunpack.c.l.b16 %v978
        %v1098 = vunpack.c.l.b16 %v979
        %v1099 = vunpack.c.l.b16 %v980
        %v1100 = vpack.c.b16 %v1058, %v1057
        %v1101 = vpack.c.b16 %v1060, %v1059
        %v1102 = vpack.c.b16 %v1062, %v1061
        %v1103 = vpack.c.b16 %v1064, %v1063
        %v1104 = vpack.c.b16 %v1066, %v1065
        %v1105 = vpack.c.b16 %v1068, %v1067
        %v1106 = vpack.c.b16 %v1070, %v1069
        %v1107 = vpack.c.b16 %v1072, %v1071
        %v1108 = vpack.c.b16 %v1074, %v1073
        %v1109 = vpack.c.b16 %v1076, %v1075
        %v1110 = vpack.c.b16 %v1078, %v1077
        %v1111 = vpack.c.b16 %v1080, %v1079
        %v1112 = vpack.c.b16 %v1082, %v1081
        %v1113 = vpack.c.b16 %v1084, %v1083
        %v1114 = vpack.c.b16 %v1086, %v1085
        %v1115 = vpack.c.b16 %v1088, %v1087
        %v1116 = vpack.c.b16 %v1090, %v1089
        %v1117 = vpack.c.b16 %v1092, %v1091
        %v1118 = vpack.c.b16 %v1094, %v1093
        %v1119 = vpack.c.b16 %v1096, %v1095
        %v1120 = vpack.c.b16 %v1098, %v1097
        %v1121 = vpack.c.b16 %v1099, %v1099
        %v1160 = vunpack.c.l.b16 %v998
        %v1161 = vunpack.c.l.b16 %v999
        %v1162 = vunpack.c.l.b16 %v1000
        %v1163 = vunpack.c.l.b16 %v1001
        %v1164 = vunpack.c.l.b16 %v1002
        %v1165 = vunpack.c.l.b16 %v1003
        %v1166 = vunpack.c.l.b16 %v1004
        %v1167 = vunpack.c.l.b16 %v1005
        %v1168 = vunpack.c.l.b16 %v1006
        %v1169 = vunpack.c.l.b16 %v1007
        %v1170 = vunpack.c.l.b16 %v1008
        %v1171 = vunpack.c.l.b16 %v1009
        %v1172 = vunpack.c.l.b16 %v1010
        %v1173 = vunpack.c.l.b16 %v1011
        %v1174 = vunpack.c.l.b16 %v1012
        %v1175 = vunpack.c.l.b16 %v1013
        %v1176 = vpack.c.b16 %v1161, %v1160
        %v1177 = vpack.c.b16 %v1163, %v1162
        %v1178 = vpack.c.b16 %v1165, %v1164
        %v1179 = vpack.c.b16 %v1167, %v1166
        %v1180 = vpack.c.b16 %v1169, %v1168
        %v1181 = vpack.c.b16 %v1171, %v1170
        %v1182 = vpack.c.b16 %v1173, %v1172
        %v1183 = vpack.c.b16 %v1175, %v1174
        %1192 = vmatpush.bf16.msra.mxu0 %v1183
        %1193 = vmatpush.bf16.msra.mxu0 %v1182
        %1194 = vmatpush.bf16.msra.mxu0 %v1181
        %1195 = vmatpush.bf16.msra.mxu0 %v1180
        %1196 = vmatpush.bf16.msra.mxu0 %v1179
        %1197 = vmatpush.bf16.msra.mxu0 %v1178
        %1198 = vmatpush.bf16.msra.mxu0 %v1177
        %1199 = vmatpush.bf16.msra.mxu0 %v1176
        %1200 = vmatmul.bf16.gmra.mxu0 %v1100
        %v1201 = vpop.f32.mrf.mxu0
        %v1202 = vadd.f32 0.0, %v1201
        %v1203 = vpop.f32.mrf.mxu0
        %v1204 = vadd.f32 0.0, %v1203
        %1205 = vmatmul.bf16.gmra.mxu0 %v1101
        %v1206 = vpop.f32.mrf.mxu0
        %v1207 = vadd.f32 0.0, %v1206
        %v1208 = vpop.f32.mrf.mxu0
        %v1209 = vadd.f32 0.0, %v1208
        %1210 = vmatmul.bf16.gmra.mxu0 %v1102
        %v1211 = vpop.f32.mrf.mxu0
        %v1212 = vadd.f32 0.0, %v1211
        %v1213 = vpop.f32.mrf.mxu0
        %v1214 = vadd.f32 0.0, %v1213
        %1215 = vmatmul.bf16.gmra.mxu0 %v1103
        %v1216 = vpop.f32.mrf.mxu0
        %v1217 = vadd.f32 0.0, %v1216
        %v1218 = vpop.f32.mrf.mxu0
        %v1219 = vadd.f32 0.0, %v1218
        %1220 = vmatmul.bf16.gmra.mxu0 %v1104
        %v1221 = vpop.f32.mrf.mxu0
        %v1222 = vadd.f32 0.0, %v1221
        %v1223 = vpop.f32.mrf.mxu0
        %v1224 = vadd.f32 0.0, %v1223
        %1225 = vmatmul.bf16.gmra.mxu0 %v1105
        %v1226 = vpop.f32.mrf.mxu0
        %v1227 = vadd.f32 0.0, %v1226
        %v1228 = vpop.f32.mrf.mxu0
        %v1229 = vadd.f32 0.0, %v1228
        %1230 = vmatmul.bf16.gmra.mxu0 %v1106
        %v1231 = vpop.f32.mrf.mxu0
        %v1232 = vadd.f32 0.0, %v1231
        %v1233 = vpop.f32.mrf.mxu0
        %v1234 = vadd.f32 0.0, %v1233
        %1235 = vmatmul.bf16.gmra.mxu0 %v1107
        %v1236 = vpop.f32.mrf.mxu0
        %v1237 = vadd.f32 0.0, %v1236
        %v1238 = vpop.f32.mrf.mxu0
        %v1239 = vadd.f32 0.0, %v1238
        %1240 = vmatmul.bf16.gmra.mxu0 %v1108
        %v1241 = vpop.f32.mrf.mxu0
        %v1242 = vadd.f32 0.0, %v1241
        %v1243 = vpop.f32.mrf.mxu0
        %v1244 = vadd.f32 0.0, %v1243
        %1245 = vmatmul.bf16.gmra.mxu0 %v1109
        %v1246 = vpop.f32.mrf.mxu0
        %v1247 = vadd.f32 0.0, %v1246
        %v1248 = vpop.f32.mrf.mxu0
        %v1249 = vadd.f32 0.0, %v1248
        %1250 = vmatmul.bf16.gmra.mxu0 %v1110
        %v1251 = vpop.f32.mrf.mxu0
        %v1252 = vadd.f32 0.0, %v1251
        %v1253 = vpop.f32.mrf.mxu0
        %v1254 = vadd.f32 0.0, %v1253
        %1255 = vmatmul.bf16.gmra.mxu0 %v1111
        %v1256 = vpop.f32.mrf.mxu0
        %v1257 = vadd.f32 0.0, %v1256
        %v1258 = vpop.f32.mrf.mxu0
        %v1259 = vadd.f32 0.0, %v1258
        %1260 = vmatmul.bf16.gmra.mxu0 %v1112
        %v1261 = vpop.f32.mrf.mxu0
        %v1262 = vadd.f32 0.0, %v1261
        %v1263 = vpop.f32.mrf.mxu0
        %v1264 = vadd.f32 0.0, %v1263
        %1265 = vmatmul.bf16.gmra.mxu0 %v1113
        %v1266 = vpop.f32.mrf.mxu0
        %v1267 = vadd.f32 0.0, %v1266
        %v1268 = vpop.f32.mrf.mxu0
        %v1269 = vadd.f32 0.0, %v1268
        %1270 = vmatmul.bf16.gmra.mxu0 %v1114
        %v1271 = vpop.f32.mrf.mxu0
        %v1272 = vadd.f32 0.0, %v1271
        %v1273 = vpop.f32.mrf.mxu0
        %v1274 = vadd.f32 0.0, %v1273
        %1275 = vmatmul.bf16.gmra.mxu0 %v1115
        %v1276 = vpop.f32.mrf.mxu0
        %v1277 = vadd.f32 0.0, %v1276
        %v1278 = vpop.f32.mrf.mxu0
        %v1279 = vadd.f32 0.0, %v1278
        %1280 = vmatmul.bf16.gmra.mxu0 %v1116
        %v1281 = vpop.f32.mrf.mxu0
        %v1282 = vadd.f32 0.0, %v1281
        %v1283 = vpop.f32.mrf.mxu0
        %v1284 = vadd.f32 0.0, %v1283
        %1285 = vmatmul.bf16.gmra.mxu0 %v1117
        %v1286 = vpop.f32.mrf.mxu0
        %v1287 = vadd.f32 0.0, %v1286
        %v1288 = vpop.f32.mrf.mxu0
        %v1289 = vadd.f32 0.0, %v1288
        %1290 = vmatmul.bf16.gmra.mxu0 %v1118
        %v1291 = vpop.f32.mrf.mxu0
        %v1292 = vadd.f32 0.0, %v1291
        %v1293 = vpop.f32.mrf.mxu0
        %v1294 = vadd.f32 0.0, %v1293
        %1295 = vmatmul.bf16.gmra.mxu0 %v1119
        %v1296 = vpop.f32.mrf.mxu0
        %v1297 = vadd.f32 0.0, %v1296
        %v1298 = vpop.f32.mrf.mxu0
        %v1299 = vadd.f32 0.0, %v1298
        %1300 = vmatmul.bf16.gmra.mxu0 %v1120
        %v1301 = vpop.f32.mrf.mxu0
        %v1302 = vadd.f32 0.0, %v1301
        %v1303 = vpop.f32.mrf.mxu0
        %v1304 = vadd.f32 0.0, %v1303
        %1305 = vmatmul.bf16.gmra.mxu0 %v1121
        %v1306 = vpop.f32.mrf.mxu0
        %v1307 = vadd.f32 0.0, %v1306
        %v1308 = vpop.f32.mrf.mxu0
        %1309 = vdwg.mxu0
        %v1311 = vunpack.c.l.b16 %v937
        %v1312 = vpack.c.b16 %v1057, %v1311
        %v1313 = vpack.c.b16 %v1059, %v1058
        %v1314 = vpack.c.b16 %v1061, %v1060
        %v1315 = vpack.c.b16 %v1063, %v1062
        %v1316 = vpack.c.b16 %v1065, %v1064
        %v1317 = vpack.c.b16 %v1067, %v1066
        %v1318 = vpack.c.b16 %v1069, %v1068
        %v1319 = vpack.c.b16 %v1071, %v1070
        %v1320 = vpack.c.b16 %v1073, %v1072
        %v1321 = vpack.c.b16 %v1075, %v1074
        %v1322 = vpack.c.b16 %v1077, %v1076
        %v1323 = vpack.c.b16 %v1079, %v1078
        %v1324 = vpack.c.b16 %v1081, %v1080
        %v1325 = vpack.c.b16 %v1083, %v1082
        %v1326 = vpack.c.b16 %v1085, %v1084
        %v1327 = vpack.c.b16 %v1087, %v1086
        %v1328 = vpack.c.b16 %v1089, %v1088
        %v1329 = vpack.c.b16 %v1091, %v1090
        %v1330 = vpack.c.b16 %v1093, %v1092
        %v1331 = vpack.c.b16 %v1095, %v1094
        %v1332 = vpack.c.b16 %v1097, %v1096
        %v1333 = vpack.c.b16 %v1099, %v1098
        %vm1334 = vsmask.f32 4352
        %v1336 = vshrl.u32 %v1312, 16
        %v1338 = vrot.slane %v1336, 3
        %v1339 = vshll.u32 %v1312, 16
        %v1341 = vrot.slane %v1339, 4
        %v1342 = vor.u32 %v1338, %v1341
        %v1344 = vshrl.u32 %v1313, 16
        %v1346 = vrot.slane %v1344, 3
        %v1347 = vshll.u32 %v1313, 16
        %v1349 = vrot.slane %v1347, 4
        %v1350 = vor.u32 %v1346, %v1349
        %v1351 = vsel %vm1334, %v1342, %v1350
        %v1353 = vshrl.u32 %v1314, 16
        %v1355 = vrot.slane %v1353, 3
        %v1356 = vshll.u32 %v1314, 16
        %v1358 = vrot.slane %v1356, 4
        %v1359 = vor.u32 %v1355, %v1358
        %v1360 = vsel %vm1334, %v1350, %v1359
        %v1362 = vshrl.u32 %v1315, 16
        %v1364 = vrot.slane %v1362, 3
        %v1365 = vshll.u32 %v1315, 16
        %v1367 = vrot.slane %v1365, 4
        %v1368 = vor.u32 %v1364, %v1367
        %v1369 = vsel %vm1334, %v1359, %v1368
        %v1371 = vshrl.u32 %v1316, 16
        %v1373 = vrot.slane %v1371, 3
        %v1374 = vshll.u32 %v1316, 16
        %v1376 = vrot.slane %v1374, 4
        %v1377 = vor.u32 %v1373, %v1376
        %v1378 = vsel %vm1334, %v1368, %v1377
        %v1380 = vshrl.u32 %v1317, 16
        %v1382 = vrot.slane %v1380, 3
        %v1383 = vshll.u32 %v1317, 16
        %v1385 = vrot.slane %v1383, 4
        %v1386 = vor.u32 %v1382, %v1385
        %v1387 = vsel %vm1334, %v1377, %v1386
        %v1389 = vshrl.u32 %v1318, 16
        %v1391 = vrot.slane %v1389, 3
        %v1392 = vshll.u32 %v1318, 16
        %v1394 = vrot.slane %v1392, 4
        %v1395 = vor.u32 %v1391, %v1394
        %v1396 = vsel %vm1334, %v1386, %v1395
        %v1398 = vshrl.u32 %v1319, 16
        %v1400 = vrot.slane %v1398, 3
        %v1401 = vshll.u32 %v1319, 16
        %v1403 = vrot.slane %v1401, 4
        %v1404 = vor.u32 %v1400, %v1403
        %v1405 = vsel %vm1334, %v1395, %v1404
        %v1407 = vshrl.u32 %v1320, 16
        %v1409 = vrot.slane %v1407, 3
        %v1410 = vshll.u32 %v1320, 16
        %v1412 = vrot.slane %v1410, 4
        %v1413 = vor.u32 %v1409, %v1412
        %v1414 = vsel %vm1334, %v1404, %v1413
        %v1416 = vshrl.u32 %v1321, 16
        %v1418 = vrot.slane %v1416, 3
        %v1419 = vshll.u32 %v1321, 16
        %v1421 = vrot.slane %v1419, 4
        %v1422 = vor.u32 %v1418, %v1421
        %v1423 = vsel %vm1334, %v1413, %v1422
        %v1425 = vshrl.u32 %v1322, 16
        %v1427 = vrot.slane %v1425, 3
        %v1428 = vshll.u32 %v1322, 16
        %v1430 = vrot.slane %v1428, 4
        %v1431 = vor.u32 %v1427, %v1430
        %v1432 = vsel %vm1334, %v1422, %v1431
        %v1434 = vshrl.u32 %v1323, 16
        %v1436 = vrot.slane %v1434, 3
        %v1437 = vshll.u32 %v1323, 16
        %v1439 = vrot.slane %v1437, 4
        %v1440 = vor.u32 %v1436, %v1439
        %v1441 = vsel %vm1334, %v1431, %v1440
        %v1443 = vshrl.u32 %v1324, 16
        %v1445 = vrot.slane %v1443, 3
        %v1446 = vshll.u32 %v1324, 16
        %v1448 = vrot.slane %v1446, 4
        %v1449 = vor.u32 %v1445, %v1448
        %v1450 = vsel %vm1334, %v1440, %v1449
        %v1452 = vshrl.u32 %v1325, 16
        %v1454 = vrot.slane %v1452, 3
        %v1455 = vshll.u32 %v1325, 16
        %v1457 = vrot.slane %v1455, 4
        %v1458 = vor.u32 %v1454, %v1457
        %v1459 = vsel %vm1334, %v1449, %v1458
        %v1461 = vshrl.u32 %v1326, 16
        %v1463 = vrot.slane %v1461, 3
        %v1464 = vshll.u32 %v1326, 16
        %v1466 = vrot.slane %v1464, 4
        %v1467 = vor.u32 %v1463, %v1466
        %v1468 = vsel %vm1334, %v1458, %v1467
        %v1470 = vshrl.u32 %v1327, 16
        %v1472 = vrot.slane %v1470, 3
        %v1473 = vshll.u32 %v1327, 16
        %v1475 = vrot.slane %v1473, 4
        %v1476 = vor.u32 %v1472, %v1475
        %v1477 = vsel %vm1334, %v1467, %v1476
        %v1479 = vshrl.u32 %v1328, 16
        %v1481 = vrot.slane %v1479, 3
        %v1482 = vshll.u32 %v1328, 16
        %v1484 = vrot.slane %v1482, 4
        %v1485 = vor.u32 %v1481, %v1484
        %v1486 = vsel %vm1334, %v1476, %v1485
        %v1488 = vshrl.u32 %v1329, 16
        %v1490 = vrot.slane %v1488, 3
        %v1491 = vshll.u32 %v1329, 16
        %v1493 = vrot.slane %v1491, 4
        %v1494 = vor.u32 %v1490, %v1493
        %v1495 = vsel %vm1334, %v1485, %v1494
        %v1497 = vshrl.u32 %v1330, 16
        %v1499 = vrot.slane %v1497, 3
        %v1500 = vshll.u32 %v1330, 16
        %v1502 = vrot.slane %v1500, 4
        %v1503 = vor.u32 %v1499, %v1502
        %v1504 = vsel %vm1334, %v1494, %v1503
        %v1506 = vshrl.u32 %v1331, 16
        %v1508 = vrot.slane %v1506, 3
        %v1509 = vshll.u32 %v1331, 16
        %v1511 = vrot.slane %v1509, 4
        %v1512 = vor.u32 %v1508, %v1511
        %v1513 = vsel %vm1334, %v1503, %v1512
        %v1515 = vshrl.u32 %v1332, 16
        %v1517 = vrot.slane %v1515, 3
        %v1518 = vshll.u32 %v1332, 16
        %v1520 = vrot.slane %v1518, 4
        %v1521 = vor.u32 %v1517, %v1520
        %v1522 = vsel %vm1334, %v1512, %v1521
        %v1524 = vshrl.u32 %v1333, 16
        %v1526 = vrot.slane %v1524, 3
        %v1527 = vshll.u32 %v1333, 16
        %v1529 = vrot.slane %v1527, 4
        %v1530 = vor.u32 %v1526, %v1529
        %v1531 = vsel %vm1334, %v1521, %v1530
        %v1570 = vunpack.c.l.b16 %v981
        %v1571 = vunpack.c.l.b16 %v982
        %v1572 = vunpack.c.l.b16 %v983
        %v1573 = vunpack.c.l.b16 %v984
        %v1574 = vunpack.c.l.b16 %v985
        %v1575 = vunpack.c.l.b16 %v986
        %v1576 = vunpack.c.l.b16 %v987
        %v1577 = vunpack.c.l.b16 %v988
        %v1578 = vunpack.c.l.b16 %v989
        %v1579 = vunpack.c.l.b16 %v990
        %v1580 = vunpack.c.l.b16 %v991
        %v1581 = vunpack.c.l.b16 %v992
        %v1582 = vunpack.c.l.b16 %v993
        %v1583 = vunpack.c.l.b16 %v994
        %v1584 = vunpack.c.l.b16 %v995
        %v1585 = vunpack.c.l.b16 %v996
        %v1586 = vpack.c.b16 %v1571, %v1570
        %v1587 = vpack.c.b16 %v1573, %v1572
        %v1588 = vpack.c.b16 %v1575, %v1574
        %v1589 = vpack.c.b16 %v1577, %v1576
        %v1590 = vpack.c.b16 %v1579, %v1578
        %v1591 = vpack.c.b16 %v1581, %v1580
        %v1592 = vpack.c.b16 %v1583, %v1582
        %v1593 = vpack.c.b16 %v1585, %v1584
        %1602 = vmatpush.bf16.msra.mxu0 %v1593
        %1603 = vmatpush.bf16.msra.mxu0 %v1592
        %1604 = vmatpush.bf16.msra.mxu0 %v1591
        %1605 = vmatpush.bf16.msra.mxu0 %v1590
        %1606 = vmatpush.bf16.msra.mxu0 %v1589
        %1607 = vmatpush.bf16.msra.mxu0 %v1588
        %1608 = vmatpush.bf16.msra.mxu0 %v1587
        %1609 = vmatpush.bf16.msra.mxu0 %v1586
        %1610 = vmatmul.bf16.gmra.mxu0 %v1351
        %v1611 = vpop.f32.mrf.mxu0
        %v1612 = vadd.f32 %v1202, %v1611
        %v1613 = vpop.f32.mrf.mxu0
        %v1614 = vadd.f32 %v1204, %v1613
        %1615 = vmatmul.bf16.gmra.mxu0 %v1360
        %v1616 = vpop.f32.mrf.mxu0
        %v1617 = vadd.f32 %v1207, %v1616
        %v1618 = vpop.f32.mrf.mxu0
        %v1619 = vadd.f32 %v1209, %v1618
        %1620 = vmatmul.bf16.gmra.mxu0 %v1369
        %v1621 = vpop.f32.mrf.mxu0
        %v1622 = vadd.f32 %v1212, %v1621
        %v1623 = vpop.f32.mrf.mxu0
        %v1624 = vadd.f32 %v1214, %v1623
        %1625 = vmatmul.bf16.gmra.mxu0 %v1378
        %v1626 = vpop.f32.mrf.mxu0
        %v1627 = vadd.f32 %v1217, %v1626
        %v1628 = vpop.f32.mrf.mxu0
        %v1629 = vadd.f32 %v1219, %v1628
        %1630 = vmatmul.bf16.gmra.mxu0 %v1387
        %v1631 = vpop.f32.mrf.mxu0
        %v1632 = vadd.f32 %v1222, %v1631
        %v1633 = vpop.f32.mrf.mxu0
        %v1634 = vadd.f32 %v1224, %v1633
        %1635 = vmatmul.bf16.gmra.mxu0 %v1396
        %v1636 = vpop.f32.mrf.mxu0
        %v1637 = vadd.f32 %v1227, %v1636
        %v1638 = vpop.f32.mrf.mxu0
        %v1639 = vadd.f32 %v1229, %v1638
        %1640 = vmatmul.bf16.gmra.mxu0 %v1405
        %v1641 = vpop.f32.mrf.mxu0
        %v1642 = vadd.f32 %v1232, %v1641
        %v1643 = vpop.f32.mrf.mxu0
        %v1644 = vadd.f32 %v1234, %v1643
        %1645 = vmatmul.bf16.gmra.mxu0 %v1414
        %v1646 = vpop.f32.mrf.mxu0
        %v1647 = vadd.f32 %v1237, %v1646
        %v1648 = vpop.f32.mrf.mxu0
        %v1649 = vadd.f32 %v1239, %v1648
        %1650 = vmatmul.bf16.gmra.mxu0 %v1423
        %v1651 = vpop.f32.mrf.mxu0
        %v1652 = vadd.f32 %v1242, %v1651
        %v1653 = vpop.f32.mrf.mxu0
        %v1654 = vadd.f32 %v1244, %v1653
        %1655 = vmatmul.bf16.gmra.mxu0 %v1432
        %v1656 = vpop.f32.mrf.mxu0
        %v1657 = vadd.f32 %v1247, %v1656
        %v1658 = vpop.f32.mrf.mxu0
        %v1659 = vadd.f32 %v1249, %v1658
        %1660 = vmatmul.bf16.gmra.mxu0 %v1441
        %v1661 = vpop.f32.mrf.mxu0
        %v1662 = vadd.f32 %v1252, %v1661
        %v1663 = vpop.f32.mrf.mxu0
        %v1664 = vadd.f32 %v1254, %v1663
        %1665 = vmatmul.bf16.gmra.mxu0 %v1450
        %v1666 = vpop.f32.mrf.mxu0
        %v1667 = vadd.f32 %v1257, %v1666
        %v1668 = vpop.f32.mrf.mxu0
        %v1669 = vadd.f32 %v1259, %v1668
        %1670 = vmatmul.bf16.gmra.mxu0 %v1459
        %v1671 = vpop.f32.mrf.mxu0
        %v1672 = vadd.f32 %v1262, %v1671
        %v1673 = vpop.f32.mrf.mxu0
        %v1674 = vadd.f32 %v1264, %v1673
        %1675 = vmatmul.bf16.gmra.mxu0 %v1468
        %v1676 = vpop.f32.mrf.mxu0
        %v1677 = vadd.f32 %v1267, %v1676
        %v1678 = vpop.f32.mrf.mxu0
        %v1679 = vadd.f32 %v1269, %v1678
        %1680 = vmatmul.bf16.gmra.mxu0 %v1477
        %v1681 = vpop.f32.mrf.mxu0
        %v1682 = vadd.f32 %v1272, %v1681
        %v1683 = vpop.f32.mrf.mxu0
        %v1684 = vadd.f32 %v1274, %v1683
        %1685 = vmatmul.bf16.gmra.mxu0 %v1486
        %v1686 = vpop.f32.mrf.mxu0
        %v1687 = vadd.f32 %v1277, %v1686
        %v1688 = vpop.f32.mrf.mxu0
        %v1689 = vadd.f32 %v1279, %v1688
        %1690 = vmatmul.bf16.gmra.mxu0 %v1495
        %v1691 = vpop.f32.mrf.mxu0
        %v1692 = vadd.f32 %v1282, %v1691
        %v1693 = vpop.f32.mrf.mxu0
        %v1694 = vadd.f32 %v1284, %v1693
        %1695 = vmatmul.bf16.gmra.mxu0 %v1504
        %v1696 = vpop.f32.mrf.mxu0
        %v1697 = vadd.f32 %v1287, %v1696
        %v1698 = vpop.f32.mrf.mxu0
        %v1699 = vadd.f32 %v1289, %v1698
        %1700 = vmatmul.bf16.gmra.mxu0 %v1513
        %v1701 = vpop.f32.mrf.mxu0
        %v1702 = vadd.f32 %v1292, %v1701
        %v1703 = vpop.f32.mrf.mxu0
        %v1704 = vadd.f32 %v1294, %v1703
        %1705 = vmatmul.bf16.gmra.mxu0 %v1522
        %v1706 = vpop.f32.mrf.mxu0
        %v1707 = vadd.f32 %v1297, %v1706
        %v1708 = vpop.f32.mrf.mxu0
        %v1709 = vadd.f32 %v1299, %v1708
        %1710 = vmatmul.bf16.gmra.mxu0 %v1531
        %v1711 = vpop.f32.mrf.mxu0
        %v1712 = vadd.f32 %v1302, %v1711
        %v1713 = vpop.f32.mrf.mxu0
        %v1714 = vadd.f32 %v1304, %v1713
        %1715 = vmatmul.bf16.gmra.mxu0 %v1530
        %v1716 = vpop.f32.mrf.mxu0
        %v1717 = vadd.f32 %v1307, %v1716
        %v1718 = vpop.f32.mrf.mxu0
        %1719 = vdwg.mxu0
        %v1720 = vld [vmem:[#allocation2 + $0x8] sm:$0xf]
        %v1721 = vld [vmem:[#allocation2 + $0xc] sm:$0xf]
        %v1722 = vld [vmem:[#allocation2 + $0x10] sm:$0xf]
        %v1723 = vld [vmem:[#allocation2 + $0x14] sm:$0xf]
        %v1724 = vld [vmem:[#allocation2 + $0x18] sm:$0xf]
        %v1725 = vld [vmem:[#allocation2 + $0x1c] sm:$0xf]
        %v1726 = vld [vmem:[#allocation2 + $0x20] sm:$0xf]
        %v1727 = vld [vmem:[#allocation2 + $0x24] sm:$0xf]
        %v1728 = vld [vmem:[#allocation2 + $0x28] sm:$0xf]
        %v1729 = vld [vmem:[#allocation2 + $0x2c] sm:$0xf]
        %v1730 = vld [vmem:[#allocation2 + $0x30] sm:$0xf]
        %v1731 = vld [vmem:[#allocation2 + $0x34] sm:$0xf]
        %v1732 = vld [vmem:[#allocation2 + $0x38] sm:$0xf]
        %v1733 = vld [vmem:[#allocation2 + $0x3c] sm:$0xf]
        %v1734 = vld [vmem:[#allocation2 + $0x40] sm:$0xf]
        %v1735 = vld [vmem:[#allocation2 + $0x44] sm:$0xf]
        %v1736 = vld [vmem:[#allocation2 + $0x48] sm:$0xf]
        %v1737 = vld [vmem:[#allocation2 + $0x4c] sm:$0xf]
        %v1738 = vld [vmem:[#allocation2 + $0x50] sm:$0xf]
        %v1739 = vld [vmem:[#allocation2 + $0x54] sm:$0xf]
        %v1740 = vld [vmem:[#allocation2 + $0x58] sm:$0xf]
        %v1741 = vld [vmem:[#allocation2 + $0x5c] sm:$0xf]
        %v1742 = vld [vmem:[#allocation2 + $0x60] sm:$0xf]
        %v1743 = vld [vmem:[#allocation2 + $0x64] sm:$0xf]
        %v1744 = vld [vmem:[#allocation2 + $0x68] sm:$0xf]
        %v1745 = vld [vmem:[#allocation2 + $0x6c] sm:$0xf]
        %v1746 = vld [vmem:[#allocation2 + $0x70] sm:$0xf]
        %v1747 = vld [vmem:[#allocation2 + $0x74] sm:$0xf]
        %v1748 = vld [vmem:[#allocation2 + $0x78] sm:$0xf]
        %v1749 = vld [vmem:[#allocation2 + $0x7c] sm:$0xf]
        %v1750 = vld [vmem:[#allocation2 + $0x80] sm:$0xf]
        %v1751 = vld [vmem:[#allocation2 + $0x84] sm:$0xf]
        %v1752 = vld [vmem:[#allocation2 + $0x88] sm:$0xf]
        %v1753 = vld [vmem:[#allocation2 + $0x8c] sm:$0xf]
        %v1754 = vld [vmem:[#allocation2 + $0x90] sm:$0xf]
        %v1755 = vld [vmem:[#allocation2 + $0x94] sm:$0xf]
        %v1756 = vld [vmem:[#allocation2 + $0x98] sm:$0xf]
        %v1757 = vld [vmem:[#allocation2 + $0x9c] sm:$0xf]
        %v1758 = vld [vmem:[#allocation2 + $0xa0] sm:$0xf]
        %v1759 = vld [vmem:[#allocation2 + $0xa4] sm:$0xf]
        %v1760 = vld [vmem:[#allocation2 + $0xa8] sm:$0xf]
        %v1761 = vld [vmem:[#allocation2 + $0xac] sm:$0xf]
        %v1762 = vld [vmem:[#allocation2 + $0xb0] sm:$0xf]
        %v1763 = vld [vmem:[#allocation2 + $0xb4] sm:$0x1]
        %s1764 = scalar_lea.vmem [#allocation3], 128
        %v1765 = vld [vmem:[%s1764] sm:$0xf]
        %v1766 = vld [vmem:[%s1764 + $0x4] sm:$0xf]
        %v1767 = vld [vmem:[%s1764 + $0x8] sm:$0xf]
        %v1768 = vld [vmem:[%s1764 + $0xc] sm:$0xf]
        %v1769 = vld [vmem:[%s1764 + $0x10] sm:$0xf]
        %v1770 = vld [vmem:[%s1764 + $0x14] sm:$0xf]
        %v1771 = vld [vmem:[%s1764 + $0x18] sm:$0xf]
        %v1772 = vld [vmem:[%s1764 + $0x1c] sm:$0xf]
        %v1773 = vld [vmem:[%s1764 + $0x20] sm:$0xf]
        %v1774 = vld [vmem:[%s1764 + $0x24] sm:$0xf]
        %v1775 = vld [vmem:[%s1764 + $0x28] sm:$0xf]
        %v1776 = vld [vmem:[%s1764 + $0x2c] sm:$0xf]
        %v1777 = vld [vmem:[%s1764 + $0x30] sm:$0xf]
        %v1778 = vld [vmem:[%s1764 + $0x34] sm:$0xf]
        %v1779 = vld [vmem:[%s1764 + $0x38] sm:$0xf]
        %v1780 = vld [vmem:[%s1764 + $0x3c] sm:$0xf]
        %v1825 = vunpack.c.l.b16 %v1720
        %v1826 = vunpack.c.l.b16 %v1721
        %v1827 = vunpack.c.l.b16 %v1722
        %v1828 = vunpack.c.l.b16 %v1723
        %v1829 = vunpack.c.l.b16 %v1724
        %v1830 = vunpack.c.l.b16 %v1725
        %v1831 = vunpack.c.l.b16 %v1726
        %v1832 = vunpack.c.l.b16 %v1727
        %v1833 = vunpack.c.l.b16 %v1728
        %v1834 = vunpack.c.l.b16 %v1729
        %v1835 = vunpack.c.l.b16 %v1730
        %v1836 = vunpack.c.l.b16 %v1731
        %v1837 = vunpack.c.l.b16 %v1732
        %v1838 = vunpack.c.l.b16 %v1733
        %v1839 = vunpack.c.l.b16 %v1734
        %v1840 = vunpack.c.l.b16 %v1735
        %v1841 = vunpack.c.l.b16 %v1736
        %v1842 = vunpack.c.l.b16 %v1737
        %v1843 = vunpack.c.l.b16 %v1738
        %v1844 = vunpack.c.l.b16 %v1739
        %v1845 = vunpack.c.l.b16 %v1740
        %v1846 = vunpack.c.l.b16 %v1741
        %v1847 = vunpack.c.l.b16 %v1742
        %v1848 = vunpack.c.l.b16 %v1743
        %v1849 = vunpack.c.l.b16 %v1744
        %v1850 = vunpack.c.l.b16 %v1745
        %v1851 = vunpack.c.l.b16 %v1746
        %v1852 = vunpack.c.l.b16 %v1747
        %v1853 = vunpack.c.l.b16 %v1748
        %v1854 = vunpack.c.l.b16 %v1749
        %v1855 = vunpack.c.l.b16 %v1750
        %v1856 = vunpack.c.l.b16 %v1751
        %v1857 = vunpack.c.l.b16 %v1752
        %v1858 = vunpack.c.l.b16 %v1753
        %v1859 = vunpack.c.l.b16 %v1754
        %v1860 = vunpack.c.l.b16 %v1755
        %v1861 = vunpack.c.l.b16 %v1756
        %v1862 = vunpack.c.l.b16 %v1757
        %v1863 = vunpack.c.l.b16 %v1758
        %v1864 = vunpack.c.l.b16 %v1759
        %v1865 = vunpack.c.l.b16 %v1760
        %v1866 = vunpack.c.l.b16 %v1761
        %v1867 = vunpack.c.l.b16 %v1762
        %v1868 = vunpack.c.l.b16 %v1763
        %v1869 = vpack.c.b16 %v1826, %v1825
        %v1870 = vpack.c.b16 %v1828, %v1827
        %v1871 = vpack.c.b16 %v1830, %v1829
        %v1872 = vpack.c.b16 %v1832, %v1831
        %v1873 = vpack.c.b16 %v1834, %v1833
        %v1874 = vpack.c.b16 %v1836, %v1835
        %v1875 = vpack.c.b16 %v1838, %v1837
        %v1876 = vpack.c.b16 %v1840, %v1839
        %v1877 = vpack.c.b16 %v1842, %v1841
        %v1878 = vpack.c.b16 %v1844, %v1843
        %v1879 = vpack.c.b16 %v1846, %v1845
        %v1880 = vpack.c.b16 %v1848, %v1847
        %v1881 = vpack.c.b16 %v1850, %v1849
        %v1882 = vpack.c.b16 %v1852, %v1851
        %v1883 = vpack.c.b16 %v1854, %v1853
        %v1884 = vpack.c.b16 %v1856, %v1855
        %v1885 = vpack.c.b16 %v1858, %v1857
        %v1886 = vpack.c.b16 %v1860, %v1859
        %v1887 = vpack.c.b16 %v1862, %v1861
        %v1888 = vpack.c.b16 %v1864, %v1863
        %v1889 = vpack.c.b16 %v1866, %v1865
        %v1890 = vpack.c.b16 %v1868, %v1867
        %vm1891 = vsmask.f32 7424
        %v1893 = vshrl.u32 %v1869, 16
        %v1895 = vshll.u32 %v1869, 16
        %v1897 = vrot.slane %v1895, 1
        %v1898 = vor.u32 %v1893, %v1897
        %v1900 = vshll.u32 %v1870, 16
        %v1902 = vrot.slane %v1900, 1
        %v1903 = vsel %vm1891, %v1898, %v1902
        %v1904 = vshrl.u32 %v1870, 16
        %v1906 = vor.u32 %v1904, %v1902
        %v1908 = vshll.u32 %v1871, 16
        %v1910 = vrot.slane %v1908, 1
        %v1911 = vsel %vm1891, %v1906, %v1910
        %v1912 = vshrl.u32 %v1871, 16
        %v1914 = vor.u32 %v1912, %v1910
        %v1916 = vshll.u32 %v1872, 16
        %v1918 = vrot.slane %v1916, 1
        %v1919 = vsel %vm1891, %v1914, %v1918
        %v1920 = vshrl.u32 %v1872, 16
        %v1922 = vor.u32 %v1920, %v1918
        %v1924 = vshll.u32 %v1873, 16
        %v1926 = vrot.slane %v1924, 1
        %v1927 = vsel %vm1891, %v1922, %v1926
        %v1928 = vshrl.u32 %v1873, 16
        %v1930 = vor.u32 %v1928, %v1926
        %v1932 = vshll.u32 %v1874, 16
        %v1934 = vrot.slane %v1932, 1
        %v1935 = vsel %vm1891, %v1930, %v1934
        %v1936 = vshrl.u32 %v1874, 16
        %v1938 = vor.u32 %v1936, %v1934
        %v1940 = vshll.u32 %v1875, 16
        %v1942 = vrot.slane %v1940, 1
        %v1943 = vsel %vm1891, %v1938, %v1942
        %v1944 = vshrl.u32 %v1875, 16
        %v1946 = vor.u32 %v1944, %v1942
        %v1948 = vshll.u32 %v1876, 16
        %v1950 = vrot.slane %v1948, 1
        %v1951 = vsel %vm1891, %v1946, %v1950
        %v1952 = vshrl.u32 %v1876, 16
        %v1954 = vor.u32 %v1952, %v1950
        %v1956 = vshll.u32 %v1877, 16
        %v1958 = vrot.slane %v1956, 1
        %v1959 = vsel %vm1891, %v1954, %v1958
        %v1960 = vshrl.u32 %v1877, 16
        %v1962 = vor.u32 %v1960, %v1958
        %v1964 = vshll.u32 %v1878, 16
        %v1966 = vrot.slane %v1964, 1
        %v1967 = vsel %vm1891, %v1962, %v1966
        %v1968 = vshrl.u32 %v1878, 16
        %v1970 = vor.u32 %v1968, %v1966
        %v1972 = vshll.u32 %v1879, 16
        %v1974 = vrot.slane %v1972, 1
        %v1975 = vsel %vm1891, %v1970, %v1974
        %v1976 = vshrl.u32 %v1879, 16
        %v1978 = vor.u32 %v1976, %v1974
        %v1980 = vshll.u32 %v1880, 16
        %v1982 = vrot.slane %v1980, 1
        %v1983 = vsel %vm1891, %v1978, %v1982
        %v1984 = vshrl.u32 %v1880, 16
        %v1986 = vor.u32 %v1984, %v1982
        %v1988 = vshll.u32 %v1881, 16
        %v1990 = vrot.slane %v1988, 1
        %v1991 = vsel %vm1891, %v1986, %v1990
        %v1992 = vshrl.u32 %v1881, 16
        %v1994 = vor.u32 %v1992, %v1990
        %v1996 = vshll.u32 %v1882, 16
        %v1998 = vrot.slane %v1996, 1
        %v1999 = vsel %vm1891, %v1994, %v1998
        %v2000 = vshrl.u32 %v1882, 16
        %v2002 = vor.u32 %v2000, %v1998
        %v2004 = vshll.u32 %v1883, 16
        %v2006 = vrot.slane %v2004, 1
        %v2007 = vsel %vm1891, %v2002, %v2006
        %v2008 = vshrl.u32 %v1883, 16
        %v2010 = vor.u32 %v2008, %v2006
        %v2012 = vshll.u32 %v1884, 16
        %v2014 = vrot.slane %v2012, 1
        %v2015 = vsel %vm1891, %v2010, %v2014
        %v2016 = vshrl.u32 %v1884, 16
        %v2018 = vor.u32 %v2016, %v2014
        %v2020 = vshll.u32 %v1885, 16
        %v2022 = vrot.slane %v2020, 1
        %v2023 = vsel %vm1891, %v2018, %v2022
        %v2024 = vshrl.u32 %v1885, 16
        %v2026 = vor.u32 %v2024, %v2022
        %v2028 = vshll.u32 %v1886, 16
        %v2030 = vrot.slane %v2028, 1
        %v2031 = vsel %vm1891, %v2026, %v2030
        %v2032 = vshrl.u32 %v1886, 16
        %v2034 = vor.u32 %v2032, %v2030
        %v2036 = vshll.u32 %v1887, 16
        %v2038 = vrot.slane %v2036, 1
        %v2039 = vsel %vm1891, %v2034, %v2038
        %v2040 = vshrl.u32 %v1887, 16
        %v2042 = vor.u32 %v2040, %v2038
        %v2044 = vshll.u32 %v1888, 16
        %v2046 = vrot.slane %v2044, 1
        %v2047 = vsel %vm1891, %v2042, %v2046
        %v2048 = vshrl.u32 %v1888, 16
        %v2050 = vor.u32 %v2048, %v2046
        %v2052 = vshll.u32 %v1889, 16
        %v2054 = vrot.slane %v2052, 1
        %v2055 = vsel %vm1891, %v2050, %v2054
        %v2056 = vshrl.u32 %v1889, 16
        %v2058 = vor.u32 %v2056, %v2054
        %v2060 = vshll.u32 %v1890, 16
        %v2062 = vrot.slane %v2060, 1
        %v2063 = vsel %vm1891, %v2058, %v2062
        %v2064 = vshrl.u32 %v1890, 16
        %v2066 = vor.u32 %v2064, %v2062
        %v2105 = vunpack.c.l.b16 %v1765
        %v2106 = vunpack.c.l.b16 %v1766
        %v2107 = vunpack.c.l.b16 %v1767
        %v2108 = vunpack.c.l.b16 %v1768
        %v2109 = vunpack.c.l.b16 %v1769
        %v2110 = vunpack.c.l.b16 %v1770
        %v2111 = vunpack.c.l.b16 %v1771
        %v2112 = vunpack.c.l.b16 %v1772
        %v2113 = vunpack.c.l.b16 %v1773
        %v2114 = vunpack.c.l.b16 %v1774
        %v2115 = vunpack.c.l.b16 %v1775
        %v2116 = vunpack.c.l.b16 %v1776
        %v2117 = vunpack.c.l.b16 %v1777
        %v2118 = vunpack.c.l.b16 %v1778
        %v2119 = vunpack.c.l.b16 %v1779
        %v2120 = vunpack.c.l.b16 %v1780
        %v2121 = vpack.c.b16 %v2106, %v2105
        %v2122 = vpack.c.b16 %v2108, %v2107
        %v2123 = vpack.c.b16 %v2110, %v2109
        %v2124 = vpack.c.b16 %v2112, %v2111
        %v2125 = vpack.c.b16 %v2114, %v2113
        %v2126 = vpack.c.b16 %v2116, %v2115
        %v2127 = vpack.c.b16 %v2118, %v2117
        %v2128 = vpack.c.b16 %v2120, %v2119
        %2137 = vmatpush.bf16.msra.mxu0 %v2128
        %2138 = vmatpush.bf16.msra.mxu0 %v2127
        %2139 = vmatpush.bf16.msra.mxu0 %v2126
        %2140 = vmatpush.bf16.msra.mxu0 %v2125
        %2141 = vmatpush.bf16.msra.mxu0 %v2124
        %2142 = vmatpush.bf16.msra.mxu0 %v2123
        %2143 = vmatpush.bf16.msra.mxu0 %v2122
        %2144 = vmatpush.bf16.msra.mxu0 %v2121
        %2145 = vmatmul.bf16.gmra.mxu0 %v1903
        %v2146 = vpop.f32.mrf.mxu0
        %v2147 = vadd.f32 0.0, %v2146
        %v2148 = vpop.f32.mrf.mxu0
        %v2149 = vadd.f32 0.0, %v2148
        %2150 = vmatmul.bf16.gmra.mxu0 %v1911
        %v2151 = vpop.f32.mrf.mxu0
        %v2152 = vadd.f32 0.0, %v2151
        %v2153 = vpop.f32.mrf.mxu0
        %v2154 = vadd.f32 0.0, %v2153
        %2155 = vmatmul.bf16.gmra.mxu0 %v1919
        %v2156 = vpop.f32.mrf.mxu0
        %v2157 = vadd.f32 0.0, %v2156
        %v2158 = vpop.f32.mrf.mxu0
        %v2159 = vadd.f32 0.0, %v2158
        %2160 = vmatmul.bf16.gmra.mxu0 %v1927
        %v2161 = vpop.f32.mrf.mxu0
        %v2162 = vadd.f32 0.0, %v2161
        %v2163 = vpop.f32.mrf.mxu0
        %v2164 = vadd.f32 0.0, %v2163
        %2165 = vmatmul.bf16.gmra.mxu0 %v1935
        %v2166 = vpop.f32.mrf.mxu0
        %v2167 = vadd.f32 0.0, %v2166
        %v2168 = vpop.f32.mrf.mxu0
        %v2169 = vadd.f32 0.0, %v2168
        %2170 = vmatmul.bf16.gmra.mxu0 %v1943
        %v2171 = vpop.f32.mrf.mxu0
        %v2172 = vadd.f32 0.0, %v2171
        %v2173 = vpop.f32.mrf.mxu0
        %v2174 = vadd.f32 0.0, %v2173
        %2175 = vmatmul.bf16.gmra.mxu0 %v1951
        %v2176 = vpop.f32.mrf.mxu0
        %v2177 = vadd.f32 0.0, %v2176
        %v2178 = vpop.f32.mrf.mxu0
        %v2179 = vadd.f32 0.0, %v2178
        %2180 = vmatmul.bf16.gmra.mxu0 %v1959
        %v2181 = vpop.f32.mrf.mxu0
        %v2182 = vadd.f32 0.0, %v2181
        %v2183 = vpop.f32.mrf.mxu0
        %v2184 = vadd.f32 0.0, %v2183
        %2185 = vmatmul.bf16.gmra.mxu0 %v1967
        %v2186 = vpop.f32.mrf.mxu0
        %v2187 = vadd.f32 0.0, %v2186
        %v2188 = vpop.f32.mrf.mxu0
        %v2189 = vadd.f32 0.0, %v2188
        %2190 = vmatmul.bf16.gmra.mxu0 %v1975
        %v2191 = vpop.f32.mrf.mxu0
        %v2192 = vadd.f32 0.0, %v2191
        %v2193 = vpop.f32.mrf.mxu0
        %v2194 = vadd.f32 0.0, %v2193
        %2195 = vmatmul.bf16.gmra.mxu0 %v1983
        %v2196 = vpop.f32.mrf.mxu0
        %v2197 = vadd.f32 0.0, %v2196
        %v2198 = vpop.f32.mrf.mxu0
        %v2199 = vadd.f32 0.0, %v2198
        %2200 = vmatmul.bf16.gmra.mxu0 %v1991
        %v2201 = vpop.f32.mrf.mxu0
        %v2202 = vadd.f32 0.0, %v2201
        %v2203 = vpop.f32.mrf.mxu0
        %v2204 = vadd.f32 0.0, %v2203
        %2205 = vmatmul.bf16.gmra.mxu0 %v1999
        %v2206 = vpop.f32.mrf.mxu0
        %v2207 = vadd.f32 0.0, %v2206
        %v2208 = vpop.f32.mrf.mxu0
        %v2209 = vadd.f32 0.0, %v2208
        %2210 = vmatmul.bf16.gmra.mxu0 %v2007
        %v2211 = vpop.f32.mrf.mxu0
        %v2212 = vadd.f32 0.0, %v2211
        %v2213 = vpop.f32.mrf.mxu0
        %v2214 = vadd.f32 0.0, %v2213
        %2215 = vmatmul.bf16.gmra.mxu0 %v2015
        %v2216 = vpop.f32.mrf.mxu0
        %v2217 = vadd.f32 0.0, %v2216
        %v2218 = vpop.f32.mrf.mxu0
        %v2219 = vadd.f32 0.0, %v2218
        %2220 = vmatmul.bf16.gmra.mxu0 %v2023
        %v2221 = vpop.f32.mrf.mxu0
        %v2222 = vadd.f32 0.0, %v2221
        %v2223 = vpop.f32.mrf.mxu0
        %v2224 = vadd.f32 0.0, %v2223
        %2225 = vmatmul.bf16.gmra.mxu0 %v2031
        %v2226 = vpop.f32.mrf.mxu0
        %v2227 = vadd.f32 0.0, %v2226
        %v2228 = vpop.f32.mrf.mxu0
        %v2229 = vadd.f32 0.0, %v2228
        %2230 = vmatmul.bf16.gmra.mxu0 %v2039
        %v2231 = vpop.f32.mrf.mxu0
        %v2232 = vadd.f32 0.0, %v2231
        %v2233 = vpop.f32.mrf.mxu0
        %v2234 = vadd.f32 0.0, %v2233
        %2235 = vmatmul.bf16.gmra.mxu0 %v2047
        %v2236 = vpop.f32.mrf.mxu0
        %v2237 = vadd.f32 0.0, %v2236
        %v2238 = vpop.f32.mrf.mxu0
        %v2239 = vadd.f32 0.0, %v2238
        %2240 = vmatmul.bf16.gmra.mxu0 %v2055
        %v2241 = vpop.f32.mrf.mxu0
        %v2242 = vadd.f32 0.0, %v2241
        %v2243 = vpop.f32.mrf.mxu0
        %v2244 = vadd.f32 0.0, %v2243
        %2245 = vmatmul.bf16.gmra.mxu0 %v2063
        %v2246 = vpop.f32.mrf.mxu0
        %v2247 = vadd.f32 0.0, %v2246
        %v2248 = vpop.f32.mrf.mxu0
        %v2249 = vadd.f32 0.0, %v2248
        %2250 = vmatmul.bf16.gmra.mxu0 %v2066
        %v2251 = vpop.f32.mrf.mxu0
        %v2252 = vadd.f32 0.0, %v2251
        %v2253 = vpop.f32.mrf.mxu0
        %2254 = vdwg.mxu0
        %v2255 = vadd.f32 %v1612, %v2147
        %v2256 = vadd.f32 %v1614, %v2149
        %v2257 = vadd.f32 %v1617, %v2152
        %v2258 = vadd.f32 %v1619, %v2154
        %v2259 = vadd.f32 %v1622, %v2157
        %v2260 = vadd.f32 %v1624, %v2159
        %v2261 = vadd.f32 %v1627, %v2162
        %v2262 = vadd.f32 %v1629, %v2164
        %v2263 = vadd.f32 %v1632, %v2167
        %v2264 = vadd.f32 %v1634, %v2169
        %v2265 = vadd.f32 %v1637, %v2172
        %v2266 = vadd.f32 %v1639, %v2174
        %v2267 = vadd.f32 %v1642, %v2177
        %v2268 = vadd.f32 %v1644, %v2179
        %v2269 = vadd.f32 %v1647, %v2182
        %v2270 = vadd.f32 %v1649, %v2184
        %v2271 = vadd.f32 %v1652, %v2187
        %v2272 = vadd.f32 %v1654, %v2189
        %v2273 = vadd.f32 %v1657, %v2192
        %v2274 = vadd.f32 %v1659, %v2194
        %v2275 = vadd.f32 %v1662, %v2197
        %v2276 = vadd.f32 %v1664, %v2199
        %v2277 = vadd.f32 %v1667, %v2202
        %v2278 = vadd.f32 %v1669, %v2204
        %v2279 = vadd.f32 %v1672, %v2207
        %v2280 = vadd.f32 %v1674, %v2209
        %v2281 = vadd.f32 %v1677, %v2212
        %v2282 = vadd.f32 %v1679, %v2214
        %v2283 = vadd.f32 %v1682, %v2217
        %v2284 = vadd.f32 %v1684, %v2219
        %v2285 = vadd.f32 %v1687, %v2222
        %v2286 = vadd.f32 %v1689, %v2224
        %v2287 = vadd.f32 %v1692, %v2227
        %v2288 = vadd.f32 %v1694, %v2229
        %v2289 = vadd.f32 %v1697, %v2232
        %v2290 = vadd.f32 %v1699, %v2234
        %v2291 = vadd.f32 %v1702, %v2237
        %v2292 = vadd.f32 %v1704, %v2239
        %v2293 = vadd.f32 %v1707, %v2242
        %v2294 = vadd.f32 %v1709, %v2244
        %v2295 = vadd.f32 %v1712, %v2247
        %v2296 = vadd.f32 %v1714, %v2249
        %v2297 = vadd.f32 %v1717, %v2252
        %v2298 = vld [vmem:[#allocation2 + $0x1c] sm:$0x8]
        %v2299 = vld [vmem:[#allocation2 + $0x20] sm:$0xf]
        %v2300 = vld [vmem:[#allocation2 + $0x24] sm:$0xf]
        %v2301 = vld [vmem:[#allocation2 + $0x28] sm:$0xf]
        %v2302 = vld [vmem:[#allocation2 + $0x2c] sm:$0xf]
        %v2303 = vld [vmem:[#allocation2 + $0x30] sm:$0xf]
        %v2304 = vld [vmem:[#allocation2 + $0x34] sm:$0xf]
        %v2305 = vld [vmem:[#allocation2 + $0x38] sm:$0xf]
        %v2306 = vld [vmem:[#allocation2 + $0x3c] sm:$0xf]
        %v2307 = vld [vmem:[#allocation2 + $0x40] sm:$0xf]
        %v2308 = vld [vmem:[#allocation2 + $0x44] sm:$0xf]
        %v2309 = vld [vmem:[#allocation2 + $0x48] sm:$0xf]
        %v2310 = vld [vmem:[#allocation2 + $0x4c] sm:$0xf]
        %v2311 = vld [vmem:[#allocation2 + $0x50] sm:$0xf]
        %v2312 = vld [vmem:[#allocation2 + $0x54] sm:$0xf]
        %v2313 = vld [vmem:[#allocation2 + $0x58] sm:$0xf]
        %v2314 = vld [vmem:[#allocation2 + $0x5c] sm:$0xf]
        %v2315 = vld [vmem:[#allocation2 + $0x60] sm:$0xf]
        %v2316 = vld [vmem:[#allocation2 + $0x64] sm:$0xf]
        %v2317 = vld [vmem:[#allocation2 + $0x68] sm:$0xf]
        %v2318 = vld [vmem:[#allocation2 + $0x6c] sm:$0xf]
        %v2319 = vld [vmem:[#allocation2 + $0x70] sm:$0xf]
        %v2320 = vld [vmem:[#allocation2 + $0x74] sm:$0xf]
        %v2321 = vld [vmem:[#allocation2 + $0x78] sm:$0xf]
        %v2322 = vld [vmem:[#allocation2 + $0x7c] sm:$0xf]
        %v2323 = vld [vmem:[#allocation2 + $0x80] sm:$0xf]
        %v2324 = vld [vmem:[#allocation2 + $0x84] sm:$0xf]
        %v2325 = vld [vmem:[#allocation2 + $0x88] sm:$0xf]
        %v2326 = vld [vmem:[#allocation2 + $0x8c] sm:$0xf]
        %v2327 = vld [vmem:[#allocation2 + $0x90] sm:$0xf]
        %v2328 = vld [vmem:[#allocation2 + $0x94] sm:$0xf]
        %v2329 = vld [vmem:[#allocation2 + $0x98] sm:$0xf]
        %v2330 = vld [vmem:[#allocation2 + $0x9c] sm:$0xf]
        %v2331 = vld [vmem:[#allocation2 + $0xa0] sm:$0xf]
        %v2332 = vld [vmem:[#allocation2 + $0xa4] sm:$0xf]
        %v2333 = vld [vmem:[#allocation2 + $0xa8] sm:$0xf]
        %v2334 = vld [vmem:[#allocation2 + $0xac] sm:$0xf]
        %v2335 = vld [vmem:[#allocation2 + $0xb0] sm:$0xf]
        %v2336 = vld [vmem:[#allocation2 + $0xb4] sm:$0xf]
        %v2337 = vld [vmem:[#allocation2 + $0xb8] sm:$0xf]
        %v2338 = vld [vmem:[#allocation2 + $0xbc] sm:$0xf]
        %v2339 = vld [vmem:[#allocation2 + $0xc0] sm:$0xf]
        %v2340 = vld [vmem:[#allocation2 + $0xc4] sm:$0xf]
        %v2341 = vld [vmem:[#allocation2 + $0xc8] sm:$0xf]
        %s2342 = scalar_lea.vmem [#allocation3], 192
        %v2343 = vld [vmem:[%s2342] sm:$0xf]
        %v2344 = vld [vmem:[%s2342 + $0x4] sm:$0xf]
        %v2345 = vld [vmem:[%s2342 + $0x8] sm:$0xf]
        %v2346 = vld [vmem:[%s2342 + $0xc] sm:$0xf]
        %v2347 = vld [vmem:[%s2342 + $0x10] sm:$0xf]
        %v2348 = vld [vmem:[%s2342 + $0x14] sm:$0xf]
        %v2349 = vld [vmem:[%s2342 + $0x18] sm:$0xf]
        %v2350 = vld [vmem:[%s2342 + $0x1c] sm:$0xf]
        %v2351 = vld [vmem:[%s2342 + $0x20] sm:$0xf]
        %v2352 = vld [vmem:[%s2342 + $0x24] sm:$0xf]
        %v2353 = vld [vmem:[%s2342 + $0x28] sm:$0xf]
        %v2354 = vld [vmem:[%s2342 + $0x2c] sm:$0xf]
        %v2355 = vld [vmem:[%s2342 + $0x30] sm:$0xf]
        %v2356 = vld [vmem:[%s2342 + $0x34] sm:$0xf]
        %v2357 = vld [vmem:[%s2342 + $0x38] sm:$0xf]
        %v2358 = vld [vmem:[%s2342 + $0x3c] sm:$0xf]
        %v2403 = vunpack.c.l.b16 %v2298
        %v2404 = vunpack.c.l.b16 %v2299
        %v2405 = vunpack.c.l.b16 %v2300
        %v2406 = vunpack.c.l.b16 %v2301
        %v2407 = vunpack.c.l.b16 %v2302
        %v2408 = vunpack.c.l.b16 %v2303
        %v2409 = vunpack.c.l.b16 %v2304
        %v2410 = vunpack.c.l.b16 %v2305
        %v2411 = vunpack.c.l.b16 %v2306
        %v2412 = vunpack.c.l.b16 %v2307
        %v2413 = vunpack.c.l.b16 %v2308
        %v2414 = vunpack.c.l.b16 %v2309
        %v2415 = vunpack.c.l.b16 %v2310
        %v2416 = vunpack.c.l.b16 %v2311
        %v2417 = vunpack.c.l.b16 %v2312
        %v2418 = vunpack.c.l.b16 %v2313
        %v2419 = vunpack.c.l.b16 %v2314
        %v2420 = vunpack.c.l.b16 %v2315
        %v2421 = vunpack.c.l.b16 %v2316
        %v2422 = vunpack.c.l.b16 %v2317
        %v2423 = vunpack.c.l.b16 %v2318
        %v2424 = vunpack.c.l.b16 %v2319
        %v2425 = vunpack.c.l.b16 %v2320
        %v2426 = vunpack.c.l.b16 %v2321
        %v2427 = vunpack.c.l.b16 %v2322
        %v2428 = vunpack.c.l.b16 %v2323
        %v2429 = vunpack.c.l.b16 %v2324
        %v2430 = vunpack.c.l.b16 %v2325
        %v2431 = vunpack.c.l.b16 %v2326
        %v2432 = vunpack.c.l.b16 %v2327
        %v2433 = vunpack.c.l.b16 %v2328
        %v2434 = vunpack.c.l.b16 %v2329
        %v2435 = vunpack.c.l.b16 %v2330
        %v2436 = vunpack.c.l.b16 %v2331
        %v2437 = vunpack.c.l.b16 %v2332
        %v2438 = vunpack.c.l.b16 %v2333
        %v2439 = vunpack.c.l.b16 %v2334
        %v2440 = vunpack.c.l.b16 %v2335
        %v2441 = vunpack.c.l.b16 %v2336
        %v2442 = vunpack.c.l.b16 %v2337
        %v2443 = vunpack.c.l.b16 %v2338
        %v2444 = vunpack.c.l.b16 %v2339
        %v2445 = vunpack.c.l.b16 %v2340
        %v2446 = vunpack.c.l.b16 %v2341
        %v2447 = vpack.c.b16 %v2404, %v2403
        %v2448 = vpack.c.b16 %v2406, %v2405
        %v2449 = vpack.c.b16 %v2408, %v2407
        %v2450 = vpack.c.b16 %v2410, %v2409
        %v2451 = vpack.c.b16 %v2412, %v2411
        %v2452 = vpack.c.b16 %v2414, %v2413
        %v2453 = vpack.c.b16 %v2416, %v2415
        %v2454 = vpack.c.b16 %v2418, %v2417
        %v2455 = vpack.c.b16 %v2420, %v2419
        %v2456 = vpack.c.b16 %v2422, %v2421
        %v2457 = vpack.c.b16 %v2424, %v2423
        %v2458 = vpack.c.b16 %v2426, %v2425
        %v2459 = vpack.c.b16 %v2428, %v2427
        %v2460 = vpack.c.b16 %v2430, %v2429
        %v2461 = vpack.c.b16 %v2432, %v2431
        %v2462 = vpack.c.b16 %v2434, %v2433
        %v2463 = vpack.c.b16 %v2436, %v2435
        %v2464 = vpack.c.b16 %v2438, %v2437
        %v2465 = vpack.c.b16 %v2440, %v2439
        %v2466 = vpack.c.b16 %v2442, %v2441
        %v2467 = vpack.c.b16 %v2444, %v2443
        %v2468 = vpack.c.b16 %v2446, %v2445
        %v2470 = vshrl.u32 %v2447, 16
        %v2472 = vrot.slane %v2470, 3
        %v2473 = vshll.u32 %v2447, 16
        %v2475 = vrot.slane %v2473, 4
        %v2476 = vor.u32 %v2472, %v2475
        %v2478 = vshrl.u32 %v2448, 16
        %v2480 = vrot.slane %v2478, 3
        %v2481 = vshll.u32 %v2448, 16
        %v2483 = vrot.slane %v2481, 4
        %v2484 = vor.u32 %v2480, %v2483
        %v2485 = vsel %vm1334, %v2476, %v2484
        %v2487 = vshrl.u32 %v2449, 16
        %v2489 = vrot.slane %v2487, 3
        %v2490 = vshll.u32 %v2449, 16
        %v2492 = vrot.slane %v2490, 4
        %v2493 = vor.u32 %v2489, %v2492
        %v2494 = vsel %vm1334, %v2484, %v2493
        %v2496 = vshrl.u32 %v2450, 16
        %v2498 = vrot.slane %v2496, 3
        %v2499 = vshll.u32 %v2450, 16
        %v2501 = vrot.slane %v2499, 4
        %v2502 = vor.u32 %v2498, %v2501
        %v2503 = vsel %vm1334, %v2493, %v2502
        %v2505 = vshrl.u32 %v2451, 16
        %v2507 = vrot.slane %v2505, 3
        %v2508 = vshll.u32 %v2451, 16
        %v2510 = vrot.slane %v2508, 4
        %v2511 = vor.u32 %v2507, %v2510
        %v2512 = vsel %vm1334, %v2502, %v2511
        %v2514 = vshrl.u32 %v2452, 16
        %v2516 = vrot.slane %v2514, 3
        %v2517 = vshll.u32 %v2452, 16
        %v2519 = vrot.slane %v2517, 4
        %v2520 = vor.u32 %v2516, %v2519
        %v2521 = vsel %vm1334, %v2511, %v2520
        %v2523 = vshrl.u32 %v2453, 16
        %v2525 = vrot.slane %v2523, 3
        %v2526 = vshll.u32 %v2453, 16
        %v2528 = vrot.slane %v2526, 4
        %v2529 = vor.u32 %v2525, %v2528
        %v2530 = vsel %vm1334, %v2520, %v2529
        %v2532 = vshrl.u32 %v2454, 16
        %v2534 = vrot.slane %v2532, 3
        %v2535 = vshll.u32 %v2454, 16
        %v2537 = vrot.slane %v2535, 4
        %v2538 = vor.u32 %v2534, %v2537
        %v2539 = vsel %vm1334, %v2529, %v2538
        %v2541 = vshrl.u32 %v2455, 16
        %v2543 = vrot.slane %v2541, 3
        %v2544 = vshll.u32 %v2455, 16
        %v2546 = vrot.slane %v2544, 4
        %v2547 = vor.u32 %v2543, %v2546
        %v2548 = vsel %vm1334, %v2538, %v2547
        %v2550 = vshrl.u32 %v2456, 16
        %v2552 = vrot.slane %v2550, 3
        %v2553 = vshll.u32 %v2456, 16
        %v2555 = vrot.slane %v2553, 4
        %v2556 = vor.u32 %v2552, %v2555
        %v2557 = vsel %vm1334, %v2547, %v2556
        %v2559 = vshrl.u32 %v2457, 16
        %v2561 = vrot.slane %v2559, 3
        %v2562 = vshll.u32 %v2457, 16
        %v2564 = vrot.slane %v2562, 4
        %v2565 = vor.u32 %v2561, %v2564
        %v2566 = vsel %vm1334, %v2556, %v2565
        %v2568 = vshrl.u32 %v2458, 16
        %v2570 = vrot.slane %v2568, 3
        %v2571 = vshll.u32 %v2458, 16
        %v2573 = vrot.slane %v2571, 4
        %v2574 = vor.u32 %v2570, %v2573
        %v2575 = vsel %vm1334, %v2565, %v2574
        %v2577 = vshrl.u32 %v2459, 16
        %v2579 = vrot.slane %v2577, 3
        %v2580 = vshll.u32 %v2459, 16
        %v2582 = vrot.slane %v2580, 4
        %v2583 = vor.u32 %v2579, %v2582
        %v2584 = vsel %vm1334, %v2574, %v2583
        %v2586 = vshrl.u32 %v2460, 16
        %v2588 = vrot.slane %v2586, 3
        %v2589 = vshll.u32 %v2460, 16
        %v2591 = vrot.slane %v2589, 4
        %v2592 = vor.u32 %v2588, %v2591
        %v2593 = vsel %vm1334, %v2583, %v2592
        %v2595 = vshrl.u32 %v2461, 16
        %v2597 = vrot.slane %v2595, 3
        %v2598 = vshll.u32 %v2461, 16
        %v2600 = vrot.slane %v2598, 4
        %v2601 = vor.u32 %v2597, %v2600
        %v2602 = vsel %vm1334, %v2592, %v2601
        %v2604 = vshrl.u32 %v2462, 16
        %v2606 = vrot.slane %v2604, 3
        %v2607 = vshll.u32 %v2462, 16
        %v2609 = vrot.slane %v2607, 4
        %v2610 = vor.u32 %v2606, %v2609
        %v2611 = vsel %vm1334, %v2601, %v2610
        %v2613 = vshrl.u32 %v2463, 16
        %v2615 = vrot.slane %v2613, 3
        %v2616 = vshll.u32 %v2463, 16
        %v2618 = vrot.slane %v2616, 4
        %v2619 = vor.u32 %v2615, %v2618
        %v2620 = vsel %vm1334, %v2610, %v2619
        %v2622 = vshrl.u32 %v2464, 16
        %v2624 = vrot.slane %v2622, 3
        %v2625 = vshll.u32 %v2464, 16
        %v2627 = vrot.slane %v2625, 4
        %v2628 = vor.u32 %v2624, %v2627
        %v2629 = vsel %vm1334, %v2619, %v2628
        %v2631 = vshrl.u32 %v2465, 16
        %v2633 = vrot.slane %v2631, 3
        %v2634 = vshll.u32 %v2465, 16
        %v2636 = vrot.slane %v2634, 4
        %v2637 = vor.u32 %v2633, %v2636
        %v2638 = vsel %vm1334, %v2628, %v2637
        %v2640 = vshrl.u32 %v2466, 16
        %v2642 = vrot.slane %v2640, 3
        %v2643 = vshll.u32 %v2466, 16
        %v2645 = vrot.slane %v2643, 4
        %v2646 = vor.u32 %v2642, %v2645
        %v2647 = vsel %vm1334, %v2637, %v2646
        %v2649 = vshrl.u32 %v2467, 16
        %v2651 = vrot.slane %v2649, 3
        %v2652 = vshll.u32 %v2467, 16
        %v2654 = vrot.slane %v2652, 4
        %v2655 = vor.u32 %v2651, %v2654
        %v2656 = vsel %vm1334, %v2646, %v2655
        %v2658 = vshrl.u32 %v2468, 16
        %v2660 = vrot.slane %v2658, 3
        %v2661 = vshll.u32 %v2468, 16
        %v2663 = vrot.slane %v2661, 4
        %v2664 = vor.u32 %v2660, %v2663
        %v2665 = vsel %vm1334, %v2655, %v2664
        %v2704 = vunpack.c.l.b16 %v2343
        %v2705 = vunpack.c.l.b16 %v2344
        %v2706 = vunpack.c.l.b16 %v2345
        %v2707 = vunpack.c.l.b16 %v2346
        %v2708 = vunpack.c.l.b16 %v2347
        %v2709 = vunpack.c.l.b16 %v2348
        %v2710 = vunpack.c.l.b16 %v2349
        %v2711 = vunpack.c.l.b16 %v2350
        %v2712 = vunpack.c.l.b16 %v2351
        %v2713 = vunpack.c.l.b16 %v2352
        %v2714 = vunpack.c.l.b16 %v2353
        %v2715 = vunpack.c.l.b16 %v2354
        %v2716 = vunpack.c.l.b16 %v2355
        %v2717 = vunpack.c.l.b16 %v2356
        %v2718 = vunpack.c.l.b16 %v2357
        %v2719 = vunpack.c.l.b16 %v2358
        %v2720 = vpack.c.b16 %v2705, %v2704
        %v2721 = vpack.c.b16 %v2707, %v2706
        %v2722 = vpack.c.b16 %v2709, %v2708
        %v2723 = vpack.c.b16 %v2711, %v2710
        %v2724 = vpack.c.b16 %v2713, %v2712
        %v2725 = vpack.c.b16 %v2715, %v2714
        %v2726 = vpack.c.b16 %v2717, %v2716
        %v2727 = vpack.c.b16 %v2719, %v2718
        %2736 = vmatpush.bf16.msra.mxu0 %v2727
        %2737 = vmatpush.bf16.msra.mxu0 %v2726
        %2738 = vmatpush.bf16.msra.mxu0 %v2725
        %2739 = vmatpush.bf16.msra.mxu0 %v2724
        %2740 = vmatpush.bf16.msra.mxu0 %v2723
        %2741 = vmatpush.bf16.msra.mxu0 %v2722
        %2742 = vmatpush.bf16.msra.mxu0 %v2721
        %2743 = vmatpush.bf16.msra.mxu0 %v2720
        %2744 = vmatmul.bf16.gmra.mxu0 %v2485
        %v2745 = vpop.f32.mrf.mxu0
        %v2746 = vadd.f32 0.0, %v2745
        %v2747 = vpop.f32.mrf.mxu0
        %v2748 = vadd.f32 0.0, %v2747
        %2749 = vmatmul.bf16.gmra.mxu0 %v2494
        %v2750 = vpop.f32.mrf.mxu0
        %v2751 = vadd.f32 0.0, %v2750
        %v2752 = vpop.f32.mrf.mxu0
        %v2753 = vadd.f32 0.0, %v2752
        %2754 = vmatmul.bf16.gmra.mxu0 %v2503
        %v2755 = vpop.f32.mrf.mxu0
        %v2756 = vadd.f32 0.0, %v2755
        %v2757 = vpop.f32.mrf.mxu0
        %v2758 = vadd.f32 0.0, %v2757
        %2759 = vmatmul.bf16.gmra.mxu0 %v2512
        %v2760 = vpop.f32.mrf.mxu0
        %v2761 = vadd.f32 0.0, %v2760
        %v2762 = vpop.f32.mrf.mxu0
        %v2763 = vadd.f32 0.0, %v2762
        %2764 = vmatmul.bf16.gmra.mxu0 %v2521
        %v2765 = vpop.f32.mrf.mxu0
        %v2766 = vadd.f32 0.0, %v2765
        %v2767 = vpop.f32.mrf.mxu0
        %v2768 = vadd.f32 0.0, %v2767
        %2769 = vmatmul.bf16.gmra.mxu0 %v2530
        %v2770 = vpop.f32.mrf.mxu0
        %v2771 = vadd.f32 0.0, %v2770
        %v2772 = vpop.f32.mrf.mxu0
        %v2773 = vadd.f32 0.0, %v2772
        %2774 = vmatmul.bf16.gmra.mxu0 %v2539
        %v2775 = vpop.f32.mrf.mxu0
        %v2776 = vadd.f32 0.0, %v2775
        %v2777 = vpop.f32.mrf.mxu0
        %v2778 = vadd.f32 0.0, %v2777
        %2779 = vmatmul.bf16.gmra.mxu0 %v2548
        %v2780 = vpop.f32.mrf.mxu0
        %v2781 = vadd.f32 0.0, %v2780
        %v2782 = vpop.f32.mrf.mxu0
        %v2783 = vadd.f32 0.0, %v2782
        %2784 = vmatmul.bf16.gmra.mxu0 %v2557
        %v2785 = vpop.f32.mrf.mxu0
        %v2786 = vadd.f32 0.0, %v2785
        %v2787 = vpop.f32.mrf.mxu0
        %v2788 = vadd.f32 0.0, %v2787
        %2789 = vmatmul.bf16.gmra.mxu0 %v2566
        %v2790 = vpop.f32.mrf.mxu0
        %v2791 = vadd.f32 0.0, %v2790
        %v2792 = vpop.f32.mrf.mxu0
        %v2793 = vadd.f32 0.0, %v2792
        %2794 = vmatmul.bf16.gmra.mxu0 %v2575
        %v2795 = vpop.f32.mrf.mxu0
        %v2796 = vadd.f32 0.0, %v2795
        %v2797 = vpop.f32.mrf.mxu0
        %v2798 = vadd.f32 0.0, %v2797
        %2799 = vmatmul.bf16.gmra.mxu0 %v2584
        %v2800 = vpop.f32.mrf.mxu0
        %v2801 = vadd.f32 0.0, %v2800
        %v2802 = vpop.f32.mrf.mxu0
        %v2803 = vadd.f32 0.0, %v2802
        %2804 = vmatmul.bf16.gmra.mxu0 %v2593
        %v2805 = vpop.f32.mrf.mxu0
        %v2806 = vadd.f32 0.0, %v2805
        %v2807 = vpop.f32.mrf.mxu0
        %v2808 = vadd.f32 0.0, %v2807
        %2809 = vmatmul.bf16.gmra.mxu0 %v2602
        %v2810 = vpop.f32.mrf.mxu0
        %v2811 = vadd.f32 0.0, %v2810
        %v2812 = vpop.f32.mrf.mxu0
        %v2813 = vadd.f32 0.0, %v2812
        %2814 = vmatmul.bf16.gmra.mxu0 %v2611
        %v2815 = vpop.f32.mrf.mxu0
        %v2816 = vadd.f32 0.0, %v2815
        %v2817 = vpop.f32.mrf.mxu0
        %v2818 = vadd.f32 0.0, %v2817
        %2819 = vmatmul.bf16.gmra.mxu0 %v2620
        %v2820 = vpop.f32.mrf.mxu0
        %v2821 = vadd.f32 0.0, %v2820
        %v2822 = vpop.f32.mrf.mxu0
        %v2823 = vadd.f32 0.0, %v2822
        %2824 = vmatmul.bf16.gmra.mxu0 %v2629
        %v2825 = vpop.f32.mrf.mxu0
        %v2826 = vadd.f32 0.0, %v2825
        %v2827 = vpop.f32.mrf.mxu0
        %v2828 = vadd.f32 0.0, %v2827
        %2829 = vmatmul.bf16.gmra.mxu0 %v2638
        %v2830 = vpop.f32.mrf.mxu0
        %v2831 = vadd.f32 0.0, %v2830
        %v2832 = vpop.f32.mrf.mxu0
        %v2833 = vadd.f32 0.0, %v2832
        %2834 = vmatmul.bf16.gmra.mxu0 %v2647
        %v2835 = vpop.f32.mrf.mxu0
        %v2836 = vadd.f32 0.0, %v2835
        %v2837 = vpop.f32.mrf.mxu0
        %v2838 = vadd.f32 0.0, %v2837
        %2839 = vmatmul.bf16.gmra.mxu0 %v2656
        %v2840 = vpop.f32.mrf.mxu0
        %v2841 = vadd.f32 0.0, %v2840
        %v2842 = vpop.f32.mrf.mxu0
        %v2843 = vadd.f32 0.0, %v2842
        %2844 = vmatmul.bf16.gmra.mxu0 %v2665
        %v2845 = vpop.f32.mrf.mxu0
        %v2846 = vadd.f32 0.0, %v2845
        %v2847 = vpop.f32.mrf.mxu0
        %v2848 = vadd.f32 0.0, %v2847
        %2849 = vmatmul.bf16.gmra.mxu0 %v2664
        %v2850 = vpop.f32.mrf.mxu0
        %v2851 = vadd.f32 0.0, %v2850
        %v2852 = vpop.f32.mrf.mxu0
        %2853 = vdwg.mxu0
        %v2854 = vadd.f32 %v2255, %v2746
        %v2855 = vadd.f32 %v2256, %v2748
        %v2856 = vadd.f32 %v2257, %v2751
        %v2857 = vadd.f32 %v2258, %v2753
        %v2858 = vadd.f32 %v2259, %v2756
        %v2859 = vadd.f32 %v2260, %v2758
        %v2860 = vadd.f32 %v2261, %v2761
        %v2861 = vadd.f32 %v2262, %v2763
        %v2862 = vadd.f32 %v2263, %v2766
        %v2863 = vadd.f32 %v2264, %v2768
        %v2864 = vadd.f32 %v2265, %v2771
        %v2865 = vadd.f32 %v2266, %v2773
        %v2866 = vadd.f32 %v2267, %v2776
        %v2867 = vadd.f32 %v2268, %v2778
        %v2868 = vadd.f32 %v2269, %v2781
        %v2869 = vadd.f32 %v2270, %v2783
        %v2870 = vadd.f32 %v2271, %v2786
        %v2871 = vadd.f32 %v2272, %v2788
        %v2872 = vadd.f32 %v2273, %v2791
        %v2873 = vadd.f32 %v2274, %v2793
        %v2874 = vadd.f32 %v2275, %v2796
        %v2875 = vadd.f32 %v2276, %v2798
        %v2876 = vadd.f32 %v2277, %v2801
        %v2877 = vadd.f32 %v2278, %v2803
        %v2878 = vadd.f32 %v2279, %v2806
        %v2879 = vadd.f32 %v2280, %v2808
        %v2880 = vadd.f32 %v2281, %v2811
        %v2881 = vadd.f32 %v2282, %v2813
        %v2882 = vadd.f32 %v2283, %v2816
        %v2883 = vadd.f32 %v2284, %v2818
        %v2884 = vadd.f32 %v2285, %v2821
        %v2885 = vadd.f32 %v2286, %v2823
        %v2886 = vadd.f32 %v2287, %v2826
        %v2887 = vadd.f32 %v2288, %v2828
        %v2888 = vadd.f32 %v2289, %v2831
        %v2889 = vadd.f32 %v2290, %v2833
        %v2890 = vadd.f32 %v2291, %v2836
        %v2891 = vadd.f32 %v2292, %v2838
        %v2892 = vadd.f32 %v2293, %v2841
        %v2893 = vadd.f32 %v2294, %v2843
        %v2894 = vadd.f32 %v2295, %v2846
        %v2895 = vadd.f32 %v2296, %v2848
        %v2896 = vadd.f32 %v2297, %v2851
        %s2897 = scalar_lea.vmem [#allocation3], 256
        %v2898 = vld [vmem:[%s2897] sm:$0xf]
        %v2899 = vld [vmem:[%s2897 + $0x4] sm:$0xf]
        %v2900 = vld [vmem:[%s2897 + $0x8] sm:$0xf]
        %v2901 = vld [vmem:[%s2897 + $0xc] sm:$0xf]
        %v2902 = vld [vmem:[%s2897 + $0x10] sm:$0xf]
        %v2903 = vld [vmem:[%s2897 + $0x14] sm:$0xf]
        %v2904 = vld [vmem:[%s2897 + $0x18] sm:$0xf]
        %v2905 = vld [vmem:[%s2897 + $0x1c] sm:$0xf]
        %v2906 = vld [vmem:[%s2897 + $0x20] sm:$0xf]
        %v2907 = vld [vmem:[%s2897 + $0x24] sm:$0xf]
        %v2908 = vld [vmem:[%s2897 + $0x28] sm:$0xf]
        %v2909 = vld [vmem:[%s2897 + $0x2c] sm:$0xf]
        %v2910 = vld [vmem:[%s2897 + $0x30] sm:$0xf]
        %v2911 = vld [vmem:[%s2897 + $0x34] sm:$0xf]
        %v2912 = vld [vmem:[%s2897 + $0x38] sm:$0xf]
        %v2913 = vld [vmem:[%s2897 + $0x3c] sm:$0xf]
        %v2914 = vpack.c.b16 %v2405, %v2404
        %v2915 = vpack.c.b16 %v2407, %v2406
        %v2916 = vpack.c.b16 %v2409, %v2408
        %v2917 = vpack.c.b16 %v2411, %v2410
        %v2918 = vpack.c.b16 %v2413, %v2412
        %v2919 = vpack.c.b16 %v2415, %v2414
        %v2920 = vpack.c.b16 %v2417, %v2416
        %v2921 = vpack.c.b16 %v2419, %v2418
        %v2922 = vpack.c.b16 %v2421, %v2420
        %v2923 = vpack.c.b16 %v2423, %v2422
        %v2924 = vpack.c.b16 %v2425, %v2424
        %v2925 = vpack.c.b16 %v2427, %v2426
        %v2926 = vpack.c.b16 %v2429, %v2428
        %v2927 = vpack.c.b16 %v2431, %v2430
        %v2928 = vpack.c.b16 %v2433, %v2432
        %v2929 = vpack.c.b16 %v2435, %v2434
        %v2930 = vpack.c.b16 %v2437, %v2436
        %v2931 = vpack.c.b16 %v2439, %v2438
        %v2932 = vpack.c.b16 %v2441, %v2440
        %v2933 = vpack.c.b16 %v2443, %v2442
        %v2934 = vpack.c.b16 %v2445, %v2444
        %v2935 = vpack.c.b16 %v2446, %v2446
        %v2974 = vunpack.c.l.b16 %v2898
        %v2975 = vunpack.c.l.b16 %v2899
        %v2976 = vunpack.c.l.b16 %v2900
        %v2977 = vunpack.c.l.b16 %v2901
        %v2978 = vunpack.c.l.b16 %v2902
        %v2979 = vunpack.c.l.b16 %v2903
        %v2980 = vunpack.c.l.b16 %v2904
        %v2981 = vunpack.c.l.b16 %v2905
        %v2982 = vunpack.c.l.b16 %v2906
        %v2983 = vunpack.c.l.b16 %v2907
        %v2984 = vunpack.c.l.b16 %v2908
        %v2985 = vunpack.c.l.b16 %v2909
        %v2986 = vunpack.c.l.b16 %v2910
        %v2987 = vunpack.c.l.b16 %v2911
        %v2988 = vunpack.c.l.b16 %v2912
        %v2989 = vunpack.c.l.b16 %v2913
        %v2990 = vpack.c.b16 %v2975, %v2974
        %v2991 = vpack.c.b16 %v2977, %v2976
        %v2992 = vpack.c.b16 %v2979, %v2978
        %v2993 = vpack.c.b16 %v2981, %v2980
        %v2994 = vpack.c.b16 %v2983, %v2982
        %v2995 = vpack.c.b16 %v2985, %v2984
        %v2996 = vpack.c.b16 %v2987, %v2986
        %v2997 = vpack.c.b16 %v2989, %v2988
        %3006 = vmatpush.bf16.msra.mxu0 %v2997
        %3007 = vmatpush.bf16.msra.mxu0 %v2996
        %3008 = vmatpush.bf16.msra.mxu0 %v2995
        %3009 = vmatpush.bf16.msra.mxu0 %v2994
        %3010 = vmatpush.bf16.msra.mxu0 %v2993
        %3011 = vmatpush.bf16.msra.mxu0 %v2992
        %3012 = vmatpush.bf16.msra.mxu0 %v2991
        %3013 = vmatpush.bf16.msra.mxu0 %v2990
        %3014 = vmatmul.bf16.gmra.mxu0 %v2914
        %v3015 = vpop.f32.mrf.mxu0
        %v3016 = vadd.f32 0.0, %v3015
        %v3017 = vpop.f32.mrf.mxu0
        %v3018 = vadd.f32 0.0, %v3017
        %3019 = vmatmul.bf16.gmra.mxu0 %v2915
        %v3020 = vpop.f32.mrf.mxu0
        %v3021 = vadd.f32 0.0, %v3020
        %v3022 = vpop.f32.mrf.mxu0
        %v3023 = vadd.f32 0.0, %v3022
        %3024 = vmatmul.bf16.gmra.mxu0 %v2916
        %v3025 = vpop.f32.mrf.mxu0
        %v3026 = vadd.f32 0.0, %v3025
        %v3027 = vpop.f32.mrf.mxu0
        %v3028 = vadd.f32 0.0, %v3027
        %3029 = vmatmul.bf16.gmra.mxu0 %v2917
        %v3030 = vpop.f32.mrf.mxu0
        %v3031 = vadd.f32 0.0, %v3030
        %v3032 = vpop.f32.mrf.mxu0
        %v3033 = vadd.f32 0.0, %v3032
        %3034 = vmatmul.bf16.gmra.mxu0 %v2918
        %v3035 = vpop.f32.mrf.mxu0
        %v3036 = vadd.f32 0.0, %v3035
        %v3037 = vpop.f32.mrf.mxu0
        %v3038 = vadd.f32 0.0, %v3037
        %3039 = vmatmul.bf16.gmra.mxu0 %v2919
        %v3040 = vpop.f32.mrf.mxu0
        %v3041 = vadd.f32 0.0, %v3040
        %v3042 = vpop.f32.mrf.mxu0
        %v3043 = vadd.f32 0.0, %v3042
        %3044 = vmatmul.bf16.gmra.mxu0 %v2920
        %v3045 = vpop.f32.mrf.mxu0
        %v3046 = vadd.f32 0.0, %v3045
        %v3047 = vpop.f32.mrf.mxu0
        %v3048 = vadd.f32 0.0, %v3047
        %3049 = vmatmul.bf16.gmra.mxu0 %v2921
        %v3050 = vpop.f32.mrf.mxu0
        %v3051 = vadd.f32 0.0, %v3050
        %v3052 = vpop.f32.mrf.mxu0
        %v3053 = vadd.f32 0.0, %v3052
        %3054 = vmatmul.bf16.gmra.mxu0 %v2922
        %v3055 = vpop.f32.mrf.mxu0
        %v3056 = vadd.f32 0.0, %v3055
        %v3057 = vpop.f32.mrf.mxu0
        %v3058 = vadd.f32 0.0, %v3057
        %3059 = vmatmul.bf16.gmra.mxu0 %v2923
        %v3060 = vpop.f32.mrf.mxu0
        %v3061 = vadd.f32 0.0, %v3060
        %v3062 = vpop.f32.mrf.mxu0
        %v3063 = vadd.f32 0.0, %v3062
        %3064 = vmatmul.bf16.gmra.mxu0 %v2924
        %v3065 = vpop.f32.mrf.mxu0
        %v3066 = vadd.f32 0.0, %v3065
        %v3067 = vpop.f32.mrf.mxu0
        %v3068 = vadd.f32 0.0, %v3067
        %3069 = vmatmul.bf16.gmra.mxu0 %v2925
        %v3070 = vpop.f32.mrf.mxu0
        %v3071 = vadd.f32 0.0, %v3070
        %v3072 = vpop.f32.mrf.mxu0
        %v3073 = vadd.f32 0.0, %v3072
        %3074 = vmatmul.bf16.gmra.mxu0 %v2926
        %v3075 = vpop.f32.mrf.mxu0
        %v3076 = vadd.f32 0.0, %v3075
        %v3077 = vpop.f32.mrf.mxu0
        %v3078 = vadd.f32 0.0, %v3077
        %3079 = vmatmul.bf16.gmra.mxu0 %v2927
        %v3080 = vpop.f32.mrf.mxu0
        %v3081 = vadd.f32 0.0, %v3080
        %v3082 = vpop.f32.mrf.mxu0
        %v3083 = vadd.f32 0.0, %v3082
        %3084 = vmatmul.bf16.gmra.mxu0 %v2928
        %v3085 = vpop.f32.mrf.mxu0
        %v3086 = vadd.f32 0.0, %v3085
        %v3087 = vpop.f32.mrf.mxu0
        %v3088 = vadd.f32 0.0, %v3087
        %3089 = vmatmul.bf16.gmra.mxu0 %v2929
        %v3090 = vpop.f32.mrf.mxu0
        %v3091 = vadd.f32 0.0, %v3090
        %v3092 = vpop.f32.mrf.mxu0
        %v3093 = vadd.f32 0.0, %v3092
        %3094 = vmatmul.bf16.gmra.mxu0 %v2930
        %v3095 = vpop.f32.mrf.mxu0
        %v3096 = vadd.f32 0.0, %v3095
        %v3097 = vpop.f32.mrf.mxu0
        %v3098 = vadd.f32 0.0, %v3097
        %3099 = vmatmul.bf16.gmra.mxu0 %v2931
        %v3100 = vpop.f32.mrf.mxu0
        %v3101 = vadd.f32 0.0, %v3100
        %v3102 = vpop.f32.mrf.mxu0
        %v3103 = vadd.f32 0.0, %v3102
        %3104 = vmatmul.bf16.gmra.mxu0 %v2932
        %v3105 = vpop.f32.mrf.mxu0
        %v3106 = vadd.f32 0.0, %v3105
        %v3107 = vpop.f32.mrf.mxu0
        %v3108 = vadd.f32 0.0, %v3107
        %3109 = vmatmul.bf16.gmra.mxu0 %v2933
        %v3110 = vpop.f32.mrf.mxu0
        %v3111 = vadd.f32 0.0, %v3110
        %v3112 = vpop.f32.mrf.mxu0
        %v3113 = vadd.f32 0.0, %v3112
        %3114 = vmatmul.bf16.gmra.mxu0 %v2934
        %v3115 = vpop.f32.mrf.mxu0
        %v3116 = vadd.f32 0.0, %v3115
        %v3117 = vpop.f32.mrf.mxu0
        %v3118 = vadd.f32 0.0, %v3117
        %3119 = vmatmul.bf16.gmra.mxu0 %v2935
        %v3120 = vpop.f32.mrf.mxu0
        %v3121 = vadd.f32 0.0, %v3120
        %v3122 = vpop.f32.mrf.mxu0
        %3123 = vdwg.mxu0
        %v3124 = vadd.f32 %v2854, %v3016
        %v3125 = vadd.f32 %v2855, %v3018
        %v3126 = vadd.f32 %v2856, %v3021
        %v3127 = vadd.f32 %v2857, %v3023
        %v3128 = vadd.f32 %v2858, %v3026
        %v3129 = vadd.f32 %v2859, %v3028
        %v3130 = vadd.f32 %v2860, %v3031
        %v3131 = vadd.f32 %v2861, %v3033
        %v3132 = vadd.f32 %v2862, %v3036
        %v3133 = vadd.f32 %v2863, %v3038
        %v3134 = vadd.f32 %v2864, %v3041
        %v3135 = vadd.f32 %v2865, %v3043
        %v3136 = vadd.f32 %v2866, %v3046
        %v3137 = vadd.f32 %v2867, %v3048
        %v3138 = vadd.f32 %v2868, %v3051
        %v3139 = vadd.f32 %v2869, %v3053
        %v3140 = vadd.f32 %v2870, %v3056
        %v3141 = vadd.f32 %v2871, %v3058
        %v3142 = vadd.f32 %v2872, %v3061
        %v3143 = vadd.f32 %v2873, %v3063
        %v3144 = vadd.f32 %v2874, %v3066
        %v3145 = vadd.f32 %v2875, %v3068
        %v3146 = vadd.f32 %v2876, %v3071
        %v3147 = vadd.f32 %v2877, %v3073
        %v3148 = vadd.f32 %v2878, %v3076
        %v3149 = vadd.f32 %v2879, %v3078
        %v3150 = vadd.f32 %v2880, %v3081
        %v3151 = vadd.f32 %v2881, %v3083
        %v3152 = vadd.f32 %v2882, %v3086
        %v3153 = vadd.f32 %v2883, %v3088
        %v3154 = vadd.f32 %v2884, %v3091
        %v3155 = vadd.f32 %v2885, %v3093
        %v3156 = vadd.f32 %v2886, %v3096
        %v3157 = vadd.f32 %v2887, %v3098
        %v3158 = vadd.f32 %v2888, %v3101
        %v3159 = vadd.f32 %v2889, %v3103
        %v3160 = vadd.f32 %v2890, %v3106
        %v3161 = vadd.f32 %v2891, %v3108
        %v3162 = vadd.f32 %v2892, %v3111
        %v3163 = vadd.f32 %v2893, %v3113
        %v3164 = vadd.f32 %v2894, %v3116
        %v3165 = vadd.f32 %v2895, %v3118
        %v3166 = vadd.f32 %v2896, %v3121
        %v3167 = vld [vmem:[#allocation2 + $0x20] sm:$0xf]
        %v3168 = vld [vmem:[#allocation2 + $0x24] sm:$0xf]
        %v3169 = vld [vmem:[#allocation2 + $0x28] sm:$0xf]
        %v3170 = vld [vmem:[#allocation2 + $0x2c] sm:$0xf]
        %v3171 = vld [vmem:[#allocation2 + $0x30] sm:$0xf]
        %v3172 = vld [vmem:[#allocation2 + $0x34] sm:$0xf]
        %v3173 = vld [vmem:[#allocation2 + $0x38] sm:$0xf]
        %v3174 = vld [vmem:[#allocation2 + $0x3c] sm:$0xf]
        %v3175 = vld [vmem:[#allocation2 + $0x40] sm:$0xf]
        %v3176 = vld [vmem:[#allocation2 + $0x44] sm:$0xf]
        %v3177 = vld [vmem:[#allocation2 + $0x48] sm:$0xf]
        %v3178 = vld [vmem:[#allocation2 + $0x4c] sm:$0xf]
        %v3179 = vld [vmem:[#allocation2 + $0x50] sm:$0xf]
        %v3180 = vld [vmem:[#allocation2 + $0x54] sm:$0xf]
        %v3181 = vld [vmem:[#allocation2 + $0x58] sm:$0xf]
        %v3182 = vld [vmem:[#allocation2 + $0x5c] sm:$0xf]
        %v3183 = vld [vmem:[#allocation2 + $0x60] sm:$0xf]
        %v3184 = vld [vmem:[#allocation2 + $0x64] sm:$0xf]
        %v3185 = vld [vmem:[#allocation2 + $0x68] sm:$0xf]
        %v3186 = vld [vmem:[#allocation2 + $0x6c] sm:$0xf]
        %v3187 = vld [vmem:[#allocation2 + $0x70] sm:$0xf]
        %v3188 = vld [vmem:[#allocation2 + $0x74] sm:$0xf]
        %v3189 = vld [vmem:[#allocation2 + $0x78] sm:$0xf]
        %v3190 = vld [vmem:[#allocation2 + $0x7c] sm:$0xf]
        %v3191 = vld [vmem:[#allocation2 + $0x80] sm:$0xf]
        %v3192 = vld [vmem:[#allocation2 + $0x84] sm:$0xf]
        %v3193 = vld [vmem:[#allocation2 + $0x88] sm:$0xf]
        %v3194 = vld [vmem:[#allocation2 + $0x8c] sm:$0xf]
        %v3195 = vld [vmem:[#allocation2 + $0x90] sm:$0xf]
        %v3196 = vld [vmem:[#allocation2 + $0x94] sm:$0xf]
        %v3197 = vld [vmem:[#allocation2 + $0x98] sm:$0xf]
        %v3198 = vld [vmem:[#allocation2 + $0x9c] sm:$0xf]
        %v3199 = vld [vmem:[#allocation2 + $0xa0] sm:$0xf]
        %v3200 = vld [vmem:[#allocation2 + $0xa4] sm:$0xf]
        %v3201 = vld [vmem:[#allocation2 + $0xa8] sm:$0xf]
        %v3202 = vld [vmem:[#allocation2 + $0xac] sm:$0xf]
        %v3203 = vld [vmem:[#allocation2 + $0xb0] sm:$0xf]
        %v3204 = vld [vmem:[#allocation2 + $0xb4] sm:$0xf]
        %v3205 = vld [vmem:[#allocation2 + $0xb8] sm:$0xf]
        %v3206 = vld [vmem:[#allocation2 + $0xbc] sm:$0xf]
        %v3207 = vld [vmem:[#allocation2 + $0xc0] sm:$0xf]
        %v3208 = vld [vmem:[#allocation2 + $0xc4] sm:$0xf]
        %v3209 = vld [vmem:[#allocation2 + $0xc8] sm:$0xf]
        %v3210 = vld [vmem:[#allocation2 + $0xcc] sm:$0x1]
        %s3211 = scalar_lea.vmem [#allocation3], 320
        %v3212 = vld [vmem:[%s3211] sm:$0xf]
        %v3213 = vld [vmem:[%s3211 + $0x4] sm:$0xf]
        %v3214 = vld [vmem:[%s3211 + $0x8] sm:$0xf]
        %v3215 = vld [vmem:[%s3211 + $0xc] sm:$0xf]
        %v3216 = vld [vmem:[%s3211 + $0x10] sm:$0xf]
        %v3217 = vld [vmem:[%s3211 + $0x14] sm:$0xf]
        %v3218 = vld [vmem:[%s3211 + $0x18] sm:$0xf]
        %v3219 = vld [vmem:[%s3211 + $0x1c] sm:$0xf]
        %v3220 = vld [vmem:[%s3211 + $0x20] sm:$0xf]
        %v3221 = vld [vmem:[%s3211 + $0x24] sm:$0xf]
        %v3222 = vld [vmem:[%s3211 + $0x28] sm:$0xf]
        %v3223 = vld [vmem:[%s3211 + $0x2c] sm:$0xf]
        %v3224 = vld [vmem:[%s3211 + $0x30] sm:$0xf]
        %v3225 = vld [vmem:[%s3211 + $0x34] sm:$0xf]
        %v3226 = vld [vmem:[%s3211 + $0x38] sm:$0xf]
        %v3227 = vld [vmem:[%s3211 + $0x3c] sm:$0xf]
        %v3272 = vunpack.c.l.b16 %v3167
        %v3273 = vunpack.c.l.b16 %v3168
        %v3274 = vunpack.c.l.b16 %v3169
        %v3275 = vunpack.c.l.b16 %v3170
        %v3276 = vunpack.c.l.b16 %v3171
        %v3277 = vunpack.c.l.b16 %v3172
        %v3278 = vunpack.c.l.b16 %v3173
        %v3279 = vunpack.c.l.b16 %v3174
        %v3280 = vunpack.c.l.b16 %v3175
        %v3281 = vunpack.c.l.b16 %v3176
        %v3282 = vunpack.c.l.b16 %v3177
        %v3283 = vunpack.c.l.b16 %v3178
        %v3284 = vunpack.c.l.b16 %v3179
        %v3285 = vunpack.c.l.b16 %v3180
        %v3286 = vunpack.c.l.b16 %v3181
        %v3287 = vunpack.c.l.b16 %v3182
        %v3288 = vunpack.c.l.b16 %v3183
        %v3289 = vunpack.c.l.b16 %v3184
        %v3290 = vunpack.c.l.b16 %v3185
        %v3291 = vunpack.c.l.b16 %v3186
        %v3292 = vunpack.c.l.b16 %v3187
        %v3293 = vunpack.c.l.b16 %v3188
        %v3294 = vunpack.c.l.b16 %v3189
        %v3295 = vunpack.c.l.b16 %v3190
        %v3296 = vunpack.c.l.b16 %v3191
        %v3297 = vunpack.c.l.b16 %v3192
        %v3298 = vunpack.c.l.b16 %v3193
        %v3299 = vunpack.c.l.b16 %v3194
        %v3300 = vunpack.c.l.b16 %v3195
        %v3301 = vunpack.c.l.b16 %v3196
        %v3302 = vunpack.c.l.b16 %v3197
        %v3303 = vunpack.c.l.b16 %v3198
        %v3304 = vunpack.c.l.b16 %v3199
        %v3305 = vunpack.c.l.b16 %v3200
        %v3306 = vunpack.c.l.b16 %v3201
        %v3307 = vunpack.c.l.b16 %v3202
        %v3308 = vunpack.c.l.b16 %v3203
        %v3309 = vunpack.c.l.b16 %v3204
        %v3310 = vunpack.c.l.b16 %v3205
        %v3311 = vunpack.c.l.b16 %v3206
        %v3312 = vunpack.c.l.b16 %v3207
        %v3313 = vunpack.c.l.b16 %v3208
        %v3314 = vunpack.c.l.b16 %v3209
        %v3315 = vunpack.c.l.b16 %v3210
        %v3316 = vpack.c.b16 %v3273, %v3272
        %v3317 = vpack.c.b16 %v3275, %v3274
        %v3318 = vpack.c.b16 %v3277, %v3276
        %v3319 = vpack.c.b16 %v3279, %v3278
        %v3320 = vpack.c.b16 %v3281, %v3280
        %v3321 = vpack.c.b16 %v3283, %v3282
        %v3322 = vpack.c.b16 %v3285, %v3284
        %v3323 = vpack.c.b16 %v3287, %v3286
        %v3324 = vpack.c.b16 %v3289, %v3288
        %v3325 = vpack.c.b16 %v3291, %v3290
        %v3326 = vpack.c.b16 %v3293, %v3292
        %v3327 = vpack.c.b16 %v3295, %v3294
        %v3328 = vpack.c.b16 %v3297, %v3296
        %v3329 = vpack.c.b16 %v3299, %v3298
        %v3330 = vpack.c.b16 %v3301, %v3300
        %v3331 = vpack.c.b16 %v3303, %v3302
        %v3332 = vpack.c.b16 %v3305, %v3304
        %v3333 = vpack.c.b16 %v3307, %v3306
        %v3334 = vpack.c.b16 %v3309, %v3308
        %v3335 = vpack.c.b16 %v3311, %v3310
        %v3336 = vpack.c.b16 %v3313, %v3312
        %v3337 = vpack.c.b16 %v3315, %v3314
        %v3339 = vshrl.u32 %v3316, 16
        %v3341 = vshll.u32 %v3316, 16
        %v3343 = vrot.slane %v3341, 1
        %v3344 = vor.u32 %v3339, %v3343
        %v3346 = vshll.u32 %v3317, 16
        %v3348 = vrot.slane %v3346, 1
        %v3349 = vsel %vm1891, %v3344, %v3348
        %v3350 = vshrl.u32 %v3317, 16
        %v3352 = vor.u32 %v3350, %v3348
        %v3354 = vshll.u32 %v3318, 16
        %v3356 = vrot.slane %v3354, 1
        %v3357 = vsel %vm1891, %v3352, %v3356
        %v3358 = vshrl.u32 %v3318, 16
        %v3360 = vor.u32 %v3358, %v3356
        %v3362 = vshll.u32 %v3319, 16
        %v3364 = vrot.slane %v3362, 1
        %v3365 = vsel %vm1891, %v3360, %v3364
        %v3366 = vshrl.u32 %v3319, 16
        %v3368 = vor.u32 %v3366, %v3364
        %v3370 = vshll.u32 %v3320, 16
        %v3372 = vrot.slane %v3370, 1
        %v3373 = vsel %vm1891, %v3368, %v3372
        %v3374 = vshrl.u32 %v3320, 16
        %v3376 = vor.u32 %v3374, %v3372
        %v3378 = vshll.u32 %v3321, 16
        %v3380 = vrot.slane %v3378, 1
        %v3381 = vsel %vm1891, %v3376, %v3380
        %v3382 = vshrl.u32 %v3321, 16
        %v3384 = vor.u32 %v3382, %v3380
        %v3386 = vshll.u32 %v3322, 16
        %v3388 = vrot.slane %v3386, 1
        %v3389 = vsel %vm1891, %v3384, %v3388
        %v3390 = vshrl.u32 %v3322, 16
        %v3392 = vor.u32 %v3390, %v3388
        %v3394 = vshll.u32 %v3323, 16
        %v3396 = vrot.slane %v3394, 1
        %v3397 = vsel %vm1891, %v3392, %v3396
        %v3398 = vshrl.u32 %v3323, 16
        %v3400 = vor.u32 %v3398, %v3396
        %v3402 = vshll.u32 %v3324, 16
        %v3404 = vrot.slane %v3402, 1
        %v3405 = vsel %vm1891, %v3400, %v3404
        %v3406 = vshrl.u32 %v3324, 16
        %v3408 = vor.u32 %v3406, %v3404
        %v3410 = vshll.u32 %v3325, 16
        %v3412 = vrot.slane %v3410, 1
        %v3413 = vsel %vm1891, %v3408, %v3412
        %v3414 = vshrl.u32 %v3325, 16
        %v3416 = vor.u32 %v3414, %v3412
        %v3418 = vshll.u32 %v3326, 16
        %v3420 = vrot.slane %v3418, 1
        %v3421 = vsel %vm1891, %v3416, %v3420
        %v3422 = vshrl.u32 %v3326, 16
        %v3424 = vor.u32 %v3422, %v3420
        %v3426 = vshll.u32 %v3327, 16
        %v3428 = vrot.slane %v3426, 1
        %v3429 = vsel %vm1891, %v3424, %v3428
        %v3430 = vshrl.u32 %v3327, 16
        %v3432 = vor.u32 %v3430, %v3428
        %v3434 = vshll.u32 %v3328, 16
        %v3436 = vrot.slane %v3434, 1
        %v3437 = vsel %vm1891, %v3432, %v3436
        %v3438 = vshrl.u32 %v3328, 16
        %v3440 = vor.u32 %v3438, %v3436
        %v3442 = vshll.u32 %v3329, 16
        %v3444 = vrot.slane %v3442, 1
        %v3445 = vsel %vm1891, %v3440, %v3444
        %v3446 = vshrl.u32 %v3329, 16
        %v3448 = vor.u32 %v3446, %v3444
        %v3450 = vshll.u32 %v3330, 16
        %v3452 = vrot.slane %v3450, 1
        %v3453 = vsel %vm1891, %v3448, %v3452
        %v3454 = vshrl.u32 %v3330, 16
        %v3456 = vor.u32 %v3454, %v3452
        %v3458 = vshll.u32 %v3331, 16
        %v3460 = vrot.slane %v3458, 1
        %v3461 = vsel %vm1891, %v3456, %v3460
        %v3462 = vshrl.u32 %v3331, 16
        %v3464 = vor.u32 %v3462, %v3460
        %v3466 = vshll.u32 %v3332, 16
        %v3468 = vrot.slane %v3466, 1
        %v3469 = vsel %vm1891, %v3464, %v3468
        %v3470 = vshrl.u32 %v3332, 16
        %v3472 = vor.u32 %v3470, %v3468
        %v3474 = vshll.u32 %v3333, 16
        %v3476 = vrot.slane %v3474, 1
        %v3477 = vsel %vm1891, %v3472, %v3476
        %v3478 = vshrl.u32 %v3333, 16
        %v3480 = vor.u32 %v3478, %v3476
        %v3482 = vshll.u32 %v3334, 16
        %v3484 = vrot.slane %v3482, 1
        %v3485 = vsel %vm1891, %v3480, %v3484
        %v3486 = vshrl.u32 %v3334, 16
        %v3488 = vor.u32 %v3486, %v3484
        %v3490 = vshll.u32 %v3335, 16
        %v3492 = vrot.slane %v3490, 1
        %v3493 = vsel %vm1891, %v3488, %v3492
        %v3494 = vshrl.u32 %v3335, 16
        %v3496 = vor.u32 %v3494, %v3492
        %v3498 = vshll.u32 %v3336, 16
        %v3500 = vrot.slane %v3498, 1
        %v3501 = vsel %vm1891, %v3496, %v3500
        %v3502 = vshrl.u32 %v3336, 16
        %v3504 = vor.u32 %v3502, %v3500
        %v3506 = vshll.u32 %v3337, 16
        %v3508 = vrot.slane %v3506, 1
        %v3509 = vsel %vm1891, %v3504, %v3508
        %v3510 = vshrl.u32 %v3337, 16
        %v3512 = vor.u32 %v3510, %v3508
        %v3551 = vunpack.c.l.b16 %v3212
        %v3552 = vunpack.c.l.b16 %v3213
        %v3553 = vunpack.c.l.b16 %v3214
        %v3554 = vunpack.c.l.b16 %v3215
        %v3555 = vunpack.c.l.b16 %v3216
        %v3556 = vunpack.c.l.b16 %v3217
        %v3557 = vunpack.c.l.b16 %v3218
        %v3558 = vunpack.c.l.b16 %v3219
        %v3559 = vunpack.c.l.b16 %v3220
        %v3560 = vunpack.c.l.b16 %v3221
        %v3561 = vunpack.c.l.b16 %v3222
        %v3562 = vunpack.c.l.b16 %v3223
        %v3563 = vunpack.c.l.b16 %v3224
        %v3564 = vunpack.c.l.b16 %v3225
        %v3565 = vunpack.c.l.b16 %v3226
        %v3566 = vunpack.c.l.b16 %v3227
        %v3567 = vpack.c.b16 %v3552, %v3551
        %v3568 = vpack.c.b16 %v3554, %v3553
        %v3569 = vpack.c.b16 %v3556, %v3555
        %v3570 = vpack.c.b16 %v3558, %v3557
        %v3571 = vpack.c.b16 %v3560, %v3559
        %v3572 = vpack.c.b16 %v3562, %v3561
        %v3573 = vpack.c.b16 %v3564, %v3563
        %v3574 = vpack.c.b16 %v3566, %v3565
        %3583 = vmatpush.bf16.msra.mxu0 %v3574
        %3584 = vmatpush.bf16.msra.mxu0 %v3573
        %3585 = vmatpush.bf16.msra.mxu0 %v3572
        %3586 = vmatpush.bf16.msra.mxu0 %v3571
        %3587 = vmatpush.bf16.msra.mxu0 %v3570
        %3588 = vmatpush.bf16.msra.mxu0 %v3569
        %3589 = vmatpush.bf16.msra.mxu0 %v3568
        %3590 = vmatpush.bf16.msra.mxu0 %v3567
        %3591 = vmatmul.bf16.gmra.mxu0 %v3349
        %v3592 = vpop.f32.mrf.mxu0
        %v3593 = vadd.f32 0.0, %v3592
        %v3594 = vpop.f32.mrf.mxu0
        %v3595 = vadd.f32 0.0, %v3594
        %3596 = vmatmul.bf16.gmra.mxu0 %v3357
        %v3597 = vpop.f32.mrf.mxu0
        %v3598 = vadd.f32 0.0, %v3597
        %v3599 = vpop.f32.mrf.mxu0
        %v3600 = vadd.f32 0.0, %v3599
        %3601 = vmatmul.bf16.gmra.mxu0 %v3365
        %v3602 = vpop.f32.mrf.mxu0
        %v3603 = vadd.f32 0.0, %v3602
        %v3604 = vpop.f32.mrf.mxu0
        %v3605 = vadd.f32 0.0, %v3604
        %3606 = vmatmul.bf16.gmra.mxu0 %v3373
        %v3607 = vpop.f32.mrf.mxu0
        %v3608 = vadd.f32 0.0, %v3607
        %v3609 = vpop.f32.mrf.mxu0
        %v3610 = vadd.f32 0.0, %v3609
        %3611 = vmatmul.bf16.gmra.mxu0 %v3381
        %v3612 = vpop.f32.mrf.mxu0
        %v3613 = vadd.f32 0.0, %v3612
        %v3614 = vpop.f32.mrf.mxu0
        %v3615 = vadd.f32 0.0, %v3614
        %3616 = vmatmul.bf16.gmra.mxu0 %v3389
        %v3617 = vpop.f32.mrf.mxu0
        %v3618 = vadd.f32 0.0, %v3617
        %v3619 = vpop.f32.mrf.mxu0
        %v3620 = vadd.f32 0.0, %v3619
        %3621 = vmatmul.bf16.gmra.mxu0 %v3397
        %v3622 = vpop.f32.mrf.mxu0
        %v3623 = vadd.f32 0.0, %v3622
        %v3624 = vpop.f32.mrf.mxu0
        %v3625 = vadd.f32 0.0, %v3624
        %3626 = vmatmul.bf16.gmra.mxu0 %v3405
        %v3627 = vpop.f32.mrf.mxu0
        %v3628 = vadd.f32 0.0, %v3627
        %v3629 = vpop.f32.mrf.mxu0
        %v3630 = vadd.f32 0.0, %v3629
        %3631 = vmatmul.bf16.gmra.mxu0 %v3413
        %v3632 = vpop.f32.mrf.mxu0
        %v3633 = vadd.f32 0.0, %v3632
        %v3634 = vpop.f32.mrf.mxu0
        %v3635 = vadd.f32 0.0, %v3634
        %3636 = vmatmul.bf16.gmra.mxu0 %v3421
        %v3637 = vpop.f32.mrf.mxu0
        %v3638 = vadd.f32 0.0, %v3637
        %v3639 = vpop.f32.mrf.mxu0
        %v3640 = vadd.f32 0.0, %v3639
        %3641 = vmatmul.bf16.gmra.mxu0 %v3429
        %v3642 = vpop.f32.mrf.mxu0
        %v3643 = vadd.f32 0.0, %v3642
        %v3644 = vpop.f32.mrf.mxu0
        %v3645 = vadd.f32 0.0, %v3644
        %3646 = vmatmul.bf16.gmra.mxu0 %v3437
        %v3647 = vpop.f32.mrf.mxu0
        %v3648 = vadd.f32 0.0, %v3647
        %v3649 = vpop.f32.mrf.mxu0
        %v3650 = vadd.f32 0.0, %v3649
        %3651 = vmatmul.bf16.gmra.mxu0 %v3445
        %v3652 = vpop.f32.mrf.mxu0
        %v3653 = vadd.f32 0.0, %v3652
        %v3654 = vpop.f32.mrf.mxu0
        %v3655 = vadd.f32 0.0, %v3654
        %3656 = vmatmul.bf16.gmra.mxu0 %v3453
        %v3657 = vpop.f32.mrf.mxu0
        %v3658 = vadd.f32 0.0, %v3657
        %v3659 = vpop.f32.mrf.mxu0
        %v3660 = vadd.f32 0.0, %v3659
        %3661 = vmatmul.bf16.gmra.mxu0 %v3461
        %v3662 = vpop.f32.mrf.mxu0
        %v3663 = vadd.f32 0.0, %v3662
        %v3664 = vpop.f32.mrf.mxu0
        %v3665 = vadd.f32 0.0, %v3664
        %3666 = vmatmul.bf16.gmra.mxu0 %v3469
        %v3667 = vpop.f32.mrf.mxu0
        %v3668 = vadd.f32 0.0, %v3667
        %v3669 = vpop.f32.mrf.mxu0
        %v3670 = vadd.f32 0.0, %v3669
        %3671 = vmatmul.bf16.gmra.mxu0 %v3477
        %v3672 = vpop.f32.mrf.mxu0
        %v3673 = vadd.f32 0.0, %v3672
        %v3674 = vpop.f32.mrf.mxu0
        %v3675 = vadd.f32 0.0, %v3674
        %3676 = vmatmul.bf16.gmra.mxu0 %v3485
        %v3677 = vpop.f32.mrf.mxu0
        %v3678 = vadd.f32 0.0, %v3677
        %v3679 = vpop.f32.mrf.mxu0
        %v3680 = vadd.f32 0.0, %v3679
        %3681 = vmatmul.bf16.gmra.mxu0 %v3493
        %v3682 = vpop.f32.mrf.mxu0
        %v3683 = vadd.f32 0.0, %v3682
        %v3684 = vpop.f32.mrf.mxu0
        %v3685 = vadd.f32 0.0, %v3684
        %3686 = vmatmul.bf16.gmra.mxu0 %v3501
        %v3687 = vpop.f32.mrf.mxu0
        %v3688 = vadd.f32 0.0, %v3687
        %v3689 = vpop.f32.mrf.mxu0
        %v3690 = vadd.f32 0.0, %v3689
        %3691 = vmatmul.bf16.gmra.mxu0 %v3509
        %v3692 = vpop.f32.mrf.mxu0
        %v3693 = vadd.f32 0.0, %v3692
        %v3694 = vpop.f32.mrf.mxu0
        %v3695 = vadd.f32 0.0, %v3694
        %3696 = vmatmul.bf16.gmra.mxu0 %v3512
        %v3697 = vpop.f32.mrf.mxu0
        %v3698 = vadd.f32 0.0, %v3697
        %v3699 = vpop.f32.mrf.mxu0
        %3700 = vdwg.mxu0
        %v3701 = vadd.f32 %v3124, %v3593
        %v3702 = vadd.f32 %v3125, %v3595
        %v3703 = vadd.f32 %v3126, %v3598
        %v3704 = vadd.f32 %v3127, %v3600
        %v3705 = vadd.f32 %v3128, %v3603
        %v3706 = vadd.f32 %v3129, %v3605
        %v3707 = vadd.f32 %v3130, %v3608
        %v3708 = vadd.f32 %v3131, %v3610
        %v3709 = vadd.f32 %v3132, %v3613
        %v3710 = vadd.f32 %v3133, %v3615
        %v3711 = vadd.f32 %v3134, %v3618
        %v3712 = vadd.f32 %v3135, %v3620
        %v3713 = vadd.f32 %v3136, %v3623
        %v3714 = vadd.f32 %v3137, %v3625
        %v3715 = vadd.f32 %v3138, %v3628
        %v3716 = vadd.f32 %v3139, %v3630
        %v3717 = vadd.f32 %v3140, %v3633
        %v3718 = vadd.f32 %v3141, %v3635
        %v3719 = vadd.f32 %v3142, %v3638
        %v3720 = vadd.f32 %v3143, %v3640
        %v3721 = vadd.f32 %v3144, %v3643
        %v3722 = vadd.f32 %v3145, %v3645
        %v3723 = vadd.f32 %v3146, %v3648
        %v3724 = vadd.f32 %v3147, %v3650
        %v3725 = vadd.f32 %v3148, %v3653
        %v3726 = vadd.f32 %v3149, %v3655
        %v3727 = vadd.f32 %v3150, %v3658
        %v3728 = vadd.f32 %v3151, %v3660
        %v3729 = vadd.f32 %v3152, %v3663
        %v3730 = vadd.f32 %v3153, %v3665
        %v3731 = vadd.f32 %v3154, %v3668
        %v3732 = vadd.f32 %v3155, %v3670
        %v3733 = vadd.f32 %v3156, %v3673
        %v3734 = vadd.f32 %v3157, %v3675
        %v3735 = vadd.f32 %v3158, %v3678
        %v3736 = vadd.f32 %v3159, %v3680
        %v3737 = vadd.f32 %v3160, %v3683
        %v3738 = vadd.f32 %v3161, %v3685
        %v3739 = vadd.f32 %v3162, %v3688
        %v3740 = vadd.f32 %v3163, %v3690
        %v3741 = vadd.f32 %v3164, %v3693
        %v3742 = vadd.f32 %v3165, %v3695
        %v3743 = vadd.f32 %v3166, %v3698
        %v3744 = vld [vmem:[#allocation2 + $0x34] sm:$0x8]
        %v3745 = vld [vmem:[#allocation2 + $0x38] sm:$0xf]
        %v3746 = vld [vmem:[#allocation2 + $0x3c] sm:$0xf]
        %v3747 = vld [vmem:[#allocation2 + $0x40] sm:$0xf]
        %v3748 = vld [vmem:[#allocation2 + $0x44] sm:$0xf]
        %v3749 = vld [vmem:[#allocation2 + $0x48] sm:$0xf]
        %v3750 = vld [vmem:[#allocation2 + $0x4c] sm:$0xf]
        %v3751 = vld [vmem:[#allocation2 + $0x50] sm:$0xf]
        %v3752 = vld [vmem:[#allocation2 + $0x54] sm:$0xf]
        %v3753 = vld [vmem:[#allocation2 + $0x58] sm:$0xf]
        %v3754 = vld [vmem:[#allocation2 + $0x5c] sm:$0xf]
        %v3755 = vld [vmem:[#allocation2 + $0x60] sm:$0xf]
        %v3756 = vld [vmem:[#allocation2 + $0x64] sm:$0xf]
        %v3757 = vld [vmem:[#allocation2 + $0x68] sm:$0xf]
        %v3758 = vld [vmem:[#allocation2 + $0x6c] sm:$0xf]
        %v3759 = vld [vmem:[#allocation2 + $0x70] sm:$0xf]
        %v3760 = vld [vmem:[#allocation2 + $0x74] sm:$0xf]
        %v3761 = vld [vmem:[#allocation2 + $0x78] sm:$0xf]
        %v3762 = vld [vmem:[#allocation2 + $0x7c] sm:$0xf]
        %v3763 = vld [vmem:[#allocation2 + $0x80] sm:$0xf]
        %v3764 = vld [vmem:[#allocation2 + $0x84] sm:$0xf]
        %v3765 = vld [vmem:[#allocation2 + $0x88] sm:$0xf]
        %v3766 = vld [vmem:[#allocation2 + $0x8c] sm:$0xf]
        %v3767 = vld [vmem:[#allocation2 + $0x90] sm:$0xf]
        %v3768 = vld [vmem:[#allocation2 + $0x94] sm:$0xf]
        %v3769 = vld [vmem:[#allocation2 + $0x98] sm:$0xf]
        %v3770 = vld [vmem:[#allocation2 + $0x9c] sm:$0xf]
        %v3771 = vld [vmem:[#allocation2 + $0xa0] sm:$0xf]
        %v3772 = vld [vmem:[#allocation2 + $0xa4] sm:$0xf]
        %v3773 = vld [vmem:[#allocation2 + $0xa8] sm:$0xf]
        %v3774 = vld [vmem:[#allocation2 + $0xac] sm:$0xf]
        %v3775 = vld [vmem:[#allocation2 + $0xb0] sm:$0xf]
        %v3776 = vld [vmem:[#allocation2 + $0xb4] sm:$0xf]
        %v3777 = vld [vmem:[#allocation2 + $0xb8] sm:$0xf]
        %v3778 = vld [vmem:[#allocation2 + $0xbc] sm:$0xf]
        %v3779 = vld [vmem:[#allocation2 + $0xc0] sm:$0xf]
        %v3780 = vld [vmem:[#allocation2 + $0xc4] sm:$0xf]
        %v3781 = vld [vmem:[#allocation2 + $0xc8] sm:$0xf]
        %v3782 = vld [vmem:[#allocation2 + $0xcc] sm:$0xf]
        %v3783 = vld [vmem:[#allocation2 + $0xd0] sm:$0xf]
        %v3784 = vld [vmem:[#allocation2 + $0xd4] sm:$0xf]
        %v3785 = vld [vmem:[#allocation2 + $0xd8] sm:$0xf]
        %v3786 = vld [vmem:[#allocation2 + $0xdc] sm:$0xf]
        %v3787 = vld [vmem:[#allocation2 + $0xe0] sm:$0xf]
        %s3788 = scalar_lea.vmem [#allocation3], 384
        %v3789 = vld [vmem:[%s3788] sm:$0xf]
        %v3790 = vld [vmem:[%s3788 + $0x4] sm:$0xf]
        %v3791 = vld [vmem:[%s3788 + $0x8] sm:$0xf]
        %v3792 = vld [vmem:[%s3788 + $0xc] sm:$0xf]
        %v3793 = vld [vmem:[%s3788 + $0x10] sm:$0xf]
        %v3794 = vld [vmem:[%s3788 + $0x14] sm:$0xf]
        %v3795 = vld [vmem:[%s3788 + $0x18] sm:$0xf]
        %v3796 = vld [vmem:[%s3788 + $0x1c] sm:$0xf]
        %v3797 = vld [vmem:[%s3788 + $0x20] sm:$0xf]
        %v3798 = vld [vmem:[%s3788 + $0x24] sm:$0xf]
        %v3799 = vld [vmem:[%s3788 + $0x28] sm:$0xf]
        %v3800 = vld [vmem:[%s3788 + $0x2c] sm:$0xf]
        %v3801 = vld [vmem:[%s3788 + $0x30] sm:$0xf]
        %v3802 = vld [vmem:[%s3788 + $0x34] sm:$0xf]
        %v3803 = vld [vmem:[%s3788 + $0x38] sm:$0xf]
        %v3804 = vld [vmem:[%s3788 + $0x3c] sm:$0xf]
        %v3849 = vunpack.c.l.b16 %v3744
        %v3850 = vunpack.c.l.b16 %v3745
        %v3851 = vunpack.c.l.b16 %v3746
        %v3852 = vunpack.c.l.b16 %v3747
        %v3853 = vunpack.c.l.b16 %v3748
        %v3854 = vunpack.c.l.b16 %v3749
        %v3855 = vunpack.c.l.b16 %v3750
        %v3856 = vunpack.c.l.b16 %v3751
        %v3857 = vunpack.c.l.b16 %v3752
        %v3858 = vunpack.c.l.b16 %v3753
        %v3859 = vunpack.c.l.b16 %v3754
        %v3860 = vunpack.c.l.b16 %v3755
        %v3861 = vunpack.c.l.b16 %v3756
        %v3862 = vunpack.c.l.b16 %v3757
        %v3863 = vunpack.c.l.b16 %v3758
        %v3864 = vunpack.c.l.b16 %v3759
        %v3865 = vunpack.c.l.b16 %v3760
        %v3866 = vunpack.c.l.b16 %v3761
        %v3867 = vunpack.c.l.b16 %v3762
        %v3868 = vunpack.c.l.b16 %v3763
        %v3869 = vunpack.c.l.b16 %v3764
        %v3870 = vunpack.c.l.b16 %v3765
        %v3871 = vunpack.c.l.b16 %v3766
        %v3872 = vunpack.c.l.b16 %v3767
        %v3873 = vunpack.c.l.b16 %v3768
        %v3874 = vunpack.c.l.b16 %v3769
        %v3875 = vunpack.c.l.b16 %v3770
        %v3876 = vunpack.c.l.b16 %v3771
        %v3877 = vunpack.c.l.b16 %v3772
        %v3878 = vunpack.c.l.b16 %v3773
        %v3879 = vunpack.c.l.b16 %v3774
        %v3880 = vunpack.c.l.b16 %v3775
        %v3881 = vunpack.c.l.b16 %v3776
        %v3882 = vunpack.c.l.b16 %v3777
        %v3883 = vunpack.c.l.b16 %v3778
        %v3884 = vunpack.c.l.b16 %v3779
        %v3885 = vunpack.c.l.b16 %v3780
        %v3886 = vunpack.c.l.b16 %v3781
        %v3887 = vunpack.c.l.b16 %v3782
        %v3888 = vunpack.c.l.b16 %v3783
        %v3889 = vunpack.c.l.b16 %v3784
        %v3890 = vunpack.c.l.b16 %v3785
        %v3891 = vunpack.c.l.b16 %v3786
        %v3892 = vunpack.c.l.b16 %v3787
        %v3893 = vpack.c.b16 %v3850, %v3849
        %v3894 = vpack.c.b16 %v3852, %v3851
        %v3895 = vpack.c.b16 %v3854, %v3853
        %v3896 = vpack.c.b16 %v3856, %v3855
        %v3897 = vpack.c.b16 %v3858, %v3857
        %v3898 = vpack.c.b16 %v3860, %v3859
        %v3899 = vpack.c.b16 %v3862, %v3861
        %v3900 = vpack.c.b16 %v3864, %v3863
        %v3901 = vpack.c.b16 %v3866, %v3865
        %v3902 = vpack.c.b16 %v3868, %v3867
        %v3903 = vpack.c.b16 %v3870, %v3869
        %v3904 = vpack.c.b16 %v3872, %v3871
        %v3905 = vpack.c.b16 %v3874, %v3873
        %v3906 = vpack.c.b16 %v3876, %v3875
        %v3907 = vpack.c.b16 %v3878, %v3877
        %v3908 = vpack.c.b16 %v3880, %v3879
        %v3909 = vpack.c.b16 %v3882, %v3881
        %v3910 = vpack.c.b16 %v3884, %v3883
        %v3911 = vpack.c.b16 %v3886, %v3885
        %v3912 = vpack.c.b16 %v3888, %v3887
        %v3913 = vpack.c.b16 %v3890, %v3889
        %v3914 = vpack.c.b16 %v3892, %v3891
        %v3916 = vshrl.u32 %v3893, 16
        %v3918 = vrot.slane %v3916, 3
        %v3919 = vshll.u32 %v3893, 16
        %v3921 = vrot.slane %v3919, 4
        %v3922 = vor.u32 %v3918, %v3921
        %v3924 = vshrl.u32 %v3894, 16
        %v3926 = vrot.slane %v3924, 3
        %v3927 = vshll.u32 %v3894, 16
        %v3929 = vrot.slane %v3927, 4
        %v3930 = vor.u32 %v3926, %v3929
        %v3931 = vsel %vm1334, %v3922, %v3930
        %v3933 = vshrl.u32 %v3895, 16
        %v3935 = vrot.slane %v3933, 3
        %v3936 = vshll.u32 %v3895, 16
        %v3938 = vrot.slane %v3936, 4
        %v3939 = vor.u32 %v3935, %v3938
        %v3940 = vsel %vm1334, %v3930, %v3939
        %v3942 = vshrl.u32 %v3896, 16
        %v3944 = vrot.slane %v3942, 3
        %v3945 = vshll.u32 %v3896, 16
        %v3947 = vrot.slane %v3945, 4
        %v3948 = vor.u32 %v3944, %v3947
        %v3949 = vsel %vm1334, %v3939, %v3948
        %v3951 = vshrl.u32 %v3897, 16
        %v3953 = vrot.slane %v3951, 3
        %v3954 = vshll.u32 %v3897, 16
        %v3956 = vrot.slane %v3954, 4
        %v3957 = vor.u32 %v3953, %v3956
        %v3958 = vsel %vm1334, %v3948, %v3957
        %v3960 = vshrl.u32 %v3898, 16
        %v3962 = vrot.slane %v3960, 3
        %v3963 = vshll.u32 %v3898, 16
        %v3965 = vrot.slane %v3963, 4
        %v3966 = vor.u32 %v3962, %v3965
        %v3967 = vsel %vm1334, %v3957, %v3966
        %v3969 = vshrl.u32 %v3899, 16
        %v3971 = vrot.slane %v3969, 3
        %v3972 = vshll.u32 %v3899, 16
        %v3974 = vrot.slane %v3972, 4
        %v3975 = vor.u32 %v3971, %v3974
        %v3976 = vsel %vm1334, %v3966, %v3975
        %v3978 = vshrl.u32 %v3900, 16
        %v3980 = vrot.slane %v3978, 3
        %v3981 = vshll.u32 %v3900, 16
        %v3983 = vrot.slane %v3981, 4
        %v3984 = vor.u32 %v3980, %v3983
        %v3985 = vsel %vm1334, %v3975, %v3984
        %v3987 = vshrl.u32 %v3901, 16
        %v3989 = vrot.slane %v3987, 3
        %v3990 = vshll.u32 %v3901, 16
        %v3992 = vrot.slane %v3990, 4
        %v3993 = vor.u32 %v3989, %v3992
        %v3994 = vsel %vm1334, %v3984, %v3993
        %v3996 = vshrl.u32 %v3902, 16
        %v3998 = vrot.slane %v3996, 3
        %v3999 = vshll.u32 %v3902, 16
        %v4001 = vrot.slane %v3999, 4
        %v4002 = vor.u32 %v3998, %v4001
        %v4003 = vsel %vm1334, %v3993, %v4002
        %v4005 = vshrl.u32 %v3903, 16
        %v4007 = vrot.slane %v4005, 3
        %v4008 = vshll.u32 %v3903, 16
        %v4010 = vrot.slane %v4008, 4
        %v4011 = vor.u32 %v4007, %v4010
        %v4012 = vsel %vm1334, %v4002, %v4011
        %v4014 = vshrl.u32 %v3904, 16
        %v4016 = vrot.slane %v4014, 3
        %v4017 = vshll.u32 %v3904, 16
        %v4019 = vrot.slane %v4017, 4
        %v4020 = vor.u32 %v4016, %v4019
        %v4021 = vsel %vm1334, %v4011, %v4020
        %v4023 = vshrl.u32 %v3905, 16
        %v4025 = vrot.slane %v4023, 3
        %v4026 = vshll.u32 %v3905, 16
        %v4028 = vrot.slane %v4026, 4
        %v4029 = vor.u32 %v4025, %v4028
        %v4030 = vsel %vm1334, %v4020, %v4029
        %v4032 = vshrl.u32 %v3906, 16
        %v4034 = vrot.slane %v4032, 3
        %v4035 = vshll.u32 %v3906, 16
        %v4037 = vrot.slane %v4035, 4
        %v4038 = vor.u32 %v4034, %v4037
        %v4039 = vsel %vm1334, %v4029, %v4038
        %v4041 = vshrl.u32 %v3907, 16
        %v4043 = vrot.slane %v4041, 3
        %v4044 = vshll.u32 %v3907, 16
        %v4046 = vrot.slane %v4044, 4
        %v4047 = vor.u32 %v4043, %v4046
        %v4048 = vsel %vm1334, %v4038, %v4047
        %v4050 = vshrl.u32 %v3908, 16
        %v4052 = vrot.slane %v4050, 3
        %v4053 = vshll.u32 %v3908, 16
        %v4055 = vrot.slane %v4053, 4
        %v4056 = vor.u32 %v4052, %v4055
        %v4057 = vsel %vm1334, %v4047, %v4056
        %v4059 = vshrl.u32 %v3909, 16
        %v4061 = vrot.slane %v4059, 3
        %v4062 = vshll.u32 %v3909, 16
        %v4064 = vrot.slane %v4062, 4
        %v4065 = vor.u32 %v4061, %v4064
        %v4066 = vsel %vm1334, %v4056, %v4065
        %v4068 = vshrl.u32 %v3910, 16
        %v4070 = vrot.slane %v4068, 3
        %v4071 = vshll.u32 %v3910, 16
        %v4073 = vrot.slane %v4071, 4
        %v4074 = vor.u32 %v4070, %v4073
        %v4075 = vsel %vm1334, %v4065, %v4074
        %v4077 = vshrl.u32 %v3911, 16
        %v4079 = vrot.slane %v4077, 3
        %v4080 = vshll.u32 %v3911, 16
        %v4082 = vrot.slane %v4080, 4
        %v4083 = vor.u32 %v4079, %v4082
        %v4084 = vsel %vm1334, %v4074, %v4083
        %v4086 = vshrl.u32 %v3912, 16
        %v4088 = vrot.slane %v4086, 3
        %v4089 = vshll.u32 %v3912, 16
        %v4091 = vrot.slane %v4089, 4
        %v4092 = vor.u32 %v4088, %v4091
        %v4093 = vsel %vm1334, %v4083, %v4092
        %v4095 = vshrl.u32 %v3913, 16
        %v4097 = vrot.slane %v4095, 3
        %v4098 = vshll.u32 %v3913, 16
        %v4100 = vrot.slane %v4098, 4
        %v4101 = vor.u32 %v4097, %v4100
        %v4102 = vsel %vm1334, %v4092, %v4101
        %v4104 = vshrl.u32 %v3914, 16
        %v4106 = vrot.slane %v4104, 3
        %v4107 = vshll.u32 %v3914, 16
        %v4109 = vrot.slane %v4107, 4
        %v4110 = vor.u32 %v4106, %v4109
        %v4111 = vsel %vm1334, %v4101, %v4110
        %v4150 = vunpack.c.l.b16 %v3789
        %v4151 = vunpack.c.l.b16 %v3790
        %v4152 = vunpack.c.l.b16 %v3791
        %v4153 = vunpack.c.l.b16 %v3792
        %v4154 = vunpack.c.l.b16 %v3793
        %v4155 = vunpack.c.l.b16 %v3794
        %v4156 = vunpack.c.l.b16 %v3795
        %v4157 = vunpack.c.l.b16 %v3796
        %v4158 = vunpack.c.l.b16 %v3797
        %v4159 = vunpack.c.l.b16 %v3798
        %v4160 = vunpack.c.l.b16 %v3799
        %v4161 = vunpack.c.l.b16 %v3800
        %v4162 = vunpack.c.l.b16 %v3801
        %v4163 = vunpack.c.l.b16 %v3802
        %v4164 = vunpack.c.l.b16 %v3803
        %v4165 = vunpack.c.l.b16 %v3804
        %v4166 = vpack.c.b16 %v4151, %v4150
        %v4167 = vpack.c.b16 %v4153, %v4152
        %v4168 = vpack.c.b16 %v4155, %v4154
        %v4169 = vpack.c.b16 %v4157, %v4156
        %v4170 = vpack.c.b16 %v4159, %v4158
        %v4171 = vpack.c.b16 %v4161, %v4160
        %v4172 = vpack.c.b16 %v4163, %v4162
        %v4173 = vpack.c.b16 %v4165, %v4164
        %4182 = vmatpush.bf16.msra.mxu0 %v4173
        %4183 = vmatpush.bf16.msra.mxu0 %v4172
        %4184 = vmatpush.bf16.msra.mxu0 %v4171
        %4185 = vmatpush.bf16.msra.mxu0 %v4170
        %4186 = vmatpush.bf16.msra.mxu0 %v4169
        %4187 = vmatpush.bf16.msra.mxu0 %v4168
        %4188 = vmatpush.bf16.msra.mxu0 %v4167
        %4189 = vmatpush.bf16.msra.mxu0 %v4166
        %4190 = vmatmul.bf16.gmra.mxu0 %v3931
        %v4191 = vpop.f32.mrf.mxu0
        %v4192 = vadd.f32 0.0, %v4191
        %v4193 = vpop.f32.mrf.mxu0
        %v4194 = vadd.f32 0.0, %v4193
        %4195 = vmatmul.bf16.gmra.mxu0 %v3940
        %v4196 = vpop.f32.mrf.mxu0
        %v4197 = vadd.f32 0.0, %v4196
        %v4198 = vpop.f32.mrf.mxu0
        %v4199 = vadd.f32 0.0, %v4198
        %4200 = vmatmul.bf16.gmra.mxu0 %v3949
        %v4201 = vpop.f32.mrf.mxu0
        %v4202 = vadd.f32 0.0, %v4201
        %v4203 = vpop.f32.mrf.mxu0
        %v4204 = vadd.f32 0.0, %v4203
        %4205 = vmatmul.bf16.gmra.mxu0 %v3958
        %v4206 = vpop.f32.mrf.mxu0
        %v4207 = vadd.f32 0.0, %v4206
        %v4208 = vpop.f32.mrf.mxu0
        %v4209 = vadd.f32 0.0, %v4208
        %4210 = vmatmul.bf16.gmra.mxu0 %v3967
        %v4211 = vpop.f32.mrf.mxu0
        %v4212 = vadd.f32 0.0, %v4211
        %v4213 = vpop.f32.mrf.mxu0
        %v4214 = vadd.f32 0.0, %v4213
        %4215 = vmatmul.bf16.gmra.mxu0 %v3976
        %v4216 = vpop.f32.mrf.mxu0
        %v4217 = vadd.f32 0.0, %v4216
        %v4218 = vpop.f32.mrf.mxu0
        %v4219 = vadd.f32 0.0, %v4218
        %4220 = vmatmul.bf16.gmra.mxu0 %v3985
        %v4221 = vpop.f32.mrf.mxu0
        %v4222 = vadd.f32 0.0, %v4221
        %v4223 = vpop.f32.mrf.mxu0
        %v4224 = vadd.f32 0.0, %v4223
        %4225 = vmatmul.bf16.gmra.mxu0 %v3994
        %v4226 = vpop.f32.mrf.mxu0
        %v4227 = vadd.f32 0.0, %v4226
        %v4228 = vpop.f32.mrf.mxu0
        %v4229 = vadd.f32 0.0, %v4228
        %4230 = vmatmul.bf16.gmra.mxu0 %v4003
        %v4231 = vpop.f32.mrf.mxu0
        %v4232 = vadd.f32 0.0, %v4231
        %v4233 = vpop.f32.mrf.mxu0
        %v4234 = vadd.f32 0.0, %v4233
        %4235 = vmatmul.bf16.gmra.mxu0 %v4012
        %v4236 = vpop.f32.mrf.mxu0
        %v4237 = vadd.f32 0.0, %v4236
        %v4238 = vpop.f32.mrf.mxu0
        %v4239 = vadd.f32 0.0, %v4238
        %4240 = vmatmul.bf16.gmra.mxu0 %v4021
        %v4241 = vpop.f32.mrf.mxu0
        %v4242 = vadd.f32 0.0, %v4241
        %v4243 = vpop.f32.mrf.mxu0
        %v4244 = vadd.f32 0.0, %v4243
        %4245 = vmatmul.bf16.gmra.mxu0 %v4030
        %v4246 = vpop.f32.mrf.mxu0
        %v4247 = vadd.f32 0.0, %v4246
        %v4248 = vpop.f32.mrf.mxu0
        %v4249 = vadd.f32 0.0, %v4248
        %4250 = vmatmul.bf16.gmra.mxu0 %v4039
        %v4251 = vpop.f32.mrf.mxu0
        %v4252 = vadd.f32 0.0, %v4251
        %v4253 = vpop.f32.mrf.mxu0
        %v4254 = vadd.f32 0.0, %v4253
        %4255 = vmatmul.bf16.gmra.mxu0 %v4048
        %v4256 = vpop.f32.mrf.mxu0
        %v4257 = vadd.f32 0.0, %v4256
        %v4258 = vpop.f32.mrf.mxu0
        %v4259 = vadd.f32 0.0, %v4258
        %4260 = vmatmul.bf16.gmra.mxu0 %v4057
        %v4261 = vpop.f32.mrf.mxu0
        %v4262 = vadd.f32 0.0, %v4261
        %v4263 = vpop.f32.mrf.mxu0
        %v4264 = vadd.f32 0.0, %v4263
        %4265 = vmatmul.bf16.gmra.mxu0 %v4066
        %v4266 = vpop.f32.mrf.mxu0
        %v4267 = vadd.f32 0.0, %v4266
        %v4268 = vpop.f32.mrf.mxu0
        %v4269 = vadd.f32 0.0, %v4268
        %4270 = vmatmul.bf16.gmra.mxu0 %v4075
        %v4271 = vpop.f32.mrf.mxu0
        %v4272 = vadd.f32 0.0, %v4271
        %v4273 = vpop.f32.mrf.mxu0
        %v4274 = vadd.f32 0.0, %v4273
        %4275 = vmatmul.bf16.gmra.mxu0 %v4084
        %v4276 = vpop.f32.mrf.mxu0
        %v4277 = vadd.f32 0.0, %v4276
        %v4278 = vpop.f32.mrf.mxu0
        %v4279 = vadd.f32 0.0, %v4278
        %4280 = vmatmul.bf16.gmra.mxu0 %v4093
        %v4281 = vpop.f32.mrf.mxu0
        %v4282 = vadd.f32 0.0, %v4281
        %v4283 = vpop.f32.mrf.mxu0
        %v4284 = vadd.f32 0.0, %v4283
        %4285 = vmatmul.bf16.gmra.mxu0 %v4102
        %v4286 = vpop.f32.mrf.mxu0
        %v4287 = vadd.f32 0.0, %v4286
        %v4288 = vpop.f32.mrf.mxu0
        %v4289 = vadd.f32 0.0, %v4288
        %4290 = vmatmul.bf16.gmra.mxu0 %v4111
        %v4291 = vpop.f32.mrf.mxu0
        %v4292 = vadd.f32 0.0, %v4291
        %v4293 = vpop.f32.mrf.mxu0
        %v4294 = vadd.f32 0.0, %v4293
        %4295 = vmatmul.bf16.gmra.mxu0 %v4110
        %v4296 = vpop.f32.mrf.mxu0
        %v4297 = vadd.f32 0.0, %v4296
        %v4298 = vpop.f32.mrf.mxu0
        %4299 = vdwg.mxu0
        %v4300 = vadd.f32 %v3701, %v4192
        %v4301 = vadd.f32 %v3702, %v4194
        %v4302 = vadd.f32 %v3703, %v4197
        %v4303 = vadd.f32 %v3704, %v4199
        %v4304 = vadd.f32 %v3705, %v4202
        %v4305 = vadd.f32 %v3706, %v4204
        %v4306 = vadd.f32 %v3707, %v4207
        %v4307 = vadd.f32 %v3708, %v4209
        %v4308 = vadd.f32 %v3709, %v4212
        %v4309 = vadd.f32 %v3710, %v4214
        %v4310 = vadd.f32 %v3711, %v4217
        %v4311 = vadd.f32 %v3712, %v4219
        %v4312 = vadd.f32 %v3713, %v4222
        %v4313 = vadd.f32 %v3714, %v4224
        %v4314 = vadd.f32 %v3715, %v4227
        %v4315 = vadd.f32 %v3716, %v4229
        %v4316 = vadd.f32 %v3717, %v4232
        %v4317 = vadd.f32 %v3718, %v4234
        %v4318 = vadd.f32 %v3719, %v4237
        %v4319 = vadd.f32 %v3720, %v4239
        %v4320 = vadd.f32 %v3721, %v4242
        %v4321 = vadd.f32 %v3722, %v4244
        %v4322 = vadd.f32 %v3723, %v4247
        %v4323 = vadd.f32 %v3724, %v4249
        %v4324 = vadd.f32 %v3725, %v4252
        %v4325 = vadd.f32 %v3726, %v4254
        %v4326 = vadd.f32 %v3727, %v4257
        %v4327 = vadd.f32 %v3728, %v4259
        %v4328 = vadd.f32 %v3729, %v4262
        %v4329 = vadd.f32 %v3730, %v4264
        %v4330 = vadd.f32 %v3731, %v4267
        %v4331 = vadd.f32 %v3732, %v4269
        %v4332 = vadd.f32 %v3733, %v4272
        %v4333 = vadd.f32 %v3734, %v4274
        %v4334 = vadd.f32 %v3735, %v4277
        %v4335 = vadd.f32 %v3736, %v4279
        %v4336 = vadd.f32 %v3737, %v4282
        %v4337 = vadd.f32 %v3738, %v4284
        %v4338 = vadd.f32 %v3739, %v4287
        %v4339 = vadd.f32 %v3740, %v4289
        %v4340 = vadd.f32 %v3741, %v4292
        %v4341 = vadd.f32 %v3742, %v4294
        %v4342 = vadd.f32 %v3743, %v4297
        %s4343 = scalar_lea.vmem [#allocation3], 448
        %v4344 = vld [vmem:[%s4343] sm:$0xf]
        %v4345 = vld [vmem:[%s4343 + $0x4] sm:$0xf]
        %v4346 = vld [vmem:[%s4343 + $0x8] sm:$0xf]
        %v4347 = vld [vmem:[%s4343 + $0xc] sm:$0xf]
        %v4348 = vld [vmem:[%s4343 + $0x10] sm:$0xf]
        %v4349 = vld [vmem:[%s4343 + $0x14] sm:$0xf]
        %v4350 = vld [vmem:[%s4343 + $0x18] sm:$0xf]
        %v4351 = vld [vmem:[%s4343 + $0x1c] sm:$0xf]
        %v4352 = vld [vmem:[%s4343 + $0x20] sm:$0xf]
        %v4353 = vld [vmem:[%s4343 + $0x24] sm:$0xf]
        %v4354 = vld [vmem:[%s4343 + $0x28] sm:$0xf]
        %v4355 = vld [vmem:[%s4343 + $0x2c] sm:$0xf]
        %v4356 = vld [vmem:[%s4343 + $0x30] sm:$0xf]
        %v4357 = vld [vmem:[%s4343 + $0x34] sm:$0xf]
        %v4358 = vld [vmem:[%s4343 + $0x38] sm:$0xf]
        %v4359 = vld [vmem:[%s4343 + $0x3c] sm:$0xf]
        %v4360 = vpack.c.b16 %v3851, %v3850
        %v4361 = vpack.c.b16 %v3853, %v3852
        %v4362 = vpack.c.b16 %v3855, %v3854
        %v4363 = vpack.c.b16 %v3857, %v3856
        %v4364 = vpack.c.b16 %v3859, %v3858
        %v4365 = vpack.c.b16 %v3861, %v3860
        %v4366 = vpack.c.b16 %v3863, %v3862
        %v4367 = vpack.c.b16 %v3865, %v3864
        %v4368 = vpack.c.b16 %v3867, %v3866
        %v4369 = vpack.c.b16 %v3869, %v3868
        %v4370 = vpack.c.b16 %v3871, %v3870
        %v4371 = vpack.c.b16 %v3873, %v3872
        %v4372 = vpack.c.b16 %v3875, %v3874
        %v4373 = vpack.c.b16 %v3877, %v3876
        %v4374 = vpack.c.b16 %v3879, %v3878
        %v4375 = vpack.c.b16 %v3881, %v3880
        %v4376 = vpack.c.b16 %v3883, %v3882
        %v4377 = vpack.c.b16 %v3885, %v3884
        %v4378 = vpack.c.b16 %v3887, %v3886
        %v4379 = vpack.c.b16 %v3889, %v3888
        %v4380 = vpack.c.b16 %v3891, %v3890
        %v4381 = vpack.c.b16 %v3892, %v3892
        %v4420 = vunpack.c.l.b16 %v4344
        %v4421 = vunpack.c.l.b16 %v4345
        %v4422 = vunpack.c.l.b16 %v4346
        %v4423 = vunpack.c.l.b16 %v4347
        %v4424 = vunpack.c.l.b16 %v4348
        %v4425 = vunpack.c.l.b16 %v4349
        %v4426 = vunpack.c.l.b16 %v4350
        %v4427 = vunpack.c.l.b16 %v4351
        %v4428 = vunpack.c.l.b16 %v4352
        %v4429 = vunpack.c.l.b16 %v4353
        %v4430 = vunpack.c.l.b16 %v4354
        %v4431 = vunpack.c.l.b16 %v4355
        %v4432 = vunpack.c.l.b16 %v4356
        %v4433 = vunpack.c.l.b16 %v4357
        %v4434 = vunpack.c.l.b16 %v4358
        %v4435 = vunpack.c.l.b16 %v4359
        %v4436 = vpack.c.b16 %v4421, %v4420
        %v4437 = vpack.c.b16 %v4423, %v4422
        %v4438 = vpack.c.b16 %v4425, %v4424
        %v4439 = vpack.c.b16 %v4427, %v4426
        %v4440 = vpack.c.b16 %v4429, %v4428
        %v4441 = vpack.c.b16 %v4431, %v4430
        %v4442 = vpack.c.b16 %v4433, %v4432
        %v4443 = vpack.c.b16 %v4435, %v4434
        %4452 = vmatpush.bf16.msra.mxu0 %v4443
        %4453 = vmatpush.bf16.msra.mxu0 %v4442
        %4454 = vmatpush.bf16.msra.mxu0 %v4441
        %4455 = vmatpush.bf16.msra.mxu0 %v4440
        %4456 = vmatpush.bf16.msra.mxu0 %v4439
        %4457 = vmatpush.bf16.msra.mxu0 %v4438
        %4458 = vmatpush.bf16.msra.mxu0 %v4437
        %4459 = vmatpush.bf16.msra.mxu0 %v4436
        %4460 = vmatmul.bf16.gmra.mxu0 %v4360
        %v4461 = vpop.f32.mrf.mxu0
        %v4462 = vadd.f32 0.0, %v4461
        %v4463 = vpop.f32.mrf.mxu0
        %v4464 = vadd.f32 0.0, %v4463
        %4465 = vmatmul.bf16.gmra.mxu0 %v4361
        %v4466 = vpop.f32.mrf.mxu0
        %v4467 = vadd.f32 0.0, %v4466
        %v4468 = vpop.f32.mrf.mxu0
        %v4469 = vadd.f32 0.0, %v4468
        %4470 = vmatmul.bf16.gmra.mxu0 %v4362
        %v4471 = vpop.f32.mrf.mxu0
        %v4472 = vadd.f32 0.0, %v4471
        %v4473 = vpop.f32.mrf.mxu0
        %v4474 = vadd.f32 0.0, %v4473
        %4475 = vmatmul.bf16.gmra.mxu0 %v4363
        %v4476 = vpop.f32.mrf.mxu0
        %v4477 = vadd.f32 0.0, %v4476
        %v4478 = vpop.f32.mrf.mxu0
        %v4479 = vadd.f32 0.0, %v4478
        %4480 = vmatmul.bf16.gmra.mxu0 %v4364
        %v4481 = vpop.f32.mrf.mxu0
        %v4482 = vadd.f32 0.0, %v4481
        %v4483 = vpop.f32.mrf.mxu0
        %v4484 = vadd.f32 0.0, %v4483
        %4485 = vmatmul.bf16.gmra.mxu0 %v4365
        %v4486 = vpop.f32.mrf.mxu0
        %v4487 = vadd.f32 0.0, %v4486
        %v4488 = vpop.f32.mrf.mxu0
        %v4489 = vadd.f32 0.0, %v4488
        %4490 = vmatmul.bf16.gmra.mxu0 %v4366
        %v4491 = vpop.f32.mrf.mxu0
        %v4492 = vadd.f32 0.0, %v4491
        %v4493 = vpop.f32.mrf.mxu0
        %v4494 = vadd.f32 0.0, %v4493
        %4495 = vmatmul.bf16.gmra.mxu0 %v4367
        %v4496 = vpop.f32.mrf.mxu0
        %v4497 = vadd.f32 0.0, %v4496
        %v4498 = vpop.f32.mrf.mxu0
        %v4499 = vadd.f32 0.0, %v4498
        %4500 = vmatmul.bf16.gmra.mxu0 %v4368
        %v4501 = vpop.f32.mrf.mxu0
        %v4502 = vadd.f32 0.0, %v4501
        %v4503 = vpop.f32.mrf.mxu0
        %v4504 = vadd.f32 0.0, %v4503
        %4505 = vmatmul.bf16.gmra.mxu0 %v4369
        %v4506 = vpop.f32.mrf.mxu0
        %v4507 = vadd.f32 0.0, %v4506
        %v4508 = vpop.f32.mrf.mxu0
        %v4509 = vadd.f32 0.0, %v4508
        %4510 = vmatmul.bf16.gmra.mxu0 %v4370
        %v4511 = vpop.f32.mrf.mxu0
        %v4512 = vadd.f32 0.0, %v4511
        %v4513 = vpop.f32.mrf.mxu0
        %v4514 = vadd.f32 0.0, %v4513
        %4515 = vmatmul.bf16.gmra.mxu0 %v4371
        %v4516 = vpop.f32.mrf.mxu0
        %v4517 = vadd.f32 0.0, %v4516
        %v4518 = vpop.f32.mrf.mxu0
        %v4519 = vadd.f32 0.0, %v4518
        %4520 = vmatmul.bf16.gmra.mxu0 %v4372
        %v4521 = vpop.f32.mrf.mxu0
        %v4522 = vadd.f32 0.0, %v4521
        %v4523 = vpop.f32.mrf.mxu0
        %v4524 = vadd.f32 0.0, %v4523
        %4525 = vmatmul.bf16.gmra.mxu0 %v4373
        %v4526 = vpop.f32.mrf.mxu0
        %v4527 = vadd.f32 0.0, %v4526
        %v4528 = vpop.f32.mrf.mxu0
        %v4529 = vadd.f32 0.0, %v4528
        %4530 = vmatmul.bf16.gmra.mxu0 %v4374
        %v4531 = vpop.f32.mrf.mxu0
        %v4532 = vadd.f32 0.0, %v4531
        %v4533 = vpop.f32.mrf.mxu0
        %v4534 = vadd.f32 0.0, %v4533
        %4535 = vmatmul.bf16.gmra.mxu0 %v4375
        %v4536 = vpop.f32.mrf.mxu0
        %v4537 = vadd.f32 0.0, %v4536
        %v4538 = vpop.f32.mrf.mxu0
        %v4539 = vadd.f32 0.0, %v4538
        %4540 = vmatmul.bf16.gmra.mxu0 %v4376
        %v4541 = vpop.f32.mrf.mxu0
        %v4542 = vadd.f32 0.0, %v4541
        %v4543 = vpop.f32.mrf.mxu0
        %v4544 = vadd.f32 0.0, %v4543
        %4545 = vmatmul.bf16.gmra.mxu0 %v4377
        %v4546 = vpop.f32.mrf.mxu0
        %v4547 = vadd.f32 0.0, %v4546
        %v4548 = vpop.f32.mrf.mxu0
        %v4549 = vadd.f32 0.0, %v4548
        %4550 = vmatmul.bf16.gmra.mxu0 %v4378
        %v4551 = vpop.f32.mrf.mxu0
        %v4552 = vadd.f32 0.0, %v4551
        %v4553 = vpop.f32.mrf.mxu0
        %v4554 = vadd.f32 0.0, %v4553
        %4555 = vmatmul.bf16.gmra.mxu0 %v4379
        %v4556 = vpop.f32.mrf.mxu0
        %v4557 = vadd.f32 0.0, %v4556
        %v4558 = vpop.f32.mrf.mxu0
        %v4559 = vadd.f32 0.0, %v4558
        %4560 = vmatmul.bf16.gmra.mxu0 %v4380
        %v4561 = vpop.f32.mrf.mxu0
        %v4562 = vadd.f32 0.0, %v4561
        %v4563 = vpop.f32.mrf.mxu0
        %v4564 = vadd.f32 0.0, %v4563
        %4565 = vmatmul.bf16.gmra.mxu0 %v4381
        %v4566 = vpop.f32.mrf.mxu0
        %v4567 = vadd.f32 0.0, %v4566
        %v4568 = vpop.f32.mrf.mxu0
        %4569 = vdwg.mxu0
        %v4570 = vadd.f32 %v4300, %v4462
        %v4571 = vadd.f32 %v4301, %v4464
        %v4572 = vadd.f32 %v4302, %v4467
        %v4573 = vadd.f32 %v4303, %v4469
        %v4574 = vadd.f32 %v4304, %v4472
        %v4575 = vadd.f32 %v4305, %v4474
        %v4576 = vadd.f32 %v4306, %v4477
        %v4577 = vadd.f32 %v4307, %v4479
        %v4578 = vadd.f32 %v4308, %v4482
        %v4579 = vadd.f32 %v4309, %v4484
        %v4580 = vadd.f32 %v4310, %v4487
        %v4581 = vadd.f32 %v4311, %v4489
        %v4582 = vadd.f32 %v4312, %v4492
        %v4583 = vadd.f32 %v4313, %v4494
        %v4584 = vadd.f32 %v4314, %v4497
        %v4585 = vadd.f32 %v4315, %v4499
        %v4586 = vadd.f32 %v4316, %v4502
        %v4587 = vadd.f32 %v4317, %v4504
        %v4588 = vadd.f32 %v4318, %v4507
        %v4589 = vadd.f32 %v4319, %v4509
        %v4590 = vadd.f32 %v4320, %v4512
        %v4591 = vadd.f32 %v4321, %v4514
        %v4592 = vadd.f32 %v4322, %v4517
        %v4593 = vadd.f32 %v4323, %v4519
        %v4594 = vadd.f32 %v4324, %v4522
        %v4595 = vadd.f32 %v4325, %v4524
        %v4596 = vadd.f32 %v4326, %v4527
        %v4597 = vadd.f32 %v4327, %v4529
        %v4598 = vadd.f32 %v4328, %v4532
        %v4599 = vadd.f32 %v4329, %v4534
        %v4600 = vadd.f32 %v4330, %v4537
        %v4601 = vadd.f32 %v4331, %v4539
        %v4602 = vadd.f32 %v4332, %v4542
        %v4603 = vadd.f32 %v4333, %v4544
        %v4604 = vadd.f32 %v4334, %v4547
        %v4605 = vadd.f32 %v4335, %v4549
        %v4606 = vadd.f32 %v4336, %v4552
        %v4607 = vadd.f32 %v4337, %v4554
        %v4608 = vadd.f32 %v4338, %v4557
        %v4609 = vadd.f32 %v4339, %v4559
        %v4610 = vadd.f32 %v4340, %v4562
        %v4611 = vadd.f32 %v4341, %v4564
        %v4612 = vadd.f32 %v4342, %v4567
        %v4613 = vld [vmem:[#allocation2 + $0x38] sm:$0xf]
        %v4614 = vld [vmem:[#allocation2 + $0x3c] sm:$0xf]
        %v4615 = vld [vmem:[#allocation2 + $0x40] sm:$0xf]
        %v4616 = vld [vmem:[#allocation2 + $0x44] sm:$0xf]
        %v4617 = vld [vmem:[#allocation2 + $0x48] sm:$0xf]
        %v4618 = vld [vmem:[#allocation2 + $0x4c] sm:$0xf]
        %v4619 = vld [vmem:[#allocation2 + $0x50] sm:$0xf]
        %v4620 = vld [vmem:[#allocation2 + $0x54] sm:$0xf]
        %v4621 = vld [vmem:[#allocation2 + $0x58] sm:$0xf]
        %v4622 = vld [vmem:[#allocation2 + $0x5c] sm:$0xf]
        %v4623 = vld [vmem:[#allocation2 + $0x60] sm:$0xf]
        %v4624 = vld [vmem:[#allocation2 + $0x64] sm:$0xf]
        %v4625 = vld [vmem:[#allocation2 + $0x68] sm:$0xf]
        %v4626 = vld [vmem:[#allocation2 + $0x6c] sm:$0xf]
        %v4627 = vld [vmem:[#allocation2 + $0x70] sm:$0xf]
        %v4628 = vld [vmem:[#allocation2 + $0x74] sm:$0xf]
        %v4629 = vld [vmem:[#allocation2 + $0x78] sm:$0xf]
        %v4630 = vld [vmem:[#allocation2 + $0x7c] sm:$0xf]
        %v4631 = vld [vmem:[#allocation2 + $0x80] sm:$0xf]
        %v4632 = vld [vmem:[#allocation2 + $0x84] sm:$0xf]
        %v4633 = vld [vmem:[#allocation2 + $0x88] sm:$0xf]
        %v4634 = vld [vmem:[#allocation2 + $0x8c] sm:$0xf]
        %v4635 = vld [vmem:[#allocation2 + $0x90] sm:$0xf]
        %v4636 = vld [vmem:[#allocation2 + $0x94] sm:$0xf]
        %v4637 = vld [vmem:[#allocation2 + $0x98] sm:$0xf]
        %v4638 = vld [vmem:[#allocation2 + $0x9c] sm:$0xf]
        %v4639 = vld [vmem:[#allocation2 + $0xa0] sm:$0xf]
        %v4640 = vld [vmem:[#allocation2 + $0xa4] sm:$0xf]
        %v4641 = vld [vmem:[#allocation2 + $0xa8] sm:$0xf]
        %v4642 = vld [vmem:[#allocation2 + $0xac] sm:$0xf]
        %v4643 = vld [vmem:[#allocation2 + $0xb0] sm:$0xf]
        %v4644 = vld [vmem:[#allocation2 + $0xb4] sm:$0xf]
        %v4645 = vld [vmem:[#allocation2 + $0xb8] sm:$0xf]
        %v4646 = vld [vmem:[#allocation2 + $0xbc] sm:$0xf]
        %v4647 = vld [vmem:[#allocation2 + $0xc0] sm:$0xf]
        %v4648 = vld [vmem:[#allocation2 + $0xc4] sm:$0xf]
        %v4649 = vld [vmem:[#allocation2 + $0xc8] sm:$0xf]
        %v4650 = vld [vmem:[#allocation2 + $0xcc] sm:$0xf]
        %v4651 = vld [vmem:[#allocation2 + $0xd0] sm:$0xf]
        %v4652 = vld [vmem:[#allocation2 + $0xd4] sm:$0xf]
        %v4653 = vld [vmem:[#allocation2 + $0xd8] sm:$0xf]
        %v4654 = vld [vmem:[#allocation2 + $0xdc] sm:$0xf]
        %v4655 = vld [vmem:[#allocation2 + $0xe0] sm:$0xf]
        %v4656 = vld [vmem:[#allocation2 + $0xe4] sm:$0x1]
        %s4657 = scalar_lea.vmem [#allocation3], 512
        %v4658 = vld [vmem:[%s4657] sm:$0xf]
        %v4659 = vld [vmem:[%s4657 + $0x4] sm:$0xf]
        %v4660 = vld [vmem:[%s4657 + $0x8] sm:$0xf]
        %v4661 = vld [vmem:[%s4657 + $0xc] sm:$0xf]
        %v4662 = vld [vmem:[%s4657 + $0x10] sm:$0xf]
        %v4663 = vld [vmem:[%s4657 + $0x14] sm:$0xf]
        %v4664 = vld [vmem:[%s4657 + $0x18] sm:$0xf]
        %v4665 = vld [vmem:[%s4657 + $0x1c] sm:$0xf]
        %v4666 = vld [vmem:[%s4657 + $0x20] sm:$0xf]
        %v4667 = vld [vmem:[%s4657 + $0x24] sm:$0xf]
        %v4668 = vld [vmem:[%s4657 + $0x28] sm:$0xf]
        %v4669 = vld [vmem:[%s4657 + $0x2c] sm:$0xf]
        %v4670 = vld [vmem:[%s4657 + $0x30] sm:$0xf]
        %v4671 = vld [vmem:[%s4657 + $0x34] sm:$0xf]
        %v4672 = vld [vmem:[%s4657 + $0x38] sm:$0xf]
        %v4673 = vld [vmem:[%s4657 + $0x3c] sm:$0xf]
        %v4718 = vunpack.c.l.b16 %v4613
        %v4719 = vunpack.c.l.b16 %v4614
        %v4720 = vunpack.c.l.b16 %v4615
        %v4721 = vunpack.c.l.b16 %v4616
        %v4722 = vunpack.c.l.b16 %v4617
        %v4723 = vunpack.c.l.b16 %v4618
        %v4724 = vunpack.c.l.b16 %v4619
        %v4725 = vunpack.c.l.b16 %v4620
        %v4726 = vunpack.c.l.b16 %v4621
        %v4727 = vunpack.c.l.b16 %v4622
        %v4728 = vunpack.c.l.b16 %v4623
        %v4729 = vunpack.c.l.b16 %v4624
        %v4730 = vunpack.c.l.b16 %v4625
        %v4731 = vunpack.c.l.b16 %v4626
        %v4732 = vunpack.c.l.b16 %v4627
        %v4733 = vunpack.c.l.b16 %v4628
        %v4734 = vunpack.c.l.b16 %v4629
        %v4735 = vunpack.c.l.b16 %v4630
        %v4736 = vunpack.c.l.b16 %v4631
        %v4737 = vunpack.c.l.b16 %v4632
        %v4738 = vunpack.c.l.b16 %v4633
        %v4739 = vunpack.c.l.b16 %v4634
        %v4740 = vunpack.c.l.b16 %v4635
        %v4741 = vunpack.c.l.b16 %v4636
        %v4742 = vunpack.c.l.b16 %v4637
        %v4743 = vunpack.c.l.b16 %v4638
        %v4744 = vunpack.c.l.b16 %v4639
        %v4745 = vunpack.c.l.b16 %v4640
        %v4746 = vunpack.c.l.b16 %v4641
        %v4747 = vunpack.c.l.b16 %v4642
        %v4748 = vunpack.c.l.b16 %v4643
        %v4749 = vunpack.c.l.b16 %v4644
        %v4750 = vunpack.c.l.b16 %v4645
        %v4751 = vunpack.c.l.b16 %v4646
        %v4752 = vunpack.c.l.b16 %v4647
        %v4753 = vunpack.c.l.b16 %v4648
        %v4754 = vunpack.c.l.b16 %v4649
        %v4755 = vunpack.c.l.b16 %v4650
        %v4756 = vunpack.c.l.b16 %v4651
        %v4757 = vunpack.c.l.b16 %v4652
        %v4758 = vunpack.c.l.b16 %v4653
        %v4759 = vunpack.c.l.b16 %v4654
        %v4760 = vunpack.c.l.b16 %v4655
        %v4761 = vunpack.c.l.b16 %v4656
        %v4762 = vpack.c.b16 %v4719, %v4718
        %v4763 = vpack.c.b16 %v4721, %v4720
        %v4764 = vpack.c.b16 %v4723, %v4722
        %v4765 = vpack.c.b16 %v4725, %v4724
        %v4766 = vpack.c.b16 %v4727, %v4726
        %v4767 = vpack.c.b16 %v4729, %v4728
        %v4768 = vpack.c.b16 %v4731, %v4730
        %v4769 = vpack.c.b16 %v4733, %v4732
        %v4770 = vpack.c.b16 %v4735, %v4734
        %v4771 = vpack.c.b16 %v4737, %v4736
        %v4772 = vpack.c.b16 %v4739, %v4738
        %v4773 = vpack.c.b16 %v4741, %v4740
        %v4774 = vpack.c.b16 %v4743, %v4742
        %v4775 = vpack.c.b16 %v4745, %v4744
        %v4776 = vpack.c.b16 %v4747, %v4746
        %v4777 = vpack.c.b16 %v4749, %v4748
        %v4778 = vpack.c.b16 %v4751, %v4750
        %v4779 = vpack.c.b16 %v4753, %v4752
        %v4780 = vpack.c.b16 %v4755, %v4754
        %v4781 = vpack.c.b16 %v4757, %v4756
        %v4782 = vpack.c.b16 %v4759, %v4758
        %v4783 = vpack.c.b16 %v4761, %v4760
        %v4785 = vshrl.u32 %v4762, 16
        %v4787 = vshll.u32 %v4762, 16
        %v4789 = vrot.slane %v4787, 1
        %v4790 = vor.u32 %v4785, %v4789
        %v4792 = vshll.u32 %v4763, 16
        %v4794 = vrot.slane %v4792, 1
        %v4795 = vsel %vm1891, %v4790, %v4794
        %v4796 = vshrl.u32 %v4763, 16
        %v4798 = vor.u32 %v4796, %v4794
        %v4800 = vshll.u32 %v4764, 16
        %v4802 = vrot.slane %v4800, 1
        %v4803 = vsel %vm1891, %v4798, %v4802
        %v4804 = vshrl.u32 %v4764, 16
        %v4806 = vor.u32 %v4804, %v4802
        %v4808 = vshll.u32 %v4765, 16
        %v4810 = vrot.slane %v4808, 1
        %v4811 = vsel %vm1891, %v4806, %v4810
        %v4812 = vshrl.u32 %v4765, 16
        %v4814 = vor.u32 %v4812, %v4810
        %v4816 = vshll.u32 %v4766, 16
        %v4818 = vrot.slane %v4816, 1
        %v4819 = vsel %vm1891, %v4814, %v4818
        %v4820 = vshrl.u32 %v4766, 16
        %v4822 = vor.u32 %v4820, %v4818
        %v4824 = vshll.u32 %v4767, 16
        %v4826 = vrot.slane %v4824, 1
        %v4827 = vsel %vm1891, %v4822, %v4826
        %v4828 = vshrl.u32 %v4767, 16
        %v4830 = vor.u32 %v4828, %v4826
        %v4832 = vshll.u32 %v4768, 16
        %v4834 = vrot.slane %v4832, 1
        %v4835 = vsel %vm1891, %v4830, %v4834
        %v4836 = vshrl.u32 %v4768, 16
        %v4838 = vor.u32 %v4836, %v4834
        %v4840 = vshll.u32 %v4769, 16
        %v4842 = vrot.slane %v4840, 1
        %v4843 = vsel %vm1891, %v4838, %v4842
        %v4844 = vshrl.u32 %v4769, 16
        %v4846 = vor.u32 %v4844, %v4842
        %v4848 = vshll.u32 %v4770, 16
        %v4850 = vrot.slane %v4848, 1
        %v4851 = vsel %vm1891, %v4846, %v4850
        %v4852 = vshrl.u32 %v4770, 16
        %v4854 = vor.u32 %v4852, %v4850
        %v4856 = vshll.u32 %v4771, 16
        %v4858 = vrot.slane %v4856, 1
        %v4859 = vsel %vm1891, %v4854, %v4858
        %v4860 = vshrl.u32 %v4771, 16
        %v4862 = vor.u32 %v4860, %v4858
        %v4864 = vshll.u32 %v4772, 16
        %v4866 = vrot.slane %v4864, 1
        %v4867 = vsel %vm1891, %v4862, %v4866
        %v4868 = vshrl.u32 %v4772, 16
        %v4870 = vor.u32 %v4868, %v4866
        %v4872 = vshll.u32 %v4773, 16
        %v4874 = vrot.slane %v4872, 1
        %v4875 = vsel %vm1891, %v4870, %v4874
        %v4876 = vshrl.u32 %v4773, 16
        %v4878 = vor.u32 %v4876, %v4874
        %v4880 = vshll.u32 %v4774, 16
        %v4882 = vrot.slane %v4880, 1
        %v4883 = vsel %vm1891, %v4878, %v4882
        %v4884 = vshrl.u32 %v4774, 16
        %v4886 = vor.u32 %v4884, %v4882
        %v4888 = vshll.u32 %v4775, 16
        %v4890 = vrot.slane %v4888, 1
        %v4891 = vsel %vm1891, %v4886, %v4890
        %v4892 = vshrl.u32 %v4775, 16
        %v4894 = vor.u32 %v4892, %v4890
        %v4896 = vshll.u32 %v4776, 16
        %v4898 = vrot.slane %v4896, 1
        %v4899 = vsel %vm1891, %v4894, %v4898
        %v4900 = vshrl.u32 %v4776, 16
        %v4902 = vor.u32 %v4900, %v4898
        %v4904 = vshll.u32 %v4777, 16
        %v4906 = vrot.slane %v4904, 1
        %v4907 = vsel %vm1891, %v4902, %v4906
        %v4908 = vshrl.u32 %v4777, 16
        %v4910 = vor.u32 %v4908, %v4906
        %v4912 = vshll.u32 %v4778, 16
        %v4914 = vrot.slane %v4912, 1
        %v4915 = vsel %vm1891, %v4910, %v4914
        %v4916 = vshrl.u32 %v4778, 16
        %v4918 = vor.u32 %v4916, %v4914
        %v4920 = vshll.u32 %v4779, 16
        %v4922 = vrot.slane %v4920, 1
        %v4923 = vsel %vm1891, %v4918, %v4922
        %v4924 = vshrl.u32 %v4779, 16
        %v4926 = vor.u32 %v4924, %v4922
        %v4928 = vshll.u32 %v4780, 16
        %v4930 = vrot.slane %v4928, 1
        %v4931 = vsel %vm1891, %v4926, %v4930
        %v4932 = vshrl.u32 %v4780, 16
        %v4934 = vor.u32 %v4932, %v4930
        %v4936 = vshll.u32 %v4781, 16
        %v4938 = vrot.slane %v4936, 1
        %v4939 = vsel %vm1891, %v4934, %v4938
        %v4940 = vshrl.u32 %v4781, 16
        %v4942 = vor.u32 %v4940, %v4938
        %v4944 = vshll.u32 %v4782, 16
        %v4946 = vrot.slane %v4944, 1
        %v4947 = vsel %vm1891, %v4942, %v4946
        %v4948 = vshrl.u32 %v4782, 16
        %v4950 = vor.u32 %v4948, %v4946
        %v4952 = vshll.u32 %v4783, 16
        %v4954 = vrot.slane %v4952, 1
        %v4955 = vsel %vm1891, %v4950, %v4954
        %v4956 = vshrl.u32 %v4783, 16
        %v4958 = vor.u32 %v4956, %v4954
        %v4997 = vunpack.c.l.b16 %v4658
        %v4998 = vunpack.c.l.b16 %v4659
        %v4999 = vunpack.c.l.b16 %v4660
        %v5000 = vunpack.c.l.b16 %v4661
        %v5001 = vunpack.c.l.b16 %v4662
        %v5002 = vunpack.c.l.b16 %v4663
        %v5003 = vunpack.c.l.b16 %v4664
        %v5004 = vunpack.c.l.b16 %v4665
        %v5005 = vunpack.c.l.b16 %v4666
        %v5006 = vunpack.c.l.b16 %v4667
        %v5007 = vunpack.c.l.b16 %v4668
        %v5008 = vunpack.c.l.b16 %v4669
        %v5009 = vunpack.c.l.b16 %v4670
        %v5010 = vunpack.c.l.b16 %v4671
        %v5011 = vunpack.c.l.b16 %v4672
        %v5012 = vunpack.c.l.b16 %v4673
        %v5013 = vpack.c.b16 %v4998, %v4997
        %v5014 = vpack.c.b16 %v5000, %v4999
        %v5015 = vpack.c.b16 %v5002, %v5001
        %v5016 = vpack.c.b16 %v5004, %v5003
        %v5017 = vpack.c.b16 %v5006, %v5005
        %v5018 = vpack.c.b16 %v5008, %v5007
        %v5019 = vpack.c.b16 %v5010, %v5009
        %v5020 = vpack.c.b16 %v5012, %v5011
        %5029 = vmatpush.bf16.msra.mxu0 %v5020
        %5030 = vmatpush.bf16.msra.mxu0 %v5019
        %5031 = vmatpush.bf16.msra.mxu0 %v5018
        %5032 = vmatpush.bf16.msra.mxu0 %v5017
        %5033 = vmatpush.bf16.msra.mxu0 %v5016
        %5034 = vmatpush.bf16.msra.mxu0 %v5015
        %5035 = vmatpush.bf16.msra.mxu0 %v5014
        %5036 = vmatpush.bf16.msra.mxu0 %v5013
        %5037 = vmatmul.bf16.gmra.mxu0 %v4795
        %v5038 = vpop.f32.mrf.mxu0
        %v5039 = vadd.f32 0.0, %v5038
        %v5040 = vpop.f32.mrf.mxu0
        %v5041 = vadd.f32 0.0, %v5040
        %5042 = vmatmul.bf16.gmra.mxu0 %v4803
        %v5043 = vpop.f32.mrf.mxu0
        %v5044 = vadd.f32 0.0, %v5043
        %v5045 = vpop.f32.mrf.mxu0
        %v5046 = vadd.f32 0.0, %v5045
        %5047 = vmatmul.bf16.gmra.mxu0 %v4811
        %v5048 = vpop.f32.mrf.mxu0
        %v5049 = vadd.f32 0.0, %v5048
        %v5050 = vpop.f32.mrf.mxu0
        %v5051 = vadd.f32 0.0, %v5050
        %5052 = vmatmul.bf16.gmra.mxu0 %v4819
        %v5053 = vpop.f32.mrf.mxu0
        %v5054 = vadd.f32 0.0, %v5053
        %v5055 = vpop.f32.mrf.mxu0
        %v5056 = vadd.f32 0.0, %v5055
        %5057 = vmatmul.bf16.gmra.mxu0 %v4827
        %v5058 = vpop.f32.mrf.mxu0
        %v5059 = vadd.f32 0.0, %v5058
        %v5060 = vpop.f32.mrf.mxu0
        %v5061 = vadd.f32 0.0, %v5060
        %5062 = vmatmul.bf16.gmra.mxu0 %v4835
        %v5063 = vpop.f32.mrf.mxu0
        %v5064 = vadd.f32 0.0, %v5063
        %v5065 = vpop.f32.mrf.mxu0
        %v5066 = vadd.f32 0.0, %v5065
        %5067 = vmatmul.bf16.gmra.mxu0 %v4843
        %v5068 = vpop.f32.mrf.mxu0
        %v5069 = vadd.f32 0.0, %v5068
        %v5070 = vpop.f32.mrf.mxu0
        %v5071 = vadd.f32 0.0, %v5070
        %5072 = vmatmul.bf16.gmra.mxu0 %v4851
        %v5073 = vpop.f32.mrf.mxu0
        %v5074 = vadd.f32 0.0, %v5073
        %v5075 = vpop.f32.mrf.mxu0
        %v5076 = vadd.f32 0.0, %v5075
        %5077 = vmatmul.bf16.gmra.mxu0 %v4859
        %v5078 = vpop.f32.mrf.mxu0
        %v5079 = vadd.f32 0.0, %v5078
        %v5080 = vpop.f32.mrf.mxu0
        %v5081 = vadd.f32 0.0, %v5080
        %5082 = vmatmul.bf16.gmra.mxu0 %v4867
        %v5083 = vpop.f32.mrf.mxu0
        %v5084 = vadd.f32 0.0, %v5083
        %v5085 = vpop.f32.mrf.mxu0
        %v5086 = vadd.f32 0.0, %v5085
        %5087 = vmatmul.bf16.gmra.mxu0 %v4875
        %v5088 = vpop.f32.mrf.mxu0
        %v5089 = vadd.f32 0.0, %v5088
        %v5090 = vpop.f32.mrf.mxu0
        %v5091 = vadd.f32 0.0, %v5090
        %5092 = vmatmul.bf16.gmra.mxu0 %v4883
        %v5093 = vpop.f32.mrf.mxu0
        %v5094 = vadd.f32 0.0, %v5093
        %v5095 = vpop.f32.mrf.mxu0
        %v5096 = vadd.f32 0.0, %v5095
        %5097 = vmatmul.bf16.gmra.mxu0 %v4891
        %v5098 = vpop.f32.mrf.mxu0
        %v5099 = vadd.f32 0.0, %v5098
        %v5100 = vpop.f32.mrf.mxu0
        %v5101 = vadd.f32 0.0, %v5100
        %5102 = vmatmul.bf16.gmra.mxu0 %v4899
        %v5103 = vpop.f32.mrf.mxu0
        %v5104 = vadd.f32 0.0, %v5103
        %v5105 = vpop.f32.mrf.mxu0
        %v5106 = vadd.f32 0.0, %v5105
        %5107 = vmatmul.bf16.gmra.mxu0 %v4907
        %v5108 = vpop.f32.mrf.mxu0
        %v5109 = vadd.f32 0.0, %v5108
        %v5110 = vpop.f32.mrf.mxu0
        %v5111 = vadd.f32 0.0, %v5110
        %5112 = vmatmul.bf16.gmra.mxu0 %v4915
        %v5113 = vpop.f32.mrf.mxu0
        %v5114 = vadd.f32 0.0, %v5113
        %v5115 = vpop.f32.mrf.mxu0
        %v5116 = vadd.f32 0.0, %v5115
        %5117 = vmatmul.bf16.gmra.mxu0 %v4923
        %v5118 = vpop.f32.mrf.mxu0
        %v5119 = vadd.f32 0.0, %v5118
        %v5120 = vpop.f32.mrf.mxu0
        %v5121 = vadd.f32 0.0, %v5120
        %5122 = vmatmul.bf16.gmra.mxu0 %v4931
        %v5123 = vpop.f32.mrf.mxu0
        %v5124 = vadd.f32 0.0, %v5123
        %v5125 = vpop.f32.mrf.mxu0
        %v5126 = vadd.f32 0.0, %v5125
        %5127 = vmatmul.bf16.gmra.mxu0 %v4939
        %v5128 = vpop.f32.mrf.mxu0
        %v5129 = vadd.f32 0.0, %v5128
        %v5130 = vpop.f32.mrf.mxu0
        %v5131 = vadd.f32 0.0, %v5130
        %5132 = vmatmul.bf16.gmra.mxu0 %v4947
        %v5133 = vpop.f32.mrf.mxu0
        %v5134 = vadd.f32 0.0, %v5133
        %v5135 = vpop.f32.mrf.mxu0
        %v5136 = vadd.f32 0.0, %v5135
        %5137 = vmatmul.bf16.gmra.mxu0 %v4955
        %v5138 = vpop.f32.mrf.mxu0
        %v5139 = vadd.f32 0.0, %v5138
        %v5140 = vpop.f32.mrf.mxu0
        %v5141 = vadd.f32 0.0, %v5140
        %5142 = vmatmul.bf16.gmra.mxu0 %v4958
        %v5143 = vpop.f32.mrf.mxu0
        %v5144 = vadd.f32 0.0, %v5143
        %v5145 = vpop.f32.mrf.mxu0
        %5146 = vdwg.mxu0
        %v5147 = vadd.f32 %v4570, %v5039
        %v5148 = vadd.f32 %v4571, %v5041
        %v5149 = vadd.f32 %v4572, %v5044
        %v5150 = vadd.f32 %v4573, %v5046
        %v5151 = vadd.f32 %v4574, %v5049
        %v5152 = vadd.f32 %v4575, %v5051
        %v5153 = vadd.f32 %v4576, %v5054
        %v5154 = vadd.f32 %v4577, %v5056
        %v5155 = vadd.f32 %v4578, %v5059
        %v5156 = vadd.f32 %v4579, %v5061
        %v5157 = vadd.f32 %v4580, %v5064
        %v5158 = vadd.f32 %v4581, %v5066
        %v5159 = vadd.f32 %v4582, %v5069
        %v5160 = vadd.f32 %v4583, %v5071
        %v5161 = vadd.f32 %v4584, %v5074
        %v5162 = vadd.f32 %v4585, %v5076
        %v5163 = vadd.f32 %v4586, %v5079
        %v5164 = vadd.f32 %v4587, %v5081
        %v5165 = vadd.f32 %v4588, %v5084
        %v5166 = vadd.f32 %v4589, %v5086
        %v5167 = vadd.f32 %v4590, %v5089
        %v5168 = vadd.f32 %v4591, %v5091
        %v5169 = vadd.f32 %v4592, %v5094
        %v5170 = vadd.f32 %v4593, %v5096
        %v5171 = vadd.f32 %v4594, %v5099
        %v5172 = vadd.f32 %v4595, %v5101
        %v5173 = vadd.f32 %v4596, %v5104
        %v5174 = vadd.f32 %v4597, %v5106
        %v5175 = vadd.f32 %v4598, %v5109
        %v5176 = vadd.f32 %v4599, %v5111
        %v5177 = vadd.f32 %v4600, %v5114
        %v5178 = vadd.f32 %v4601, %v5116
        %v5179 = vadd.f32 %v4602, %v5119
        %v5180 = vadd.f32 %v4603, %v5121
        %v5181 = vadd.f32 %v4604, %v5124
        %v5182 = vadd.f32 %v4605, %v5126
        %v5183 = vadd.f32 %v4606, %v5129
        %v5184 = vadd.f32 %v4607, %v5131
        %v5185 = vadd.f32 %v4608, %v5134
        %v5186 = vadd.f32 %v4609, %v5136
        %v5187 = vadd.f32 %v4610, %v5139
        %v5188 = vadd.f32 %v4611, %v5141
        %v5189 = vadd.f32 %v4612, %v5144
        %vm5233 = vcmask 1046528
        %v5234 = vrot.slane %v5147, 1
        %v5235 = vrot.slane %v5148, 1
        %v5236 = vsel %vm5233, %v5234, %v5235
        %v5237 = vrot.slane %v5149, 1
        %v5238 = vsel %vm5233, %v5235, %v5237
        %v5239 = vrot.slane %v5150, 1
        %v5240 = vsel %vm5233, %v5237, %v5239
        %v5241 = vrot.slane %v5151, 1
        %v5242 = vsel %vm5233, %v5239, %v5241
        %v5243 = vrot.slane %v5152, 1
        %v5244 = vsel %vm5233, %v5241, %v5243
        %v5245 = vrot.slane %v5153, 1
        %v5246 = vsel %vm5233, %v5243, %v5245
        %v5247 = vrot.slane %v5154, 1
        %v5248 = vsel %vm5233, %v5245, %v5247
        %v5249 = vrot.slane %v5155, 1
        %v5250 = vsel %vm5233, %v5247, %v5249
        %v5251 = vrot.slane %v5156, 1
        %v5252 = vsel %vm5233, %v5249, %v5251
        %v5253 = vrot.slane %v5157, 1
        %v5254 = vsel %vm5233, %v5251, %v5253
        %v5255 = vrot.slane %v5158, 1
        %v5256 = vsel %vm5233, %v5253, %v5255
        %v5257 = vrot.slane %v5159, 1
        %v5258 = vsel %vm5233, %v5255, %v5257
        %v5259 = vrot.slane %v5160, 1
        %v5260 = vsel %vm5233, %v5257, %v5259
        %v5261 = vrot.slane %v5161, 1
        %v5262 = vsel %vm5233, %v5259, %v5261
        %v5263 = vrot.slane %v5162, 1
        %v5264 = vsel %vm5233, %v5261, %v5263
        %v5265 = vrot.slane %v5163, 1
        %v5266 = vsel %vm5233, %v5263, %v5265
        %v5267 = vrot.slane %v5164, 1
        %v5268 = vsel %vm5233, %v5265, %v5267
        %v5269 = vrot.slane %v5165, 1
        %v5270 = vsel %vm5233, %v5267, %v5269
        %v5271 = vrot.slane %v5166, 1
        %v5272 = vsel %vm5233, %v5269, %v5271
        %v5273 = vrot.slane %v5167, 1
        %v5274 = vsel %vm5233, %v5271, %v5273
        %v5275 = vrot.slane %v5168, 1
        %v5276 = vsel %vm5233, %v5273, %v5275
        %v5277 = vrot.slane %v5169, 1
        %v5278 = vsel %vm5233, %v5275, %v5277
        %v5279 = vrot.slane %v5170, 1
        %v5280 = vsel %vm5233, %v5277, %v5279
        %v5281 = vrot.slane %v5171, 1
        %v5282 = vsel %vm5233, %v5279, %v5281
        %v5283 = vrot.slane %v5172, 1
        %v5284 = vsel %vm5233, %v5281, %v5283
        %v5285 = vrot.slane %v5173, 1
        %v5286 = vsel %vm5233, %v5283, %v5285
        %v5287 = vrot.slane %v5174, 1
        %v5288 = vsel %vm5233, %v5285, %v5287
        %v5289 = vrot.slane %v5175, 1
        %v5290 = vsel %vm5233, %v5287, %v5289
        %v5291 = vrot.slane %v5176, 1
        %v5292 = vsel %vm5233, %v5289, %v5291
        %v5293 = vrot.slane %v5177, 1
        %v5294 = vsel %vm5233, %v5291, %v5293
        %v5295 = vrot.slane %v5178, 1
        %v5296 = vsel %vm5233, %v5293, %v5295
        %v5297 = vrot.slane %v5179, 1
        %v5298 = vsel %vm5233, %v5295, %v5297
        %v5299 = vrot.slane %v5180, 1
        %v5300 = vsel %vm5233, %v5297, %v5299
        %v5301 = vrot.slane %v5181, 1
        %v5302 = vsel %vm5233, %v5299, %v5301
        %v5303 = vrot.slane %v5182, 1
        %v5304 = vsel %vm5233, %v5301, %v5303
        %v5305 = vrot.slane %v5183, 1
        %v5306 = vsel %vm5233, %v5303, %v5305
        %v5307 = vrot.slane %v5184, 1
        %v5308 = vsel %vm5233, %v5305, %v5307
        %v5309 = vrot.slane %v5185, 1
        %v5310 = vsel %vm5233, %v5307, %v5309
        %v5311 = vrot.slane %v5186, 1
        %v5312 = vsel %vm5233, %v5309, %v5311
        %v5313 = vrot.slane %v5187, 1
        %v5314 = vsel %vm5233, %v5311, %v5313
        %v5315 = vrot.slane %v5188, 1
        %v5316 = vsel %vm5233, %v5313, %v5315
        %v5317 = vrot.slane %v5189, 1
        %v5318 = vsel %vm5233, %v5315, %v5317
        %v5361 = vmax.f32 %v5147, %v5236
        %v5362 = vmax.f32 %v5148, %v5238
        %v5363 = vmax.f32 %v5149, %v5240
        %v5364 = vmax.f32 %v5150, %v5242
        %v5365 = vmax.f32 %v5151, %v5244
        %v5366 = vmax.f32 %v5152, %v5246
        %v5367 = vmax.f32 %v5153, %v5248
        %v5368 = vmax.f32 %v5154, %v5250
        %v5369 = vmax.f32 %v5155, %v5252
        %v5370 = vmax.f32 %v5156, %v5254
        %v5371 = vmax.f32 %v5157, %v5256
        %v5372 = vmax.f32 %v5158, %v5258
        %v5373 = vmax.f32 %v5159, %v5260
        %v5374 = vmax.f32 %v5160, %v5262
        %v5375 = vmax.f32 %v5161, %v5264
        %v5376 = vmax.f32 %v5162, %v5266
        %v5377 = vmax.f32 %v5163, %v5268
        %v5378 = vmax.f32 %v5164, %v5270
        %v5379 = vmax.f32 %v5165, %v5272
        %v5380 = vmax.f32 %v5166, %v5274
        %v5381 = vmax.f32 %v5167, %v5276
        %v5382 = vmax.f32 %v5168, %v5278
        %v5383 = vmax.f32 %v5169, %v5280
        %v5384 = vmax.f32 %v5170, %v5282
        %v5385 = vmax.f32 %v5171, %v5284
        %v5386 = vmax.f32 %v5172, %v5286
        %v5387 = vmax.f32 %v5173, %v5288
        %v5388 = vmax.f32 %v5174, %v5290
        %v5389 = vmax.f32 %v5175, %v5292
        %v5390 = vmax.f32 %v5176, %v5294
        %v5391 = vmax.f32 %v5177, %v5296
        %v5392 = vmax.f32 %v5178, %v5298
        %v5393 = vmax.f32 %v5179, %v5300
        %v5394 = vmax.f32 %v5180, %v5302
        %v5395 = vmax.f32 %v5181, %v5304
        %v5396 = vmax.f32 %v5182, %v5306
        %v5397 = vmax.f32 %v5183, %v5308
        %v5398 = vmax.f32 %v5184, %v5310
        %v5399 = vmax.f32 %v5185, %v5312
        %v5400 = vmax.f32 %v5186, %v5314
        %v5401 = vmax.f32 %v5187, %v5316
        %v5402 = vmax.f32 %v5188, %v5318
        %v5403 = vld [vmem:[%s3] sm:$0x1]
        %v5405 = vperm.slane %v5403, 0
        %v5407 = vadd.f32 %v5361, %v5405
        %v5408 = vadd.f32 %v5362, %v5405
        %v5409 = vadd.f32 %v5363, %v5405
        %v5410 = vadd.f32 %v5364, %v5405
        %v5411 = vadd.f32 %v5365, %v5405
        %v5412 = vadd.f32 %v5366, %v5405
        %v5413 = vadd.f32 %v5367, %v5405
        %v5414 = vadd.f32 %v5368, %v5405
        %v5415 = vadd.f32 %v5369, %v5405
        %v5416 = vadd.f32 %v5370, %v5405
        %v5417 = vadd.f32 %v5371, %v5405
        %v5418 = vadd.f32 %v5372, %v5405
        %v5419 = vadd.f32 %v5373, %v5405
        %v5420 = vadd.f32 %v5374, %v5405
        %v5421 = vadd.f32 %v5375, %v5405
        %v5422 = vadd.f32 %v5376, %v5405
        %v5423 = vadd.f32 %v5377, %v5405
        %v5424 = vadd.f32 %v5378, %v5405
        %v5425 = vadd.f32 %v5379, %v5405
        %v5426 = vadd.f32 %v5380, %v5405
        %v5427 = vadd.f32 %v5381, %v5405
        %v5428 = vadd.f32 %v5382, %v5405
        %v5429 = vadd.f32 %v5383, %v5405
        %v5430 = vadd.f32 %v5384, %v5405
        %v5431 = vadd.f32 %v5385, %v5405
        %v5432 = vadd.f32 %v5386, %v5405
        %v5433 = vadd.f32 %v5387, %v5405
        %v5434 = vadd.f32 %v5388, %v5405
        %v5435 = vadd.f32 %v5389, %v5405
        %v5436 = vadd.f32 %v5390, %v5405
        %v5437 = vadd.f32 %v5391, %v5405
        %v5438 = vadd.f32 %v5392, %v5405
        %v5439 = vadd.f32 %v5393, %v5405
        %v5440 = vadd.f32 %v5394, %v5405
        %v5441 = vadd.f32 %v5395, %v5405
        %v5442 = vadd.f32 %v5396, %v5405
        %v5443 = vadd.f32 %v5397, %v5405
        %v5444 = vadd.f32 %v5398, %v5405
        %v5445 = vadd.f32 %v5399, %v5405
        %v5446 = vadd.f32 %v5400, %v5405
        %v5447 = vadd.f32 %v5401, %v5405
        %v5448 = vadd.f32 %v5402, %v5405
        %v5449 = vmax.f32 %v5407, 0.0
        %v5450 = vmax.f32 %v5408, 0.0
        %v5451 = vmax.f32 %v5409, 0.0
        %v5452 = vmax.f32 %v5410, 0.0
        %v5453 = vmax.f32 %v5411, 0.0
        %v5454 = vmax.f32 %v5412, 0.0
        %v5455 = vmax.f32 %v5413, 0.0
        %v5456 = vmax.f32 %v5414, 0.0
        %v5457 = vmax.f32 %v5415, 0.0
        %v5458 = vmax.f32 %v5416, 0.0
        %v5459 = vmax.f32 %v5417, 0.0
        %v5460 = vmax.f32 %v5418, 0.0
        %v5461 = vmax.f32 %v5419, 0.0
        %v5462 = vmax.f32 %v5420, 0.0
        %v5463 = vmax.f32 %v5421, 0.0
        %v5464 = vmax.f32 %v5422, 0.0
        %v5465 = vmax.f32 %v5423, 0.0
        %v5466 = vmax.f32 %v5424, 0.0
        %v5467 = vmax.f32 %v5425, 0.0
        %v5468 = vmax.f32 %v5426, 0.0
        %v5469 = vmax.f32 %v5427, 0.0
        %v5470 = vmax.f32 %v5428, 0.0
        %v5471 = vmax.f32 %v5429, 0.0
        %v5472 = vmax.f32 %v5430, 0.0
        %v5473 = vmax.f32 %v5431, 0.0
        %v5474 = vmax.f32 %v5432, 0.0
        %v5475 = vmax.f32 %v5433, 0.0
        %v5476 = vmax.f32 %v5434, 0.0
        %v5477 = vmax.f32 %v5435, 0.0
        %v5478 = vmax.f32 %v5436, 0.0
        %v5479 = vmax.f32 %v5437, 0.0
        %v5480 = vmax.f32 %v5438, 0.0
        %v5481 = vmax.f32 %v5439, 0.0
        %v5482 = vmax.f32 %v5440, 0.0
        %v5483 = vmax.f32 %v5441, 0.0
        %v5484 = vmax.f32 %v5442, 0.0
        %v5485 = vmax.f32 %v5443, 0.0
        %v5486 = vmax.f32 %v5444, 0.0
        %v5487 = vmax.f32 %v5445, 0.0
        %v5488 = vmax.f32 %v5446, 0.0
        %v5489 = vmax.f32 %v5447, 0.0
        %v5490 = vmax.f32 %v5448, 0.0
        %v5491 = vmul.f32 %v5449, %v694
        %v5492 = vmul.f32 %v5450, %v699
        %v5493 = vmul.f32 %v5451, %v704
        %v5494 = vmul.f32 %v5452, %v709
        %v5495 = vmul.f32 %v5453, %v714
        %v5496 = vmul.f32 %v5454, %v719
        %v5497 = vmul.f32 %v5455, %v724
        %v5498 = vmul.f32 %v5456, %v729
        %v5499 = vmul.f32 %v5457, %v734
        %v5500 = vmul.f32 %v5458, %v739
        %v5501 = vmul.f32 %v5459, %v744
        %v5502 = vmul.f32 %v5460, %v749
        %v5503 = vmul.f32 %v5461, %v754
        %v5504 = vmul.f32 %v5462, %v759
        %v5505 = vmul.f32 %v5463, %v764
        %v5506 = vmul.f32 %v5464, %v769
        %v5507 = vmul.f32 %v5465, %v774
        %v5508 = vmul.f32 %v5466, %v779
        %v5509 = vmul.f32 %v5467, %v784
        %v5510 = vmul.f32 %v5468, %v789
        %v5511 = vmul.f32 %v5469, %v794
        %v5512 = vmul.f32 %v5470, %v799
        %v5513 = vmul.f32 %v5471, %v804
        %v5514 = vmul.f32 %v5472, %v809
        %v5515 = vmul.f32 %v5473, %v814
        %v5516 = vmul.f32 %v5474, %v819
        %v5517 = vmul.f32 %v5475, %v824
        %v5518 = vmul.f32 %v5476, %v829
        %v5519 = vmul.f32 %v5477, %v834
        %v5520 = vmul.f32 %v5478, %v839
        %v5521 = vmul.f32 %v5479, %v844
        %v5522 = vmul.f32 %v5480, %v849
        %v5523 = vmul.f32 %v5481, %v854
        %v5524 = vmul.f32 %v5482, %v859
        %v5525 = vmul.f32 %v5483, %v864
        %v5526 = vmul.f32 %v5484, %v869
        %v5527 = vmul.f32 %v5485, %v874
        %v5528 = vmul.f32 %v5486, %v879
        %v5529 = vmul.f32 %v5487, %v884
        %v5530 = vmul.f32 %v5488, %v889
        %v5531 = vmul.f32 %v5489, %v894
        %v5532 = vmul.f32 %v5490, %v899
        %v5533 = vpack.c.bf16 %v5491, %v5491
        %v5534 = vpack.c.bf16 %v5492, %v5492
        %v5535 = vpack.c.bf16 %v5493, %v5493
        %v5536 = vpack.c.bf16 %v5494, %v5494
        %v5537 = vpack.c.bf16 %v5495, %v5495
        %v5538 = vpack.c.bf16 %v5496, %v5496
        %v5539 = vpack.c.bf16 %v5497, %v5497
        %v5540 = vpack.c.bf16 %v5498, %v5498
        %v5541 = vpack.c.bf16 %v5499, %v5499
        %v5542 = vpack.c.bf16 %v5500, %v5500
        %v5543 = vpack.c.bf16 %v5501, %v5501
        %v5544 = vpack.c.bf16 %v5502, %v5502
        %v5545 = vpack.c.bf16 %v5503, %v5503
        %v5546 = vpack.c.bf16 %v5504, %v5504
        %v5547 = vpack.c.bf16 %v5505, %v5505
        %v5548 = vpack.c.bf16 %v5506, %v5506
        %v5549 = vpack.c.bf16 %v5507, %v5507
        %v5550 = vpack.c.bf16 %v5508, %v5508
        %v5551 = vpack.c.bf16 %v5509, %v5509
        %v5552 = vpack.c.bf16 %v5510, %v5510
        %v5553 = vpack.c.bf16 %v5511, %v5511
        %v5554 = vpack.c.bf16 %v5512, %v5512
        %v5555 = vpack.c.bf16 %v5513, %v5513
        %v5556 = vpack.c.bf16 %v5514, %v5514
        %v5557 = vpack.c.bf16 %v5515, %v5515
        %v5558 = vpack.c.bf16 %v5516, %v5516
        %v5559 = vpack.c.bf16 %v5517, %v5517
        %v5560 = vpack.c.bf16 %v5518, %v5518
        %v5561 = vpack.c.bf16 %v5519, %v5519
        %v5562 = vpack.c.bf16 %v5520, %v5520
        %v5563 = vpack.c.bf16 %v5521, %v5521
        %v5564 = vpack.c.bf16 %v5522, %v5522
        %v5565 = vpack.c.bf16 %v5523, %v5523
        %v5566 = vpack.c.bf16 %v5524, %v5524
        %v5567 = vpack.c.bf16 %v5525, %v5525
        %v5568 = vpack.c.bf16 %v5526, %v5526
        %v5569 = vpack.c.bf16 %v5527, %v5527
        %v5570 = vpack.c.bf16 %v5528, %v5528
        %v5571 = vpack.c.bf16 %v5529, %v5529
        %v5572 = vpack.c.bf16 %v5530, %v5530
        %v5573 = vpack.c.bf16 %v5531, %v5531
        %v5574 = vpack.c.bf16 %v5532, %v5532
        %5575 = vst [vmem:[#allocation2 + $0x8] sm:$0xf] %v5533
        %5576 = vst [vmem:[#allocation2 + $0xc] sm:$0xf] %v5534
        %5577 = vst [vmem:[#allocation2 + $0x10] sm:$0xf] %v5535
        %5578 = vst [vmem:[#allocation2 + $0x14] sm:$0xf] %v5536
        %5579 = vst [vmem:[#allocation2 + $0x18] sm:$0xf] %v5537
        %5580 = vst [vmem:[#allocation2 + $0x1c] sm:$0xf] %v5538
        %5581 = vst [vmem:[#allocation2 + $0x20] sm:$0xf] %v5539
        %5582 = vst [vmem:[#allocation2 + $0x24] sm:$0xf] %v5540
        %5583 = vst [vmem:[#allocation2 + $0x28] sm:$0xf] %v5541
        %5584 = vst [vmem:[#allocation2 + $0x2c] sm:$0xf] %v5542
        %5585 = vst [vmem:[#allocation2 + $0x30] sm:$0xf] %v5543
        %5586 = vst [vmem:[#allocation2 + $0x34] sm:$0xf] %v5544
        %5587 = vst [vmem:[#allocation2 + $0x38] sm:$0xf] %v5545
        %5588 = vst [vmem:[#allocation2 + $0x3c] sm:$0xf] %v5546
        %5589 = vst [vmem:[#allocation2 + $0x40] sm:$0xf] %v5547
        %5590 = vst [vmem:[#allocation2 + $0x44] sm:$0xf] %v5548
        %5591 = vst [vmem:[#allocation2 + $0x48] sm:$0xf] %v5549
        %5592 = vst [vmem:[#allocation2 + $0x4c] sm:$0xf] %v5550
        %5593 = vst [vmem:[#allocation2 + $0x50] sm:$0xf] %v5551
        %5594 = vst [vmem:[#allocation2 + $0x54] sm:$0xf] %v5552
        %5595 = vst [vmem:[#allocation2 + $0x58] sm:$0xf] %v5553
        %5596 = vst [vmem:[#allocation2 + $0x5c] sm:$0xf] %v5554
        %5597 = vst [vmem:[#allocation2 + $0x60] sm:$0xf] %v5555
        %5598 = vst [vmem:[#allocation2 + $0x64] sm:$0xf] %v5556
        %5599 = vst [vmem:[#allocation2 + $0x68] sm:$0xf] %v5557
        %5600 = vst [vmem:[#allocation2 + $0x6c] sm:$0xf] %v5558
        %5601 = vst [vmem:[#allocation2 + $0x70] sm:$0xf] %v5559
        %5602 = vst [vmem:[#allocation2 + $0x74] sm:$0xf] %v5560
        %5603 = vst [vmem:[#allocation2 + $0x78] sm:$0xf] %v5561
        %5604 = vst [vmem:[#allocation2 + $0x7c] sm:$0xf] %v5562
        %5605 = vst [vmem:[#allocation2 + $0x80] sm:$0xf] %v5563
        %5606 = vst [vmem:[#allocation2 + $0x84] sm:$0xf] %v5564
        %5607 = vst [vmem:[#allocation2 + $0x88] sm:$0xf] %v5565
        %5608 = vst [vmem:[#allocation2 + $0x8c] sm:$0xf] %v5566
        %5609 = vst [vmem:[#allocation2 + $0x90] sm:$0xf] %v5567
        %5610 = vst [vmem:[#allocation2 + $0x94] sm:$0xf] %v5568
        %5611 = vst [vmem:[#allocation2 + $0x98] sm:$0xf] %v5569
        %5612 = vst [vmem:[#allocation2 + $0x9c] sm:$0xf] %v5570
        %5613 = vst [vmem:[#allocation2 + $0xa0] sm:$0xf] %v5571
        %5614 = vst [vmem:[#allocation2 + $0xa4] sm:$0xf] %v5572
        %5615 = vst [vmem:[#allocation2 + $0xa8] sm:$0xf] %v5573
        %5616 = vst [vmem:[#allocation2 + $0xac] sm:$0xf] %v5574
        %v5617 = vld [vmem:[%s4] sm:$0xf]
        %v5618 = vld [vmem:[%s4 + $0x4] sm:$0xf]
        %v5619 = vld [vmem:[%s4 + $0x8] sm:$0xf]
        %v5620 = vld [vmem:[%s4 + $0xc] sm:$0xf]
        %v5621 = vld [vmem:[%s4 + $0x10] sm:$0xf]
        %v5622 = vld [vmem:[%s4 + $0x14] sm:$0xf]
        %5623 = vst [vmem:[#allocation3] sm:$0xf] %v5617
        %5624 = vst [vmem:[#allocation3 + $0x4] sm:$0xf] %v5618
        %5625 = vst [vmem:[#allocation3 + $0x40] sm:$0xf] %v5619
        %5626 = vst [vmem:[#allocation3 + $0x44] sm:$0xf] %v5620
        %5627 = vst [vmem:[#allocation3 + $0x80] sm:$0xf] %v5621
        %5628 = vst [vmem:[#allocation3 + $0x84] sm:$0xf] %v5622
        %v5629 = vld [vmem:[#allocation2 + $0x4] sm:$0x8]
        %v5630 = vld [vmem:[#allocation2 + $0x8] sm:$0xf]
        %v5631 = vld [vmem:[#allocation2 + $0xc] sm:$0xf]
        %v5632 = vld [vmem:[#allocation2 + $0x10] sm:$0xf]
        %v5633 = vld [vmem:[#allocation2 + $0x14] sm:$0xf]
        %v5634 = vld [vmem:[#allocation2 + $0x18] sm:$0xf]
        %v5635 = vld [vmem:[#allocation2 + $0x1c] sm:$0xf]
        %v5636 = vld [vmem:[#allocation2 + $0x20] sm:$0xf]
        %v5637 = vld [vmem:[#allocation2 + $0x24] sm:$0xf]
        %v5638 = vld [vmem:[#allocation2 + $0x28] sm:$0xf]
        %v5639 = vld [vmem:[#allocation2 + $0x2c] sm:$0xf]
        %v5640 = vld [vmem:[#allocation2 + $0x30] sm:$0xf]
        %v5641 = vld [vmem:[#allocation2 + $0x34] sm:$0xf]
        %v5642 = vld [vmem:[#allocation2 + $0x38] sm:$0xf]
        %v5643 = vld [vmem:[#allocation2 + $0x3c] sm:$0xf]
        %v5644 = vld [vmem:[#allocation2 + $0x40] sm:$0xf]
        %v5645 = vld [vmem:[#allocation2 + $0x44] sm:$0xf]
        %v5646 = vld [vmem:[#allocation2 + $0x48] sm:$0xf]
        %v5647 = vld [vmem:[#allocation2 + $0x4c] sm:$0xf]
        %v5648 = vld [vmem:[#allocation2 + $0x50] sm:$0xf]
        %v5649 = vld [vmem:[#allocation2 + $0x54] sm:$0xf]
        %v5650 = vld [vmem:[#allocation2 + $0x58] sm:$0xf]
        %v5651 = vld [vmem:[#allocation2 + $0x5c] sm:$0xf]
        %v5652 = vld [vmem:[#allocation2 + $0x60] sm:$0xf]
        %v5653 = vld [vmem:[#allocation2 + $0x64] sm:$0xf]
        %v5654 = vld [vmem:[#allocation2 + $0x68] sm:$0xf]
        %v5655 = vld [vmem:[#allocation2 + $0x6c] sm:$0xf]
        %v5656 = vld [vmem:[#allocation2 + $0x70] sm:$0xf]
        %v5657 = vld [vmem:[#allocation2 + $0x74] sm:$0xf]
        %v5658 = vld [vmem:[#allocation2 + $0x78] sm:$0xf]
        %v5659 = vld [vmem:[#allocation2 + $0x7c] sm:$0xf]
        %v5660 = vld [vmem:[#allocation2 + $0x80] sm:$0xf]
        %v5661 = vld [vmem:[#allocation2 + $0x84] sm:$0xf]
        %v5662 = vld [vmem:[#allocation2 + $0x88] sm:$0xf]
        %v5663 = vld [vmem:[#allocation2 + $0x8c] sm:$0xf]
        %v5664 = vld [vmem:[#allocation2 + $0x90] sm:$0xf]
        %v5665 = vld [vmem:[#allocation2 + $0x94] sm:$0xf]
        %v5666 = vld [vmem:[#allocation2 + $0x98] sm:$0xf]
        %v5667 = vld [vmem:[#allocation2 + $0x9c] sm:$0xf]
        %v5668 = vld [vmem:[#allocation2 + $0xa0] sm:$0xf]
        %v5669 = vld [vmem:[#allocation2 + $0xa4] sm:$0xf]
        %v5670 = vld [vmem:[#allocation2 + $0xa8] sm:$0xf]
        %v5671 = vld [vmem:[#allocation2 + $0xac] sm:$0xf]
        %v5672 = vld [vmem:[#allocation2 + $0xb0] sm:$0x7]
        %v5673 = vld [vmem:[#allocation3] sm:$0xf]
        %v5674 = vld [vmem:[#allocation3 + $0x4] sm:$0xf]
        %v5675 = vld [vmem:[#allocation3 + $0x8] sm:$0xf]
        %v5676 = vld [vmem:[#allocation3 + $0xc] sm:$0xf]
        %v5677 = vld [vmem:[#allocation3 + $0x10] sm:$0xf]
        %v5678 = vld [vmem:[#allocation3 + $0x14] sm:$0xf]
        %v5679 = vld [vmem:[#allocation3 + $0x18] sm:$0xf]
        %v5680 = vld [vmem:[#allocation3 + $0x1c] sm:$0xf]
        %v5681 = vld [vmem:[#allocation3 + $0x20] sm:$0xf]
        %v5682 = vld [vmem:[#allocation3 + $0x24] sm:$0xf]
        %v5683 = vld [vmem:[#allocation3 + $0x28] sm:$0xf]
        %v5684 = vld [vmem:[#allocation3 + $0x2c] sm:$0xf]
        %v5685 = vld [vmem:[#allocation3 + $0x30] sm:$0xf]
        %v5686 = vld [vmem:[#allocation3 + $0x34] sm:$0xf]
        %v5687 = vld [vmem:[#allocation3 + $0x38] sm:$0xf]
        %v5688 = vld [vmem:[#allocation3 + $0x3c] sm:$0xf]
        %v5689 = vld [vmem:[#allocation2 + $0xb0] sm:$0xf]
        %v5690 = vld [vmem:[%s997] sm:$0xf]
        %v5691 = vld [vmem:[%s997 + $0x4] sm:$0xf]
        %v5692 = vld [vmem:[%s997 + $0x8] sm:$0xf]
        %v5693 = vld [vmem:[%s997 + $0xc] sm:$0xf]
        %v5694 = vld [vmem:[%s997 + $0x10] sm:$0xf]
        %v5695 = vld [vmem:[%s997 + $0x14] sm:$0xf]
        %v5696 = vld [vmem:[%s997 + $0x18] sm:$0xf]
        %v5697 = vld [vmem:[%s997 + $0x1c] sm:$0xf]
        %v5698 = vld [vmem:[%s997 + $0x20] sm:$0xf]
        %v5699 = vld [vmem:[%s997 + $0x24] sm:$0xf]
        %v5700 = vld [vmem:[%s997 + $0x28] sm:$0xf]
        %v5701 = vld [vmem:[%s997 + $0x2c] sm:$0xf]
        %v5702 = vld [vmem:[%s997 + $0x30] sm:$0xf]
        %v5703 = vld [vmem:[%s997 + $0x34] sm:$0xf]
        %v5704 = vld [vmem:[%s997 + $0x38] sm:$0xf]
        %v5705 = vld [vmem:[%s997 + $0x3c] sm:$0xf]
        %v5749 = vunpack.c.l.b16 %v5630
        %v5750 = vunpack.c.l.b16 %v5631
        %v5751 = vunpack.c.l.b16 %v5632
        %v5752 = vunpack.c.l.b16 %v5633
        %v5753 = vunpack.c.l.b16 %v5634
        %v5754 = vunpack.c.l.b16 %v5635
        %v5755 = vunpack.c.l.b16 %v5636
        %v5756 = vunpack.c.l.b16 %v5637
        %v5757 = vunpack.c.l.b16 %v5638
        %v5758 = vunpack.c.l.b16 %v5639
        %v5759 = vunpack.c.l.b16 %v5640
        %v5760 = vunpack.c.l.b16 %v5641
        %v5761 = vunpack.c.l.b16 %v5642
        %v5762 = vunpack.c.l.b16 %v5643
        %v5763 = vunpack.c.l.b16 %v5644
        %v5764 = vunpack.c.l.b16 %v5645
        %v5765 = vunpack.c.l.b16 %v5646
        %v5766 = vunpack.c.l.b16 %v5647
        %v5767 = vunpack.c.l.b16 %v5648
        %v5768 = vunpack.c.l.b16 %v5649
        %v5769 = vunpack.c.l.b16 %v5650
        %v5770 = vunpack.c.l.b16 %v5651
        %v5771 = vunpack.c.l.b16 %v5652
        %v5772 = vunpack.c.l.b16 %v5653
        %v5773 = vunpack.c.l.b16 %v5654
        %v5774 = vunpack.c.l.b16 %v5655
        %v5775 = vunpack.c.l.b16 %v5656
        %v5776 = vunpack.c.l.b16 %v5657
        %v5777 = vunpack.c.l.b16 %v5658
        %v5778 = vunpack.c.l.b16 %v5659
        %v5779 = vunpack.c.l.b16 %v5660
        %v5780 = vunpack.c.l.b16 %v5661
        %v5781 = vunpack.c.l.b16 %v5662
        %v5782 = vunpack.c.l.b16 %v5663
        %v5783 = vunpack.c.l.b16 %v5664
        %v5784 = vunpack.c.l.b16 %v5665
        %v5785 = vunpack.c.l.b16 %v5666
        %v5786 = vunpack.c.l.b16 %v5667
        %v5787 = vunpack.c.l.b16 %v5668
        %v5788 = vunpack.c.l.b16 %v5669
        %v5789 = vunpack.c.l.b16 %v5670
        %v5790 = vunpack.c.l.b16 %v5671
        %v5791 = vunpack.c.l.b16 %v5689
        %v5792 = vpack.c.b16 %v5750, %v5749
        %v5793 = vpack.c.b16 %v5752, %v5751
        %v5794 = vpack.c.b16 %v5754, %v5753
        %v5795 = vpack.c.b16 %v5756, %v5755
        %v5796 = vpack.c.b16 %v5758, %v5757
        %v5797 = vpack.c.b16 %v5760, %v5759
        %v5798 = vpack.c.b16 %v5762, %v5761
        %v5799 = vpack.c.b16 %v5764, %v5763
        %v5800 = vpack.c.b16 %v5766, %v5765
        %v5801 = vpack.c.b16 %v5768, %v5767
        %v5802 = vpack.c.b16 %v5770, %v5769
        %v5803 = vpack.c.b16 %v5772, %v5771
        %v5804 = vpack.c.b16 %v5774, %v5773
        %v5805 = vpack.c.b16 %v5776, %v5775
        %v5806 = vpack.c.b16 %v5778, %v5777
        %v5807 = vpack.c.b16 %v5780, %v5779
        %v5808 = vpack.c.b16 %v5782, %v5781
        %v5809 = vpack.c.b16 %v5784, %v5783
        %v5810 = vpack.c.b16 %v5786, %v5785
        %v5811 = vpack.c.b16 %v5788, %v5787
        %v5812 = vpack.c.b16 %v5790, %v5789
        %v5813 = vpack.c.b16 %v5791, %v5791
        %v5852 = vunpack.c.l.b16 %v5690
        %v5853 = vunpack.c.l.b16 %v5691
        %v5854 = vunpack.c.l.b16 %v5692
        %v5855 = vunpack.c.l.b16 %v5693
        %v5856 = vunpack.c.l.b16 %v5694
        %v5857 = vunpack.c.l.b16 %v5695
        %v5858 = vunpack.c.l.b16 %v5696
        %v5859 = vunpack.c.l.b16 %v5697
        %v5860 = vunpack.c.l.b16 %v5698
        %v5861 = vunpack.c.l.b16 %v5699
        %v5862 = vunpack.c.l.b16 %v5700
        %v5863 = vunpack.c.l.b16 %v5701
        %v5864 = vunpack.c.l.b16 %v5702
        %v5865 = vunpack.c.l.b16 %v5703
        %v5866 = vunpack.c.l.b16 %v5704
        %v5867 = vunpack.c.l.b16 %v5705
        %v5868 = vpack.c.b16 %v5853, %v5852
        %v5869 = vpack.c.b16 %v5855, %v5854
        %v5870 = vpack.c.b16 %v5857, %v5856
        %v5871 = vpack.c.b16 %v5859, %v5858
        %v5872 = vpack.c.b16 %v5861, %v5860
        %v5873 = vpack.c.b16 %v5863, %v5862
        %v5874 = vpack.c.b16 %v5865, %v5864
        %v5875 = vpack.c.b16 %v5867, %v5866
        %5884 = vmatpush.bf16.msra.mxu0 %v5875
        %5885 = vmatpush.bf16.msra.mxu0 %v5874
        %5886 = vmatpush.bf16.msra.mxu0 %v5873
        %5887 = vmatpush.bf16.msra.mxu0 %v5872
        %5888 = vmatpush.bf16.msra.mxu0 %v5871
        %5889 = vmatpush.bf16.msra.mxu0 %v5870
        %5890 = vmatpush.bf16.msra.mxu0 %v5869
        %5891 = vmatpush.bf16.msra.mxu0 %v5868
        %5892 = vmatmul.bf16.gmra.mxu0 %v5792
        %v5893 = vpop.f32.mrf.mxu0
        %v5894 = vadd.f32 0.0, %v5893
        %v5895 = vpop.f32.mrf.mxu0
        %v5896 = vadd.f32 0.0, %v5895
        %5897 = vmatmul.bf16.gmra.mxu0 %v5793
        %v5898 = vpop.f32.mrf.mxu0
        %v5899 = vadd.f32 0.0, %v5898
        %v5900 = vpop.f32.mrf.mxu0
        %v5901 = vadd.f32 0.0, %v5900
        %5902 = vmatmul.bf16.gmra.mxu0 %v5794
        %v5903 = vpop.f32.mrf.mxu0
        %v5904 = vadd.f32 0.0, %v5903
        %v5905 = vpop.f32.mrf.mxu0
        %v5906 = vadd.f32 0.0, %v5905
        %5907 = vmatmul.bf16.gmra.mxu0 %v5795
        %v5908 = vpop.f32.mrf.mxu0
        %v5909 = vadd.f32 0.0, %v5908
        %v5910 = vpop.f32.mrf.mxu0
        %v5911 = vadd.f32 0.0, %v5910
        %5912 = vmatmul.bf16.gmra.mxu0 %v5796
        %v5913 = vpop.f32.mrf.mxu0
        %v5914 = vadd.f32 0.0, %v5913
        %v5915 = vpop.f32.mrf.mxu0
        %v5916 = vadd.f32 0.0, %v5915
        %5917 = vmatmul.bf16.gmra.mxu0 %v5797
        %v5918 = vpop.f32.mrf.mxu0
        %v5919 = vadd.f32 0.0, %v5918
        %v5920 = vpop.f32.mrf.mxu0
        %v5921 = vadd.f32 0.0, %v5920
        %5922 = vmatmul.bf16.gmra.mxu0 %v5798
        %v5923 = vpop.f32.mrf.mxu0
        %v5924 = vadd.f32 0.0, %v5923
        %v5925 = vpop.f32.mrf.mxu0
        %v5926 = vadd.f32 0.0, %v5925
        %5927 = vmatmul.bf16.gmra.mxu0 %v5799
        %v5928 = vpop.f32.mrf.mxu0
        %v5929 = vadd.f32 0.0, %v5928
        %v5930 = vpop.f32.mrf.mxu0
        %v5931 = vadd.f32 0.0, %v5930
        %5932 = vmatmul.bf16.gmra.mxu0 %v5800
        %v5933 = vpop.f32.mrf.mxu0
        %v5934 = vadd.f32 0.0, %v5933
        %v5935 = vpop.f32.mrf.mxu0
        %v5936 = vadd.f32 0.0, %v5935
        %5937 = vmatmul.bf16.gmra.mxu0 %v5801
        %v5938 = vpop.f32.mrf.mxu0
        %v5939 = vadd.f32 0.0, %v5938
        %v5940 = vpop.f32.mrf.mxu0
        %v5941 = vadd.f32 0.0, %v5940
        %5942 = vmatmul.bf16.gmra.mxu0 %v5802
        %v5943 = vpop.f32.mrf.mxu0
        %v5944 = vadd.f32 0.0, %v5943
        %v5945 = vpop.f32.mrf.mxu0
        %v5946 = vadd.f32 0.0, %v5945
        %5947 = vmatmul.bf16.gmra.mxu0 %v5803
        %v5948 = vpop.f32.mrf.mxu0
        %v5949 = vadd.f32 0.0, %v5948
        %v5950 = vpop.f32.mrf.mxu0
        %v5951 = vadd.f32 0.0, %v5950
        %5952 = vmatmul.bf16.gmra.mxu0 %v5804
        %v5953 = vpop.f32.mrf.mxu0
        %v5954 = vadd.f32 0.0, %v5953
        %v5955 = vpop.f32.mrf.mxu0
        %v5956 = vadd.f32 0.0, %v5955
        %5957 = vmatmul.bf16.gmra.mxu0 %v5805
        %v5958 = vpop.f32.mrf.mxu0
        %v5959 = vadd.f32 0.0, %v5958
        %v5960 = vpop.f32.mrf.mxu0
        %v5961 = vadd.f32 0.0, %v5960
        %5962 = vmatmul.bf16.gmra.mxu0 %v5806
        %v5963 = vpop.f32.mrf.mxu0
        %v5964 = vadd.f32 0.0, %v5963
        %v5965 = vpop.f32.mrf.mxu0
        %v5966 = vadd.f32 0.0, %v5965
        %5967 = vmatmul.bf16.gmra.mxu0 %v5807
        %v5968 = vpop.f32.mrf.mxu0
        %v5969 = vadd.f32 0.0, %v5968
        %v5970 = vpop.f32.mrf.mxu0
        %v5971 = vadd.f32 0.0, %v5970
        %5972 = vmatmul.bf16.gmra.mxu0 %v5808
        %v5973 = vpop.f32.mrf.mxu0
        %v5974 = vadd.f32 0.0, %v5973
        %v5975 = vpop.f32.mrf.mxu0
        %v5976 = vadd.f32 0.0, %v5975
        %5977 = vmatmul.bf16.gmra.mxu0 %v5809
        %v5978 = vpop.f32.mrf.mxu0
        %v5979 = vadd.f32 0.0, %v5978
        %v5980 = vpop.f32.mrf.mxu0
        %v5981 = vadd.f32 0.0, %v5980
        %5982 = vmatmul.bf16.gmra.mxu0 %v5810
        %v5983 = vpop.f32.mrf.mxu0
        %v5984 = vadd.f32 0.0, %v5983
        %v5985 = vpop.f32.mrf.mxu0
        %v5986 = vadd.f32 0.0, %v5985
        %5987 = vmatmul.bf16.gmra.mxu0 %v5811
        %v5988 = vpop.f32.mrf.mxu0
        %v5989 = vadd.f32 0.0, %v5988
        %v5990 = vpop.f32.mrf.mxu0
        %v5991 = vadd.f32 0.0, %v5990
        %5992 = vmatmul.bf16.gmra.mxu0 %v5812
        %v5993 = vpop.f32.mrf.mxu0
        %v5994 = vadd.f32 0.0, %v5993
        %v5995 = vpop.f32.mrf.mxu0
        %v5996 = vadd.f32 0.0, %v5995
        %5997 = vmatmul.bf16.gmra.mxu0 %v5813
        %v5998 = vpop.f32.mrf.mxu0
        %v5999 = vadd.f32 0.0, %v5998
        %v6000 = vpop.f32.mrf.mxu0
        %6001 = vdwg.mxu0
        %v6004 = vunpack.c.l.b16 %v5629
        %v6005 = vunpack.c.l.b16 %v5672
        %v6006 = vpack.c.b16 %v5749, %v6004
        %v6007 = vpack.c.b16 %v5751, %v5750
        %v6008 = vpack.c.b16 %v5753, %v5752
        %v6009 = vpack.c.b16 %v5755, %v5754
        %v6010 = vpack.c.b16 %v5757, %v5756
        %v6011 = vpack.c.b16 %v5759, %v5758
        %v6012 = vpack.c.b16 %v5761, %v5760
        %v6013 = vpack.c.b16 %v5763, %v5762
        %v6014 = vpack.c.b16 %v5765, %v5764
        %v6015 = vpack.c.b16 %v5767, %v5766
        %v6016 = vpack.c.b16 %v5769, %v5768
        %v6017 = vpack.c.b16 %v5771, %v5770
        %v6018 = vpack.c.b16 %v5773, %v5772
        %v6019 = vpack.c.b16 %v5775, %v5774
        %v6020 = vpack.c.b16 %v5777, %v5776
        %v6021 = vpack.c.b16 %v5779, %v5778
        %v6022 = vpack.c.b16 %v5781, %v5780
        %v6023 = vpack.c.b16 %v5783, %v5782
        %v6024 = vpack.c.b16 %v5785, %v5784
        %v6025 = vpack.c.b16 %v5787, %v5786
        %v6026 = vpack.c.b16 %v5789, %v5788
        %v6027 = vpack.c.b16 %v6005, %v5790
        %vm6028 = vcmask 1044480
        %v6029 = vrot.slane %v6006, 3
        %v6030 = vrot.slane %v6007, 3
        %v6031 = vsel %vm6028, %v6029, %v6030
        %v6032 = vrot.slane %v6008, 3
        %v6033 = vsel %vm6028, %v6030, %v6032
        %v6034 = vrot.slane %v6009, 3
        %v6035 = vsel %vm6028, %v6032, %v6034
        %v6036 = vrot.slane %v6010, 3
        %v6037 = vsel %vm6028, %v6034, %v6036
        %v6038 = vrot.slane %v6011, 3
        %v6039 = vsel %vm6028, %v6036, %v6038
        %v6040 = vrot.slane %v6012, 3
        %v6041 = vsel %vm6028, %v6038, %v6040
        %v6042 = vrot.slane %v6013, 3
        %v6043 = vsel %vm6028, %v6040, %v6042
        %v6044 = vrot.slane %v6014, 3
        %v6045 = vsel %vm6028, %v6042, %v6044
        %v6046 = vrot.slane %v6015, 3
        %v6047 = vsel %vm6028, %v6044, %v6046
        %v6048 = vrot.slane %v6016, 3
        %v6049 = vsel %vm6028, %v6046, %v6048
        %v6050 = vrot.slane %v6017, 3
        %v6051 = vsel %vm6028, %v6048, %v6050
        %v6052 = vrot.slane %v6018, 3
        %v6053 = vsel %vm6028, %v6050, %v6052
        %v6054 = vrot.slane %v6019, 3
        %v6055 = vsel %vm6028, %v6052, %v6054
        %v6056 = vrot.slane %v6020, 3
        %v6057 = vsel %vm6028, %v6054, %v6056
        %v6058 = vrot.slane %v6021, 3
        %v6059 = vsel %vm6028, %v6056, %v6058
        %v6060 = vrot.slane %v6022, 3
        %v6061 = vsel %vm6028, %v6058, %v6060
        %v6062 = vrot.slane %v6023, 3
        %v6063 = vsel %vm6028, %v6060, %v6062
        %v6064 = vrot.slane %v6024, 3
        %v6065 = vsel %vm6028, %v6062, %v6064
        %v6066 = vrot.slane %v6025, 3
        %v6067 = vsel %vm6028, %v6064, %v6066
        %v6068 = vrot.slane %v6026, 3
        %v6069 = vsel %vm6028, %v6066, %v6068
        %v6070 = vrot.slane %v6027, 3
        %v6071 = vsel %vm6028, %v6068, %v6070
        %v6110 = vunpack.c.l.b16 %v5673
        %v6111 = vunpack.c.l.b16 %v5674
        %v6112 = vunpack.c.l.b16 %v5675
        %v6113 = vunpack.c.l.b16 %v5676
        %v6114 = vunpack.c.l.b16 %v5677
        %v6115 = vunpack.c.l.b16 %v5678
        %v6116 = vunpack.c.l.b16 %v5679
        %v6117 = vunpack.c.l.b16 %v5680
        %v6118 = vunpack.c.l.b16 %v5681
        %v6119 = vunpack.c.l.b16 %v5682
        %v6120 = vunpack.c.l.b16 %v5683
        %v6121 = vunpack.c.l.b16 %v5684
        %v6122 = vunpack.c.l.b16 %v5685
        %v6123 = vunpack.c.l.b16 %v5686
        %v6124 = vunpack.c.l.b16 %v5687
        %v6125 = vunpack.c.l.b16 %v5688
        %v6126 = vpack.c.b16 %v6111, %v6110
        %v6127 = vpack.c.b16 %v6113, %v6112
        %v6128 = vpack.c.b16 %v6115, %v6114
        %v6129 = vpack.c.b16 %v6117, %v6116
        %v6130 = vpack.c.b16 %v6119, %v6118
        %v6131 = vpack.c.b16 %v6121, %v6120
        %v6132 = vpack.c.b16 %v6123, %v6122
        %v6133 = vpack.c.b16 %v6125, %v6124
        %6142 = vmatpush.bf16.msra.mxu0 %v6133
        %6143 = vmatpush.bf16.msra.mxu0 %v6132
        %6144 = vmatpush.bf16.msra.mxu0 %v6131
        %6145 = vmatpush.bf16.msra.mxu0 %v6130
        %6146 = vmatpush.bf16.msra.mxu0 %v6129
        %6147 = vmatpush.bf16.msra.mxu0 %v6128
        %6148 = vmatpush.bf16.msra.mxu0 %v6127
        %6149 = vmatpush.bf16.msra.mxu0 %v6126
        %6150 = vmatmul.bf16.gmra.mxu0 %v6031
        %v6151 = vpop.f32.mrf.mxu0
        %v6152 = vadd.f32 %v5894, %v6151
        %v6153 = vpop.f32.mrf.mxu0
        %v6154 = vadd.f32 %v5896, %v6153
        %6155 = vmatmul.bf16.gmra.mxu0 %v6033
        %v6156 = vpop.f32.mrf.mxu0
        %v6157 = vadd.f32 %v5899, %v6156
        %v6158 = vpop.f32.mrf.mxu0
        %v6159 = vadd.f32 %v5901, %v6158
        %6160 = vmatmul.bf16.gmra.mxu0 %v6035
        %v6161 = vpop.f32.mrf.mxu0
        %v6162 = vadd.f32 %v5904, %v6161
        %v6163 = vpop.f32.mrf.mxu0
        %v6164 = vadd.f32 %v5906, %v6163
        %6165 = vmatmul.bf16.gmra.mxu0 %v6037
        %v6166 = vpop.f32.mrf.mxu0
        %v6167 = vadd.f32 %v5909, %v6166
        %v6168 = vpop.f32.mrf.mxu0
        %v6169 = vadd.f32 %v5911, %v6168
        %6170 = vmatmul.bf16.gmra.mxu0 %v6039
        %v6171 = vpop.f32.mrf.mxu0
        %v6172 = vadd.f32 %v5914, %v6171
        %v6173 = vpop.f32.mrf.mxu0
        %v6174 = vadd.f32 %v5916, %v6173
        %6175 = vmatmul.bf16.gmra.mxu0 %v6041
        %v6176 = vpop.f32.mrf.mxu0
        %v6177 = vadd.f32 %v5919, %v6176
        %v6178 = vpop.f32.mrf.mxu0
        %v6179 = vadd.f32 %v5921, %v6178
        %6180 = vmatmul.bf16.gmra.mxu0 %v6043
        %v6181 = vpop.f32.mrf.mxu0
        %v6182 = vadd.f32 %v5924, %v6181
        %v6183 = vpop.f32.mrf.mxu0
        %v6184 = vadd.f32 %v5926, %v6183
        %6185 = vmatmul.bf16.gmra.mxu0 %v6045
        %v6186 = vpop.f32.mrf.mxu0
        %v6187 = vadd.f32 %v5929, %v6186
        %v6188 = vpop.f32.mrf.mxu0
        %v6189 = vadd.f32 %v5931, %v6188
        %6190 = vmatmul.bf16.gmra.mxu0 %v6047
        %v6191 = vpop.f32.mrf.mxu0
        %v6192 = vadd.f32 %v5934, %v6191
        %v6193 = vpop.f32.mrf.mxu0
        %v6194 = vadd.f32 %v5936, %v6193
        %6195 = vmatmul.bf16.gmra.mxu0 %v6049
        %v6196 = vpop.f32.mrf.mxu0
        %v6197 = vadd.f32 %v5939, %v6196
        %v6198 = vpop.f32.mrf.mxu0
        %v6199 = vadd.f32 %v5941, %v6198
        %6200 = vmatmul.bf16.gmra.mxu0 %v6051
        %v6201 = vpop.f32.mrf.mxu0
        %v6202 = vadd.f32 %v5944, %v6201
        %v6203 = vpop.f32.mrf.mxu0
        %v6204 = vadd.f32 %v5946, %v6203
        %6205 = vmatmul.bf16.gmra.mxu0 %v6053
        %v6206 = vpop.f32.mrf.mxu0
        %v6207 = vadd.f32 %v5949, %v6206
        %v6208 = vpop.f32.mrf.mxu0
        %v6209 = vadd.f32 %v5951, %v6208
        %6210 = vmatmul.bf16.gmra.mxu0 %v6055
        %v6211 = vpop.f32.mrf.mxu0
        %v6212 = vadd.f32 %v5954, %v6211
        %v6213 = vpop.f32.mrf.mxu0
        %v6214 = vadd.f32 %v5956, %v6213
        %6215 = vmatmul.bf16.gmra.mxu0 %v6057
        %v6216 = vpop.f32.mrf.mxu0
        %v6217 = vadd.f32 %v5959, %v6216
        %v6218 = vpop.f32.mrf.mxu0
        %v6219 = vadd.f32 %v5961, %v6218
        %6220 = vmatmul.bf16.gmra.mxu0 %v6059
        %v6221 = vpop.f32.mrf.mxu0
        %v6222 = vadd.f32 %v5964, %v6221
        %v6223 = vpop.f32.mrf.mxu0
        %v6224 = vadd.f32 %v5966, %v6223
        %6225 = vmatmul.bf16.gmra.mxu0 %v6061
        %v6226 = vpop.f32.mrf.mxu0
        %v6227 = vadd.f32 %v5969, %v6226
        %v6228 = vpop.f32.mrf.mxu0
        %v6229 = vadd.f32 %v5971, %v6228
        %6230 = vmatmul.bf16.gmra.mxu0 %v6063
        %v6231 = vpop.f32.mrf.mxu0
        %v6232 = vadd.f32 %v5974, %v6231
        %v6233 = vpop.f32.mrf.mxu0
        %v6234 = vadd.f32 %v5976, %v6233
        %6235 = vmatmul.bf16.gmra.mxu0 %v6065
        %v6236 = vpop.f32.mrf.mxu0
        %v6237 = vadd.f32 %v5979, %v6236
        %v6238 = vpop.f32.mrf.mxu0
        %v6239 = vadd.f32 %v5981, %v6238
        %6240 = vmatmul.bf16.gmra.mxu0 %v6067
        %v6241 = vpop.f32.mrf.mxu0
        %v6242 = vadd.f32 %v5984, %v6241
        %v6243 = vpop.f32.mrf.mxu0
        %v6244 = vadd.f32 %v5986, %v6243
        %6245 = vmatmul.bf16.gmra.mxu0 %v6069
        %v6246 = vpop.f32.mrf.mxu0
        %v6247 = vadd.f32 %v5989, %v6246
        %v6248 = vpop.f32.mrf.mxu0
        %v6249 = vadd.f32 %v5991, %v6248
        %6250 = vmatmul.bf16.gmra.mxu0 %v6071
        %v6251 = vpop.f32.mrf.mxu0
        %v6252 = vadd.f32 %v5994, %v6251
        %v6253 = vpop.f32.mrf.mxu0
        %v6254 = vadd.f32 %v5996, %v6253
        %6255 = vmatmul.bf16.gmra.mxu0 %v6070
        %v6256 = vpop.f32.mrf.mxu0
        %v6257 = vadd.f32 %v5999, %v6256
        %v6258 = vpop.f32.mrf.mxu0
        %6259 = vdwg.mxu0
        %v6260 = vld [vmem:[#allocation2 + $0x8] sm:$0xe]
        %v6261 = vld [vmem:[#allocation2 + $0xc] sm:$0xf]
        %v6262 = vld [vmem:[#allocation2 + $0x10] sm:$0xf]
        %v6263 = vld [vmem:[#allocation2 + $0x14] sm:$0xf]
        %v6264 = vld [vmem:[#allocation2 + $0x18] sm:$0xf]
        %v6265 = vld [vmem:[#allocation2 + $0x1c] sm:$0xf]
        %v6266 = vld [vmem:[#allocation2 + $0x20] sm:$0xf]
        %v6267 = vld [vmem:[#allocation2 + $0x24] sm:$0xf]
        %v6268 = vld [vmem:[#allocation2 + $0x28] sm:$0xf]
        %v6269 = vld [vmem:[#allocation2 + $0x2c] sm:$0xf]
        %v6270 = vld [vmem:[#allocation2 + $0x30] sm:$0xf]
        %v6271 = vld [vmem:[#allocation2 + $0x34] sm:$0xf]
        %v6272 = vld [vmem:[#allocation2 + $0x38] sm:$0xf]
        %v6273 = vld [vmem:[#allocation2 + $0x3c] sm:$0xf]
        %v6274 = vld [vmem:[#allocation2 + $0x40] sm:$0xf]
        %v6275 = vld [vmem:[#allocation2 + $0x44] sm:$0xf]
        %v6276 = vld [vmem:[#allocation2 + $0x48] sm:$0xf]
        %v6277 = vld [vmem:[#allocation2 + $0x4c] sm:$0xf]
        %v6278 = vld [vmem:[#allocation2 + $0x50] sm:$0xf]
        %v6279 = vld [vmem:[#allocation2 + $0x54] sm:$0xf]
        %v6280 = vld [vmem:[#allocation2 + $0x58] sm:$0xf]
        %v6281 = vld [vmem:[#allocation2 + $0x5c] sm:$0xf]
        %v6282 = vld [vmem:[#allocation2 + $0x60] sm:$0xf]
        %v6283 = vld [vmem:[#allocation2 + $0x64] sm:$0xf]
        %v6284 = vld [vmem:[#allocation2 + $0x68] sm:$0xf]
        %v6285 = vld [vmem:[#allocation2 + $0x6c] sm:$0xf]
        %v6286 = vld [vmem:[#allocation2 + $0x70] sm:$0xf]
        %v6287 = vld [vmem:[#allocation2 + $0x74] sm:$0xf]
        %v6288 = vld [vmem:[#allocation2 + $0x78] sm:$0xf]
        %v6289 = vld [vmem:[#allocation2 + $0x7c] sm:$0xf]
        %v6290 = vld [vmem:[#allocation2 + $0x80] sm:$0xf]
        %v6291 = vld [vmem:[#allocation2 + $0x84] sm:$0xf]
        %v6292 = vld [vmem:[#allocation2 + $0x88] sm:$0xf]
        %v6293 = vld [vmem:[#allocation2 + $0x8c] sm:$0xf]
        %v6294 = vld [vmem:[#allocation2 + $0x90] sm:$0xf]
        %v6295 = vld [vmem:[#allocation2 + $0x94] sm:$0xf]
        %v6296 = vld [vmem:[#allocation2 + $0x98] sm:$0xf]
        %v6297 = vld [vmem:[#allocation2 + $0x9c] sm:$0xf]
        %v6298 = vld [vmem:[#allocation2 + $0xa0] sm:$0xf]
        %v6299 = vld [vmem:[#allocation2 + $0xa4] sm:$0xf]
        %v6300 = vld [vmem:[#allocation2 + $0xa8] sm:$0xf]
        %v6301 = vld [vmem:[#allocation2 + $0xac] sm:$0xf]
        %v6302 = vld [vmem:[#allocation2 + $0xb0] sm:$0xf]
        %v6303 = vld [vmem:[#allocation2 + $0xb4] sm:$0x1]
        %v6304 = vld [vmem:[%s1764] sm:$0xf]
        %v6305 = vld [vmem:[%s1764 + $0x4] sm:$0xf]
        %v6306 = vld [vmem:[%s1764 + $0x8] sm:$0xf]
        %v6307 = vld [vmem:[%s1764 + $0xc] sm:$0xf]
        %v6308 = vld [vmem:[%s1764 + $0x10] sm:$0xf]
        %v6309 = vld [vmem:[%s1764 + $0x14] sm:$0xf]
        %v6310 = vld [vmem:[%s1764 + $0x18] sm:$0xf]
        %v6311 = vld [vmem:[%s1764 + $0x1c] sm:$0xf]
        %v6312 = vld [vmem:[%s1764 + $0x20] sm:$0xf]
        %v6313 = vld [vmem:[%s1764 + $0x24] sm:$0xf]
        %v6314 = vld [vmem:[%s1764 + $0x28] sm:$0xf]
        %v6315 = vld [vmem:[%s1764 + $0x2c] sm:$0xf]
        %v6316 = vld [vmem:[%s1764 + $0x30] sm:$0xf]
        %v6317 = vld [vmem:[%s1764 + $0x34] sm:$0xf]
        %v6318 = vld [vmem:[%s1764 + $0x38] sm:$0xf]
        %v6319 = vld [vmem:[%s1764 + $0x3c] sm:$0xf]
        %v6364 = vunpack.c.l.b16 %v6260
        %v6365 = vunpack.c.l.b16 %v6261
        %v6366 = vunpack.c.l.b16 %v6262
        %v6367 = vunpack.c.l.b16 %v6263
        %v6368 = vunpack.c.l.b16 %v6264
        %v6369 = vunpack.c.l.b16 %v6265
        %v6370 = vunpack.c.l.b16 %v6266
        %v6371 = vunpack.c.l.b16 %v6267
        %v6372 = vunpack.c.l.b16 %v6268
        %v6373 = vunpack.c.l.b16 %v6269
        %v6374 = vunpack.c.l.b16 %v6270
        %v6375 = vunpack.c.l.b16 %v6271
        %v6376 = vunpack.c.l.b16 %v6272
        %v6377 = vunpack.c.l.b16 %v6273
        %v6378 = vunpack.c.l.b16 %v6274
        %v6379 = vunpack.c.l.b16 %v6275
        %v6380 = vunpack.c.l.b16 %v6276
        %v6381 = vunpack.c.l.b16 %v6277
        %v6382 = vunpack.c.l.b16 %v6278
        %v6383 = vunpack.c.l.b16 %v6279
        %v6384 = vunpack.c.l.b16 %v6280
        %v6385 = vunpack.c.l.b16 %v6281
        %v6386 = vunpack.c.l.b16 %v6282
        %v6387 = vunpack.c.l.b16 %v6283
        %v6388 = vunpack.c.l.b16 %v6284
        %v6389 = vunpack.c.l.b16 %v6285
        %v6390 = vunpack.c.l.b16 %v6286
        %v6391 = vunpack.c.l.b16 %v6287
        %v6392 = vunpack.c.l.b16 %v6288
        %v6393 = vunpack.c.l.b16 %v6289
        %v6394 = vunpack.c.l.b16 %v6290
        %v6395 = vunpack.c.l.b16 %v6291
        %v6396 = vunpack.c.l.b16 %v6292
        %v6397 = vunpack.c.l.b16 %v6293
        %v6398 = vunpack.c.l.b16 %v6294
        %v6399 = vunpack.c.l.b16 %v6295
        %v6400 = vunpack.c.l.b16 %v6296
        %v6401 = vunpack.c.l.b16 %v6297
        %v6402 = vunpack.c.l.b16 %v6298
        %v6403 = vunpack.c.l.b16 %v6299
        %v6404 = vunpack.c.l.b16 %v6300
        %v6405 = vunpack.c.l.b16 %v6301
        %v6406 = vunpack.c.l.b16 %v6302
        %v6407 = vunpack.c.l.b16 %v6303
        %v6408 = vpack.c.b16 %v6365, %v6364
        %v6409 = vpack.c.b16 %v6367, %v6366
        %v6410 = vpack.c.b16 %v6369, %v6368
        %v6411 = vpack.c.b16 %v6371, %v6370
        %v6412 = vpack.c.b16 %v6373, %v6372
        %v6413 = vpack.c.b16 %v6375, %v6374
        %v6414 = vpack.c.b16 %v6377, %v6376
        %v6415 = vpack.c.b16 %v6379, %v6378
        %v6416 = vpack.c.b16 %v6381, %v6380
        %v6417 = vpack.c.b16 %v6383, %v6382
        %v6418 = vpack.c.b16 %v6385, %v6384
        %v6419 = vpack.c.b16 %v6387, %v6386
        %v6420 = vpack.c.b16 %v6389, %v6388
        %v6421 = vpack.c.b16 %v6391, %v6390
        %v6422 = vpack.c.b16 %v6393, %v6392
        %v6423 = vpack.c.b16 %v6395, %v6394
        %v6424 = vpack.c.b16 %v6397, %v6396
        %v6425 = vpack.c.b16 %v6399, %v6398
        %v6426 = vpack.c.b16 %v6401, %v6400
        %v6427 = vpack.c.b16 %v6403, %v6402
        %v6428 = vpack.c.b16 %v6405, %v6404
        %v6429 = vpack.c.b16 %v6407, %v6406
        %vm6430 = vcmask 1046528
        %v6431 = vrot.slane %v6408, 1
        %v6432 = vrot.slane %v6409, 1
        %v6433 = vsel %vm6430, %v6431, %v6432
        %v6434 = vrot.slane %v6410, 1
        %v6435 = vsel %vm6430, %v6432, %v6434
        %v6436 = vrot.slane %v6411, 1
        %v6437 = vsel %vm6430, %v6434, %v6436
        %v6438 = vrot.slane %v6412, 1
        %v6439 = vsel %vm6430, %v6436, %v6438
        %v6440 = vrot.slane %v6413, 1
        %v6441 = vsel %vm6430, %v6438, %v6440
        %v6442 = vrot.slane %v6414, 1
        %v6443 = vsel %vm6430, %v6440, %v6442
        %v6444 = vrot.slane %v6415, 1
        %v6445 = vsel %vm6430, %v6442, %v6444
        %v6446 = vrot.slane %v6416, 1
        %v6447 = vsel %vm6430, %v6444, %v6446
        %v6448 = vrot.slane %v6417, 1
        %v6449 = vsel %vm6430, %v6446, %v6448
        %v6450 = vrot.slane %v6418, 1
        %v6451 = vsel %vm6430, %v6448, %v6450
        %v6452 = vrot.slane %v6419, 1
        %v6453 = vsel %vm6430, %v6450, %v6452
        %v6454 = vrot.slane %v6420, 1
        %v6455 = vsel %vm6430, %v6452, %v6454
        %v6456 = vrot.slane %v6421, 1
        %v6457 = vsel %vm6430, %v6454, %v6456
        %v6458 = vrot.slane %v6422, 1
        %v6459 = vsel %vm6430, %v6456, %v6458
        %v6460 = vrot.slane %v6423, 1
        %v6461 = vsel %vm6430, %v6458, %v6460
        %v6462 = vrot.slane %v6424, 1
        %v6463 = vsel %vm6430, %v6460, %v6462
        %v6464 = vrot.slane %v6425, 1
        %v6465 = vsel %vm6430, %v6462, %v6464
        %v6466 = vrot.slane %v6426, 1
        %v6467 = vsel %vm6430, %v6464, %v6466
        %v6468 = vrot.slane %v6427, 1
        %v6469 = vsel %vm6430, %v6466, %v6468
        %v6470 = vrot.slane %v6428, 1
        %v6471 = vsel %vm6430, %v6468, %v6470
        %v6472 = vrot.slane %v6429, 1
        %v6473 = vsel %vm6430, %v6470, %v6472
        %v6512 = vunpack.c.l.b16 %v6304
        %v6513 = vunpack.c.l.b16 %v6305
        %v6514 = vunpack.c.l.b16 %v6306
        %v6515 = vunpack.c.l.b16 %v6307
        %v6516 = vunpack.c.l.b16 %v6308
        %v6517 = vunpack.c.l.b16 %v6309
        %v6518 = vunpack.c.l.b16 %v6310
        %v6519 = vunpack.c.l.b16 %v6311
        %v6520 = vunpack.c.l.b16 %v6312
        %v6521 = vunpack.c.l.b16 %v6313
        %v6522 = vunpack.c.l.b16 %v6314
        %v6523 = vunpack.c.l.b16 %v6315
        %v6524 = vunpack.c.l.b16 %v6316
        %v6525 = vunpack.c.l.b16 %v6317
        %v6526 = vunpack.c.l.b16 %v6318
        %v6527 = vunpack.c.l.b16 %v6319
        %v6528 = vpack.c.b16 %v6513, %v6512
        %v6529 = vpack.c.b16 %v6515, %v6514
        %v6530 = vpack.c.b16 %v6517, %v6516
        %v6531 = vpack.c.b16 %v6519, %v6518
        %v6532 = vpack.c.b16 %v6521, %v6520
        %v6533 = vpack.c.b16 %v6523, %v6522
        %v6534 = vpack.c.b16 %v6525, %v6524
        %v6535 = vpack.c.b16 %v6527, %v6526
        %6544 = vmatpush.bf16.msra.mxu0 %v6535
        %6545 = vmatpush.bf16.msra.mxu0 %v6534
        %6546 = vmatpush.bf16.msra.mxu0 %v6533
        %6547 = vmatpush.bf16.msra.mxu0 %v6532
        %6548 = vmatpush.bf16.msra.mxu0 %v6531
        %6549 = vmatpush.bf16.msra.mxu0 %v6530
        %6550 = vmatpush.bf16.msra.mxu0 %v6529
        %6551 = vmatpush.bf16.msra.mxu0 %v6528
        %6552 = vmatmul.bf16.gmra.mxu0 %v6433
        %v6553 = vpop.f32.mrf.mxu0
        %v6554 = vadd.f32 0.0, %v6553
        %v6555 = vpop.f32.mrf.mxu0
        %v6556 = vadd.f32 0.0, %v6555
        %6557 = vmatmul.bf16.gmra.mxu0 %v6435
        %v6558 = vpop.f32.mrf.mxu0
        %v6559 = vadd.f32 0.0, %v6558
        %v6560 = vpop.f32.mrf.mxu0
        %v6561 = vadd.f32 0.0, %v6560
        %6562 = vmatmul.bf16.gmra.mxu0 %v6437
        %v6563 = vpop.f32.mrf.mxu0
        %v6564 = vadd.f32 0.0, %v6563
        %v6565 = vpop.f32.mrf.mxu0
        %v6566 = vadd.f32 0.0, %v6565
        %6567 = vmatmul.bf16.gmra.mxu0 %v6439
        %v6568 = vpop.f32.mrf.mxu0
        %v6569 = vadd.f32 0.0, %v6568
        %v6570 = vpop.f32.mrf.mxu0
        %v6571 = vadd.f32 0.0, %v6570
        %6572 = vmatmul.bf16.gmra.mxu0 %v6441
        %v6573 = vpop.f32.mrf.mxu0
        %v6574 = vadd.f32 0.0, %v6573
        %v6575 = vpop.f32.mrf.mxu0
        %v6576 = vadd.f32 0.0, %v6575
        %6577 = vmatmul.bf16.gmra.mxu0 %v6443
        %v6578 = vpop.f32.mrf.mxu0
        %v6579 = vadd.f32 0.0, %v6578
        %v6580 = vpop.f32.mrf.mxu0
        %v6581 = vadd.f32 0.0, %v6580
        %6582 = vmatmul.bf16.gmra.mxu0 %v6445
        %v6583 = vpop.f32.mrf.mxu0
        %v6584 = vadd.f32 0.0, %v6583
        %v6585 = vpop.f32.mrf.mxu0
        %v6586 = vadd.f32 0.0, %v6585
        %6587 = vmatmul.bf16.gmra.mxu0 %v6447
        %v6588 = vpop.f32.mrf.mxu0
        %v6589 = vadd.f32 0.0, %v6588
        %v6590 = vpop.f32.mrf.mxu0
        %v6591 = vadd.f32 0.0, %v6590
        %6592 = vmatmul.bf16.gmra.mxu0 %v6449
        %v6593 = vpop.f32.mrf.mxu0
        %v6594 = vadd.f32 0.0, %v6593
        %v6595 = vpop.f32.mrf.mxu0
        %v6596 = vadd.f32 0.0, %v6595
        %6597 = vmatmul.bf16.gmra.mxu0 %v6451
        %v6598 = vpop.f32.mrf.mxu0
        %v6599 = vadd.f32 0.0, %v6598
        %v6600 = vpop.f32.mrf.mxu0
        %v6601 = vadd.f32 0.0, %v6600
        %6602 = vmatmul.bf16.gmra.mxu0 %v6453
        %v6603 = vpop.f32.mrf.mxu0
        %v6604 = vadd.f32 0.0, %v6603
        %v6605 = vpop.f32.mrf.mxu0
        %v6606 = vadd.f32 0.0, %v6605
        %6607 = vmatmul.bf16.gmra.mxu0 %v6455
        %v6608 = vpop.f32.mrf.mxu0
        %v6609 = vadd.f32 0.0, %v6608
        %v6610 = vpop.f32.mrf.mxu0
        %v6611 = vadd.f32 0.0, %v6610
        %6612 = vmatmul.bf16.gmra.mxu0 %v6457
        %v6613 = vpop.f32.mrf.mxu0
        %v6614 = vadd.f32 0.0, %v6613
        %v6615 = vpop.f32.mrf.mxu0
        %v6616 = vadd.f32 0.0, %v6615
        %6617 = vmatmul.bf16.gmra.mxu0 %v6459
        %v6618 = vpop.f32.mrf.mxu0
        %v6619 = vadd.f32 0.0, %v6618
        %v6620 = vpop.f32.mrf.mxu0
        %v6621 = vadd.f32 0.0, %v6620
        %6622 = vmatmul.bf16.gmra.mxu0 %v6461
        %v6623 = vpop.f32.mrf.mxu0
        %v6624 = vadd.f32 0.0, %v6623
        %v6625 = vpop.f32.mrf.mxu0
        %v6626 = vadd.f32 0.0, %v6625
        %6627 = vmatmul.bf16.gmra.mxu0 %v6463
        %v6628 = vpop.f32.mrf.mxu0
        %v6629 = vadd.f32 0.0, %v6628
        %v6630 = vpop.f32.mrf.mxu0
        %v6631 = vadd.f32 0.0, %v6630
        %6632 = vmatmul.bf16.gmra.mxu0 %v6465
        %v6633 = vpop.f32.mrf.mxu0
        %v6634 = vadd.f32 0.0, %v6633
        %v6635 = vpop.f32.mrf.mxu0
        %v6636 = vadd.f32 0.0, %v6635
        %6637 = vmatmul.bf16.gmra.mxu0 %v6467
        %v6638 = vpop.f32.mrf.mxu0
        %v6639 = vadd.f32 0.0, %v6638
        %v6640 = vpop.f32.mrf.mxu0
        %v6641 = vadd.f32 0.0, %v6640
        %6642 = vmatmul.bf16.gmra.mxu0 %v6469
        %v6643 = vpop.f32.mrf.mxu0
        %v6644 = vadd.f32 0.0, %v6643
        %v6645 = vpop.f32.mrf.mxu0
        %v6646 = vadd.f32 0.0, %v6645
        %6647 = vmatmul.bf16.gmra.mxu0 %v6471
        %v6648 = vpop.f32.mrf.mxu0
        %v6649 = vadd.f32 0.0, %v6648
        %v6650 = vpop.f32.mrf.mxu0
        %v6651 = vadd.f32 0.0, %v6650
        %6652 = vmatmul.bf16.gmra.mxu0 %v6473
        %v6653 = vpop.f32.mrf.mxu0
        %v6654 = vadd.f32 0.0, %v6653
        %v6655 = vpop.f32.mrf.mxu0
        %v6656 = vadd.f32 0.0, %v6655
        %6657 = vmatmul.bf16.gmra.mxu0 %v6472
        %v6658 = vpop.f32.mrf.mxu0
        %v6659 = vadd.f32 0.0, %v6658
        %v6660 = vpop.f32.mrf.mxu0
        %6661 = vdwg.mxu0
        %v6662 = vadd.f32 %v6152, %v6554
        %v6663 = vadd.f32 %v6154, %v6556
        %v6664 = vadd.f32 %v6157, %v6559
        %v6665 = vadd.f32 %v6159, %v6561
        %v6666 = vadd.f32 %v6162, %v6564
        %v6667 = vadd.f32 %v6164, %v6566
        %v6668 = vadd.f32 %v6167, %v6569
        %v6669 = vadd.f32 %v6169, %v6571
        %v6670 = vadd.f32 %v6172, %v6574
        %v6671 = vadd.f32 %v6174, %v6576
        %v6672 = vadd.f32 %v6177, %v6579
        %v6673 = vadd.f32 %v6179, %v6581
        %v6674 = vadd.f32 %v6182, %v6584
        %v6675 = vadd.f32 %v6184, %v6586
        %v6676 = vadd.f32 %v6187, %v6589
        %v6677 = vadd.f32 %v6189, %v6591
        %v6678 = vadd.f32 %v6192, %v6594
        %v6679 = vadd.f32 %v6194, %v6596
        %v6680 = vadd.f32 %v6197, %v6599
        %v6681 = vadd.f32 %v6199, %v6601
        %v6682 = vadd.f32 %v6202, %v6604
        %v6683 = vadd.f32 %v6204, %v6606
        %v6684 = vadd.f32 %v6207, %v6609
        %v6685 = vadd.f32 %v6209, %v6611
        %v6686 = vadd.f32 %v6212, %v6614
        %v6687 = vadd.f32 %v6214, %v6616
        %v6688 = vadd.f32 %v6217, %v6619
        %v6689 = vadd.f32 %v6219, %v6621
        %v6690 = vadd.f32 %v6222, %v6624
        %v6691 = vadd.f32 %v6224, %v6626
        %v6692 = vadd.f32 %v6227, %v6629
        %v6693 = vadd.f32 %v6229, %v6631
        %v6694 = vadd.f32 %v6232, %v6634
        %v6695 = vadd.f32 %v6234, %v6636
        %v6696 = vadd.f32 %v6237, %v6639
        %v6697 = vadd.f32 %v6239, %v6641
        %v6698 = vadd.f32 %v6242, %v6644
        %v6699 = vadd.f32 %v6244, %v6646
        %v6700 = vadd.f32 %v6247, %v6649
        %v6701 = vadd.f32 %v6249, %v6651
        %v6702 = vadd.f32 %v6252, %v6654
        %v6703 = vadd.f32 %v6254, %v6656
        %v6704 = vadd.f32 %v6257, %v6659
        %vm6748 = vcmask 1045504
        %v6749 = vrot.slane %v6662, 2
        %v6750 = vrot.slane %v6663, 2
        %v6751 = vsel %vm6748, %v6749, %v6750
        %v6752 = vrot.slane %v6664, 2
        %v6753 = vsel %vm6748, %v6750, %v6752
        %v6754 = vrot.slane %v6665, 2
        %v6755 = vsel %vm6748, %v6752, %v6754
        %v6756 = vrot.slane %v6666, 2
        %v6757 = vsel %vm6748, %v6754, %v6756
        %v6758 = vrot.slane %v6667, 2
        %v6759 = vsel %vm6748, %v6756, %v6758
        %v6760 = vrot.slane %v6668, 2
        %v6761 = vsel %vm6748, %v6758, %v6760
        %v6762 = vrot.slane %v6669, 2
        %v6763 = vsel %vm6748, %v6760, %v6762
        %v6764 = vrot.slane %v6670, 2
        %v6765 = vsel %vm6748, %v6762, %v6764
        %v6766 = vrot.slane %v6671, 2
        %v6767 = vsel %vm6748, %v6764, %v6766
        %v6768 = vrot.slane %v6672, 2
        %v6769 = vsel %vm6748, %v6766, %v6768
        %v6770 = vrot.slane %v6673, 2
        %v6771 = vsel %vm6748, %v6768, %v6770
        %v6772 = vrot.slane %v6674, 2
        %v6773 = vsel %vm6748, %v6770, %v6772
        %v6774 = vrot.slane %v6675, 2
        %v6775 = vsel %vm6748, %v6772, %v6774
        %v6776 = vrot.slane %v6676, 2
        %v6777 = vsel %vm6748, %v6774, %v6776
        %v6778 = vrot.slane %v6677, 2
        %v6779 = vsel %vm6748, %v6776, %v6778
        %v6780 = vrot.slane %v6678, 2
        %v6781 = vsel %vm6748, %v6778, %v6780
        %v6782 = vrot.slane %v6679, 2
        %v6783 = vsel %vm6748, %v6780, %v6782
        %v6784 = vrot.slane %v6680, 2
        %v6785 = vsel %vm6748, %v6782, %v6784
        %v6786 = vrot.slane %v6681, 2
        %v6787 = vsel %vm6748, %v6784, %v6786
        %v6788 = vrot.slane %v6682, 2
        %v6789 = vsel %vm6748, %v6786, %v6788
        %v6790 = vrot.slane %v6683, 2
        %v6791 = vsel %vm6748, %v6788, %v6790
        %v6792 = vrot.slane %v6684, 2
        %v6793 = vsel %vm6748, %v6790, %v6792
        %v6794 = vrot.slane %v6685, 2
        %v6795 = vsel %vm6748, %v6792, %v6794
        %v6796 = vrot.slane %v6686, 2
        %v6797 = vsel %vm6748, %v6794, %v6796
        %v6798 = vrot.slane %v6687, 2
        %v6799 = vsel %vm6748, %v6796, %v6798
        %v6800 = vrot.slane %v6688, 2
        %v6801 = vsel %vm6748, %v6798, %v6800
        %v6802 = vrot.slane %v6689, 2
        %v6803 = vsel %vm6748, %v6800, %v6802
        %v6804 = vrot.slane %v6690, 2
        %v6805 = vsel %vm6748, %v6802, %v6804
        %v6806 = vrot.slane %v6691, 2
        %v6807 = vsel %vm6748, %v6804, %v6806
        %v6808 = vrot.slane %v6692, 2
        %v6809 = vsel %vm6748, %v6806, %v6808
        %v6810 = vrot.slane %v6693, 2
        %v6811 = vsel %vm6748, %v6808, %v6810
        %v6812 = vrot.slane %v6694, 2
        %v6813 = vsel %vm6748, %v6810, %v6812
        %v6814 = vrot.slane %v6695, 2
        %v6815 = vsel %vm6748, %v6812, %v6814
        %v6816 = vrot.slane %v6696, 2
        %v6817 = vsel %vm6748, %v6814, %v6816
        %v6818 = vrot.slane %v6697, 2
        %v6819 = vsel %vm6748, %v6816, %v6818
        %v6820 = vrot.slane %v6698, 2
        %v6821 = vsel %vm6748, %v6818, %v6820
        %v6822 = vrot.slane %v6699, 2
        %v6823 = vsel %vm6748, %v6820, %v6822
        %v6824 = vrot.slane %v6700, 2
        %v6825 = vsel %vm6748, %v6822, %v6824
        %v6826 = vrot.slane %v6701, 2
        %v6827 = vsel %vm6748, %v6824, %v6826
        %v6828 = vrot.slane %v6702, 2
        %v6829 = vsel %vm6748, %v6826, %v6828
        %v6830 = vrot.slane %v6703, 2
        %v6831 = vsel %vm6748, %v6828, %v6830
        %v6832 = vrot.slane %v6704, 2
        %v6833 = vsel %vm6748, %v6830, %v6832
        %v6876 = vmax.f32 %v6662, %v6751
        %v6877 = vmax.f32 %v6663, %v6753
        %v6878 = vmax.f32 %v6664, %v6755
        %v6879 = vmax.f32 %v6665, %v6757
        %v6880 = vmax.f32 %v6666, %v6759
        %v6881 = vmax.f32 %v6667, %v6761
        %v6882 = vmax.f32 %v6668, %v6763
        %v6883 = vmax.f32 %v6669, %v6765
        %v6884 = vmax.f32 %v6670, %v6767
        %v6885 = vmax.f32 %v6671, %v6769
        %v6886 = vmax.f32 %v6672, %v6771
        %v6887 = vmax.f32 %v6673, %v6773
        %v6888 = vmax.f32 %v6674, %v6775
        %v6889 = vmax.f32 %v6675, %v6777
        %v6890 = vmax.f32 %v6676, %v6779
        %v6891 = vmax.f32 %v6677, %v6781
        %v6892 = vmax.f32 %v6678, %v6783
        %v6893 = vmax.f32 %v6679, %v6785
        %v6894 = vmax.f32 %v6680, %v6787
        %v6895 = vmax.f32 %v6681, %v6789
        %v6896 = vmax.f32 %v6682, %v6791
        %v6897 = vmax.f32 %v6683, %v6793
        %v6898 = vmax.f32 %v6684, %v6795
        %v6899 = vmax.f32 %v6685, %v6797
        %v6900 = vmax.f32 %v6686, %v6799
        %v6901 = vmax.f32 %v6687, %v6801
        %v6902 = vmax.f32 %v6688, %v6803
        %v6903 = vmax.f32 %v6689, %v6805
        %v6904 = vmax.f32 %v6690, %v6807
        %v6905 = vmax.f32 %v6691, %v6809
        %v6906 = vmax.f32 %v6692, %v6811
        %v6907 = vmax.f32 %v6693, %v6813
        %v6908 = vmax.f32 %v6694, %v6815
        %v6909 = vmax.f32 %v6695, %v6817
        %v6910 = vmax.f32 %v6696, %v6819
        %v6911 = vmax.f32 %v6697, %v6821
        %v6912 = vmax.f32 %v6698, %v6823
        %v6913 = vmax.f32 %v6699, %v6825
        %v6914 = vmax.f32 %v6700, %v6827
        %v6915 = vmax.f32 %v6701, %v6829
        %v6916 = vmax.f32 %v6702, %v6831
        %v6917 = vmax.f32 %v6703, %v6833
        %v6918 = vld [vmem:[%s5] sm:$0x1]
        %v6920 = vperm.slane %v6918, 0
        %v6922 = vadd.f32 %v6876, %v6920
        %v6923 = vadd.f32 %v6877, %v6920
        %v6924 = vadd.f32 %v6878, %v6920
        %v6925 = vadd.f32 %v6879, %v6920
        %v6926 = vadd.f32 %v6880, %v6920
        %v6927 = vadd.f32 %v6881, %v6920
        %v6928 = vadd.f32 %v6882, %v6920
        %v6929 = vadd.f32 %v6883, %v6920
        %v6930 = vadd.f32 %v6884, %v6920
        %v6931 = vadd.f32 %v6885, %v6920
        %v6932 = vadd.f32 %v6886, %v6920
        %v6933 = vadd.f32 %v6887, %v6920
        %v6934 = vadd.f32 %v6888, %v6920
        %v6935 = vadd.f32 %v6889, %v6920
        %v6936 = vadd.f32 %v6890, %v6920
        %v6937 = vadd.f32 %v6891, %v6920
        %v6938 = vadd.f32 %v6892, %v6920
        %v6939 = vadd.f32 %v6893, %v6920
        %v6940 = vadd.f32 %v6894, %v6920
        %v6941 = vadd.f32 %v6895, %v6920
        %v6942 = vadd.f32 %v6896, %v6920
        %v6943 = vadd.f32 %v6897, %v6920
        %v6944 = vadd.f32 %v6898, %v6920
        %v6945 = vadd.f32 %v6899, %v6920
        %v6946 = vadd.f32 %v6900, %v6920
        %v6947 = vadd.f32 %v6901, %v6920
        %v6948 = vadd.f32 %v6902, %v6920
        %v6949 = vadd.f32 %v6903, %v6920
        %v6950 = vadd.f32 %v6904, %v6920
        %v6951 = vadd.f32 %v6905, %v6920
        %v6952 = vadd.f32 %v6906, %v6920
        %v6953 = vadd.f32 %v6907, %v6920
        %v6954 = vadd.f32 %v6908, %v6920
        %v6955 = vadd.f32 %v6909, %v6920
        %v6956 = vadd.f32 %v6910, %v6920
        %v6957 = vadd.f32 %v6911, %v6920
        %v6958 = vadd.f32 %v6912, %v6920
        %v6959 = vadd.f32 %v6913, %v6920
        %v6960 = vadd.f32 %v6914, %v6920
        %v6961 = vadd.f32 %v6915, %v6920
        %v6962 = vadd.f32 %v6916, %v6920
        %v6963 = vadd.f32 %v6917, %v6920
        %v6964 = vmax.f32 %v6922, 0.0
        %v6965 = vmax.f32 %v6923, 0.0
        %v6966 = vmax.f32 %v6924, 0.0
        %v6967 = vmax.f32 %v6925, 0.0
        %v6968 = vmax.f32 %v6926, 0.0
        %v6969 = vmax.f32 %v6927, 0.0
        %v6970 = vmax.f32 %v6928, 0.0
        %v6971 = vmax.f32 %v6929, 0.0
        %v6972 = vmax.f32 %v6930, 0.0
        %v6973 = vmax.f32 %v6931, 0.0
        %v6974 = vmax.f32 %v6932, 0.0
        %v6975 = vmax.f32 %v6933, 0.0
        %v6976 = vmax.f32 %v6934, 0.0
        %v6977 = vmax.f32 %v6935, 0.0
        %v6978 = vmax.f32 %v6936, 0.0
        %v6979 = vmax.f32 %v6937, 0.0
        %v6980 = vmax.f32 %v6938, 0.0
        %v6981 = vmax.f32 %v6939, 0.0
        %v6982 = vmax.f32 %v6940, 0.0
        %v6983 = vmax.f32 %v6941, 0.0
        %v6984 = vmax.f32 %v6942, 0.0
        %v6985 = vmax.f32 %v6943, 0.0
        %v6986 = vmax.f32 %v6944, 0.0
        %v6987 = vmax.f32 %v6945, 0.0
        %v6988 = vmax.f32 %v6946, 0.0
        %v6989 = vmax.f32 %v6947, 0.0
        %v6990 = vmax.f32 %v6948, 0.0
        %v6991 = vmax.f32 %v6949, 0.0
        %v6992 = vmax.f32 %v6950, 0.0
        %v6993 = vmax.f32 %v6951, 0.0
        %v6994 = vmax.f32 %v6952, 0.0
        %v6995 = vmax.f32 %v6953, 0.0
        %v6996 = vmax.f32 %v6954, 0.0
        %v6997 = vmax.f32 %v6955, 0.0
        %v6998 = vmax.f32 %v6956, 0.0
        %v6999 = vmax.f32 %v6957, 0.0
        %v7000 = vmax.f32 %v6958, 0.0
        %v7001 = vmax.f32 %v6959, 0.0
        %v7002 = vmax.f32 %v6960, 0.0
        %v7003 = vmax.f32 %v6961, 0.0
        %v7004 = vmax.f32 %v6962, 0.0
        %v7005 = vmax.f32 %v6963, 0.0
        %v7006 = vmul.f32 %v6964, %v694
        %v7007 = vmul.f32 %v6965, %v699
        %v7008 = vmul.f32 %v6966, %v704
        %v7009 = vmul.f32 %v6967, %v709
        %v7010 = vmul.f32 %v6968, %v714
        %v7011 = vmul.f32 %v6969, %v719
        %v7012 = vmul.f32 %v6970, %v724
        %v7013 = vmul.f32 %v6971, %v729
        %v7014 = vmul.f32 %v6972, %v734
        %v7015 = vmul.f32 %v6973, %v739
        %v7016 = vmul.f32 %v6974, %v744
        %v7017 = vmul.f32 %v6975, %v749
        %v7018 = vmul.f32 %v6976, %v754
        %v7019 = vmul.f32 %v6977, %v759
        %v7020 = vmul.f32 %v6978, %v764
        %v7021 = vmul.f32 %v6979, %v769
        %v7022 = vmul.f32 %v6980, %v774
        %v7023 = vmul.f32 %v6981, %v779
        %v7024 = vmul.f32 %v6982, %v784
        %v7025 = vmul.f32 %v6983, %v789
        %v7026 = vmul.f32 %v6984, %v794
        %v7027 = vmul.f32 %v6985, %v799
        %v7028 = vmul.f32 %v6986, %v804
        %v7029 = vmul.f32 %v6987, %v809
        %v7030 = vmul.f32 %v6988, %v814
        %v7031 = vmul.f32 %v6989, %v819
        %v7032 = vmul.f32 %v6990, %v824
        %v7033 = vmul.f32 %v6991, %v829
        %v7034 = vmul.f32 %v6992, %v834
        %v7035 = vmul.f32 %v6993, %v839
        %v7036 = vmul.f32 %v6994, %v844
        %v7037 = vmul.f32 %v6995, %v849
        %v7038 = vmul.f32 %v6996, %v854
        %v7039 = vmul.f32 %v6997, %v859
        %v7040 = vmul.f32 %v6998, %v864
        %v7041 = vmul.f32 %v6999, %v869
        %v7042 = vmul.f32 %v7000, %v874
        %v7043 = vmul.f32 %v7001, %v879
        %v7044 = vmul.f32 %v7002, %v884
        %v7045 = vmul.f32 %v7003, %v889
        %v7046 = vmul.f32 %v7004, %v894
        %v7047 = vmul.f32 %v7005, %v899
        %v7048 = vpack.c.bf16 %v7006, %v7006
        %v7049 = vpack.c.bf16 %v7007, %v7007
        %v7050 = vpack.c.bf16 %v7008, %v7008
        %v7051 = vpack.c.bf16 %v7009, %v7009
        %v7052 = vpack.c.bf16 %v7010, %v7010
        %v7053 = vpack.c.bf16 %v7011, %v7011
        %v7054 = vpack.c.bf16 %v7012, %v7012
        %v7055 = vpack.c.bf16 %v7013, %v7013
        %v7056 = vpack.c.bf16 %v7014, %v7014
        %v7057 = vpack.c.bf16 %v7015, %v7015
        %v7058 = vpack.c.bf16 %v7016, %v7016
        %v7059 = vpack.c.bf16 %v7017, %v7017
        %v7060 = vpack.c.bf16 %v7018, %v7018
        %v7061 = vpack.c.bf16 %v7019, %v7019
        %v7062 = vpack.c.bf16 %v7020, %v7020
        %v7063 = vpack.c.bf16 %v7021, %v7021
        %v7064 = vpack.c.bf16 %v7022, %v7022
        %v7065 = vpack.c.bf16 %v7023, %v7023
        %v7066 = vpack.c.bf16 %v7024, %v7024
        %v7067 = vpack.c.bf16 %v7025, %v7025
        %v7068 = vpack.c.bf16 %v7026, %v7026
        %v7069 = vpack.c.bf16 %v7027, %v7027
        %v7070 = vpack.c.bf16 %v7028, %v7028
        %v7071 = vpack.c.bf16 %v7029, %v7029
        %v7072 = vpack.c.bf16 %v7030, %v7030
        %v7073 = vpack.c.bf16 %v7031, %v7031
        %v7074 = vpack.c.bf16 %v7032, %v7032
        %v7075 = vpack.c.bf16 %v7033, %v7033
        %v7076 = vpack.c.bf16 %v7034, %v7034
        %v7077 = vpack.c.bf16 %v7035, %v7035
        %v7078 = vpack.c.bf16 %v7036, %v7036
        %v7079 = vpack.c.bf16 %v7037, %v7037
        %v7080 = vpack.c.bf16 %v7038, %v7038
        %v7081 = vpack.c.bf16 %v7039, %v7039
        %v7082 = vpack.c.bf16 %v7040, %v7040
        %v7083 = vpack.c.bf16 %v7041, %v7041
        %v7084 = vpack.c.bf16 %v7042, %v7042
        %v7085 = vpack.c.bf16 %v7043, %v7043
        %v7086 = vpack.c.bf16 %v7044, %v7044
        %v7087 = vpack.c.bf16 %v7045, %v7045
        %v7088 = vpack.c.bf16 %v7046, %v7046
        %v7089 = vpack.c.bf16 %v7047, %v7047
        %7090 = vst [vmem:[#allocation2 + $0x8] sm:$0xf] %v7048
        %7091 = vst [vmem:[#allocation2 + $0xc] sm:$0xf] %v7049
        %7092 = vst [vmem:[#allocation2 + $0x10] sm:$0xf] %v7050
        %7093 = vst [vmem:[#allocation2 + $0x14] sm:$0xf] %v7051
        %7094 = vst [vmem:[#allocation2 + $0x18] sm:$0xf] %v7052
        %7095 = vst [vmem:[#allocation2 + $0x1c] sm:$0xf] %v7053
        %7096 = vst [vmem:[#allocation2 + $0x20] sm:$0xf] %v7054
        %7097 = vst [vmem:[#allocation2 + $0x24] sm:$0xf] %v7055
        %7098 = vst [vmem:[#allocation2 + $0x28] sm:$0xf] %v7056
        %7099 = vst [vmem:[#allocation2 + $0x2c] sm:$0xf] %v7057
        %7100 = vst [vmem:[#allocation2 + $0x30] sm:$0xf] %v7058
        %7101 = vst [vmem:[#allocation2 + $0x34] sm:$0xf] %v7059
        %7102 = vst [vmem:[#allocation2 + $0x38] sm:$0xf] %v7060
        %7103 = vst [vmem:[#allocation2 + $0x3c] sm:$0xf] %v7061
        %7104 = vst [vmem:[#allocation2 + $0x40] sm:$0xf] %v7062
        %7105 = vst [vmem:[#allocation2 + $0x44] sm:$0xf] %v7063
        %7106 = vst [vmem:[#allocation2 + $0x48] sm:$0xf] %v7064
        %7107 = vst [vmem:[#allocation2 + $0x4c] sm:$0xf] %v7065
        %7108 = vst [vmem:[#allocation2 + $0x50] sm:$0xf] %v7066
        %7109 = vst [vmem:[#allocation2 + $0x54] sm:$0xf] %v7067
        %7110 = vst [vmem:[#allocation2 + $0x58] sm:$0xf] %v7068
        %7111 = vst [vmem:[#allocation2 + $0x5c] sm:$0xf] %v7069
        %7112 = vst [vmem:[#allocation2 + $0x60] sm:$0xf] %v7070
        %7113 = vst [vmem:[#allocation2 + $0x64] sm:$0xf] %v7071
        %7114 = vst [vmem:[#allocation2 + $0x68] sm:$0xf] %v7072
        %7115 = vst [vmem:[#allocation2 + $0x6c] sm:$0xf] %v7073
        %7116 = vst [vmem:[#allocation2 + $0x70] sm:$0xf] %v7074
        %7117 = vst [vmem:[#allocation2 + $0x74] sm:$0xf] %v7075
        %7118 = vst [vmem:[#allocation2 + $0x78] sm:$0xf] %v7076
        %7119 = vst [vmem:[#allocation2 + $0x7c] sm:$0xf] %v7077
        %7120 = vst [vmem:[#allocation2 + $0x80] sm:$0xf] %v7078
        %7121 = vst [vmem:[#allocation2 + $0x84] sm:$0xf] %v7079
        %7122 = vst [vmem:[#allocation2 + $0x88] sm:$0xf] %v7080
        %7123 = vst [vmem:[#allocation2 + $0x8c] sm:$0xf] %v7081
        %7124 = vst [vmem:[#allocation2 + $0x90] sm:$0xf] %v7082
        %7125 = vst [vmem:[#allocation2 + $0x94] sm:$0xf] %v7083
        %7126 = vst [vmem:[#allocation2 + $0x98] sm:$0xf] %v7084
        %7127 = vst [vmem:[#allocation2 + $0x9c] sm:$0xf] %v7085
        %7128 = vst [vmem:[#allocation2 + $0xa0] sm:$0xf] %v7086
        %7129 = vst [vmem:[#allocation2 + $0xa4] sm:$0xf] %v7087
        %7130 = vst [vmem:[#allocation2 + $0xa8] sm:$0xf] %v7088
        %7131 = vst [vmem:[#allocation2 + $0xac] sm:$0xf] %v7089
        %v7132 = vld [vmem:[%s6] sm:$0xf]
        %v7133 = vld [vmem:[%s6 + $0x4] sm:$0xf]
        %v7134 = vld [vmem:[%s6 + $0x8] sm:$0xf]
        %v7135 = vld [vmem:[%s6 + $0xc] sm:$0xf]
        %v7136 = vld [vmem:[%s6 + $0x10] sm:$0xf]
        %v7137 = vld [vmem:[%s6 + $0x14] sm:$0xf]
        %v7138 = vld [vmem:[%s6 + $0x18] sm:$0xf]
        %v7139 = vld [vmem:[%s6 + $0x1c] sm:$0xf]
        %v7140 = vld [vmem:[%s6 + $0x20] sm:$0xf]
        %v7141 = vld [vmem:[%s6 + $0x24] sm:$0xf]
        %v7142 = vld [vmem:[%s6 + $0x28] sm:$0xf]
        %v7143 = vld [vmem:[%s6 + $0x2c] sm:$0xf]
        %v7144 = vld [vmem:[%s6 + $0x30] sm:$0xf]
        %v7145 = vld [vmem:[%s6 + $0x34] sm:$0xf]
        %v7146 = vld [vmem:[%s6 + $0x38] sm:$0xf]
        %v7147 = vld [vmem:[%s6 + $0x3c] sm:$0xf]
        %v7148 = vld [vmem:[%s6 + $0x40] sm:$0xf]
        %v7149 = vld [vmem:[%s6 + $0x44] sm:$0xf]
        %7150 = vst [vmem:[#allocation3] sm:$0xf] %v7132
        %7151 = vst [vmem:[#allocation3 + $0x4] sm:$0xf] %v7133
        %7152 = vst [vmem:[#allocation3 + $0x40] sm:$0xf] %v7134
        %7153 = vst [vmem:[#allocation3 + $0x44] sm:$0xf] %v7135
        %7154 = vst [vmem:[#allocation3 + $0x80] sm:$0xf] %v7136
        %7155 = vst [vmem:[#allocation3 + $0x84] sm:$0xf] %v7137
        %7156 = vst [vmem:[#allocation3 + $0xc0] sm:$0xf] %v7138
        %7157 = vst [vmem:[#allocation3 + $0xc4] sm:$0xf] %v7139
        %7158 = vst [vmem:[#allocation3 + $0x100] sm:$0xf] %v7140
        %7159 = vst [vmem:[#allocation3 + $0x104] sm:$0xf] %v7141
        %7160 = vst [vmem:[#allocation3 + $0x140] sm:$0xf] %v7142
        %7161 = vst [vmem:[#allocation3 + $0x144] sm:$0xf] %v7143
        %7162 = vst [vmem:[#allocation3 + $0x180] sm:$0xf] %v7144
        %7163 = vst [vmem:[#allocation3 + $0x184] sm:$0xf] %v7145
        %7164 = vst [vmem:[#allocation3 + $0x1c0] sm:$0xf] %v7146
        %7165 = vst [vmem:[#allocation3 + $0x1c4] sm:$0xf] %v7147
        %7166 = vst [vmem:[#allocation3 + $0x200] sm:$0xf] %v7148
        %7167 = vst [vmem:[#allocation3 + $0x204] sm:$0xf] %v7149
        %v7168 = vld [vmem:[#allocation2 + $0x4] sm:$0xc]
        %v7169 = vld [vmem:[#allocation2 + $0x8] sm:$0xf]
        %v7170 = vld [vmem:[#allocation2 + $0xc] sm:$0xf]
        %v7171 = vld [vmem:[#allocation2 + $0x10] sm:$0xf]
        %v7172 = vld [vmem:[#allocation2 + $0x14] sm:$0xf]
        %v7173 = vld [vmem:[#allocation2 + $0x18] sm:$0xf]
        %v7174 = vld [vmem:[#allocation2 + $0x1c] sm:$0xf]
        %v7175 = vld [vmem:[#allocation2 + $0x20] sm:$0xf]
        %v7176 = vld [vmem:[#allocation2 + $0x24] sm:$0xf]
        %v7177 = vld [vmem:[#allocation2 + $0x28] sm:$0xf]
        %v7178 = vld [vmem:[#allocation2 + $0x2c] sm:$0xf]
        %v7179 = vld [vmem:[#allocation2 + $0x30] sm:$0xf]
        %v7180 = vld [vmem:[#allocation2 + $0x34] sm:$0xf]
        %v7181 = vld [vmem:[#allocation2 + $0x38] sm:$0xf]
        %v7182 = vld [vmem:[#allocation2 + $0x3c] sm:$0xf]
        %v7183 = vld [vmem:[#allocation2 + $0x40] sm:$0xf]
        %v7184 = vld [vmem:[#allocation2 + $0x44] sm:$0xf]
        %v7185 = vld [vmem:[#allocation2 + $0x48] sm:$0xf]
        %v7186 = vld [vmem:[#allocation2 + $0x4c] sm:$0xf]
        %v7187 = vld [vmem:[#allocation2 + $0x50] sm:$0xf]
        %v7188 = vld [vmem:[#allocation2 + $0x54] sm:$0xf]
        %v7189 = vld [vmem:[#allocation2 + $0x58] sm:$0xf]
        %v7190 = vld [vmem:[#allocation2 + $0x5c] sm:$0xf]
        %v7191 = vld [vmem:[#allocation2 + $0x60] sm:$0xf]
        %v7192 = vld [vmem:[#allocation2 + $0x64] sm:$0xf]
        %v7193 = vld [vmem:[#allocation2 + $0x68] sm:$0xf]
        %v7194 = vld [vmem:[#allocation2 + $0x6c] sm:$0xf]
        %v7195 = vld [vmem:[#allocation2 + $0x70] sm:$0xf]
        %v7196 = vld [vmem:[#allocation2 + $0x74] sm:$0xf]
        %v7197 = vld [vmem:[#allocation2 + $0x78] sm:$0xf]
        %v7198 = vld [vmem:[#allocation2 + $0x7c] sm:$0xf]
        %v7199 = vld [vmem:[#allocation2 + $0x80] sm:$0xf]
        %v7200 = vld [vmem:[#allocation2 + $0x84] sm:$0xf]
        %v7201 = vld [vmem:[#allocation2 + $0x88] sm:$0xf]
        %v7202 = vld [vmem:[#allocation2 + $0x8c] sm:$0xf]
        %v7203 = vld [vmem:[#allocation2 + $0x90] sm:$0xf]
        %v7204 = vld [vmem:[#allocation2 + $0x94] sm:$0xf]
        %v7205 = vld [vmem:[#allocation2 + $0x98] sm:$0xf]
        %v7206 = vld [vmem:[#allocation2 + $0x9c] sm:$0xf]
        %v7207 = vld [vmem:[#allocation2 + $0xa0] sm:$0xf]
        %v7208 = vld [vmem:[#allocation2 + $0xa4] sm:$0xf]
        %v7209 = vld [vmem:[#allocation2 + $0xa8] sm:$0xf]
        %v7210 = vld [vmem:[#allocation2 + $0xac] sm:$0xf]
        %v7211 = vld [vmem:[#allocation2 + $0xb0] sm:$0x3]
        %v7212 = vld [vmem:[#allocation3] sm:$0xf]
        %v7213 = vld [vmem:[#allocation3 + $0x4] sm:$0xf]
        %v7214 = vld [vmem:[#allocation3 + $0x8] sm:$0xf]
        %v7215 = vld [vmem:[#allocation3 + $0xc] sm:$0xf]
        %v7216 = vld [vmem:[#allocation3 + $0x10] sm:$0xf]
        %v7217 = vld [vmem:[#allocation3 + $0x14] sm:$0xf]
        %v7218 = vld [vmem:[#allocation3 + $0x18] sm:$0xf]
        %v7219 = vld [vmem:[#allocation3 + $0x1c] sm:$0xf]
        %v7220 = vld [vmem:[#allocation3 + $0x20] sm:$0xf]
        %v7221 = vld [vmem:[#allocation3 + $0x24] sm:$0xf]
        %v7222 = vld [vmem:[#allocation3 + $0x28] sm:$0xf]
        %v7223 = vld [vmem:[#allocation3 + $0x2c] sm:$0xf]
        %v7224 = vld [vmem:[#allocation3 + $0x30] sm:$0xf]
        %v7225 = vld [vmem:[#allocation3 + $0x34] sm:$0xf]
        %v7226 = vld [vmem:[#allocation3 + $0x38] sm:$0xf]
        %v7227 = vld [vmem:[#allocation3 + $0x3c] sm:$0xf]
        %v7228 = vld [vmem:[#allocation2 + $0xb0] sm:$0xf]
        %v7229 = vld [vmem:[%s997] sm:$0xf]
        %v7230 = vld [vmem:[%s997 + $0x4] sm:$0xf]
        %v7231 = vld [vmem:[%s997 + $0x8] sm:$0xf]
        %v7232 = vld [vmem:[%s997 + $0xc] sm:$0xf]
        %v7233 = vld [vmem:[%s997 + $0x10] sm:$0xf]
        %v7234 = vld [vmem:[%s997 + $0x14] sm:$0xf]
        %v7235 = vld [vmem:[%s997 + $0x18] sm:$0xf]
        %v7236 = vld [vmem:[%s997 + $0x1c] sm:$0xf]
        %v7237 = vld [vmem:[%s997 + $0x20] sm:$0xf]
        %v7238 = vld [vmem:[%s997 + $0x24] sm:$0xf]
        %v7239 = vld [vmem:[%s997 + $0x28] sm:$0xf]
        %v7240 = vld [vmem:[%s997 + $0x2c] sm:$0xf]
        %v7241 = vld [vmem:[%s997 + $0x30] sm:$0xf]
        %v7242 = vld [vmem:[%s997 + $0x34] sm:$0xf]
        %v7243 = vld [vmem:[%s997 + $0x38] sm:$0xf]
        %v7244 = vld [vmem:[%s997 + $0x3c] sm:$0xf]
        %v7288 = vunpack.c.l.b16 %v7169
        %v7289 = vunpack.c.l.b16 %v7170
        %v7290 = vunpack.c.l.b16 %v7171
        %v7291 = vunpack.c.l.b16 %v7172
        %v7292 = vunpack.c.l.b16 %v7173
        %v7293 = vunpack.c.l.b16 %v7174
        %v7294 = vunpack.c.l.b16 %v7175
        %v7295 = vunpack.c.l.b16 %v7176
        %v7296 = vunpack.c.l.b16 %v7177
        %v7297 = vunpack.c.l.b16 %v7178
        %v7298 = vunpack.c.l.b16 %v7179
        %v7299 = vunpack.c.l.b16 %v7180
        %v7300 = vunpack.c.l.b16 %v7181
        %v7301 = vunpack.c.l.b16 %v7182
        %v7302 = vunpack.c.l.b16 %v7183
        %v7303 = vunpack.c.l.b16 %v7184
        %v7304 = vunpack.c.l.b16 %v7185
        %v7305 = vunpack.c.l.b16 %v7186
        %v7306 = vunpack.c.l.b16 %v7187
        %v7307 = vunpack.c.l.b16 %v7188
        %v7308 = vunpack.c.l.b16 %v7189
        %v7309 = vunpack.c.l.b16 %v7190
        %v7310 = vunpack.c.l.b16 %v7191
        %v7311 = vunpack.c.l.b16 %v7192
        %v7312 = vunpack.c.l.b16 %v7193
        %v7313 = vunpack.c.l.b16 %v7194
        %v7314 = vunpack.c.l.b16 %v7195
        %v7315 = vunpack.c.l.b16 %v7196
        %v7316 = vunpack.c.l.b16 %v7197
        %v7317 = vunpack.c.l.b16 %v7198
        %v7318 = vunpack.c.l.b16 %v7199
        %v7319 = vunpack.c.l.b16 %v7200
        %v7320 = vunpack.c.l.b16 %v7201
        %v7321 = vunpack.c.l.b16 %v7202
        %v7322 = vunpack.c.l.b16 %v7203
        %v7323 = vunpack.c.l.b16 %v7204
        %v7324 = vunpack.c.l.b16 %v7205
        %v7325 = vunpack.c.l.b16 %v7206
        %v7326 = vunpack.c.l.b16 %v7207
        %v7327 = vunpack.c.l.b16 %v7208
        %v7328 = vunpack.c.l.b16 %v7209
        %v7329 = vunpack.c.l.b16 %v7210
        %v7330 = vunpack.c.l.b16 %v7228
        %v7331 = vpack.c.b16 %v7289, %v7288
        %v7332 = vpack.c.b16 %v7291, %v7290
        %v7333 = vpack.c.b16 %v7293, %v7292
        %v7334 = vpack.c.b16 %v7295, %v7294
        %v7335 = vpack.c.b16 %v7297, %v7296
        %v7336 = vpack.c.b16 %v7299, %v7298
        %v7337 = vpack.c.b16 %v7301, %v7300
        %v7338 = vpack.c.b16 %v7303, %v7302
        %v7339 = vpack.c.b16 %v7305, %v7304
        %v7340 = vpack.c.b16 %v7307, %v7306
        %v7341 = vpack.c.b16 %v7309, %v7308
        %v7342 = vpack.c.b16 %v7311, %v7310
        %v7343 = vpack.c.b16 %v7313, %v7312
        %v7344 = vpack.c.b16 %v7315, %v7314
        %v7345 = vpack.c.b16 %v7317, %v7316
        %v7346 = vpack.c.b16 %v7319, %v7318
        %v7347 = vpack.c.b16 %v7321, %v7320
        %v7348 = vpack.c.b16 %v7323, %v7322
        %v7349 = vpack.c.b16 %v7325, %v7324
        %v7350 = vpack.c.b16 %v7327, %v7326
        %v7351 = vpack.c.b16 %v7329, %v7328
        %v7352 = vpack.c.b16 %v7330, %v7330
        %v7391 = vunpack.c.l.b16 %v7229
        %v7392 = vunpack.c.l.b16 %v7230
        %v7393 = vunpack.c.l.b16 %v7231
        %v7394 = vunpack.c.l.b16 %v7232
        %v7395 = vunpack.c.l.b16 %v7233
        %v7396 = vunpack.c.l.b16 %v7234
        %v7397 = vunpack.c.l.b16 %v7235
        %v7398 = vunpack.c.l.b16 %v7236
        %v7399 = vunpack.c.l.b16 %v7237
        %v7400 = vunpack.c.l.b16 %v7238
        %v7401 = vunpack.c.l.b16 %v7239
        %v7402 = vunpack.c.l.b16 %v7240
        %v7403 = vunpack.c.l.b16 %v7241
        %v7404 = vunpack.c.l.b16 %v7242
        %v7405 = vunpack.c.l.b16 %v7243
        %v7406 = vunpack.c.l.b16 %v7244
        %v7407 = vpack.c.b16 %v7392, %v7391
        %v7408 = vpack.c.b16 %v7394, %v7393
        %v7409 = vpack.c.b16 %v7396, %v7395
        %v7410 = vpack.c.b16 %v7398, %v7397
        %v7411 = vpack.c.b16 %v7400, %v7399
        %v7412 = vpack.c.b16 %v7402, %v7401
        %v7413 = vpack.c.b16 %v7404, %v7403
        %v7414 = vpack.c.b16 %v7406, %v7405
        %7423 = vmatpush.bf16.msra.mxu0 %v7414
        %7424 = vmatpush.bf16.msra.mxu0 %v7413
        %7425 = vmatpush.bf16.msra.mxu0 %v7412
        %7426 = vmatpush.bf16.msra.mxu0 %v7411
        %7427 = vmatpush.bf16.msra.mxu0 %v7410
        %7428 = vmatpush.bf16.msra.mxu0 %v7409
        %7429 = vmatpush.bf16.msra.mxu0 %v7408
        %7430 = vmatpush.bf16.msra.mxu0 %v7407
        %7431 = vmatmul.bf16.gmra.mxu0 %v7331
        %v7432 = vpop.f32.mrf.mxu0
        %v7433 = vadd.f32 0.0, %v7432
        %v7434 = vpop.f32.mrf.mxu0
        %v7435 = vadd.f32 0.0, %v7434
        %7436 = vmatmul.bf16.gmra.mxu0 %v7332
        %v7437 = vpop.f32.mrf.mxu0
        %v7438 = vadd.f32 0.0, %v7437
        %v7439 = vpop.f32.mrf.mxu0
        %v7440 = vadd.f32 0.0, %v7439
        %7441 = vmatmul.bf16.gmra.mxu0 %v7333
        %v7442 = vpop.f32.mrf.mxu0
        %v7443 = vadd.f32 0.0, %v7442
        %v7444 = vpop.f32.mrf.mxu0
        %v7445 = vadd.f32 0.0, %v7444
        %7446 = vmatmul.bf16.gmra.mxu0 %v7334
        %v7447 = vpop.f32.mrf.mxu0
        %v7448 = vadd.f32 0.0, %v7447
        %v7449 = vpop.f32.mrf.mxu0
        %v7450 = vadd.f32 0.0, %v7449
        %7451 = vmatmul.bf16.gmra.mxu0 %v7335
        %v7452 = vpop.f32.mrf.mxu0
        %v7453 = vadd.f32 0.0, %v7452
        %v7454 = vpop.f32.mrf.mxu0
        %v7455 = vadd.f32 0.0, %v7454
        %7456 = vmatmul.bf16.gmra.mxu0 %v7336
        %v7457 = vpop.f32.mrf.mxu0
        %v7458 = vadd.f32 0.0, %v7457
        %v7459 = vpop.f32.mrf.mxu0
        %v7460 = vadd.f32 0.0, %v7459
        %7461 = vmatmul.bf16.gmra.mxu0 %v7337
        %v7462 = vpop.f32.mrf.mxu0
        %v7463 = vadd.f32 0.0, %v7462
        %v7464 = vpop.f32.mrf.mxu0
        %v7465 = vadd.f32 0.0, %v7464
        %7466 = vmatmul.bf16.gmra.mxu0 %v7338
        %v7467 = vpop.f32.mrf.mxu0
        %v7468 = vadd.f32 0.0, %v7467
        %v7469 = vpop.f32.mrf.mxu0
        %v7470 = vadd.f32 0.0, %v7469
        %7471 = vmatmul.bf16.gmra.mxu0 %v7339
        %v7472 = vpop.f32.mrf.mxu0
        %v7473 = vadd.f32 0.0, %v7472
        %v7474 = vpop.f32.mrf.mxu0
        %v7475 = vadd.f32 0.0, %v7474
        %7476 = vmatmul.bf16.gmra.mxu0 %v7340
        %v7477 = vpop.f32.mrf.mxu0
        %v7478 = vadd.f32 0.0, %v7477
        %v7479 = vpop.f32.mrf.mxu0
        %v7480 = vadd.f32 0.0, %v7479
        %7481 = vmatmul.bf16.gmra.mxu0 %v7341
        %v7482 = vpop.f32.mrf.mxu0
        %v7483 = vadd.f32 0.0, %v7482
        %v7484 = vpop.f32.mrf.mxu0
        %v7485 = vadd.f32 0.0, %v7484
        %7486 = vmatmul.bf16.gmra.mxu0 %v7342
        %v7487 = vpop.f32.mrf.mxu0
        %v7488 = vadd.f32 0.0, %v7487
        %v7489 = vpop.f32.mrf.mxu0
        %v7490 = vadd.f32 0.0, %v7489
        %7491 = vmatmul.bf16.gmra.mxu0 %v7343
        %v7492 = vpop.f32.mrf.mxu0
        %v7493 = vadd.f32 0.0, %v7492
        %v7494 = vpop.f32.mrf.mxu0
        %v7495 = vadd.f32 0.0, %v7494
        %7496 = vmatmul.bf16.gmra.mxu0 %v7344
        %v7497 = vpop.f32.mrf.mxu0
        %v7498 = vadd.f32 0.0, %v7497
        %v7499 = vpop.f32.mrf.mxu0
        %v7500 = vadd.f32 0.0, %v7499
        %7501 = vmatmul.bf16.gmra.mxu0 %v7345
        %v7502 = vpop.f32.mrf.mxu0
        %v7503 = vadd.f32 0.0, %v7502
        %v7504 = vpop.f32.mrf.mxu0
        %v7505 = vadd.f32 0.0, %v7504
        %7506 = vmatmul.bf16.gmra.mxu0 %v7346
        %v7507 = vpop.f32.mrf.mxu0
        %v7508 = vadd.f32 0.0, %v7507
        %v7509 = vpop.f32.mrf.mxu0
        %v7510 = vadd.f32 0.0, %v7509
        %7511 = vmatmul.bf16.gmra.mxu0 %v7347
        %v7512 = vpop.f32.mrf.mxu0
        %v7513 = vadd.f32 0.0, %v7512
        %v7514 = vpop.f32.mrf.mxu0
        %v7515 = vadd.f32 0.0, %v7514
        %7516 = vmatmul.bf16.gmra.mxu0 %v7348
        %v7517 = vpop.f32.mrf.mxu0
        %v7518 = vadd.f32 0.0, %v7517
        %v7519 = vpop.f32.mrf.mxu0
        %v7520 = vadd.f32 0.0, %v7519
        %7521 = vmatmul.bf16.gmra.mxu0 %v7349
        %v7522 = vpop.f32.mrf.mxu0
        %v7523 = vadd.f32 0.0, %v7522
        %v7524 = vpop.f32.mrf.mxu0
        %v7525 = vadd.f32 0.0, %v7524
        %7526 = vmatmul.bf16.gmra.mxu0 %v7350
        %v7527 = vpop.f32.mrf.mxu0
        %v7528 = vadd.f32 0.0, %v7527
        %v7529 = vpop.f32.mrf.mxu0
        %v7530 = vadd.f32 0.0, %v7529
        %7531 = vmatmul.bf16.gmra.mxu0 %v7351
        %v7532 = vpop.f32.mrf.mxu0
        %v7533 = vadd.f32 0.0, %v7532
        %v7534 = vpop.f32.mrf.mxu0
        %v7535 = vadd.f32 0.0, %v7534
        %7536 = vmatmul.bf16.gmra.mxu0 %v7352
        %v7537 = vpop.f32.mrf.mxu0
        %v7538 = vadd.f32 0.0, %v7537
        %v7539 = vpop.f32.mrf.mxu0
        %7540 = vdwg.mxu0
        %v7543 = vunpack.c.l.b16 %v7168
        %v7544 = vunpack.c.l.b16 %v7211
        %v7545 = vpack.c.b16 %v7288, %v7543
        %v7546 = vpack.c.b16 %v7290, %v7289
        %v7547 = vpack.c.b16 %v7292, %v7291
        %v7548 = vpack.c.b16 %v7294, %v7293
        %v7549 = vpack.c.b16 %v7296, %v7295
        %v7550 = vpack.c.b16 %v7298, %v7297
        %v7551 = vpack.c.b16 %v7300, %v7299
        %v7552 = vpack.c.b16 %v7302, %v7301
        %v7553 = vpack.c.b16 %v7304, %v7303
        %v7554 = vpack.c.b16 %v7306, %v7305
        %v7555 = vpack.c.b16 %v7308, %v7307
        %v7556 = vpack.c.b16 %v7310, %v7309
        %v7557 = vpack.c.b16 %v7312, %v7311
        %v7558 = vpack.c.b16 %v7314, %v7313
        %v7559 = vpack.c.b16 %v7316, %v7315
        %v7560 = vpack.c.b16 %v7318, %v7317
        %v7561 = vpack.c.b16 %v7320, %v7319
        %v7562 = vpack.c.b16 %v7322, %v7321
        %v7563 = vpack.c.b16 %v7324, %v7323
        %v7564 = vpack.c.b16 %v7326, %v7325
        %v7565 = vpack.c.b16 %v7328, %v7327
        %v7566 = vpack.c.b16 %v7544, %v7329
        %vm7567 = vcmask 1045504
        %v7568 = vrot.slane %v7545, 2
        %v7569 = vrot.slane %v7546, 2
        %v7570 = vsel %vm7567, %v7568, %v7569
        %v7571 = vrot.slane %v7547, 2
        %v7572 = vsel %vm7567, %v7569, %v7571
        %v7573 = vrot.slane %v7548, 2
        %v7574 = vsel %vm7567, %v7571, %v7573
        %v7575 = vrot.slane %v7549, 2
        %v7576 = vsel %vm7567, %v7573, %v7575
        %v7577 = vrot.slane %v7550, 2
        %v7578 = vsel %vm7567, %v7575, %v7577
        %v7579 = vrot.slane %v7551, 2
        %v7580 = vsel %vm7567, %v7577, %v7579
        %v7581 = vrot.slane %v7552, 2
        %v7582 = vsel %vm7567, %v7579, %v7581
        %v7583 = vrot.slane %v7553, 2
        %v7584 = vsel %vm7567, %v7581, %v7583
        %v7585 = vrot.slane %v7554, 2
        %v7586 = vsel %vm7567, %v7583, %v7585
        %v7587 = vrot.slane %v7555, 2
        %v7588 = vsel %vm7567, %v7585, %v7587
        %v7589 = vrot.slane %v7556, 2
        %v7590 = vsel %vm7567, %v7587, %v7589
        %v7591 = vrot.slane %v7557, 2
        %v7592 = vsel %vm7567, %v7589, %v7591
        %v7593 = vrot.slane %v7558, 2
        %v7594 = vsel %vm7567, %v7591, %v7593
        %v7595 = vrot.slane %v7559, 2
        %v7596 = vsel %vm7567, %v7593, %v7595
        %v7597 = vrot.slane %v7560, 2
        %v7598 = vsel %vm7567, %v7595, %v7597
        %v7599 = vrot.slane %v7561, 2
        %v7600 = vsel %vm7567, %v7597, %v7599
        %v7601 = vrot.slane %v7562, 2
        %v7602 = vsel %vm7567, %v7599, %v7601
        %v7603 = vrot.slane %v7563, 2
        %v7604 = vsel %vm7567, %v7601, %v7603
        %v7605 = vrot.slane %v7564, 2
        %v7606 = vsel %vm7567, %v7603, %v7605
        %v7607 = vrot.slane %v7565, 2
        %v7608 = vsel %vm7567, %v7605, %v7607
        %v7609 = vrot.slane %v7566, 2
        %v7610 = vsel %vm7567, %v7607, %v7609
        %v7649 = vunpack.c.l.b16 %v7212
        %v7650 = vunpack.c.l.b16 %v7213
        %v7651 = vunpack.c.l.b16 %v7214
        %v7652 = vunpack.c.l.b16 %v7215
        %v7653 = vunpack.c.l.b16 %v7216
        %v7654 = vunpack.c.l.b16 %v7217
        %v7655 = vunpack.c.l.b16 %v7218
        %v7656 = vunpack.c.l.b16 %v7219
        %v7657 = vunpack.c.l.b16 %v7220
        %v7658 = vunpack.c.l.b16 %v7221
        %v7659 = vunpack.c.l.b16 %v7222
        %v7660 = vunpack.c.l.b16 %v7223
        %v7661 = vunpack.c.l.b16 %v7224
        %v7662 = vunpack.c.l.b16 %v7225
        %v7663 = vunpack.c.l.b16 %v7226
        %v7664 = vunpack.c.l.b16 %v7227
        %v7665 = vpack.c.b16 %v7650, %v7649
        %v7666 = vpack.c.b16 %v7652, %v7651
        %v7667 = vpack.c.b16 %v7654, %v7653
        %v7668 = vpack.c.b16 %v7656, %v7655
        %v7669 = vpack.c.b16 %v7658, %v7657
        %v7670 = vpack.c.b16 %v7660, %v7659
        %v7671 = vpack.c.b16 %v7662, %v7661
        %v7672 = vpack.c.b16 %v7664, %v7663
        %7681 = vmatpush.bf16.msra.mxu0 %v7672
        %7682 = vmatpush.bf16.msra.mxu0 %v7671
        %7683 = vmatpush.bf16.msra.mxu0 %v7670
        %7684 = vmatpush.bf16.msra.mxu0 %v7669
        %7685 = vmatpush.bf16.msra.mxu0 %v7668
        %7686 = vmatpush.bf16.msra.mxu0 %v7667
        %7687 = vmatpush.bf16.msra.mxu0 %v7666
        %7688 = vmatpush.bf16.msra.mxu0 %v7665
        %7689 = vmatmul.bf16.gmra.mxu0 %v7570
        %v7690 = vpop.f32.mrf.mxu0
        %v7691 = vadd.f32 %v7433, %v7690
        %v7692 = vpop.f32.mrf.mxu0
        %v7693 = vadd.f32 %v7435, %v7692
        %7694 = vmatmul.bf16.gmra.mxu0 %v7572
        %v7695 = vpop.f32.mrf.mxu0
        %v7696 = vadd.f32 %v7438, %v7695
        %v7697 = vpop.f32.mrf.mxu0
        %v7698 = vadd.f32 %v7440, %v7697
        %7699 = vmatmul.bf16.gmra.mxu0 %v7574
        %v7700 = vpop.f32.mrf.mxu0
        %v7701 = vadd.f32 %v7443, %v7700
        %v7702 = vpop.f32.mrf.mxu0
        %v7703 = vadd.f32 %v7445, %v7702
        %7704 = vmatmul.bf16.gmra.mxu0 %v7576
        %v7705 = vpop.f32.mrf.mxu0
        %v7706 = vadd.f32 %v7448, %v7705
        %v7707 = vpop.f32.mrf.mxu0
        %v7708 = vadd.f32 %v7450, %v7707
        %7709 = vmatmul.bf16.gmra.mxu0 %v7578
        %v7710 = vpop.f32.mrf.mxu0
        %v7711 = vadd.f32 %v7453, %v7710
        %v7712 = vpop.f32.mrf.mxu0
        %v7713 = vadd.f32 %v7455, %v7712
        %7714 = vmatmul.bf16.gmra.mxu0 %v7580
        %v7715 = vpop.f32.mrf.mxu0
        %v7716 = vadd.f32 %v7458, %v7715
        %v7717 = vpop.f32.mrf.mxu0
        %v7718 = vadd.f32 %v7460, %v7717
        %7719 = vmatmul.bf16.gmra.mxu0 %v7582
        %v7720 = vpop.f32.mrf.mxu0
        %v7721 = vadd.f32 %v7463, %v7720
        %v7722 = vpop.f32.mrf.mxu0
        %v7723 = vadd.f32 %v7465, %v7722
        %7724 = vmatmul.bf16.gmra.mxu0 %v7584
        %v7725 = vpop.f32.mrf.mxu0
        %v7726 = vadd.f32 %v7468, %v7725
        %v7727 = vpop.f32.mrf.mxu0
        %v7728 = vadd.f32 %v7470, %v7727
        %7729 = vmatmul.bf16.gmra.mxu0 %v7586
        %v7730 = vpop.f32.mrf.mxu0
        %v7731 = vadd.f32 %v7473, %v7730
        %v7732 = vpop.f32.mrf.mxu0
        %v7733 = vadd.f32 %v7475, %v7732
        %7734 = vmatmul.bf16.gmra.mxu0 %v7588
        %v7735 = vpop.f32.mrf.mxu0
        %v7736 = vadd.f32 %v7478, %v7735
        %v7737 = vpop.f32.mrf.mxu0
        %v7738 = vadd.f32 %v7480, %v7737
        %7739 = vmatmul.bf16.gmra.mxu0 %v7590
        %v7740 = vpop.f32.mrf.mxu0
        %v7741 = vadd.f32 %v7483, %v7740
        %v7742 = vpop.f32.mrf.mxu0
        %v7743 = vadd.f32 %v7485, %v7742
        %7744 = vmatmul.bf16.gmra.mxu0 %v7592
        %v7745 = vpop.f32.mrf.mxu0
        %v7746 = vadd.f32 %v7488, %v7745
        %v7747 = vpop.f32.mrf.mxu0
        %v7748 = vadd.f32 %v7490, %v7747
        %7749 = vmatmul.bf16.gmra.mxu0 %v7594
        %v7750 = vpop.f32.mrf.mxu0
        %v7751 = vadd.f32 %v7493, %v7750
        %v7752 = vpop.f32.mrf.mxu0
        %v7753 = vadd.f32 %v7495, %v7752
        %7754 = vmatmul.bf16.gmra.mxu0 %v7596
        %v7755 = vpop.f32.mrf.mxu0
        %v7756 = vadd.f32 %v7498, %v7755
        %v7757 = vpop.f32.mrf.mxu0
        %v7758 = vadd.f32 %v7500, %v7757
        %7759 = vmatmul.bf16.gmra.mxu0 %v7598
        %v7760 = vpop.f32.mrf.mxu0
        %v7761 = vadd.f32 %v7503, %v7760
        %v7762 = vpop.f32.mrf.mxu0
        %v7763 = vadd.f32 %v7505, %v7762
        %7764 = vmatmul.bf16.gmra.mxu0 %v7600
        %v7765 = vpop.f32.mrf.mxu0
        %v7766 = vadd.f32 %v7508, %v7765
        %v7767 = vpop.f32.mrf.mxu0
        %v7768 = vadd.f32 %v7510, %v7767
        %7769 = vmatmul.bf16.gmra.mxu0 %v7602
        %v7770 = vpop.f32.mrf.mxu0
        %v7771 = vadd.f32 %v7513, %v7770
        %v7772 = vpop.f32.mrf.mxu0
        %v7773 = vadd.f32 %v7515, %v7772
        %7774 = vmatmul.bf16.gmra.mxu0 %v7604
        %v7775 = vpop.f32.mrf.mxu0
        %v7776 = vadd.f32 %v7518, %v7775
        %v7777 = vpop.f32.mrf.mxu0
        %v7778 = vadd.f32 %v7520, %v7777
        %7779 = vmatmul.bf16.gmra.mxu0 %v7606
        %v7780 = vpop.f32.mrf.mxu0
        %v7781 = vadd.f32 %v7523, %v7780
        %v7782 = vpop.f32.mrf.mxu0
        %v7783 = vadd.f32 %v7525, %v7782
        %7784 = vmatmul.bf16.gmra.mxu0 %v7608
        %v7785 = vpop.f32.mrf.mxu0
        %v7786 = vadd.f32 %v7528, %v7785
        %v7787 = vpop.f32.mrf.mxu0
        %v7788 = vadd.f32 %v7530, %v7787
        %7789 = vmatmul.bf16.gmra.mxu0 %v7610
        %v7790 = vpop.f32.mrf.mxu0
        %v7791 = vadd.f32 %v7533, %v7790
        %v7792 = vpop.f32.mrf.mxu0
        %v7793 = vadd.f32 %v7535, %v7792
        %7794 = vmatmul.bf16.gmra.mxu0 %v7609
        %v7795 = vpop.f32.mrf.mxu0
        %v7796 = vadd.f32 %v7538, %v7795
        %v7797 = vpop.f32.mrf.mxu0
        %7798 = vdwg.mxu0
        %v7799 = vld [vmem:[#allocation2 + $0x8] sm:$0xc]
        %v7800 = vld [vmem:[#allocation2 + $0xc] sm:$0xf]
        %v7801 = vld [vmem:[#allocation2 + $0x10] sm:$0xf]
        %v7802 = vld [vmem:[#allocation2 + $0x14] sm:$0xf]
        %v7803 = vld [vmem:[#allocation2 + $0x18] sm:$0xf]
        %v7804 = vld [vmem:[#allocation2 + $0x1c] sm:$0xf]
        %v7805 = vld [vmem:[#allocation2 + $0x20] sm:$0xf]
        %v7806 = vld [vmem:[#allocation2 + $0x24] sm:$0xf]
        %v7807 = vld [vmem:[#allocation2 + $0x28] sm:$0xf]
        %v7808 = vld [vmem:[#allocation2 + $0x2c] sm:$0xf]
        %v7809 = vld [vmem:[#allocation2 + $0x30] sm:$0xf]
        %v7810 = vld [vmem:[#allocation2 + $0x34] sm:$0xf]
        %v7811 = vld [vmem:[#allocation2 + $0x38] sm:$0xf]
        %v7812 = vld [vmem:[#allocation2 + $0x3c] sm:$0xf]
        %v7813 = vld [vmem:[#allocation2 + $0x40] sm:$0xf]
        %v7814 = vld [vmem:[#allocation2 + $0x44] sm:$0xf]
        %v7815 = vld [vmem:[#allocation2 + $0x48] sm:$0xf]
        %v7816 = vld [vmem:[#allocation2 + $0x4c] sm:$0xf]
        %v7817 = vld [vmem:[#allocation2 + $0x50] sm:$0xf]
        %v7818 = vld [vmem:[#allocation2 + $0x54] sm:$0xf]
        %v7819 = vld [vmem:[#allocation2 + $0x58] sm:$0xf]
        %v7820 = vld [vmem:[#allocation2 + $0x5c] sm:$0xf]
        %v7821 = vld [vmem:[#allocation2 + $0x60] sm:$0xf]
        %v7822 = vld [vmem:[#allocation2 + $0x64] sm:$0xf]
        %v7823 = vld [vmem:[#allocation2 + $0x68] sm:$0xf]
        %v7824 = vld [vmem:[#allocation2 + $0x6c] sm:$0xf]
        %v7825 = vld [vmem:[#allocation2 + $0x70] sm:$0xf]
        %v7826 = vld [vmem:[#allocation2 + $0x74] sm:$0xf]
        %v7827 = vld [vmem:[#allocation2 + $0x78] sm:$0xf]
        %v7828 = vld [vmem:[#allocation2 + $0x7c] sm:$0xf]
        %v7829 = vld [vmem:[#allocation2 + $0x80] sm:$0xf]
        %v7830 = vld [vmem:[#allocation2 + $0x84] sm:$0xf]
        %v7831 = vld [vmem:[#allocation2 + $0x88] sm:$0xf]
        %v7832 = vld [vmem:[#allocation2 + $0x8c] sm:$0xf]
        %v7833 = vld [vmem:[#allocation2 + $0x90] sm:$0xf]
        %v7834 = vld [vmem:[#allocation2 + $0x94] sm:$0xf]
        %v7835 = vld [vmem:[#allocation2 + $0x98] sm:$0xf]
        %v7836 = vld [vmem:[#allocation2 + $0x9c] sm:$0xf]
        %v7837 = vld [vmem:[#allocation2 + $0xa0] sm:$0xf]
        %v7838 = vld [vmem:[#allocation2 + $0xa4] sm:$0xf]
        %v7839 = vld [vmem:[#allocation2 + $0xa8] sm:$0xf]
        %v7840 = vld [vmem:[#allocation2 + $0xac] sm:$0xf]
        %v7841 = vld [vmem:[#allocation2 + $0xb0] sm:$0xf]
        %v7842 = vld [vmem:[#allocation2 + $0xb4] sm:$0x3]
        %v7843 = vld [vmem:[%s1764] sm:$0xf]
        %v7844 = vld [vmem:[%s1764 + $0x4] sm:$0xf]
        %v7845 = vld [vmem:[%s1764 + $0x8] sm:$0xf]
        %v7846 = vld [vmem:[%s1764 + $0xc] sm:$0xf]
        %v7847 = vld [vmem:[%s1764 + $0x10] sm:$0xf]
        %v7848 = vld [vmem:[%s1764 + $0x14] sm:$0xf]
        %v7849 = vld [vmem:[%s1764 + $0x18] sm:$0xf]
        %v7850 = vld [vmem:[%s1764 + $0x1c] sm:$0xf]
        %v7851 = vld [vmem:[%s1764 + $0x20] sm:$0xf]
        %v7852 = vld [vmem:[%s1764 + $0x24] sm:$0xf]
        %v7853 = vld [vmem:[%s1764 + $0x28] sm:$0xf]
        %v7854 = vld [vmem:[%s1764 + $0x2c] sm:$0xf]
        %v7855 = vld [vmem:[%s1764 + $0x30] sm:$0xf]
        %v7856 = vld [vmem:[%s1764 + $0x34] sm:$0xf]
        %v7857 = vld [vmem:[%s1764 + $0x38] sm:$0xf]
        %v7858 = vld [vmem:[%s1764 + $0x3c] sm:$0xf]
        %v7903 = vunpack.c.l.b16 %v7799
        %v7904 = vunpack.c.l.b16 %v7800
        %v7905 = vunpack.c.l.b16 %v7801
        %v7906 = vunpack.c.l.b16 %v7802
        %v7907 = vunpack.c.l.b16 %v7803
        %v7908 = vunpack.c.l.b16 %v7804
        %v7909 = vunpack.c.l.b16 %v7805
        %v7910 = vunpack.c.l.b16 %v7806
        %v7911 = vunpack.c.l.b16 %v7807
        %v7912 = vunpack.c.l.b16 %v7808
        %v7913 = vunpack.c.l.b16 %v7809
        %v7914 = vunpack.c.l.b16 %v7810
        %v7915 = vunpack.c.l.b16 %v7811
        %v7916 = vunpack.c.l.b16 %v7812
        %v7917 = vunpack.c.l.b16 %v7813
        %v7918 = vunpack.c.l.b16 %v7814
        %v7919 = vunpack.c.l.b16 %v7815
        %v7920 = vunpack.c.l.b16 %v7816
        %v7921 = vunpack.c.l.b16 %v7817
        %v7922 = vunpack.c.l.b16 %v7818
        %v7923 = vunpack.c.l.b16 %v7819
        %v7924 = vunpack.c.l.b16 %v7820
        %v7925 = vunpack.c.l.b16 %v7821
        %v7926 = vunpack.c.l.b16 %v7822
        %v7927 = vunpack.c.l.b16 %v7823
        %v7928 = vunpack.c.l.b16 %v7824
        %v7929 = vunpack.c.l.b16 %v7825
        %v7930 = vunpack.c.l.b16 %v7826
        %v7931 = vunpack.c.l.b16 %v7827
        %v7932 = vunpack.c.l.b16 %v7828
        %v7933 = vunpack.c.l.b16 %v7829
        %v7934 = vunpack.c.l.b16 %v7830
        %v7935 = vunpack.c.l.b16 %v7831
        %v7936 = vunpack.c.l.b16 %v7832
        %v7937 = vunpack.c.l.b16 %v7833
        %v7938 = vunpack.c.l.b16 %v7834
        %v7939 = vunpack.c.l.b16 %v7835
        %v7940 = vunpack.c.l.b16 %v7836
        %v7941 = vunpack.c.l.b16 %v7837
        %v7942 = vunpack.c.l.b16 %v7838
        %v7943 = vunpack.c.l.b16 %v7839
        %v7944 = vunpack.c.l.b16 %v7840
        %v7945 = vunpack.c.l.b16 %v7841
        %v7946 = vunpack.c.l.b16 %v7842
        %v7947 = vpack.c.b16 %v7904, %v7903
        %v7948 = vpack.c.b16 %v7906, %v7905
        %v7949 = vpack.c.b16 %v7908, %v7907
        %v7950 = vpack.c.b16 %v7910, %v7909
        %v7951 = vpack.c.b16 %v7912, %v7911
        %v7952 = vpack.c.b16 %v7914, %v7913
        %v7953 = vpack.c.b16 %v7916, %v7915
        %v7954 = vpack.c.b16 %v7918, %v7917
        %v7955 = vpack.c.b16 %v7920, %v7919
        %v7956 = vpack.c.b16 %v7922, %v7921
        %v7957 = vpack.c.b16 %v7924, %v7923
        %v7958 = vpack.c.b16 %v7926, %v7925
        %v7959 = vpack.c.b16 %v7928, %v7927
        %v7960 = vpack.c.b16 %v7930, %v7929
        %v7961 = vpack.c.b16 %v7932, %v7931
        %v7962 = vpack.c.b16 %v7934, %v7933
        %v7963 = vpack.c.b16 %v7936, %v7935
        %v7964 = vpack.c.b16 %v7938, %v7937
        %v7965 = vpack.c.b16 %v7940, %v7939
        %v7966 = vpack.c.b16 %v7942, %v7941
        %v7967 = vpack.c.b16 %v7944, %v7943
        %v7968 = vpack.c.b16 %v7946, %v7945
        %v7969 = vrot.slane %v7947, 2
        %v7970 = vrot.slane %v7948, 2
        %v7971 = vsel %vm7567, %v7969, %v7970
        %v7972 = vrot.slane %v7949, 2
        %v7973 = vsel %vm7567, %v7970, %v7972
        %v7974 = vrot.slane %v7950, 2
        %v7975 = vsel %vm7567, %v7972, %v7974
        %v7976 = vrot.slane %v7951, 2
        %v7977 = vsel %vm7567, %v7974, %v7976
        %v7978 = vrot.slane %v7952, 2
        %v7979 = vsel %vm7567, %v7976, %v7978
        %v7980 = vrot.slane %v7953, 2
        %v7981 = vsel %vm7567, %v7978, %v7980
        %v7982 = vrot.slane %v7954, 2
        %v7983 = vsel %vm7567, %v7980, %v7982
        %v7984 = vrot.slane %v7955, 2
        %v7985 = vsel %vm7567, %v7982, %v7984
        %v7986 = vrot.slane %v7956, 2
        %v7987 = vsel %vm7567, %v7984, %v7986
        %v7988 = vrot.slane %v7957, 2
        %v7989 = vsel %vm7567, %v7986, %v7988
        %v7990 = vrot.slane %v7958, 2
        %v7991 = vsel %vm7567, %v7988, %v7990
        %v7992 = vrot.slane %v7959, 2
        %v7993 = vsel %vm7567, %v7990, %v7992
        %v7994 = vrot.slane %v7960, 2
        %v7995 = vsel %vm7567, %v7992, %v7994
        %v7996 = vrot.slane %v7961, 2
        %v7997 = vsel %vm7567, %v7994, %v7996
        %v7998 = vrot.slane %v7962, 2
        %v7999 = vsel %vm7567, %v7996, %v7998
        %v8000 = vrot.slane %v7963, 2
        %v8001 = vsel %vm7567, %v7998, %v8000
        %v8002 = vrot.slane %v7964, 2
        %v8003 = vsel %vm7567, %v8000, %v8002
        %v8004 = vrot.slane %v7965, 2
        %v8005 = vsel %vm7567, %v8002, %v8004
        %v8006 = vrot.slane %v7966, 2
        %v8007 = vsel %vm7567, %v8004, %v8006
        %v8008 = vrot.slane %v7967, 2
        %v8009 = vsel %vm7567, %v8006, %v8008
        %v8010 = vrot.slane %v7968, 2
        %v8011 = vsel %vm7567, %v8008, %v8010
        %v8050 = vunpack.c.l.b16 %v7843
        %v8051 = vunpack.c.l.b16 %v7844
        %v8052 = vunpack.c.l.b16 %v7845
        %v8053 = vunpack.c.l.b16 %v7846
        %v8054 = vunpack.c.l.b16 %v7847
        %v8055 = vunpack.c.l.b16 %v7848
        %v8056 = vunpack.c.l.b16 %v7849
        %v8057 = vunpack.c.l.b16 %v7850
        %v8058 = vunpack.c.l.b16 %v7851
        %v8059 = vunpack.c.l.b16 %v7852
        %v8060 = vunpack.c.l.b16 %v7853
        %v8061 = vunpack.c.l.b16 %v7854
        %v8062 = vunpack.c.l.b16 %v7855
        %v8063 = vunpack.c.l.b16 %v7856
        %v8064 = vunpack.c.l.b16 %v7857
        %v8065 = vunpack.c.l.b16 %v7858
        %v8066 = vpack.c.b16 %v8051, %v8050
        %v8067 = vpack.c.b16 %v8053, %v8052
        %v8068 = vpack.c.b16 %v8055, %v8054
        %v8069 = vpack.c.b16 %v8057, %v8056
        %v8070 = vpack.c.b16 %v8059, %v8058
        %v8071 = vpack.c.b16 %v8061, %v8060
        %v8072 = vpack.c.b16 %v8063, %v8062
        %v8073 = vpack.c.b16 %v8065, %v8064
        %8082 = vmatpush.bf16.msra.mxu0 %v8073
        %8083 = vmatpush.bf16.msra.mxu0 %v8072
        %8084 = vmatpush.bf16.msra.mxu0 %v8071
        %8085 = vmatpush.bf16.msra.mxu0 %v8070
        %8086 = vmatpush.bf16.msra.mxu0 %v8069
        %8087 = vmatpush.bf16.msra.mxu0 %v8068
        %8088 = vmatpush.bf16.msra.mxu0 %v8067
        %8089 = vmatpush.bf16.msra.mxu0 %v8066
        %8090 = vmatmul.bf16.gmra.mxu0 %v7971
        %v8091 = vpop.f32.mrf.mxu0
        %v8092 = vadd.f32 0.0, %v8091
        %v8093 = vpop.f32.mrf.mxu0
        %v8094 = vadd.f32 0.0, %v8093
        %8095 = vmatmul.bf16.gmra.mxu0 %v7973
        %v8096 = vpop.f32.mrf.mxu0
        %v8097 = vadd.f32 0.0, %v8096
        %v8098 = vpop.f32.mrf.mxu0
        %v8099 = vadd.f32 0.0, %v8098
        %8100 = vmatmul.bf16.gmra.mxu0 %v7975
        %v8101 = vpop.f32.mrf.mxu0
        %v8102 = vadd.f32 0.0, %v8101
        %v8103 = vpop.f32.mrf.mxu0
        %v8104 = vadd.f32 0.0, %v8103
        %8105 = vmatmul.bf16.gmra.mxu0 %v7977
        %v8106 = vpop.f32.mrf.mxu0
        %v8107 = vadd.f32 0.0, %v8106
        %v8108 = vpop.f32.mrf.mxu0
        %v8109 = vadd.f32 0.0, %v8108
        %8110 = vmatmul.bf16.gmra.mxu0 %v7979
        %v8111 = vpop.f32.mrf.mxu0
        %v8112 = vadd.f32 0.0, %v8111
        %v8113 = vpop.f32.mrf.mxu0
        %v8114 = vadd.f32 0.0, %v8113
        %8115 = vmatmul.bf16.gmra.mxu0 %v7981
        %v8116 = vpop.f32.mrf.mxu0
        %v8117 = vadd.f32 0.0, %v8116
        %v8118 = vpop.f32.mrf.mxu0
        %v8119 = vadd.f32 0.0, %v8118
        %8120 = vmatmul.bf16.gmra.mxu0 %v7983
        %v8121 = vpop.f32.mrf.mxu0
        %v8122 = vadd.f32 0.0, %v8121
        %v8123 = vpop.f32.mrf.mxu0
        %v8124 = vadd.f32 0.0, %v8123
        %8125 = vmatmul.bf16.gmra.mxu0 %v7985
        %v8126 = vpop.f32.mrf.mxu0
        %v8127 = vadd.f32 0.0, %v8126
        %v8128 = vpop.f32.mrf.mxu0
        %v8129 = vadd.f32 0.0, %v8128
        %8130 = vmatmul.bf16.gmra.mxu0 %v7987
        %v8131 = vpop.f32.mrf.mxu0
        %v8132 = vadd.f32 0.0, %v8131
        %v8133 = vpop.f32.mrf.mxu0
        %v8134 = vadd.f32 0.0, %v8133
        %8135 = vmatmul.bf16.gmra.mxu0 %v7989
        %v8136 = vpop.f32.mrf.mxu0
        %v8137 = vadd.f32 0.0, %v8136
        %v8138 = vpop.f32.mrf.mxu0
        %v8139 = vadd.f32 0.0, %v8138
        %8140 = vmatmul.bf16.gmra.mxu0 %v7991
        %v8141 = vpop.f32.mrf.mxu0
        %v8142 = vadd.f32 0.0, %v8141
        %v8143 = vpop.f32.mrf.mxu0
        %v8144 = vadd.f32 0.0, %v8143
        %8145 = vmatmul.bf16.gmra.mxu0 %v7993
        %v8146 = vpop.f32.mrf.mxu0
        %v8147 = vadd.f32 0.0, %v8146
        %v8148 = vpop.f32.mrf.mxu0
        %v8149 = vadd.f32 0.0, %v8148
        %8150 = vmatmul.bf16.gmra.mxu0 %v7995
        %v8151 = vpop.f32.mrf.mxu0
        %v8152 = vadd.f32 0.0, %v8151
        %v8153 = vpop.f32.mrf.mxu0
        %v8154 = vadd.f32 0.0, %v8153
        %8155 = vmatmul.bf16.gmra.mxu0 %v7997
        %v8156 = vpop.f32.mrf.mxu0
        %v8157 = vadd.f32 0.0, %v8156
        %v8158 = vpop.f32.mrf.mxu0
        %v8159 = vadd.f32 0.0, %v8158
        %8160 = vmatmul.bf16.gmra.mxu0 %v7999
        %v8161 = vpop.f32.mrf.mxu0
        %v8162 = vadd.f32 0.0, %v8161
        %v8163 = vpop.f32.mrf.mxu0
        %v8164 = vadd.f32 0.0, %v8163
        %8165 = vmatmul.bf16.gmra.mxu0 %v8001
        %v8166 = vpop.f32.mrf.mxu0
        %v8167 = vadd.f32 0.0, %v8166
        %v8168 = vpop.f32.mrf.mxu0
        %v8169 = vadd.f32 0.0, %v8168
        %8170 = vmatmul.bf16.gmra.mxu0 %v8003
        %v8171 = vpop.f32.mrf.mxu0
        %v8172 = vadd.f32 0.0, %v8171
        %v8173 = vpop.f32.mrf.mxu0
        %v8174 = vadd.f32 0.0, %v8173
        %8175 = vmatmul.bf16.gmra.mxu0 %v8005
        %v8176 = vpop.f32.mrf.mxu0
        %v8177 = vadd.f32 0.0, %v8176
        %v8178 = vpop.f32.mrf.mxu0
        %v8179 = vadd.f32 0.0, %v8178
        %8180 = vmatmul.bf16.gmra.mxu0 %v8007
        %v8181 = vpop.f32.mrf.mxu0
        %v8182 = vadd.f32 0.0, %v8181
        %v8183 = vpop.f32.mrf.mxu0
        %v8184 = vadd.f32 0.0, %v8183
        %8185 = vmatmul.bf16.gmra.mxu0 %v8009
        %v8186 = vpop.f32.mrf.mxu0
        %v8187 = vadd.f32 0.0, %v8186
        %v8188 = vpop.f32.mrf.mxu0
        %v8189 = vadd.f32 0.0, %v8188
        %8190 = vmatmul.bf16.gmra.mxu0 %v8011
        %v8191 = vpop.f32.mrf.mxu0
        %v8192 = vadd.f32 0.0, %v8191
        %v8193 = vpop.f32.mrf.mxu0
        %v8194 = vadd.f32 0.0, %v8193
        %8195 = vmatmul.bf16.gmra.mxu0 %v8010
        %v8196 = vpop.f32.mrf.mxu0
        %v8197 = vadd.f32 0.0, %v8196
        %v8198 = vpop.f32.mrf.mxu0
        %8199 = vdwg.mxu0
        %v8200 = vadd.f32 %v7691, %v8092
        %v8201 = vadd.f32 %v7693, %v8094
        %v8202 = vadd.f32 %v7696, %v8097
        %v8203 = vadd.f32 %v7698, %v8099
        %v8204 = vadd.f32 %v7701, %v8102
        %v8205 = vadd.f32 %v7703, %v8104
        %v8206 = vadd.f32 %v7706, %v8107
        %v8207 = vadd.f32 %v7708, %v8109
        %v8208 = vadd.f32 %v7711, %v8112
        %v8209 = vadd.f32 %v7713, %v8114
        %v8210 = vadd.f32 %v7716, %v8117
        %v8211 = vadd.f32 %v7718, %v8119
        %v8212 = vadd.f32 %v7721, %v8122
        %v8213 = vadd.f32 %v7723, %v8124
        %v8214 = vadd.f32 %v7726, %v8127
        %v8215 = vadd.f32 %v7728, %v8129
        %v8216 = vadd.f32 %v7731, %v8132
        %v8217 = vadd.f32 %v7733, %v8134
        %v8218 = vadd.f32 %v7736, %v8137
        %v8219 = vadd.f32 %v7738, %v8139
        %v8220 = vadd.f32 %v7741, %v8142
        %v8221 = vadd.f32 %v7743, %v8144
        %v8222 = vadd.f32 %v7746, %v8147
        %v8223 = vadd.f32 %v7748, %v8149
        %v8224 = vadd.f32 %v7751, %v8152
        %v8225 = vadd.f32 %v7753, %v8154
        %v8226 = vadd.f32 %v7756, %v8157
        %v8227 = vadd.f32 %v7758, %v8159
        %v8228 = vadd.f32 %v7761, %v8162
        %v8229 = vadd.f32 %v7763, %v8164
        %v8230 = vadd.f32 %v7766, %v8167
        %v8231 = vadd.f32 %v7768, %v8169
        %v8232 = vadd.f32 %v7771, %v8172
        %v8233 = vadd.f32 %v7773, %v8174
        %v8234 = vadd.f32 %v7776, %v8177
        %v8235 = vadd.f32 %v7778, %v8179
        %v8236 = vadd.f32 %v7781, %v8182
        %v8237 = vadd.f32 %v7783, %v8184
        %v8238 = vadd.f32 %v7786, %v8187
        %v8239 = vadd.f32 %v7788, %v8189
        %v8240 = vadd.f32 %v7791, %v8192
        %v8241 = vadd.f32 %v7793, %v8194
        %v8242 = vadd.f32 %v7796, %v8197
        %v8243 = vld [vmem:[#allocation2 + $0x1c] sm:$0xc]
        %v8244 = vld [vmem:[#allocation2 + $0x20] sm:$0xf]
        %v8245 = vld [vmem:[#allocation2 + $0x24] sm:$0xf]
        %v8246 = vld [vmem:[#allocation2 + $0x28] sm:$0xf]
        %v8247 = vld [vmem:[#allocation2 + $0x2c] sm:$0xf]
        %v8248 = vld [vmem:[#allocation2 + $0x30] sm:$0xf]
        %v8249 = vld [vmem:[#allocation2 + $0x34] sm:$0xf]
        %v8250 = vld [vmem:[#allocation2 + $0x38] sm:$0xf]
        %v8251 = vld [vmem:[#allocation2 + $0x3c] sm:$0xf]
        %v8252 = vld [vmem:[#allocation2 + $0x40] sm:$0xf]
        %v8253 = vld [vmem:[#allocation2 + $0x44] sm:$0xf]
        %v8254 = vld [vmem:[#allocation2 + $0x48] sm:$0xf]
        %v8255 = vld [vmem:[#allocation2 + $0x4c] sm:$0xf]
        %v8256 = vld [vmem:[#allocation2 + $0x50] sm:$0xf]
        %v8257 = vld [vmem:[#allocation2 + $0x54] sm:$0xf]
        %v8258 = vld [vmem:[#allocation2 + $0x58] sm:$0xf]
        %v8259 = vld [vmem:[#allocation2 + $0x5c] sm:$0xf]
        %v8260 = vld [vmem:[#allocation2 + $0x60] sm:$0xf]
        %v8261 = vld [vmem:[#allocation2 + $0x64] sm:$0xf]
        %v8262 = vld [vmem:[#allocation2 + $0x68] sm:$0xf]
        %v8263 = vld [vmem:[#allocation2 + $0x6c] sm:$0xf]
        %v8264 = vld [vmem:[#allocation2 + $0x70] sm:$0xf]
        %v8265 = vld [vmem:[#allocation2 + $0x74] sm:$0xf]
        %v8266 = vld [vmem:[#allocation2 + $0x78] sm:$0xf]
        %v8267 = vld [vmem:[#allocation2 + $0x7c] sm:$0xf]
        %v8268 = vld [vmem:[#allocation2 + $0x80] sm:$0xf]
        %v8269 = vld [vmem:[#allocation2 + $0x84] sm:$0xf]
        %v8270 = vld [vmem:[#allocation2 + $0x88] sm:$0xf]
        %v8271 = vld [vmem:[#allocation2 + $0x8c] sm:$0xf]
        %v8272 = vld [vmem:[#allocation2 + $0x90] sm:$0xf]
        %v8273 = vld [vmem:[#allocation2 + $0x94] sm:$0xf]
        %v8274 = vld [vmem:[#allocation2 + $0x98] sm:$0xf]
        %v8275 = vld [vmem:[#allocation2 + $0x9c] sm:$0xf]
        %v8276 = vld [vmem:[#allocation2 + $0xa0] sm:$0xf]
        %v8277 = vld [vmem:[#allocation2 + $0xa4] sm:$0xf]
        %v8278 = vld [vmem:[#allocation2 + $0xa8] sm:$0xf]
        %v8279 = vld [vmem:[#allocation2 + $0xac] sm:$0xf]
        %v8280 = vld [vmem:[#allocation2 + $0xb0] sm:$0xf]
        %v8281 = vld [vmem:[#allocation2 + $0xb4] sm:$0xf]
        %v8282 = vld [vmem:[#allocation2 + $0xb8] sm:$0xf]
        %v8283 = vld [vmem:[#allocation2 + $0xbc] sm:$0xf]
        %v8284 = vld [vmem:[#allocation2 + $0xc0] sm:$0xf]
        %v8285 = vld [vmem:[#allocation2 + $0xc4] sm:$0xf]
        %v8286 = vld [vmem:[#allocation2 + $0xc8] sm:$0x3]
        %v8287 = vld [vmem:[%s2342] sm:$0xf]
        %v8288 = vld [vmem:[%s2342 + $0x4] sm:$0xf]
        %v8289 = vld [vmem:[%s2342 + $0x8] sm:$0xf]
        %v8290 = vld [vmem:[%s2342 + $0xc] sm:$0xf]
        %v8291 = vld [vmem:[%s2342 + $0x10] sm:$0xf]
        %v8292 = vld [vmem:[%s2342 + $0x14] sm:$0xf]
        %v8293 = vld [vmem:[%s2342 + $0x18] sm:$0xf]
        %v8294 = vld [vmem:[%s2342 + $0x1c] sm:$0xf]
        %v8295 = vld [vmem:[%s2342 + $0x20] sm:$0xf]
        %v8296 = vld [vmem:[%s2342 + $0x24] sm:$0xf]
        %v8297 = vld [vmem:[%s2342 + $0x28] sm:$0xf]
        %v8298 = vld [vmem:[%s2342 + $0x2c] sm:$0xf]
        %v8299 = vld [vmem:[%s2342 + $0x30] sm:$0xf]
        %v8300 = vld [vmem:[%s2342 + $0x34] sm:$0xf]
        %v8301 = vld [vmem:[%s2342 + $0x38] sm:$0xf]
        %v8302 = vld [vmem:[%s2342 + $0x3c] sm:$0xf]
        %v8347 = vunpack.c.l.b16 %v8243
        %v8348 = vunpack.c.l.b16 %v8244
        %v8349 = vunpack.c.l.b16 %v8245
        %v8350 = vunpack.c.l.b16 %v8246
        %v8351 = vunpack.c.l.b16 %v8247
        %v8352 = vunpack.c.l.b16 %v8248
        %v8353 = vunpack.c.l.b16 %v8249
        %v8354 = vunpack.c.l.b16 %v8250
        %v8355 = vunpack.c.l.b16 %v8251
        %v8356 = vunpack.c.l.b16 %v8252
        %v8357 = vunpack.c.l.b16 %v8253
        %v8358 = vunpack.c.l.b16 %v8254
        %v8359 = vunpack.c.l.b16 %v8255
        %v8360 = vunpack.c.l.b16 %v8256
        %v8361 = vunpack.c.l.b16 %v8257
        %v8362 = vunpack.c.l.b16 %v8258
        %v8363 = vunpack.c.l.b16 %v8259
        %v8364 = vunpack.c.l.b16 %v8260
        %v8365 = vunpack.c.l.b16 %v8261
        %v8366 = vunpack.c.l.b16 %v8262
        %v8367 = vunpack.c.l.b16 %v8263
        %v8368 = vunpack.c.l.b16 %v8264
        %v8369 = vunpack.c.l.b16 %v8265
        %v8370 = vunpack.c.l.b16 %v8266
        %v8371 = vunpack.c.l.b16 %v8267
        %v8372 = vunpack.c.l.b16 %v8268
        %v8373 = vunpack.c.l.b16 %v8269
        %v8374 = vunpack.c.l.b16 %v8270
        %v8375 = vunpack.c.l.b16 %v8271
        %v8376 = vunpack.c.l.b16 %v8272
        %v8377 = vunpack.c.l.b16 %v8273
        %v8378 = vunpack.c.l.b16 %v8274
        %v8379 = vunpack.c.l.b16 %v8275
        %v8380 = vunpack.c.l.b16 %v8276
        %v8381 = vunpack.c.l.b16 %v8277
        %v8382 = vunpack.c.l.b16 %v8278
        %v8383 = vunpack.c.l.b16 %v8279
        %v8384 = vunpack.c.l.b16 %v8280
        %v8385 = vunpack.c.l.b16 %v8281
        %v8386 = vunpack.c.l.b16 %v8282
        %v8387 = vunpack.c.l.b16 %v8283
        %v8388 = vunpack.c.l.b16 %v8284
        %v8389 = vunpack.c.l.b16 %v8285
        %v8390 = vunpack.c.l.b16 %v8286
        %v8391 = vpack.c.b16 %v8348, %v8347
        %v8392 = vpack.c.b16 %v8350, %v8349
        %v8393 = vpack.c.b16 %v8352, %v8351
        %v8394 = vpack.c.b16 %v8354, %v8353
        %v8395 = vpack.c.b16 %v8356, %v8355
        %v8396 = vpack.c.b16 %v8358, %v8357
        %v8397 = vpack.c.b16 %v8360, %v8359
        %v8398 = vpack.c.b16 %v8362, %v8361
        %v8399 = vpack.c.b16 %v8364, %v8363
        %v8400 = vpack.c.b16 %v8366, %v8365
        %v8401 = vpack.c.b16 %v8368, %v8367
        %v8402 = vpack.c.b16 %v8370, %v8369
        %v8403 = vpack.c.b16 %v8372, %v8371
        %v8404 = vpack.c.b16 %v8374, %v8373
        %v8405 = vpack.c.b16 %v8376, %v8375
        %v8406 = vpack.c.b16 %v8378, %v8377
        %v8407 = vpack.c.b16 %v8380, %v8379
        %v8408 = vpack.c.b16 %v8382, %v8381
        %v8409 = vpack.c.b16 %v8384, %v8383
        %v8410 = vpack.c.b16 %v8386, %v8385
        %v8411 = vpack.c.b16 %v8388, %v8387
        %v8412 = vpack.c.b16 %v8390, %v8389
        %v8413 = vrot.slane %v8391, 2
        %v8414 = vrot.slane %v8392, 2
        %v8415 = vsel %vm7567, %v8413, %v8414
        %v8416 = vrot.slane %v8393, 2
        %v8417 = vsel %vm7567, %v8414, %v8416
        %v8418 = vrot.slane %v8394, 2
        %v8419 = vsel %vm7567, %v8416, %v8418
        %v8420 = vrot.slane %v8395, 2
        %v8421 = vsel %vm7567, %v8418, %v8420
        %v8422 = vrot.slane %v8396, 2
        %v8423 = vsel %vm7567, %v8420, %v8422
        %v8424 = vrot.slane %v8397, 2
        %v8425 = vsel %vm7567, %v8422, %v8424
        %v8426 = vrot.slane %v8398, 2
        %v8427 = vsel %vm7567, %v8424, %v8426
        %v8428 = vrot.slane %v8399, 2
        %v8429 = vsel %vm7567, %v8426, %v8428
        %v8430 = vrot.slane %v8400, 2
        %v8431 = vsel %vm7567, %v8428, %v8430
        %v8432 = vrot.slane %v8401, 2
        %v8433 = vsel %vm7567, %v8430, %v8432
        %v8434 = vrot.slane %v8402, 2
        %v8435 = vsel %vm7567, %v8432, %v8434
        %v8436 = vrot.slane %v8403, 2
        %v8437 = vsel %vm7567, %v8434, %v8436
        %v8438 = vrot.slane %v8404, 2
        %v8439 = vsel %vm7567, %v8436, %v8438
        %v8440 = vrot.slane %v8405, 2
        %v8441 = vsel %vm7567, %v8438, %v8440
        %v8442 = vrot.slane %v8406, 2
        %v8443 = vsel %vm7567, %v8440, %v8442
        %v8444 = vrot.slane %v8407, 2
        %v8445 = vsel %vm7567, %v8442, %v8444
        %v8446 = vrot.slane %v8408, 2
        %v8447 = vsel %vm7567, %v8444, %v8446
        %v8448 = vrot.slane %v8409, 2
        %v8449 = vsel %vm7567, %v8446, %v8448
        %v8450 = vrot.slane %v8410, 2
        %v8451 = vsel %vm7567, %v8448, %v8450
        %v8452 = vrot.slane %v8411, 2
        %v8453 = vsel %vm7567, %v8450, %v8452
        %v8454 = vrot.slane %v8412, 2
        %v8455 = vsel %vm7567, %v8452, %v8454
        %v8494 = vunpack.c.l.b16 %v8287
        %v8495 = vunpack.c.l.b16 %v8288
        %v8496 = vunpack.c.l.b16 %v8289
        %v8497 = vunpack.c.l.b16 %v8290
        %v8498 = vunpack.c.l.b16 %v8291
        %v8499 = vunpack.c.l.b16 %v8292
        %v8500 = vunpack.c.l.b16 %v8293
        %v8501 = vunpack.c.l.b16 %v8294
        %v8502 = vunpack.c.l.b16 %v8295
        %v8503 = vunpack.c.l.b16 %v8296
        %v8504 = vunpack.c.l.b16 %v8297
        %v8505 = vunpack.c.l.b16 %v8298
        %v8506 = vunpack.c.l.b16 %v8299
        %v8507 = vunpack.c.l.b16 %v8300
        %v8508 = vunpack.c.l.b16 %v8301
        %v8509 = vunpack.c.l.b16 %v8302
        %v8510 = vpack.c.b16 %v8495, %v8494
        %v8511 = vpack.c.b16 %v8497, %v8496
        %v8512 = vpack.c.b16 %v8499, %v8498
        %v8513 = vpack.c.b16 %v8501, %v8500
        %v8514 = vpack.c.b16 %v8503, %v8502
        %v8515 = vpack.c.b16 %v8505, %v8504
        %v8516 = vpack.c.b16 %v8507, %v8506
        %v8517 = vpack.c.b16 %v8509, %v8508
        %8526 = vmatpush.bf16.msra.mxu0 %v8517
        %8527 = vmatpush.bf16.msra.mxu0 %v8516
        %8528 = vmatpush.bf16.msra.mxu0 %v8515
        %8529 = vmatpush.bf16.msra.mxu0 %v8514
        %8530 = vmatpush.bf16.msra.mxu0 %v8513
        %8531 = vmatpush.bf16.msra.mxu0 %v8512
        %8532 = vmatpush.bf16.msra.mxu0 %v8511
        %8533 = vmatpush.bf16.msra.mxu0 %v8510
        %8534 = vmatmul.bf16.gmra.mxu0 %v8415
        %v8535 = vpop.f32.mrf.mxu0
        %v8536 = vadd.f32 0.0, %v8535
        %v8537 = vpop.f32.mrf.mxu0
        %v8538 = vadd.f32 0.0, %v8537
        %8539 = vmatmul.bf16.gmra.mxu0 %v8417
        %v8540 = vpop.f32.mrf.mxu0
        %v8541 = vadd.f32 0.0, %v8540
        %v8542 = vpop.f32.mrf.mxu0
        %v8543 = vadd.f32 0.0, %v8542
        %8544 = vmatmul.bf16.gmra.mxu0 %v8419
        %v8545 = vpop.f32.mrf.mxu0
        %v8546 = vadd.f32 0.0, %v8545
        %v8547 = vpop.f32.mrf.mxu0
        %v8548 = vadd.f32 0.0, %v8547
        %8549 = vmatmul.bf16.gmra.mxu0 %v8421
        %v8550 = vpop.f32.mrf.mxu0
        %v8551 = vadd.f32 0.0, %v8550
        %v8552 = vpop.f32.mrf.mxu0
        %v8553 = vadd.f32 0.0, %v8552
        %8554 = vmatmul.bf16.gmra.mxu0 %v8423
        %v8555 = vpop.f32.mrf.mxu0
        %v8556 = vadd.f32 0.0, %v8555
        %v8557 = vpop.f32.mrf.mxu0
        %v8558 = vadd.f32 0.0, %v8557
        %8559 = vmatmul.bf16.gmra.mxu0 %v8425
        %v8560 = vpop.f32.mrf.mxu0
        %v8561 = vadd.f32 0.0, %v8560
        %v8562 = vpop.f32.mrf.mxu0
        %v8563 = vadd.f32 0.0, %v8562
        %8564 = vmatmul.bf16.gmra.mxu0 %v8427
        %v8565 = vpop.f32.mrf.mxu0
        %v8566 = vadd.f32 0.0, %v8565
        %v8567 = vpop.f32.mrf.mxu0
        %v8568 = vadd.f32 0.0, %v8567
        %8569 = vmatmul.bf16.gmra.mxu0 %v8429
        %v8570 = vpop.f32.mrf.mxu0
        %v8571 = vadd.f32 0.0, %v8570
        %v8572 = vpop.f32.mrf.mxu0
        %v8573 = vadd.f32 0.0, %v8572
        %8574 = vmatmul.bf16.gmra.mxu0 %v8431
        %v8575 = vpop.f32.mrf.mxu0
        %v8576 = vadd.f32 0.0, %v8575
        %v8577 = vpop.f32.mrf.mxu0
        %v8578 = vadd.f32 0.0, %v8577
        %8579 = vmatmul.bf16.gmra.mxu0 %v8433
        %v8580 = vpop.f32.mrf.mxu0
        %v8581 = vadd.f32 0.0, %v8580
        %v8582 = vpop.f32.mrf.mxu0
        %v8583 = vadd.f32 0.0, %v8582
        %8584 = vmatmul.bf16.gmra.mxu0 %v8435
        %v8585 = vpop.f32.mrf.mxu0
        %v8586 = vadd.f32 0.0, %v8585
        %v8587 = vpop.f32.mrf.mxu0
        %v8588 = vadd.f32 0.0, %v8587
        %8589 = vmatmul.bf16.gmra.mxu0 %v8437
        %v8590 = vpop.f32.mrf.mxu0
        %v8591 = vadd.f32 0.0, %v8590
        %v8592 = vpop.f32.mrf.mxu0
        %v8593 = vadd.f32 0.0, %v8592
        %8594 = vmatmul.bf16.gmra.mxu0 %v8439
        %v8595 = vpop.f32.mrf.mxu0
        %v8596 = vadd.f32 0.0, %v8595
        %v8597 = vpop.f32.mrf.mxu0
        %v8598 = vadd.f32 0.0, %v8597
        %8599 = vmatmul.bf16.gmra.mxu0 %v8441
        %v8600 = vpop.f32.mrf.mxu0
        %v8601 = vadd.f32 0.0, %v8600
        %v8602 = vpop.f32.mrf.mxu0
        %v8603 = vadd.f32 0.0, %v8602
        %8604 = vmatmul.bf16.gmra.mxu0 %v8443
        %v8605 = vpop.f32.mrf.mxu0
        %v8606 = vadd.f32 0.0, %v8605
        %v8607 = vpop.f32.mrf.mxu0
        %v8608 = vadd.f32 0.0, %v8607
        %8609 = vmatmul.bf16.gmra.mxu0 %v8445
        %v8610 = vpop.f32.mrf.mxu0
        %v8611 = vadd.f32 0.0, %v8610
        %v8612 = vpop.f32.mrf.mxu0
        %v8613 = vadd.f32 0.0, %v8612
        %8614 = vmatmul.bf16.gmra.mxu0 %v8447
        %v8615 = vpop.f32.mrf.mxu0
        %v8616 = vadd.f32 0.0, %v8615
        %v8617 = vpop.f32.mrf.mxu0
        %v8618 = vadd.f32 0.0, %v8617
        %8619 = vmatmul.bf16.gmra.mxu0 %v8449
        %v8620 = vpop.f32.mrf.mxu0
        %v8621 = vadd.f32 0.0, %v8620
        %v8622 = vpop.f32.mrf.mxu0
        %v8623 = vadd.f32 0.0, %v8622
        %8624 = vmatmul.bf16.gmra.mxu0 %v8451
        %v8625 = vpop.f32.mrf.mxu0
        %v8626 = vadd.f32 0.0, %v8625
        %v8627 = vpop.f32.mrf.mxu0
        %v8628 = vadd.f32 0.0, %v8627
        %8629 = vmatmul.bf16.gmra.mxu0 %v8453
        %v8630 = vpop.f32.mrf.mxu0
        %v8631 = vadd.f32 0.0, %v8630
        %v8632 = vpop.f32.mrf.mxu0
        %v8633 = vadd.f32 0.0, %v8632
        %8634 = vmatmul.bf16.gmra.mxu0 %v8455
        %v8635 = vpop.f32.mrf.mxu0
        %v8636 = vadd.f32 0.0, %v8635
        %v8637 = vpop.f32.mrf.mxu0
        %v8638 = vadd.f32 0.0, %v8637
        %8639 = vmatmul.bf16.gmra.mxu0 %v8454
        %v8640 = vpop.f32.mrf.mxu0
        %v8641 = vadd.f32 0.0, %v8640
        %v8642 = vpop.f32.mrf.mxu0
        %8643 = vdwg.mxu0
        %v8644 = vadd.f32 %v8200, %v8536
        %v8645 = vadd.f32 %v8201, %v8538
        %v8646 = vadd.f32 %v8202, %v8541
        %v8647 = vadd.f32 %v8203, %v8543
        %v8648 = vadd.f32 %v8204, %v8546
        %v8649 = vadd.f32 %v8205, %v8548
        %v8650 = vadd.f32 %v8206, %v8551
        %v8651 = vadd.f32 %v8207, %v8553
        %v8652 = vadd.f32 %v8208, %v8556
        %v8653 = vadd.f32 %v8209, %v8558
        %v8654 = vadd.f32 %v8210, %v8561
        %v8655 = vadd.f32 %v8211, %v8563
        %v8656 = vadd.f32 %v8212, %v8566
        %v8657 = vadd.f32 %v8213, %v8568
        %v8658 = vadd.f32 %v8214, %v8571
        %v8659 = vadd.f32 %v8215, %v8573
        %v8660 = vadd.f32 %v8216, %v8576
        %v8661 = vadd.f32 %v8217, %v8578
        %v8662 = vadd.f32 %v8218, %v8581
        %v8663 = vadd.f32 %v8219, %v8583
        %v8664 = vadd.f32 %v8220, %v8586
        %v8665 = vadd.f32 %v8221, %v8588
        %v8666 = vadd.f32 %v8222, %v8591
        %v8667 = vadd.f32 %v8223, %v8593
        %v8668 = vadd.f32 %v8224, %v8596
        %v8669 = vadd.f32 %v8225, %v8598
        %v8670 = vadd.f32 %v8226, %v8601
        %v8671 = vadd.f32 %v8227, %v8603
        %v8672 = vadd.f32 %v8228, %v8606
        %v8673 = vadd.f32 %v8229, %v8608
        %v8674 = vadd.f32 %v8230, %v8611
        %v8675 = vadd.f32 %v8231, %v8613
        %v8676 = vadd.f32 %v8232, %v8616
        %v8677 = vadd.f32 %v8233, %v8618
        %v8678 = vadd.f32 %v8234, %v8621
        %v8679 = vadd.f32 %v8235, %v8623
        %v8680 = vadd.f32 %v8236, %v8626
        %v8681 = vadd.f32 %v8237, %v8628
        %v8682 = vadd.f32 %v8238, %v8631
        %v8683 = vadd.f32 %v8239, %v8633
        %v8684 = vadd.f32 %v8240, %v8636
        %v8685 = vadd.f32 %v8241, %v8638
        %v8686 = vadd.f32 %v8242, %v8641
        %v8687 = vld [vmem:[#allocation2 + $0xc8] sm:$0xf]
        %v8688 = vld [vmem:[%s2897] sm:$0xf]
        %v8689 = vld [vmem:[%s2897 + $0x4] sm:$0xf]
        %v8690 = vld [vmem:[%s2897 + $0x8] sm:$0xf]
        %v8691 = vld [vmem:[%s2897 + $0xc] sm:$0xf]
        %v8692 = vld [vmem:[%s2897 + $0x10] sm:$0xf]
        %v8693 = vld [vmem:[%s2897 + $0x14] sm:$0xf]
        %v8694 = vld [vmem:[%s2897 + $0x18] sm:$0xf]
        %v8695 = vld [vmem:[%s2897 + $0x1c] sm:$0xf]
        %v8696 = vld [vmem:[%s2897 + $0x20] sm:$0xf]
        %v8697 = vld [vmem:[%s2897 + $0x24] sm:$0xf]
        %v8698 = vld [vmem:[%s2897 + $0x28] sm:$0xf]
        %v8699 = vld [vmem:[%s2897 + $0x2c] sm:$0xf]
        %v8700 = vld [vmem:[%s2897 + $0x30] sm:$0xf]
        %v8701 = vld [vmem:[%s2897 + $0x34] sm:$0xf]
        %v8702 = vld [vmem:[%s2897 + $0x38] sm:$0xf]
        %v8703 = vld [vmem:[%s2897 + $0x3c] sm:$0xf]
        %v8705 = vunpack.c.l.b16 %v8687
        %v8706 = vpack.c.b16 %v8349, %v8348
        %v8707 = vpack.c.b16 %v8351, %v8350
        %v8708 = vpack.c.b16 %v8353, %v8352
        %v8709 = vpack.c.b16 %v8355, %v8354
        %v8710 = vpack.c.b16 %v8357, %v8356
        %v8711 = vpack.c.b16 %v8359, %v8358
        %v8712 = vpack.c.b16 %v8361, %v8360
        %v8713 = vpack.c.b16 %v8363, %v8362
        %v8714 = vpack.c.b16 %v8365, %v8364
        %v8715 = vpack.c.b16 %v8367, %v8366
        %v8716 = vpack.c.b16 %v8369, %v8368
        %v8717 = vpack.c.b16 %v8371, %v8370
        %v8718 = vpack.c.b16 %v8373, %v8372
        %v8719 = vpack.c.b16 %v8375, %v8374
        %v8720 = vpack.c.b16 %v8377, %v8376
        %v8721 = vpack.c.b16 %v8379, %v8378
        %v8722 = vpack.c.b16 %v8381, %v8380
        %v8723 = vpack.c.b16 %v8383, %v8382
        %v8724 = vpack.c.b16 %v8385, %v8384
        %v8725 = vpack.c.b16 %v8387, %v8386
        %v8726 = vpack.c.b16 %v8389, %v8388
        %v8727 = vpack.c.b16 %v8705, %v8705
        %v8766 = vunpack.c.l.b16 %v8688
        %v8767 = vunpack.c.l.b16 %v8689
        %v8768 = vunpack.c.l.b16 %v8690
        %v8769 = vunpack.c.l.b16 %v8691
        %v8770 = vunpack.c.l.b16 %v8692
        %v8771 = vunpack.c.l.b16 %v8693
        %v8772 = vunpack.c.l.b16 %v8694
        %v8773 = vunpack.c.l.b16 %v8695
        %v8774 = vunpack.c.l.b16 %v8696
        %v8775 = vunpack.c.l.b16 %v8697
        %v8776 = vunpack.c.l.b16 %v8698
        %v8777 = vunpack.c.l.b16 %v8699
        %v8778 = vunpack.c.l.b16 %v8700
        %v8779 = vunpack.c.l.b16 %v8701
        %v8780 = vunpack.c.l.b16 %v8702
        %v8781 = vunpack.c.l.b16 %v8703
        %v8782 = vpack.c.b16 %v8767, %v8766
        %v8783 = vpack.c.b16 %v8769, %v8768
        %v8784 = vpack.c.b16 %v8771, %v8770
        %v8785 = vpack.c.b16 %v8773, %v8772
        %v8786 = vpack.c.b16 %v8775, %v8774
        %v8787 = vpack.c.b16 %v8777, %v8776
        %v8788 = vpack.c.b16 %v8779, %v8778
        %v8789 = vpack.c.b16 %v8781, %v8780
        %8798 = vmatpush.bf16.msra.mxu0 %v8789
        %8799 = vmatpush.bf16.msra.mxu0 %v8788
        %8800 = vmatpush.bf16.msra.mxu0 %v8787
        %8801 = vmatpush.bf16.msra.mxu0 %v8786
        %8802 = vmatpush.bf16.msra.mxu0 %v8785
        %8803 = vmatpush.bf16.msra.mxu0 %v8784
        %8804 = vmatpush.bf16.msra.mxu0 %v8783
        %8805 = vmatpush.bf16.msra.mxu0 %v8782
        %8806 = vmatmul.bf16.gmra.mxu0 %v8706
        %v8807 = vpop.f32.mrf.mxu0
        %v8808 = vadd.f32 0.0, %v8807
        %v8809 = vpop.f32.mrf.mxu0
        %v8810 = vadd.f32 0.0, %v8809
        %8811 = vmatmul.bf16.gmra.mxu0 %v8707
        %v8812 = vpop.f32.mrf.mxu0
        %v8813 = vadd.f32 0.0, %v8812
        %v8814 = vpop.f32.mrf.mxu0
        %v8815 = vadd.f32 0.0, %v8814
        %8816 = vmatmul.bf16.gmra.mxu0 %v8708
        %v8817 = vpop.f32.mrf.mxu0
        %v8818 = vadd.f32 0.0, %v8817
        %v8819 = vpop.f32.mrf.mxu0
        %v8820 = vadd.f32 0.0, %v8819
        %8821 = vmatmul.bf16.gmra.mxu0 %v8709
        %v8822 = vpop.f32.mrf.mxu0
        %v8823 = vadd.f32 0.0, %v8822
        %v8824 = vpop.f32.mrf.mxu0
        %v8825 = vadd.f32 0.0, %v8824
        %8826 = vmatmul.bf16.gmra.mxu0 %v8710
        %v8827 = vpop.f32.mrf.mxu0
        %v8828 = vadd.f32 0.0, %v8827
        %v8829 = vpop.f32.mrf.mxu0
        %v8830 = vadd.f32 0.0, %v8829
        %8831 = vmatmul.bf16.gmra.mxu0 %v8711
        %v8832 = vpop.f32.mrf.mxu0
        %v8833 = vadd.f32 0.0, %v8832
        %v8834 = vpop.f32.mrf.mxu0
        %v8835 = vadd.f32 0.0, %v8834
        %8836 = vmatmul.bf16.gmra.mxu0 %v8712
        %v8837 = vpop.f32.mrf.mxu0
        %v8838 = vadd.f32 0.0, %v8837
        %v8839 = vpop.f32.mrf.mxu0
        %v8840 = vadd.f32 0.0, %v8839
        %8841 = vmatmul.bf16.gmra.mxu0 %v8713
        %v8842 = vpop.f32.mrf.mxu0
        %v8843 = vadd.f32 0.0, %v8842
        %v8844 = vpop.f32.mrf.mxu0
        %v8845 = vadd.f32 0.0, %v8844
        %8846 = vmatmul.bf16.gmra.mxu0 %v8714
        %v8847 = vpop.f32.mrf.mxu0
        %v8848 = vadd.f32 0.0, %v8847
        %v8849 = vpop.f32.mrf.mxu0
        %v8850 = vadd.f32 0.0, %v8849
        %8851 = vmatmul.bf16.gmra.mxu0 %v8715
        %v8852 = vpop.f32.mrf.mxu0
        %v8853 = vadd.f32 0.0, %v8852
        %v8854 = vpop.f32.mrf.mxu0
        %v8855 = vadd.f32 0.0, %v8854
        %8856 = vmatmul.bf16.gmra.mxu0 %v8716
        %v8857 = vpop.f32.mrf.mxu0
        %v8858 = vadd.f32 0.0, %v8857
        %v8859 = vpop.f32.mrf.mxu0
        %v8860 = vadd.f32 0.0, %v8859
        %8861 = vmatmul.bf16.gmra.mxu0 %v8717
        %v8862 = vpop.f32.mrf.mxu0
        %v8863 = vadd.f32 0.0, %v8862
        %v8864 = vpop.f32.mrf.mxu0
        %v8865 = vadd.f32 0.0, %v8864
        %8866 = vmatmul.bf16.gmra.mxu0 %v8718
        %v8867 = vpop.f32.mrf.mxu0
        %v8868 = vadd.f32 0.0, %v8867
        %v8869 = vpop.f32.mrf.mxu0
        %v8870 = vadd.f32 0.0, %v8869
        %8871 = vmatmul.bf16.gmra.mxu0 %v8719
        %v8872 = vpop.f32.mrf.mxu0
        %v8873 = vadd.f32 0.0, %v8872
        %v8874 = vpop.f32.mrf.mxu0
        %v8875 = vadd.f32 0.0, %v8874
        %8876 = vmatmul.bf16.gmra.mxu0 %v8720
        %v8877 = vpop.f32.mrf.mxu0
        %v8878 = vadd.f32 0.0, %v8877
        %v8879 = vpop.f32.mrf.mxu0
        %v8880 = vadd.f32 0.0, %v8879
        %8881 = vmatmul.bf16.gmra.mxu0 %v8721
        %v8882 = vpop.f32.mrf.mxu0
        %v8883 = vadd.f32 0.0, %v8882
        %v8884 = vpop.f32.mrf.mxu0
        %v8885 = vadd.f32 0.0, %v8884
        %8886 = vmatmul.bf16.gmra.mxu0 %v8722
        %v8887 = vpop.f32.mrf.mxu0
        %v8888 = vadd.f32 0.0, %v8887
        %v8889 = vpop.f32.mrf.mxu0
        %v8890 = vadd.f32 0.0, %v8889
        %8891 = vmatmul.bf16.gmra.mxu0 %v8723
        %v8892 = vpop.f32.mrf.mxu0
        %v8893 = vadd.f32 0.0, %v8892
        %v8894 = vpop.f32.mrf.mxu0
        %v8895 = vadd.f32 0.0, %v8894
        %8896 = vmatmul.bf16.gmra.mxu0 %v8724
        %v8897 = vpop.f32.mrf.mxu0
        %v8898 = vadd.f32 0.0, %v8897
        %v8899 = vpop.f32.mrf.mxu0
        %v8900 = vadd.f32 0.0, %v8899
        %8901 = vmatmul.bf16.gmra.mxu0 %v8725
        %v8902 = vpop.f32.mrf.mxu0
        %v8903 = vadd.f32 0.0, %v8902
        %v8904 = vpop.f32.mrf.mxu0
        %v8905 = vadd.f32 0.0, %v8904
        %8906 = vmatmul.bf16.gmra.mxu0 %v8726
        %v8907 = vpop.f32.mrf.mxu0
        %v8908 = vadd.f32 0.0, %v8907
        %v8909 = vpop.f32.mrf.mxu0
        %v8910 = vadd.f32 0.0, %v8909
        %8911 = vmatmul.bf16.gmra.mxu0 %v8727
        %v8912 = vpop.f32.mrf.mxu0
        %v8913 = vadd.f32 0.0, %v8912
        %v8914 = vpop.f32.mrf.mxu0
        %8915 = vdwg.mxu0
        %v8916 = vadd.f32 %v8644, %v8808
        %v8917 = vadd.f32 %v8645, %v8810
        %v8918 = vadd.f32 %v8646, %v8813
        %v8919 = vadd.f32 %v8647, %v8815
        %v8920 = vadd.f32 %v8648, %v8818
        %v8921 = vadd.f32 %v8649, %v8820
        %v8922 = vadd.f32 %v8650, %v8823
        %v8923 = vadd.f32 %v8651, %v8825
        %v8924 = vadd.f32 %v8652, %v8828
        %v8925 = vadd.f32 %v8653, %v8830
        %v8926 = vadd.f32 %v8654, %v8833
        %v8927 = vadd.f32 %v8655, %v8835
        %v8928 = vadd.f32 %v8656, %v8838
        %v8929 = vadd.f32 %v8657, %v8840
        %v8930 = vadd.f32 %v8658, %v8843
        %v8931 = vadd.f32 %v8659, %v8845
        %v8932 = vadd.f32 %v8660, %v8848
        %v8933 = vadd.f32 %v8661, %v8850
        %v8934 = vadd.f32 %v8662, %v8853
        %v8935 = vadd.f32 %v8663, %v8855
        %v8936 = vadd.f32 %v8664, %v8858
        %v8937 = vadd.f32 %v8665, %v8860
        %v8938 = vadd.f32 %v8666, %v8863
        %v8939 = vadd.f32 %v8667, %v8865
        %v8940 = vadd.f32 %v8668, %v8868
        %v8941 = vadd.f32 %v8669, %v8870
        %v8942 = vadd.f32 %v8670, %v8873
        %v8943 = vadd.f32 %v8671, %v8875
        %v8944 = vadd.f32 %v8672, %v8878
        %v8945 = vadd.f32 %v8673, %v8880
        %v8946 = vadd.f32 %v8674, %v8883
        %v8947 = vadd.f32 %v8675, %v8885
        %v8948 = vadd.f32 %v8676, %v8888
        %v8949 = vadd.f32 %v8677, %v8890
        %v8950 = vadd.f32 %v8678, %v8893
        %v8951 = vadd.f32 %v8679, %v8895
        %v8952 = vadd.f32 %v8680, %v8898
        %v8953 = vadd.f32 %v8681, %v8900
        %v8954 = vadd.f32 %v8682, %v8903
        %v8955 = vadd.f32 %v8683, %v8905
        %v8956 = vadd.f32 %v8684, %v8908
        %v8957 = vadd.f32 %v8685, %v8910
        %v8958 = vadd.f32 %v8686, %v8913
        %v8959 = vld [vmem:[#allocation2 + $0x20] sm:$0xc]
        %v8960 = vld [vmem:[#allocation2 + $0x24] sm:$0xf]
        %v8961 = vld [vmem:[#allocation2 + $0x28] sm:$0xf]
        %v8962 = vld [vmem:[#allocation2 + $0x2c] sm:$0xf]
        %v8963 = vld [vmem:[#allocation2 + $0x30] sm:$0xf]
        %v8964 = vld [vmem:[#allocation2 + $0x34] sm:$0xf]
        %v8965 = vld [vmem:[#allocation2 + $0x38] sm:$0xf]
        %v8966 = vld [vmem:[#allocation2 + $0x3c] sm:$0xf]
        %v8967 = vld [vmem:[#allocation2 + $0x40] sm:$0xf]
        %v8968 = vld [vmem:[#allocation2 + $0x44] sm:$0xf]
        %v8969 = vld [vmem:[#allocation2 + $0x48] sm:$0xf]
        %v8970 = vld [vmem:[#allocation2 + $0x4c] sm:$0xf]
        %v8971 = vld [vmem:[#allocation2 + $0x50] sm:$0xf]
        %v8972 = vld [vmem:[#allocation2 + $0x54] sm:$0xf]
        %v8973 = vld [vmem:[#allocation2 + $0x58] sm:$0xf]
        %v8974 = vld [vmem:[#allocation2 + $0x5c] sm:$0xf]
        %v8975 = vld [vmem:[#allocation2 + $0x60] sm:$0xf]
        %v8976 = vld [vmem:[#allocation2 + $0x64] sm:$0xf]
        %v8977 = vld [vmem:[#allocation2 + $0x68] sm:$0xf]
        %v8978 = vld [vmem:[#allocation2 + $0x6c] sm:$0xf]
        %v8979 = vld [vmem:[#allocation2 + $0x70] sm:$0xf]
        %v8980 = vld [vmem:[#allocation2 + $0x74] sm:$0xf]
        %v8981 = vld [vmem:[#allocation2 + $0x78] sm:$0xf]
        %v8982 = vld [vmem:[#allocation2 + $0x7c] sm:$0xf]
        %v8983 = vld [vmem:[#allocation2 + $0x80] sm:$0xf]
        %v8984 = vld [vmem:[#allocation2 + $0x84] sm:$0xf]
        %v8985 = vld [vmem:[#allocation2 + $0x88] sm:$0xf]
        %v8986 = vld [vmem:[#allocation2 + $0x8c] sm:$0xf]
        %v8987 = vld [vmem:[#allocation2 + $0x90] sm:$0xf]
        %v8988 = vld [vmem:[#allocation2 + $0x94] sm:$0xf]
        %v8989 = vld [vmem:[#allocation2 + $0x98] sm:$0xf]
        %v8990 = vld [vmem:[#allocation2 + $0x9c] sm:$0xf]
        %v8991 = vld [vmem:[#allocation2 + $0xa0] sm:$0xf]
        %v8992 = vld [vmem:[#allocation2 + $0xa4] sm:$0xf]
        %v8993 = vld [vmem:[#allocation2 + $0xa8] sm:$0xf]
        %v8994 = vld [vmem:[#allocation2 + $0xac] sm:$0xf]
        %v8995 = vld [vmem:[#allocation2 + $0xb0] sm:$0xf]
        %v8996 = vld [vmem:[#allocation2 + $0xb4] sm:$0xf]
        %v8997 = vld [vmem:[#allocation2 + $0xb8] sm:$0xf]
        %v8998 = vld [vmem:[#allocation2 + $0xbc] sm:$0xf]
        %v8999 = vld [vmem:[#allocation2 + $0xc0] sm:$0xf]
        %v9000 = vld [vmem:[#allocation2 + $0xc4] sm:$0xf]
        %v9001 = vld [vmem:[#allocation2 + $0xc8] sm:$0xf]
        %v9002 = vld [vmem:[#allocation2 + $0xcc] sm:$0x3]
        %v9003 = vld [vmem:[%s3211] sm:$0xf]
        %v9004 = vld [vmem:[%s3211 + $0x4] sm:$0xf]
        %v9005 = vld [vmem:[%s3211 + $0x8] sm:$0xf]
        %v9006 = vld [vmem:[%s3211 + $0xc] sm:$0xf]
        %v9007 = vld [vmem:[%s3211 + $0x10] sm:$0xf]
        %v9008 = vld [vmem:[%s3211 + $0x14] sm:$0xf]
        %v9009 = vld [vmem:[%s3211 + $0x18] sm:$0xf]
        %v9010 = vld [vmem:[%s3211 + $0x1c] sm:$0xf]
        %v9011 = vld [vmem:[%s3211 + $0x20] sm:$0xf]
        %v9012 = vld [vmem:[%s3211 + $0x24] sm:$0xf]
        %v9013 = vld [vmem:[%s3211 + $0x28] sm:$0xf]
        %v9014 = vld [vmem:[%s3211 + $0x2c] sm:$0xf]
        %v9015 = vld [vmem:[%s3211 + $0x30] sm:$0xf]
        %v9016 = vld [vmem:[%s3211 + $0x34] sm:$0xf]
        %v9017 = vld [vmem:[%s3211 + $0x38] sm:$0xf]
        %v9018 = vld [vmem:[%s3211 + $0x3c] sm:$0xf]
        %v9063 = vunpack.c.l.b16 %v8959
        %v9064 = vunpack.c.l.b16 %v8960
        %v9065 = vunpack.c.l.b16 %v8961
        %v9066 = vunpack.c.l.b16 %v8962
        %v9067 = vunpack.c.l.b16 %v8963
        %v9068 = vunpack.c.l.b16 %v8964
        %v9069 = vunpack.c.l.b16 %v8965
        %v9070 = vunpack.c.l.b16 %v8966
        %v9071 = vunpack.c.l.b16 %v8967
        %v9072 = vunpack.c.l.b16 %v8968
        %v9073 = vunpack.c.l.b16 %v8969
        %v9074 = vunpack.c.l.b16 %v8970
        %v9075 = vunpack.c.l.b16 %v8971
        %v9076 = vunpack.c.l.b16 %v8972
        %v9077 = vunpack.c.l.b16 %v8973
        %v9078 = vunpack.c.l.b16 %v8974
        %v9079 = vunpack.c.l.b16 %v8975
        %v9080 = vunpack.c.l.b16 %v8976
        %v9081 = vunpack.c.l.b16 %v8977
        %v9082 = vunpack.c.l.b16 %v8978
        %v9083 = vunpack.c.l.b16 %v8979
        %v9084 = vunpack.c.l.b16 %v8980
        %v9085 = vunpack.c.l.b16 %v8981
        %v9086 = vunpack.c.l.b16 %v8982
        %v9087 = vunpack.c.l.b16 %v8983
        %v9088 = vunpack.c.l.b16 %v8984
        %v9089 = vunpack.c.l.b16 %v8985
        %v9090 = vunpack.c.l.b16 %v8986
        %v9091 = vunpack.c.l.b16 %v8987
        %v9092 = vunpack.c.l.b16 %v8988
        %v9093 = vunpack.c.l.b16 %v8989
        %v9094 = vunpack.c.l.b16 %v8990
        %v9095 = vunpack.c.l.b16 %v8991
        %v9096 = vunpack.c.l.b16 %v8992
        %v9097 = vunpack.c.l.b16 %v8993
        %v9098 = vunpack.c.l.b16 %v8994
        %v9099 = vunpack.c.l.b16 %v8995
        %v9100 = vunpack.c.l.b16 %v8996
        %v9101 = vunpack.c.l.b16 %v8997
        %v9102 = vunpack.c.l.b16 %v8998
        %v9103 = vunpack.c.l.b16 %v8999
        %v9104 = vunpack.c.l.b16 %v9000
        %v9105 = vunpack.c.l.b16 %v9001
        %v9106 = vunpack.c.l.b16 %v9002
        %v9107 = vpack.c.b16 %v9064, %v9063
        %v9108 = vpack.c.b16 %v9066, %v9065
        %v9109 = vpack.c.b16 %v9068, %v9067
        %v9110 = vpack.c.b16 %v9070, %v9069
        %v9111 = vpack.c.b16 %v9072, %v9071
        %v9112 = vpack.c.b16 %v9074, %v9073
        %v9113 = vpack.c.b16 %v9076, %v9075
        %v9114 = vpack.c.b16 %v9078, %v9077
        %v9115 = vpack.c.b16 %v9080, %v9079
        %v9116 = vpack.c.b16 %v9082, %v9081
        %v9117 = vpack.c.b16 %v9084, %v9083
        %v9118 = vpack.c.b16 %v9086, %v9085
        %v9119 = vpack.c.b16 %v9088, %v9087
        %v9120 = vpack.c.b16 %v9090, %v9089
        %v9121 = vpack.c.b16 %v9092, %v9091
        %v9122 = vpack.c.b16 %v9094, %v9093
        %v9123 = vpack.c.b16 %v9096, %v9095
        %v9124 = vpack.c.b16 %v9098, %v9097
        %v9125 = vpack.c.b16 %v9100, %v9099
        %v9126 = vpack.c.b16 %v9102, %v9101
        %v9127 = vpack.c.b16 %v9104, %v9103
        %v9128 = vpack.c.b16 %v9106, %v9105
        %v9129 = vrot.slane %v9107, 2
        %v9130 = vrot.slane %v9108, 2
        %v9131 = vsel %vm7567, %v9129, %v9130
        %v9132 = vrot.slane %v9109, 2
        %v9133 = vsel %vm7567, %v9130, %v9132
        %v9134 = vrot.slane %v9110, 2
        %v9135 = vsel %vm7567, %v9132, %v9134
        %v9136 = vrot.slane %v9111, 2
        %v9137 = vsel %vm7567, %v9134, %v9136
        %v9138 = vrot.slane %v9112, 2
        %v9139 = vsel %vm7567, %v9136, %v9138
        %v9140 = vrot.slane %v9113, 2
        %v9141 = vsel %vm7567, %v9138, %v9140
        %v9142 = vrot.slane %v9114, 2
        %v9143 = vsel %vm7567, %v9140, %v9142
        %v9144 = vrot.slane %v9115, 2
        %v9145 = vsel %vm7567, %v9142, %v9144
        %v9146 = vrot.slane %v9116, 2
        %v9147 = vsel %vm7567, %v9144, %v9146
        %v9148 = vrot.slane %v9117, 2
        %v9149 = vsel %vm7567, %v9146, %v9148
        %v9150 = vrot.slane %v9118, 2
        %v9151 = vsel %vm7567, %v9148, %v9150
        %v9152 = vrot.slane %v9119, 2
        %v9153 = vsel %vm7567, %v9150, %v9152
        %v9154 = vrot.slane %v9120, 2
        %v9155 = vsel %vm7567, %v9152, %v9154
        %v9156 = vrot.slane %v9121, 2
        %v9157 = vsel %vm7567, %v9154, %v9156
        %v9158 = vrot.slane %v9122, 2
        %v9159 = vsel %vm7567, %v9156, %v9158
        %v9160 = vrot.slane %v9123, 2
        %v9161 = vsel %vm7567, %v9158, %v9160
        %v9162 = vrot.slane %v9124, 2
        %v9163 = vsel %vm7567, %v9160, %v9162
        %v9164 = vrot.slane %v9125, 2
        %v9165 = vsel %vm7567, %v9162, %v9164
        %v9166 = vrot.slane %v9126, 2
        %v9167 = vsel %vm7567, %v9164, %v9166
        %v9168 = vrot.slane %v9127, 2
        %v9169 = vsel %vm7567, %v9166, %v9168
        %v9170 = vrot.slane %v9128, 2
        %v9171 = vsel %vm7567, %v9168, %v9170
        %v9210 = vunpack.c.l.b16 %v9003
        %v9211 = vunpack.c.l.b16 %v9004
        %v9212 = vunpack.c.l.b16 %v9005
        %v9213 = vunpack.c.l.b16 %v9006
        %v9214 = vunpack.c.l.b16 %v9007
        %v9215 = vunpack.c.l.b16 %v9008
        %v9216 = vunpack.c.l.b16 %v9009
        %v9217 = vunpack.c.l.b16 %v9010
        %v9218 = vunpack.c.l.b16 %v9011
        %v9219 = vunpack.c.l.b16 %v9012
        %v9220 = vunpack.c.l.b16 %v9013
        %v9221 = vunpack.c.l.b16 %v9014
        %v9222 = vunpack.c.l.b16 %v9015
        %v9223 = vunpack.c.l.b16 %v9016
        %v9224 = vunpack.c.l.b16 %v9017
        %v9225 = vunpack.c.l.b16 %v9018
        %v9226 = vpack.c.b16 %v9211, %v9210
        %v9227 = vpack.c.b16 %v9213, %v9212
        %v9228 = vpack.c.b16 %v9215, %v9214
        %v9229 = vpack.c.b16 %v9217, %v9216
        %v9230 = vpack.c.b16 %v9219, %v9218
        %v9231 = vpack.c.b16 %v9221, %v9220
        %v9232 = vpack.c.b16 %v9223, %v9222
        %v9233 = vpack.c.b16 %v9225, %v9224
        %9242 = vmatpush.bf16.msra.mxu0 %v9233
        %9243 = vmatpush.bf16.msra.mxu0 %v9232
        %9244 = vmatpush.bf16.msra.mxu0 %v9231
        %9245 = vmatpush.bf16.msra.mxu0 %v9230
        %9246 = vmatpush.bf16.msra.mxu0 %v9229
        %9247 = vmatpush.bf16.msra.mxu0 %v9228
        %9248 = vmatpush.bf16.msra.mxu0 %v9227
        %9249 = vmatpush.bf16.msra.mxu0 %v9226
        %9250 = vmatmul.bf16.gmra.mxu0 %v9131
        %v9251 = vpop.f32.mrf.mxu0
        %v9252 = vadd.f32 0.0, %v9251
        %v9253 = vpop.f32.mrf.mxu0
        %v9254 = vadd.f32 0.0, %v9253
        %9255 = vmatmul.bf16.gmra.mxu0 %v9133
        %v9256 = vpop.f32.mrf.mxu0
        %v9257 = vadd.f32 0.0, %v9256
        %v9258 = vpop.f32.mrf.mxu0
        %v9259 = vadd.f32 0.0, %v9258
        %9260 = vmatmul.bf16.gmra.mxu0 %v9135
        %v9261 = vpop.f32.mrf.mxu0
        %v9262 = vadd.f32 0.0, %v9261
        %v9263 = vpop.f32.mrf.mxu0
        %v9264 = vadd.f32 0.0, %v9263
        %9265 = vmatmul.bf16.gmra.mxu0 %v9137
        %v9266 = vpop.f32.mrf.mxu0
        %v9267 = vadd.f32 0.0, %v9266
        %v9268 = vpop.f32.mrf.mxu0
        %v9269 = vadd.f32 0.0, %v9268
        %9270 = vmatmul.bf16.gmra.mxu0 %v9139
        %v9271 = vpop.f32.mrf.mxu0
        %v9272 = vadd.f32 0.0, %v9271
        %v9273 = vpop.f32.mrf.mxu0
        %v9274 = vadd.f32 0.0, %v9273
        %9275 = vmatmul.bf16.gmra.mxu0 %v9141
        %v9276 = vpop.f32.mrf.mxu0
        %v9277 = vadd.f32 0.0, %v9276
        %v9278 = vpop.f32.mrf.mxu0
        %v9279 = vadd.f32 0.0, %v9278
        %9280 = vmatmul.bf16.gmra.mxu0 %v9143
        %v9281 = vpop.f32.mrf.mxu0
        %v9282 = vadd.f32 0.0, %v9281
        %v9283 = vpop.f32.mrf.mxu0
        %v9284 = vadd.f32 0.0, %v9283
        %9285 = vmatmul.bf16.gmra.mxu0 %v9145
        %v9286 = vpop.f32.mrf.mxu0
        %v9287 = vadd.f32 0.0, %v9286
        %v9288 = vpop.f32.mrf.mxu0
        %v9289 = vadd.f32 0.0, %v9288
        %9290 = vmatmul.bf16.gmra.mxu0 %v9147
        %v9291 = vpop.f32.mrf.mxu0
        %v9292 = vadd.f32 0.0, %v9291
        %v9293 = vpop.f32.mrf.mxu0
        %v9294 = vadd.f32 0.0, %v9293
        %9295 = vmatmul.bf16.gmra.mxu0 %v9149
        %v9296 = vpop.f32.mrf.mxu0
        %v9297 = vadd.f32 0.0, %v9296
        %v9298 = vpop.f32.mrf.mxu0
        %v9299 = vadd.f32 0.0, %v9298
        %9300 = vmatmul.bf16.gmra.mxu0 %v9151
        %v9301 = vpop.f32.mrf.mxu0
        %v9302 = vadd.f32 0.0, %v9301
        %v9303 = vpop.f32.mrf.mxu0
        %v9304 = vadd.f32 0.0, %v9303
        %9305 = vmatmul.bf16.gmra.mxu0 %v9153
        %v9306 = vpop.f32.mrf.mxu0
        %v9307 = vadd.f32 0.0, %v9306
        %v9308 = vpop.f32.mrf.mxu0
        %v9309 = vadd.f32 0.0, %v9308
        %9310 = vmatmul.bf16.gmra.mxu0 %v9155
        %v9311 = vpop.f32.mrf.mxu0
        %v9312 = vadd.f32 0.0, %v9311
        %v9313 = vpop.f32.mrf.mxu0
        %v9314 = vadd.f32 0.0, %v9313
        %9315 = vmatmul.bf16.gmra.mxu0 %v9157
        %v9316 = vpop.f32.mrf.mxu0
        %v9317 = vadd.f32 0.0, %v9316
        %v9318 = vpop.f32.mrf.mxu0
        %v9319 = vadd.f32 0.0, %v9318
        %9320 = vmatmul.bf16.gmra.mxu0 %v9159
        %v9321 = vpop.f32.mrf.mxu0
        %v9322 = vadd.f32 0.0, %v9321
        %v9323 = vpop.f32.mrf.mxu0
        %v9324 = vadd.f32 0.0, %v9323
        %9325 = vmatmul.bf16.gmra.mxu0 %v9161
        %v9326 = vpop.f32.mrf.mxu0
        %v9327 = vadd.f32 0.0, %v9326
        %v9328 = vpop.f32.mrf.mxu0
        %v9329 = vadd.f32 0.0, %v9328
        %9330 = vmatmul.bf16.gmra.mxu0 %v9163
        %v9331 = vpop.f32.mrf.mxu0
        %v9332 = vadd.f32 0.0, %v9331
        %v9333 = vpop.f32.mrf.mxu0
        %v9334 = vadd.f32 0.0, %v9333
        %9335 = vmatmul.bf16.gmra.mxu0 %v9165
        %v9336 = vpop.f32.mrf.mxu0
        %v9337 = vadd.f32 0.0, %v9336
        %v9338 = vpop.f32.mrf.mxu0
        %v9339 = vadd.f32 0.0, %v9338
        %9340 = vmatmul.bf16.gmra.mxu0 %v9167
        %v9341 = vpop.f32.mrf.mxu0
        %v9342 = vadd.f32 0.0, %v9341
        %v9343 = vpop.f32.mrf.mxu0
        %v9344 = vadd.f32 0.0, %v9343
        %9345 = vmatmul.bf16.gmra.mxu0 %v9169
        %v9346 = vpop.f32.mrf.mxu0
        %v9347 = vadd.f32 0.0, %v9346
        %v9348 = vpop.f32.mrf.mxu0
        %v9349 = vadd.f32 0.0, %v9348
        %9350 = vmatmul.bf16.gmra.mxu0 %v9171
        %v9351 = vpop.f32.mrf.mxu0
        %v9352 = vadd.f32 0.0, %v9351
        %v9353 = vpop.f32.mrf.mxu0
        %v9354 = vadd.f32 0.0, %v9353
        %9355 = vmatmul.bf16.gmra.mxu0 %v9170
        %v9356 = vpop.f32.mrf.mxu0
        %v9357 = vadd.f32 0.0, %v9356
        %v9358 = vpop.f32.mrf.mxu0
        %9359 = vdwg.mxu0
        %v9360 = vadd.f32 %v8916, %v9252
        %v9361 = vadd.f32 %v8917, %v9254
        %v9362 = vadd.f32 %v8918, %v9257
        %v9363 = vadd.f32 %v8919, %v9259
        %v9364 = vadd.f32 %v8920, %v9262
        %v9365 = vadd.f32 %v8921, %v9264
        %v9366 = vadd.f32 %v8922, %v9267
        %v9367 = vadd.f32 %v8923, %v9269
        %v9368 = vadd.f32 %v8924, %v9272
        %v9369 = vadd.f32 %v8925, %v9274
        %v9370 = vadd.f32 %v8926, %v9277
        %v9371 = vadd.f32 %v8927, %v9279
        %v9372 = vadd.f32 %v8928, %v9282
        %v9373 = vadd.f32 %v8929, %v9284
        %v9374 = vadd.f32 %v8930, %v9287
        %v9375 = vadd.f32 %v8931, %v9289
        %v9376 = vadd.f32 %v8932, %v9292
        %v9377 = vadd.f32 %v8933, %v9294
        %v9378 = vadd.f32 %v8934, %v9297
        %v9379 = vadd.f32 %v8935, %v9299
        %v9380 = vadd.f32 %v8936, %v9302
        %v9381 = vadd.f32 %v8937, %v9304
        %v9382 = vadd.f32 %v8938, %v9307
        %v9383 = vadd.f32 %v8939, %v9309
        %v9384 = vadd.f32 %v8940, %v9312
        %v9385 = vadd.f32 %v8941, %v9314
        %v9386 = vadd.f32 %v8942, %v9317
        %v9387 = vadd.f32 %v8943, %v9319
        %v9388 = vadd.f32 %v8944, %v9322
        %v9389 = vadd.f32 %v8945, %v9324
        %v9390 = vadd.f32 %v8946, %v9327
        %v9391 = vadd.f32 %v8947, %v9329
        %v9392 = vadd.f32 %v8948, %v9332
        %v9393 = vadd.f32 %v8949, %v9334
        %v9394 = vadd.f32 %v8950, %v9337
        %v9395 = vadd.f32 %v8951, %v9339
        %v9396 = vadd.f32 %v8952, %v9342
        %v9397 = vadd.f32 %v8953, %v9344
        %v9398 = vadd.f32 %v8954, %v9347
        %v9399 = vadd.f32 %v8955, %v9349
        %v9400 = vadd.f32 %v8956, %v9352
        %v9401 = vadd.f32 %v8957, %v9354
        %v9402 = vadd.f32 %v8958, %v9357
        %v9403 = vld [vmem:[#allocation2 + $0x34] sm:$0xc]
        %v9404 = vld [vmem:[#allocation2 + $0x38] sm:$0xf]
        %v9405 = vld [vmem:[#allocation2 + $0x3c] sm:$0xf]
        %v9406 = vld [vmem:[#allocation2 + $0x40] sm:$0xf]
        %v9407 = vld [vmem:[#allocation2 + $0x44] sm:$0xf]
        %v9408 = vld [vmem:[#allocation2 + $0x48] sm:$0xf]
        %v9409 = vld [vmem:[#allocation2 + $0x4c] sm:$0xf]
        %v9410 = vld [vmem:[#allocation2 + $0x50] sm:$0xf]
        %v9411 = vld [vmem:[#allocation2 + $0x54] sm:$0xf]
        %v9412 = vld [vmem:[#allocation2 + $0x58] sm:$0xf]
        %v9413 = vld [vmem:[#allocation2 + $0x5c] sm:$0xf]
        %v9414 = vld [vmem:[#allocation2 + $0x60] sm:$0xf]
        %v9415 = vld [vmem:[#allocation2 + $0x64] sm:$0xf]
        %v9416 = vld [vmem:[#allocation2 + $0x68] sm:$0xf]
        %v9417 = vld [vmem:[#allocation2 + $0x6c] sm:$0xf]
        %v9418 = vld [vmem:[#allocation2 + $0x70] sm:$0xf]
        %v9419 = vld [vmem:[#allocation2 + $0x74] sm:$0xf]
        %v9420 = vld [vmem:[#allocation2 + $0x78] sm:$0xf]
        %v9421 = vld [vmem:[#allocation2 + $0x7c] sm:$0xf]
        %v9422 = vld [vmem:[#allocation2 + $0x80] sm:$0xf]
        %v9423 = vld [vmem:[#allocation2 + $0x84] sm:$0xf]
        %v9424 = vld [vmem:[#allocation2 + $0x88] sm:$0xf]
        %v9425 = vld [vmem:[#allocation2 + $0x8c] sm:$0xf]
        %v9426 = vld [vmem:[#allocation2 + $0x90] sm:$0xf]
        %v9427 = vld [vmem:[#allocation2 + $0x94] sm:$0xf]
        %v9428 = vld [vmem:[#allocation2 + $0x98] sm:$0xf]
        %v9429 = vld [vmem:[#allocation2 + $0x9c] sm:$0xf]
        %v9430 = vld [vmem:[#allocation2 + $0xa0] sm:$0xf]
        %v9431 = vld [vmem:[#allocation2 + $0xa4] sm:$0xf]
        %v9432 = vld [vmem:[#allocation2 + $0xa8] sm:$0xf]
        %v9433 = vld [vmem:[#allocation2 + $0xac] sm:$0xf]
        %v9434 = vld [vmem:[#allocation2 + $0xb0] sm:$0xf]
        %v9435 = vld [vmem:[#allocation2 + $0xb4] sm:$0xf]
        %v9436 = vld [vmem:[#allocation2 + $0xb8] sm:$0xf]
        %v9437 = vld [vmem:[#allocation2 + $0xbc] sm:$0xf]
        %v9438 = vld [vmem:[#allocation2 + $0xc0] sm:$0xf]
        %v9439 = vld [vmem:[#allocation2 + $0xc4] sm:$0xf]
        %v9440 = vld [vmem:[#allocation2 + $0xc8] sm:$0xf]
        %v9441 = vld [vmem:[#allocation2 + $0xcc] sm:$0xf]
        %v9442 = vld [vmem:[#allocation2 + $0xd0] sm:$0xf]
        %v9443 = vld [vmem:[#allocation2 + $0xd4] sm:$0xf]
        %v9444 = vld [vmem:[#allocation2 + $0xd8] sm:$0xf]
        %v9445 = vld [vmem:[#allocation2 + $0xdc] sm:$0xf]
        %v9446 = vld [vmem:[#allocation2 + $0xe0] sm:$0x3]
        %v9447 = vld [vmem:[%s3788] sm:$0xf]
        %v9448 = vld [vmem:[%s3788 + $0x4] sm:$0xf]
        %v9449 = vld [vmem:[%s3788 + $0x8] sm:$0xf]
        %v9450 = vld [vmem:[%s3788 + $0xc] sm:$0xf]
        %v9451 = vld [vmem:[%s3788 + $0x10] sm:$0xf]
        %v9452 = vld [vmem:[%s3788 + $0x14] sm:$0xf]
        %v9453 = vld [vmem:[%s3788 + $0x18] sm:$0xf]
        %v9454 = vld [vmem:[%s3788 + $0x1c] sm:$0xf]
        %v9455 = vld [vmem:[%s3788 + $0x20] sm:$0xf]
        %v9456 = vld [vmem:[%s3788 + $0x24] sm:$0xf]
        %v9457 = vld [vmem:[%s3788 + $0x28] sm:$0xf]
        %v9458 = vld [vmem:[%s3788 + $0x2c] sm:$0xf]
        %v9459 = vld [vmem:[%s3788 + $0x30] sm:$0xf]
        %v9460 = vld [vmem:[%s3788 + $0x34] sm:$0xf]
        %v9461 = vld [vmem:[%s3788 + $0x38] sm:$0xf]
        %v9462 = vld [vmem:[%s3788 + $0x3c] sm:$0xf]
        %v9507 = vunpack.c.l.b16 %v9403
        %v9508 = vunpack.c.l.b16 %v9404
        %v9509 = vunpack.c.l.b16 %v9405
        %v9510 = vunpack.c.l.b16 %v9406
        %v9511 = vunpack.c.l.b16 %v9407
        %v9512 = vunpack.c.l.b16 %v9408
        %v9513 = vunpack.c.l.b16 %v9409
        %v9514 = vunpack.c.l.b16 %v9410
        %v9515 = vunpack.c.l.b16 %v9411
        %v9516 = vunpack.c.l.b16 %v9412
        %v9517 = vunpack.c.l.b16 %v9413
        %v9518 = vunpack.c.l.b16 %v9414
        %v9519 = vunpack.c.l.b16 %v9415
        %v9520 = vunpack.c.l.b16 %v9416
        %v9521 = vunpack.c.l.b16 %v9417
        %v9522 = vunpack.c.l.b16 %v9418
        %v9523 = vunpack.c.l.b16 %v9419
        %v9524 = vunpack.c.l.b16 %v9420
        %v9525 = vunpack.c.l.b16 %v9421
        %v9526 = vunpack.c.l.b16 %v9422
        %v9527 = vunpack.c.l.b16 %v9423
        %v9528 = vunpack.c.l.b16 %v9424
        %v9529 = vunpack.c.l.b16 %v9425
        %v9530 = vunpack.c.l.b16 %v9426
        %v9531 = vunpack.c.l.b16 %v9427
        %v9532 = vunpack.c.l.b16 %v9428
        %v9533 = vunpack.c.l.b16 %v9429
        %v9534 = vunpack.c.l.b16 %v9430
        %v9535 = vunpack.c.l.b16 %v9431
        %v9536 = vunpack.c.l.b16 %v9432
        %v9537 = vunpack.c.l.b16 %v9433
        %v9538 = vunpack.c.l.b16 %v9434
        %v9539 = vunpack.c.l.b16 %v9435
        %v9540 = vunpack.c.l.b16 %v9436
        %v9541 = vunpack.c.l.b16 %v9437
        %v9542 = vunpack.c.l.b16 %v9438
        %v9543 = vunpack.c.l.b16 %v9439
        %v9544 = vunpack.c.l.b16 %v9440
        %v9545 = vunpack.c.l.b16 %v9441
        %v9546 = vunpack.c.l.b16 %v9442
        %v9547 = vunpack.c.l.b16 %v9443
        %v9548 = vunpack.c.l.b16 %v9444
        %v9549 = vunpack.c.l.b16 %v9445
        %v9550 = vunpack.c.l.b16 %v9446
        %v9551 = vpack.c.b16 %v9508, %v9507
        %v9552 = vpack.c.b16 %v9510, %v9509
        %v9553 = vpack.c.b16 %v9512, %v9511
        %v9554 = vpack.c.b16 %v9514, %v9513
        %v9555 = vpack.c.b16 %v9516, %v9515
        %v9556 = vpack.c.b16 %v9518, %v9517
        %v9557 = vpack.c.b16 %v9520, %v9519
        %v9558 = vpack.c.b16 %v9522, %v9521
        %v9559 = vpack.c.b16 %v9524, %v9523
        %v9560 = vpack.c.b16 %v9526, %v9525
        %v9561 = vpack.c.b16 %v9528, %v9527
        %v9562 = vpack.c.b16 %v9530, %v9529
        %v9563 = vpack.c.b16 %v9532, %v9531
        %v9564 = vpack.c.b16 %v9534, %v9533
        %v9565 = vpack.c.b16 %v9536, %v9535
        %v9566 = vpack.c.b16 %v9538, %v9537
        %v9567 = vpack.c.b16 %v9540, %v9539
        %v9568 = vpack.c.b16 %v9542, %v9541
        %v9569 = vpack.c.b16 %v9544, %v9543
        %v9570 = vpack.c.b16 %v9546, %v9545
        %v9571 = vpack.c.b16 %v9548, %v9547
        %v9572 = vpack.c.b16 %v9550, %v9549
        %v9573 = vrot.slane %v9551, 2
        %v9574 = vrot.slane %v9552, 2
        %v9575 = vsel %vm7567, %v9573, %v9574
        %v9576 = vrot.slane %v9553, 2
        %v9577 = vsel %vm7567, %v9574, %v9576
        %v9578 = vrot.slane %v9554, 2
        %v9579 = vsel %vm7567, %v9576, %v9578
        %v9580 = vrot.slane %v9555, 2
        %v9581 = vsel %vm7567, %v9578, %v9580
        %v9582 = vrot.slane %v9556, 2
        %v9583 = vsel %vm7567, %v9580, %v9582
        %v9584 = vrot.slane %v9557, 2
        %v9585 = vsel %vm7567, %v9582, %v9584
        %v9586 = vrot.slane %v9558, 2
        %v9587 = vsel %vm7567, %v9584, %v9586
        %v9588 = vrot.slane %v9559, 2
        %v9589 = vsel %vm7567, %v9586, %v9588
        %v9590 = vrot.slane %v9560, 2
        %v9591 = vsel %vm7567, %v9588, %v9590
        %v9592 = vrot.slane %v9561, 2
        %v9593 = vsel %vm7567, %v9590, %v9592
        %v9594 = vrot.slane %v9562, 2
        %v9595 = vsel %vm7567, %v9592, %v9594
        %v9596 = vrot.slane %v9563, 2
        %v9597 = vsel %vm7567, %v9594, %v9596
        %v9598 = vrot.slane %v9564, 2
        %v9599 = vsel %vm7567, %v9596, %v9598
        %v9600 = vrot.slane %v9565, 2
        %v9601 = vsel %vm7567, %v9598, %v9600
        %v9602 = vrot.slane %v9566, 2
        %v9603 = vsel %vm7567, %v9600, %v9602
        %v9604 = vrot.slane %v9567, 2
        %v9605 = vsel %vm7567, %v9602, %v9604
        %v9606 = vrot.slane %v9568, 2
        %v9607 = vsel %vm7567, %v9604, %v9606
        %v9608 = vrot.slane %v9569, 2
        %v9609 = vsel %vm7567, %v9606, %v9608
        %v9610 = vrot.slane %v9570, 2
        %v9611 = vsel %vm7567, %v9608, %v9610
        %v9612 = vrot.slane %v9571, 2
        %v9613 = vsel %vm7567, %v9610, %v9612
        %v9614 = vrot.slane %v9572, 2
        %v9615 = vsel %vm7567, %v9612, %v9614
        %v9654 = vunpack.c.l.b16 %v9447
        %v9655 = vunpack.c.l.b16 %v9448
        %v9656 = vunpack.c.l.b16 %v9449
        %v9657 = vunpack.c.l.b16 %v9450
        %v9658 = vunpack.c.l.b16 %v9451
        %v9659 = vunpack.c.l.b16 %v9452
        %v9660 = vunpack.c.l.b16 %v9453
        %v9661 = vunpack.c.l.b16 %v9454
        %v9662 = vunpack.c.l.b16 %v9455
        %v9663 = vunpack.c.l.b16 %v9456
        %v9664 = vunpack.c.l.b16 %v9457
        %v9665 = vunpack.c.l.b16 %v9458
        %v9666 = vunpack.c.l.b16 %v9459
        %v9667 = vunpack.c.l.b16 %v9460
        %v9668 = vunpack.c.l.b16 %v9461
        %v9669 = vunpack.c.l.b16 %v9462
        %v9670 = vpack.c.b16 %v9655, %v9654
        %v9671 = vpack.c.b16 %v9657, %v9656
        %v9672 = vpack.c.b16 %v9659, %v9658
        %v9673 = vpack.c.b16 %v9661, %v9660
        %v9674 = vpack.c.b16 %v9663, %v9662
        %v9675 = vpack.c.b16 %v9665, %v9664
        %v9676 = vpack.c.b16 %v9667, %v9666
        %v9677 = vpack.c.b16 %v9669, %v9668
        %9686 = vmatpush.bf16.msra.mxu0 %v9677
        %9687 = vmatpush.bf16.msra.mxu0 %v9676
        %9688 = vmatpush.bf16.msra.mxu0 %v9675
        %9689 = vmatpush.bf16.msra.mxu0 %v9674
        %9690 = vmatpush.bf16.msra.mxu0 %v9673
        %9691 = vmatpush.bf16.msra.mxu0 %v9672
        %9692 = vmatpush.bf16.msra.mxu0 %v9671
        %9693 = vmatpush.bf16.msra.mxu0 %v9670
        %9694 = vmatmul.bf16.gmra.mxu0 %v9575
        %v9695 = vpop.f32.mrf.mxu0
        %v9696 = vadd.f32 0.0, %v9695
        %v9697 = vpop.f32.mrf.mxu0
        %v9698 = vadd.f32 0.0, %v9697
        %9699 = vmatmul.bf16.gmra.mxu0 %v9577
        %v9700 = vpop.f32.mrf.mxu0
        %v9701 = vadd.f32 0.0, %v9700
        %v9702 = vpop.f32.mrf.mxu0
        %v9703 = vadd.f32 0.0, %v9702
        %9704 = vmatmul.bf16.gmra.mxu0 %v9579
        %v9705 = vpop.f32.mrf.mxu0
        %v9706 = vadd.f32 0.0, %v9705
        %v9707 = vpop.f32.mrf.mxu0
        %v9708 = vadd.f32 0.0, %v9707
        %9709 = vmatmul.bf16.gmra.mxu0 %v9581
        %v9710 = vpop.f32.mrf.mxu0
        %v9711 = vadd.f32 0.0, %v9710
        %v9712 = vpop.f32.mrf.mxu0
        %v9713 = vadd.f32 0.0, %v9712
        %9714 = vmatmul.bf16.gmra.mxu0 %v9583
        %v9715 = vpop.f32.mrf.mxu0
        %v9716 = vadd.f32 0.0, %v9715
        %v9717 = vpop.f32.mrf.mxu0
        %v9718 = vadd.f32 0.0, %v9717
        %9719 = vmatmul.bf16.gmra.mxu0 %v9585
        %v9720 = vpop.f32.mrf.mxu0
        %v9721 = vadd.f32 0.0, %v9720
        %v9722 = vpop.f32.mrf.mxu0
        %v9723 = vadd.f32 0.0, %v9722
        %9724 = vmatmul.bf16.gmra.mxu0 %v9587
        %v9725 = vpop.f32.mrf.mxu0
        %v9726 = vadd.f32 0.0, %v9725
        %v9727 = vpop.f32.mrf.mxu0
        %v9728 = vadd.f32 0.0, %v9727
        %9729 = vmatmul.bf16.gmra.mxu0 %v9589
        %v9730 = vpop.f32.mrf.mxu0
        %v9731 = vadd.f32 0.0, %v9730
        %v9732 = vpop.f32.mrf.mxu0
        %v9733 = vadd.f32 0.0, %v9732
        %9734 = vmatmul.bf16.gmra.mxu0 %v9591
        %v9735 = vpop.f32.mrf.mxu0
        %v9736 = vadd.f32 0.0, %v9735
        %v9737 = vpop.f32.mrf.mxu0
        %v9738 = vadd.f32 0.0, %v9737
        %9739 = vmatmul.bf16.gmra.mxu0 %v9593
        %v9740 = vpop.f32.mrf.mxu0
        %v9741 = vadd.f32 0.0, %v9740
        %v9742 = vpop.f32.mrf.mxu0
        %v9743 = vadd.f32 0.0, %v9742
        %9744 = vmatmul.bf16.gmra.mxu0 %v9595
        %v9745 = vpop.f32.mrf.mxu0
        %v9746 = vadd.f32 0.0, %v9745
        %v9747 = vpop.f32.mrf.mxu0
        %v9748 = vadd.f32 0.0, %v9747
        %9749 = vmatmul.bf16.gmra.mxu0 %v9597
        %v9750 = vpop.f32.mrf.mxu0
        %v9751 = vadd.f32 0.0, %v9750
        %v9752 = vpop.f32.mrf.mxu0
        %v9753 = vadd.f32 0.0, %v9752
        %9754 = vmatmul.bf16.gmra.mxu0 %v9599
        %v9755 = vpop.f32.mrf.mxu0
        %v9756 = vadd.f32 0.0, %v9755
        %v9757 = vpop.f32.mrf.mxu0
        %v9758 = vadd.f32 0.0, %v9757
        %9759 = vmatmul.bf16.gmra.mxu0 %v9601
        %v9760 = vpop.f32.mrf.mxu0
        %v9761 = vadd.f32 0.0, %v9760
        %v9762 = vpop.f32.mrf.mxu0
        %v9763 = vadd.f32 0.0, %v9762
        %9764 = vmatmul.bf16.gmra.mxu0 %v9603
        %v9765 = vpop.f32.mrf.mxu0
        %v9766 = vadd.f32 0.0, %v9765
        %v9767 = vpop.f32.mrf.mxu0
        %v9768 = vadd.f32 0.0, %v9767
        %9769 = vmatmul.bf16.gmra.mxu0 %v9605
        %v9770 = vpop.f32.mrf.mxu0
        %v9771 = vadd.f32 0.0, %v9770
        %v9772 = vpop.f32.mrf.mxu0
        %v9773 = vadd.f32 0.0, %v9772
        %9774 = vmatmul.bf16.gmra.mxu0 %v9607
        %v9775 = vpop.f32.mrf.mxu0
        %v9776 = vadd.f32 0.0, %v9775
        %v9777 = vpop.f32.mrf.mxu0
        %v9778 = vadd.f32 0.0, %v9777
        %9779 = vmatmul.bf16.gmra.mxu0 %v9609
        %v9780 = vpop.f32.mrf.mxu0
        %v9781 = vadd.f32 0.0, %v9780
        %v9782 = vpop.f32.mrf.mxu0
        %v9783 = vadd.f32 0.0, %v9782
        %9784 = vmatmul.bf16.gmra.mxu0 %v9611
        %v9785 = vpop.f32.mrf.mxu0
        %v9786 = vadd.f32 0.0, %v9785
        %v9787 = vpop.f32.mrf.mxu0
        %v9788 = vadd.f32 0.0, %v9787
        %9789 = vmatmul.bf16.gmra.mxu0 %v9613
        %v9790 = vpop.f32.mrf.mxu0
        %v9791 = vadd.f32 0.0, %v9790
        %v9792 = vpop.f32.mrf.mxu0
        %v9793 = vadd.f32 0.0, %v9792
        %9794 = vmatmul.bf16.gmra.mxu0 %v9615
        %v9795 = vpop.f32.mrf.mxu0
        %v9796 = vadd.f32 0.0, %v9795
        %v9797 = vpop.f32.mrf.mxu0
        %v9798 = vadd.f32 0.0, %v9797
        %9799 = vmatmul.bf16.gmra.mxu0 %v9614
        %v9800 = vpop.f32.mrf.mxu0
        %v9801 = vadd.f32 0.0, %v9800
        %v9802 = vpop.f32.mrf.mxu0
        %9803 = vdwg.mxu0
        %v9804 = vadd.f32 %v9360, %v9696
        %v9805 = vadd.f32 %v9361, %v9698
        %v9806 = vadd.f32 %v9362, %v9701
        %v9807 = vadd.f32 %v9363, %v9703
        %v9808 = vadd.f32 %v9364, %v9706
        %v9809 = vadd.f32 %v9365, %v9708
        %v9810 = vadd.f32 %v9366, %v9711
        %v9811 = vadd.f32 %v9367, %v9713
        %v9812 = vadd.f32 %v9368, %v9716
        %v9813 = vadd.f32 %v9369, %v9718
        %v9814 = vadd.f32 %v9370, %v9721
        %v9815 = vadd.f32 %v9371, %v9723
        %v9816 = vadd.f32 %v9372, %v9726
        %v9817 = vadd.f32 %v9373, %v9728
        %v9818 = vadd.f32 %v9374, %v9731
        %v9819 = vadd.f32 %v9375, %v9733
        %v9820 = vadd.f32 %v9376, %v9736
        %v9821 = vadd.f32 %v9377, %v9738
        %v9822 = vadd.f32 %v9378, %v9741
        %v9823 = vadd.f32 %v9379, %v9743
        %v9824 = vadd.f32 %v9380, %v9746
        %v9825 = vadd.f32 %v9381, %v9748
        %v9826 = vadd.f32 %v9382, %v9751
        %v9827 = vadd.f32 %v9383, %v9753
        %v9828 = vadd.f32 %v9384, %v9756
        %v9829 = vadd.f32 %v9385, %v9758
        %v9830 = vadd.f32 %v9386, %v9761
        %v9831 = vadd.f32 %v9387, %v9763
        %v9832 = vadd.f32 %v9388, %v9766
        %v9833 = vadd.f32 %v9389, %v9768
        %v9834 = vadd.f32 %v9390, %v9771
        %v9835 = vadd.f32 %v9391, %v9773
        %v9836 = vadd.f32 %v9392, %v9776
        %v9837 = vadd.f32 %v9393, %v9778
        %v9838 = vadd.f32 %v9394, %v9781
        %v9839 = vadd.f32 %v9395, %v9783
        %v9840 = vadd.f32 %v9396, %v9786
        %v9841 = vadd.f32 %v9397, %v9788
        %v9842 = vadd.f32 %v9398, %v9791
        %v9843 = vadd.f32 %v9399, %v9793
        %v9844 = vadd.f32 %v9400, %v9796
        %v9845 = vadd.f32 %v9401, %v9798
        %v9846 = vadd.f32 %v9402, %v9801
        %v9847 = vld [vmem:[#allocation2 + $0xe0] sm:$0xf]
        %v9848 = vld [vmem:[%s4343] sm:$0xf]
        %v9849 = vld [vmem:[%s4343 + $0x4] sm:$0xf]
        %v9850 = vld [vmem:[%s4343 + $0x8] sm:$0xf]
        %v9851 = vld [vmem:[%s4343 + $0xc] sm:$0xf]
        %v9852 = vld [vmem:[%s4343 + $0x10] sm:$0xf]
        %v9853 = vld [vmem:[%s4343 + $0x14] sm:$0xf]
        %v9854 = vld [vmem:[%s4343 + $0x18] sm:$0xf]
        %v9855 = vld [vmem:[%s4343 + $0x1c] sm:$0xf]
        %v9856 = vld [vmem:[%s4343 + $0x20] sm:$0xf]
        %v9857 = vld [vmem:[%s4343 + $0x24] sm:$0xf]
        %v9858 = vld [vmem:[%s4343 + $0x28] sm:$0xf]
        %v9859 = vld [vmem:[%s4343 + $0x2c] sm:$0xf]
        %v9860 = vld [vmem:[%s4343 + $0x30] sm:$0xf]
        %v9861 = vld [vmem:[%s4343 + $0x34] sm:$0xf]
        %v9862 = vld [vmem:[%s4343 + $0x38] sm:$0xf]
        %v9863 = vld [vmem:[%s4343 + $0x3c] sm:$0xf]
        %v9865 = vunpack.c.l.b16 %v9847
        %v9866 = vpack.c.b16 %v9509, %v9508
        %v9867 = vpack.c.b16 %v9511, %v9510
        %v9868 = vpack.c.b16 %v9513, %v9512
        %v9869 = vpack.c.b16 %v9515, %v9514
        %v9870 = vpack.c.b16 %v9517, %v9516
        %v9871 = vpack.c.b16 %v9519, %v9518
        %v9872 = vpack.c.b16 %v9521, %v9520
        %v9873 = vpack.c.b16 %v9523, %v9522
        %v9874 = vpack.c.b16 %v9525, %v9524
        %v9875 = vpack.c.b16 %v9527, %v9526
        %v9876 = vpack.c.b16 %v9529, %v9528
        %v9877 = vpack.c.b16 %v9531, %v9530
        %v9878 = vpack.c.b16 %v9533, %v9532
        %v9879 = vpack.c.b16 %v9535, %v9534
        %v9880 = vpack.c.b16 %v9537, %v9536
        %v9881 = vpack.c.b16 %v9539, %v9538
        %v9882 = vpack.c.b16 %v9541, %v9540
        %v9883 = vpack.c.b16 %v9543, %v9542
        %v9884 = vpack.c.b16 %v9545, %v9544
        %v9885 = vpack.c.b16 %v9547, %v9546
        %v9886 = vpack.c.b16 %v9549, %v9548
        %v9887 = vpack.c.b16 %v9865, %v9865
        %v9926 = vunpack.c.l.b16 %v9848
        %v9927 = vunpack.c.l.b16 %v9849
        %v9928 = vunpack.c.l.b16 %v9850
        %v9929 = vunpack.c.l.b16 %v9851
        %v9930 = vunpack.c.l.b16 %v9852
        %v9931 = vunpack.c.l.b16 %v9853
        %v9932 = vunpack.c.l.b16 %v9854
        %v9933 = vunpack.c.l.b16 %v9855
        %v9934 = vunpack.c.l.b16 %v9856
        %v9935 = vunpack.c.l.b16 %v9857
        %v9936 = vunpack.c.l.b16 %v9858
        %v9937 = vunpack.c.l.b16 %v9859
        %v9938 = vunpack.c.l.b16 %v9860
        %v9939 = vunpack.c.l.b16 %v9861
        %v9940 = vunpack.c.l.b16 %v9862
        %v9941 = vunpack.c.l.b16 %v9863
        %v9942 = vpack.c.b16 %v9927, %v9926
        %v9943 = vpack.c.b16 %v9929, %v9928
        %v9944 = vpack.c.b16 %v9931, %v9930
        %v9945 = vpack.c.b16 %v9933, %v9932
        %v9946 = vpack.c.b16 %v9935, %v9934
        %v9947 = vpack.c.b16 %v9937, %v9936
        %v9948 = vpack.c.b16 %v9939, %v9938
        %v9949 = vpack.c.b16 %v9941, %v9940
        %9958 = vmatpush.bf16.msra.mxu0 %v9949
        %9959 = vmatpush.bf16.msra.mxu0 %v9948
        %9960 = vmatpush.bf16.msra.mxu0 %v9947
        %9961 = vmatpush.bf16.msra.mxu0 %v9946
        %9962 = vmatpush.bf16.msra.mxu0 %v9945
        %9963 = vmatpush.bf16.msra.mxu0 %v9944
        %9964 = vmatpush.bf16.msra.mxu0 %v9943
        %9965 = vmatpush.bf16.msra.mxu0 %v9942
        %9966 = vmatmul.bf16.gmra.mxu0 %v9866
        %v9967 = vpop.f32.mrf.mxu0
        %v9968 = vadd.f32 0.0, %v9967
        %v9969 = vpop.f32.mrf.mxu0
        %v9970 = vadd.f32 0.0, %v9969
        %9971 = vmatmul.bf16.gmra.mxu0 %v9867
        %v9972 = vpop.f32.mrf.mxu0
        %v9973 = vadd.f32 0.0, %v9972
        %v9974 = vpop.f32.mrf.mxu0
        %v9975 = vadd.f32 0.0, %v9974
        %9976 = vmatmul.bf16.gmra.mxu0 %v9868
        %v9977 = vpop.f32.mrf.mxu0
        %v9978 = vadd.f32 0.0, %v9977
        %v9979 = vpop.f32.mrf.mxu0
        %v9980 = vadd.f32 0.0, %v9979
        %9981 = vmatmul.bf16.gmra.mxu0 %v9869
        %v9982 = vpop.f32.mrf.mxu0
        %v9983 = vadd.f32 0.0, %v9982
        %v9984 = vpop.f32.mrf.mxu0
        %v9985 = vadd.f32 0.0, %v9984
        %9986 = vmatmul.bf16.gmra.mxu0 %v9870
        %v9987 = vpop.f32.mrf.mxu0
        %v9988 = vadd.f32 0.0, %v9987
        %v9989 = vpop.f32.mrf.mxu0
        %v9990 = vadd.f32 0.0, %v9989
        %9991 = vmatmul.bf16.gmra.mxu0 %v9871
        %v9992 = vpop.f32.mrf.mxu0
        %v9993 = vadd.f32 0.0, %v9992
        %v9994 = vpop.f32.mrf.mxu0
        %v9995 = vadd.f32 0.0, %v9994
        %9996 = vmatmul.bf16.gmra.mxu0 %v9872
        %v9997 = vpop.f32.mrf.mxu0
        %v9998 = vadd.f32 0.0, %v9997
        %v9999 = vpop.f32.mrf.mxu0
        %v10000 = vadd.f32 0.0, %v9999
        %10001 = vmatmul.bf16.gmra.mxu0 %v9873
        %v10002 = vpop.f32.mrf.mxu0
        %v10003 = vadd.f32 0.0, %v10002
        %v10004 = vpop.f32.mrf.mxu0
        %v10005 = vadd.f32 0.0, %v10004
        %10006 = vmatmul.bf16.gmra.mxu0 %v9874
        %v10007 = vpop.f32.mrf.mxu0
        %v10008 = vadd.f32 0.0, %v10007
        %v10009 = vpop.f32.mrf.mxu0
        %v10010 = vadd.f32 0.0, %v10009
        %10011 = vmatmul.bf16.gmra.mxu0 %v9875
        %v10012 = vpop.f32.mrf.mxu0
        %v10013 = vadd.f32 0.0, %v10012
        %v10014 = vpop.f32.mrf.mxu0
        %v10015 = vadd.f32 0.0, %v10014
        %10016 = vmatmul.bf16.gmra.mxu0 %v9876
        %v10017 = vpop.f32.mrf.mxu0
        %v10018 = vadd.f32 0.0, %v10017
        %v10019 = vpop.f32.mrf.mxu0
        %v10020 = vadd.f32 0.0, %v10019
        %10021 = vmatmul.bf16.gmra.mxu0 %v9877
        %v10022 = vpop.f32.mrf.mxu0
        %v10023 = vadd.f32 0.0, %v10022
        %v10024 = vpop.f32.mrf.mxu0
        %v10025 = vadd.f32 0.0, %v10024
        %10026 = vmatmul.bf16.gmra.mxu0 %v9878
        %v10027 = vpop.f32.mrf.mxu0
        %v10028 = vadd.f32 0.0, %v10027
        %v10029 = vpop.f32.mrf.mxu0
        %v10030 = vadd.f32 0.0, %v10029
        %10031 = vmatmul.bf16.gmra.mxu0 %v9879
        %v10032 = vpop.f32.mrf.mxu0
        %v10033 = vadd.f32 0.0, %v10032
        %v10034 = vpop.f32.mrf.mxu0
        %v10035 = vadd.f32 0.0, %v10034
        %10036 = vmatmul.bf16.gmra.mxu0 %v9880
        %v10037 = vpop.f32.mrf.mxu0
        %v10038 = vadd.f32 0.0, %v10037
        %v10039 = vpop.f32.mrf.mxu0
        %v10040 = vadd.f32 0.0, %v10039
        %10041 = vmatmul.bf16.gmra.mxu0 %v9881
        %v10042 = vpop.f32.mrf.mxu0
        %v10043 = vadd.f32 0.0, %v10042
        %v10044 = vpop.f32.mrf.mxu0
        %v10045 = vadd.f32 0.0, %v10044
        %10046 = vmatmul.bf16.gmra.mxu0 %v9882
        %v10047 = vpop.f32.mrf.mxu0
        %v10048 = vadd.f32 0.0, %v10047
        %v10049 = vpop.f32.mrf.mxu0
        %v10050 = vadd.f32 0.0, %v10049
        %10051 = vmatmul.bf16.gmra.mxu0 %v9883
        %v10052 = vpop.f32.mrf.mxu0
        %v10053 = vadd.f32 0.0, %v10052
        %v10054 = vpop.f32.mrf.mxu0
        %v10055 = vadd.f32 0.0, %v10054
        %10056 = vmatmul.bf16.gmra.mxu0 %v9884
        %v10057 = vpop.f32.mrf.mxu0
        %v10058 = vadd.f32 0.0, %v10057
        %v10059 = vpop.f32.mrf.mxu0
        %v10060 = vadd.f32 0.0, %v10059
        %10061 = vmatmul.bf16.gmra.mxu0 %v9885
        %v10062 = vpop.f32.mrf.mxu0
        %v10063 = vadd.f32 0.0, %v10062
        %v10064 = vpop.f32.mrf.mxu0
        %v10065 = vadd.f32 0.0, %v10064
        %10066 = vmatmul.bf16.gmra.mxu0 %v9886
        %v10067 = vpop.f32.mrf.mxu0
        %v10068 = vadd.f32 0.0, %v10067
        %v10069 = vpop.f32.mrf.mxu0
        %v10070 = vadd.f32 0.0, %v10069
        %10071 = vmatmul.bf16.gmra.mxu0 %v9887
        %v10072 = vpop.f32.mrf.mxu0
        %v10073 = vadd.f32 0.0, %v10072
        %v10074 = vpop.f32.mrf.mxu0
        %10075 = vdwg.mxu0
        %v10076 = vadd.f32 %v9804, %v9968
        %v10077 = vadd.f32 %v9805, %v9970
        %v10078 = vadd.f32 %v9806, %v9973
        %v10079 = vadd.f32 %v9807, %v9975
        %v10080 = vadd.f32 %v9808, %v9978
        %v10081 = vadd.f32 %v9809, %v9980
        %v10082 = vadd.f32 %v9810, %v9983
        %v10083 = vadd.f32 %v9811, %v9985
        %v10084 = vadd.f32 %v9812, %v9988
        %v10085 = vadd.f32 %v9813, %v9990
        %v10086 = vadd.f32 %v9814, %v9993
        %v10087 = vadd.f32 %v9815, %v9995
        %v10088 = vadd.f32 %v9816, %v9998
        %v10089 = vadd.f32 %v9817, %v10000
        %v10090 = vadd.f32 %v9818, %v10003
        %v10091 = vadd.f32 %v9819, %v10005
        %v10092 = vadd.f32 %v9820, %v10008
        %v10093 = vadd.f32 %v9821, %v10010
        %v10094 = vadd.f32 %v9822, %v10013
        %v10095 = vadd.f32 %v9823, %v10015
        %v10096 = vadd.f32 %v9824, %v10018
        %v10097 = vadd.f32 %v9825, %v10020
        %v10098 = vadd.f32 %v9826, %v10023
        %v10099 = vadd.f32 %v9827, %v10025
        %v10100 = vadd.f32 %v9828, %v10028
        %v10101 = vadd.f32 %v9829, %v10030
        %v10102 = vadd.f32 %v9830, %v10033
        %v10103 = vadd.f32 %v9831, %v10035
        %v10104 = vadd.f32 %v9832, %v10038
        %v10105 = vadd.f32 %v9833, %v10040
        %v10106 = vadd.f32 %v9834, %v10043
        %v10107 = vadd.f32 %v9835, %v10045
        %v10108 = vadd.f32 %v9836, %v10048
        %v10109 = vadd.f32 %v9837, %v10050
        %v10110 = vadd.f32 %v9838, %v10053
        %v10111 = vadd.f32 %v9839, %v10055
        %v10112 = vadd.f32 %v9840, %v10058
        %v10113 = vadd.f32 %v9841, %v10060
        %v10114 = vadd.f32 %v9842, %v10063
        %v10115 = vadd.f32 %v9843, %v10065
        %v10116 = vadd.f32 %v9844, %v10068
        %v10117 = vadd.f32 %v9845, %v10070
        %v10118 = vadd.f32 %v9846, %v10073
        %v10119 = vld [vmem:[#allocation2 + $0x38] sm:$0xc]
        %v10120 = vld [vmem:[#allocation2 + $0x3c] sm:$0xf]
        %v10121 = vld [vmem:[#allocation2 + $0x40] sm:$0xf]
        %v10122 = vld [vmem:[#allocation2 + $0x44] sm:$0xf]
        %v10123 = vld [vmem:[#allocation2 + $0x48] sm:$0xf]
        %v10124 = vld [vmem:[#allocation2 + $0x4c] sm:$0xf]
        %v10125 = vld [vmem:[#allocation2 + $0x50] sm:$0xf]
        %v10126 = vld [vmem:[#allocation2 + $0x54] sm:$0xf]
        %v10127 = vld [vmem:[#allocation2 + $0x58] sm:$0xf]
        %v10128 = vld [vmem:[#allocation2 + $0x5c] sm:$0xf]
        %v10129 = vld [vmem:[#allocation2 + $0x60] sm:$0xf]
        %v10130 = vld [vmem:[#allocation2 + $0x64] sm:$0xf]
        %v10131 = vld [vmem:[#allocation2 + $0x68] sm:$0xf]
        %v10132 = vld [vmem:[#allocation2 + $0x6c] sm:$0xf]
        %v10133 = vld [vmem:[#allocation2 + $0x70] sm:$0xf]
        %v10134 = vld [vmem:[#allocation2 + $0x74] sm:$0xf]
        %v10135 = vld [vmem:[#allocation2 + $0x78] sm:$0xf]
        %v10136 = vld [vmem:[#allocation2 + $0x7c] sm:$0xf]
        %v10137 = vld [vmem:[#allocation2 + $0x80] sm:$0xf]
        %v10138 = vld [vmem:[#allocation2 + $0x84] sm:$0xf]
        %v10139 = vld [vmem:[#allocation2 + $0x88] sm:$0xf]
        %v10140 = vld [vmem:[#allocation2 + $0x8c] sm:$0xf]
        %v10141 = vld [vmem:[#allocation2 + $0x90] sm:$0xf]
        %v10142 = vld [vmem:[#allocation2 + $0x94] sm:$0xf]
        %v10143 = vld [vmem:[#allocation2 + $0x98] sm:$0xf]
        %v10144 = vld [vmem:[#allocation2 + $0x9c] sm:$0xf]
        %v10145 = vld [vmem:[#allocation2 + $0xa0] sm:$0xf]
        %v10146 = vld [vmem:[#allocation2 + $0xa4] sm:$0xf]
        %v10147 = vld [vmem:[#allocation2 + $0xa8] sm:$0xf]
        %v10148 = vld [vmem:[#allocation2 + $0xac] sm:$0xf]
        %v10149 = vld [vmem:[#allocation2 + $0xb0] sm:$0xf]
        %v10150 = vld [vmem:[#allocation2 + $0xb4] sm:$0xf]
        %v10151 = vld [vmem:[#allocation2 + $0xb8] sm:$0xf]
        %v10152 = vld [vmem:[#allocation2 + $0xbc] sm:$0xf]
        %v10153 = vld [vmem:[#allocation2 + $0xc0] sm:$0xf]
        %v10154 = vld [vmem:[#allocation2 + $0xc4] sm:$0xf]
        %v10155 = vld [vmem:[#allocation2 + $0xc8] sm:$0xf]
        %v10156 = vld [vmem:[#allocation2 + $0xcc] sm:$0xf]
        %v10157 = vld [vmem:[#allocation2 + $0xd0] sm:$0xf]
        %v10158 = vld [vmem:[#allocation2 + $0xd4] sm:$0xf]
        %v10159 = vld [vmem:[#allocation2 + $0xd8] sm:$0xf]
        %v10160 = vld [vmem:[#allocation2 + $0xdc] sm:$0xf]
        %v10161 = vld [vmem:[#allocation2 + $0xe0] sm:$0xf]
        %v10162 = vld [vmem:[#allocation2 + $0xe4] sm:$0x3]
        %v10163 = vld [vmem:[%s4657] sm:$0xf]
        %v10164 = vld [vmem:[%s4657 + $0x4] sm:$0xf]
        %v10165 = vld [vmem:[%s4657 + $0x8] sm:$0xf]
        %v10166 = vld [vmem:[%s4657 + $0xc] sm:$0xf]
        %v10167 = vld [vmem:[%s4657 + $0x10] sm:$0xf]
        %v10168 = vld [vmem:[%s4657 + $0x14] sm:$0xf]
        %v10169 = vld [vmem:[%s4657 + $0x18] sm:$0xf]
        %v10170 = vld [vmem:[%s4657 + $0x1c] sm:$0xf]
        %v10171 = vld [vmem:[%s4657 + $0x20] sm:$0xf]
        %v10172 = vld [vmem:[%s4657 + $0x24] sm:$0xf]
        %v10173 = vld [vmem:[%s4657 + $0x28] sm:$0xf]
        %v10174 = vld [vmem:[%s4657 + $0x2c] sm:$0xf]
        %v10175 = vld [vmem:[%s4657 + $0x30] sm:$0xf]
        %v10176 = vld [vmem:[%s4657 + $0x34] sm:$0xf]
        %v10177 = vld [vmem:[%s4657 + $0x38] sm:$0xf]
        %v10178 = vld [vmem:[%s4657 + $0x3c] sm:$0xf]
        %v10223 = vunpack.c.l.b16 %v10119
        %v10224 = vunpack.c.l.b16 %v10120
        %v10225 = vunpack.c.l.b16 %v10121
        %v10226 = vunpack.c.l.b16 %v10122
        %v10227 = vunpack.c.l.b16 %v10123
        %v10228 = vunpack.c.l.b16 %v10124
        %v10229 = vunpack.c.l.b16 %v10125
        %v10230 = vunpack.c.l.b16 %v10126
        %v10231 = vunpack.c.l.b16 %v10127
        %v10232 = vunpack.c.l.b16 %v10128
        %v10233 = vunpack.c.l.b16 %v10129
        %v10234 = vunpack.c.l.b16 %v10130
        %v10235 = vunpack.c.l.b16 %v10131
        %v10236 = vunpack.c.l.b16 %v10132
        %v10237 = vunpack.c.l.b16 %v10133
        %v10238 = vunpack.c.l.b16 %v10134
        %v10239 = vunpack.c.l.b16 %v10135
        %v10240 = vunpack.c.l.b16 %v10136
        %v10241 = vunpack.c.l.b16 %v10137
        %v10242 = vunpack.c.l.b16 %v10138
        %v10243 = vunpack.c.l.b16 %v10139
        %v10244 = vunpack.c.l.b16 %v10140
        %v10245 = vunpack.c.l.b16 %v10141
        %v10246 = vunpack.c.l.b16 %v10142
        %v10247 = vunpack.c.l.b16 %v10143
        %v10248 = vunpack.c.l.b16 %v10144
        %v10249 = vunpack.c.l.b16 %v10145
        %v10250 = vunpack.c.l.b16 %v10146
        %v10251 = vunpack.c.l.b16 %v10147
        %v10252 = vunpack.c.l.b16 %v10148
        %v10253 = vunpack.c.l.b16 %v10149
        %v10254 = vunpack.c.l.b16 %v10150
        %v10255 = vunpack.c.l.b16 %v10151
        %v10256 = vunpack.c.l.b16 %v10152
        %v10257 = vunpack.c.l.b16 %v10153
        %v10258 = vunpack.c.l.b16 %v10154
        %v10259 = vunpack.c.l.b16 %v10155
        %v10260 = vunpack.c.l.b16 %v10156
        %v10261 = vunpack.c.l.b16 %v10157
        %v10262 = vunpack.c.l.b16 %v10158
        %v10263 = vunpack.c.l.b16 %v10159
        %v10264 = vunpack.c.l.b16 %v10160
        %v10265 = vunpack.c.l.b16 %v10161
        %v10266 = vunpack.c.l.b16 %v10162
        %v10267 = vpack.c.b16 %v10224, %v10223
        %v10268 = vpack.c.b16 %v10226, %v10225
        %v10269 = vpack.c.b16 %v10228, %v10227
        %v10270 = vpack.c.b16 %v10230, %v10229
        %v10271 = vpack.c.b16 %v10232, %v10231
        %v10272 = vpack.c.b16 %v10234, %v10233
        %v10273 = vpack.c.b16 %v10236, %v10235
        %v10274 = vpack.c.b16 %v10238, %v10237
        %v10275 = vpack.c.b16 %v10240, %v10239
        %v10276 = vpack.c.b16 %v10242, %v10241
        %v10277 = vpack.c.b16 %v10244, %v10243
        %v10278 = vpack.c.b16 %v10246, %v10245
        %v10279 = vpack.c.b16 %v10248, %v10247
        %v10280 = vpack.c.b16 %v10250, %v10249
        %v10281 = vpack.c.b16 %v10252, %v10251
        %v10282 = vpack.c.b16 %v10254, %v10253
        %v10283 = vpack.c.b16 %v10256, %v10255
        %v10284 = vpack.c.b16 %v10258, %v10257
        %v10285 = vpack.c.b16 %v10260, %v10259
        %v10286 = vpack.c.b16 %v10262, %v10261
        %v10287 = vpack.c.b16 %v10264, %v10263
        %v10288 = vpack.c.b16 %v10266, %v10265
        %v10289 = vrot.slane %v10267, 2
        %v10290 = vrot.slane %v10268, 2
        %v10291 = vsel %vm7567, %v10289, %v10290
        %v10292 = vrot.slane %v10269, 2
        %v10293 = vsel %vm7567, %v10290, %v10292
        %v10294 = vrot.slane %v10270, 2
        %v10295 = vsel %vm7567, %v10292, %v10294
        %v10296 = vrot.slane %v10271, 2
        %v10297 = vsel %vm7567, %v10294, %v10296
        %v10298 = vrot.slane %v10272, 2
        %v10299 = vsel %vm7567, %v10296, %v10298
        %v10300 = vrot.slane %v10273, 2
        %v10301 = vsel %vm7567, %v10298, %v10300
        %v10302 = vrot.slane %v10274, 2
        %v10303 = vsel %vm7567, %v10300, %v10302
        %v10304 = vrot.slane %v10275, 2
        %v10305 = vsel %vm7567, %v10302, %v10304
        %v10306 = vrot.slane %v10276, 2
        %v10307 = vsel %vm7567, %v10304, %v10306
        %v10308 = vrot.slane %v10277, 2
        %v10309 = vsel %vm7567, %v10306, %v10308
        %v10310 = vrot.slane %v10278, 2
        %v10311 = vsel %vm7567, %v10308, %v10310
        %v10312 = vrot.slane %v10279, 2
        %v10313 = vsel %vm7567, %v10310, %v10312
        %v10314 = vrot.slane %v10280, 2
        %v10315 = vsel %vm7567, %v10312, %v10314
        %v10316 = vrot.slane %v10281, 2
        %v10317 = vsel %vm7567, %v10314, %v10316
        %v10318 = vrot.slane %v10282, 2
        %v10319 = vsel %vm7567, %v10316, %v10318
        %v10320 = vrot.slane %v10283, 2
        %v10321 = vsel %vm7567, %v10318, %v10320
        %v10322 = vrot.slane %v10284, 2
        %v10323 = vsel %vm7567, %v10320, %v10322
        %v10324 = vrot.slane %v10285, 2
        %v10325 = vsel %vm7567, %v10322, %v10324
        %v10326 = vrot.slane %v10286, 2
        %v10327 = vsel %vm7567, %v10324, %v10326
        %v10328 = vrot.slane %v10287, 2
        %v10329 = vsel %vm7567, %v10326, %v10328
        %v10330 = vrot.slane %v10288, 2
        %v10331 = vsel %vm7567, %v10328, %v10330
        %v10370 = vunpack.c.l.b16 %v10163
        %v10371 = vunpack.c.l.b16 %v10164
        %v10372 = vunpack.c.l.b16 %v10165
        %v10373 = vunpack.c.l.b16 %v10166
        %v10374 = vunpack.c.l.b16 %v10167
        %v10375 = vunpack.c.l.b16 %v10168
        %v10376 = vunpack.c.l.b16 %v10169
        %v10377 = vunpack.c.l.b16 %v10170
        %v10378 = vunpack.c.l.b16 %v10171
        %v10379 = vunpack.c.l.b16 %v10172
        %v10380 = vunpack.c.l.b16 %v10173
        %v10381 = vunpack.c.l.b16 %v10174
        %v10382 = vunpack.c.l.b16 %v10175
        %v10383 = vunpack.c.l.b16 %v10176
        %v10384 = vunpack.c.l.b16 %v10177
        %v10385 = vunpack.c.l.b16 %v10178
        %v10386 = vpack.c.b16 %v10371, %v10370
        %v10387 = vpack.c.b16 %v10373, %v10372
        %v10388 = vpack.c.b16 %v10375, %v10374
        %v10389 = vpack.c.b16 %v10377, %v10376
        %v10390 = vpack.c.b16 %v10379, %v10378
        %v10391 = vpack.c.b16 %v10381, %v10380
        %v10392 = vpack.c.b16 %v10383, %v10382
        %v10393 = vpack.c.b16 %v10385, %v10384
        %10402 = vmatpush.bf16.msra.mxu0 %v10393
        %10403 = vmatpush.bf16.msra.mxu0 %v10392
        %10404 = vmatpush.bf16.msra.mxu0 %v10391
        %10405 = vmatpush.bf16.msra.mxu0 %v10390
        %10406 = vmatpush.bf16.msra.mxu0 %v10389
        %10407 = vmatpush.bf16.msra.mxu0 %v10388
        %10408 = vmatpush.bf16.msra.mxu0 %v10387
        %10409 = vmatpush.bf16.msra.mxu0 %v10386
        %10410 = vmatmul.bf16.gmra.mxu0 %v10291
        %v10411 = vpop.f32.mrf.mxu0
        %v10412 = vadd.f32 0.0, %v10411
        %v10413 = vpop.f32.mrf.mxu0
        %v10414 = vadd.f32 0.0, %v10413
        %10415 = vmatmul.bf16.gmra.mxu0 %v10293
        %v10416 = vpop.f32.mrf.mxu0
        %v10417 = vadd.f32 0.0, %v10416
        %v10418 = vpop.f32.mrf.mxu0
        %v10419 = vadd.f32 0.0, %v10418
        %10420 = vmatmul.bf16.gmra.mxu0 %v10295
        %v10421 = vpop.f32.mrf.mxu0
        %v10422 = vadd.f32 0.0, %v10421
        %v10423 = vpop.f32.mrf.mxu0
        %v10424 = vadd.f32 0.0, %v10423
        %10425 = vmatmul.bf16.gmra.mxu0 %v10297
        %v10426 = vpop.f32.mrf.mxu0
        %v10427 = vadd.f32 0.0, %v10426
        %v10428 = vpop.f32.mrf.mxu0
        %v10429 = vadd.f32 0.0, %v10428
        %10430 = vmatmul.bf16.gmra.mxu0 %v10299
        %v10431 = vpop.f32.mrf.mxu0
        %v10432 = vadd.f32 0.0, %v10431
        %v10433 = vpop.f32.mrf.mxu0
        %v10434 = vadd.f32 0.0, %v10433
        %10435 = vmatmul.bf16.gmra.mxu0 %v10301
        %v10436 = vpop.f32.mrf.mxu0
        %v10437 = vadd.f32 0.0, %v10436
        %v10438 = vpop.f32.mrf.mxu0
        %v10439 = vadd.f32 0.0, %v10438
        %10440 = vmatmul.bf16.gmra.mxu0 %v10303
        %v10441 = vpop.f32.mrf.mxu0
        %v10442 = vadd.f32 0.0, %v10441
        %v10443 = vpop.f32.mrf.mxu0
        %v10444 = vadd.f32 0.0, %v10443
        %10445 = vmatmul.bf16.gmra.mxu0 %v10305
        %v10446 = vpop.f32.mrf.mxu0
        %v10447 = vadd.f32 0.0, %v10446
        %v10448 = vpop.f32.mrf.mxu0
        %v10449 = vadd.f32 0.0, %v10448
        %10450 = vmatmul.bf16.gmra.mxu0 %v10307
        %v10451 = vpop.f32.mrf.mxu0
        %v10452 = vadd.f32 0.0, %v10451
        %v10453 = vpop.f32.mrf.mxu0
        %v10454 = vadd.f32 0.0, %v10453
        %10455 = vmatmul.bf16.gmra.mxu0 %v10309
        %v10456 = vpop.f32.mrf.mxu0
        %v10457 = vadd.f32 0.0, %v10456
        %v10458 = vpop.f32.mrf.mxu0
        %v10459 = vadd.f32 0.0, %v10458
        %10460 = vmatmul.bf16.gmra.mxu0 %v10311
        %v10461 = vpop.f32.mrf.mxu0
        %v10462 = vadd.f32 0.0, %v10461
        %v10463 = vpop.f32.mrf.mxu0
        %v10464 = vadd.f32 0.0, %v10463
        %10465 = vmatmul.bf16.gmra.mxu0 %v10313
        %v10466 = vpop.f32.mrf.mxu0
        %v10467 = vadd.f32 0.0, %v10466
        %v10468 = vpop.f32.mrf.mxu0
        %v10469 = vadd.f32 0.0, %v10468
        %10470 = vmatmul.bf16.gmra.mxu0 %v10315
        %v10471 = vpop.f32.mrf.mxu0
        %v10472 = vadd.f32 0.0, %v10471
        %v10473 = vpop.f32.mrf.mxu0
        %v10474 = vadd.f32 0.0, %v10473
        %10475 = vmatmul.bf16.gmra.mxu0 %v10317
        %v10476 = vpop.f32.mrf.mxu0
        %v10477 = vadd.f32 0.0, %v10476
        %v10478 = vpop.f32.mrf.mxu0
        %v10479 = vadd.f32 0.0, %v10478
        %10480 = vmatmul.bf16.gmra.mxu0 %v10319
        %v10481 = vpop.f32.mrf.mxu0
        %v10482 = vadd.f32 0.0, %v10481
        %v10483 = vpop.f32.mrf.mxu0
        %v10484 = vadd.f32 0.0, %v10483
        %10485 = vmatmul.bf16.gmra.mxu0 %v10321
        %v10486 = vpop.f32.mrf.mxu0
        %v10487 = vadd.f32 0.0, %v10486
        %v10488 = vpop.f32.mrf.mxu0
        %v10489 = vadd.f32 0.0, %v10488
        %10490 = vmatmul.bf16.gmra.mxu0 %v10323
        %v10491 = vpop.f32.mrf.mxu0
        %v10492 = vadd.f32 0.0, %v10491
        %v10493 = vpop.f32.mrf.mxu0
        %v10494 = vadd.f32 0.0, %v10493
        %10495 = vmatmul.bf16.gmra.mxu0 %v10325
        %v10496 = vpop.f32.mrf.mxu0
        %v10497 = vadd.f32 0.0, %v10496
        %v10498 = vpop.f32.mrf.mxu0
        %v10499 = vadd.f32 0.0, %v10498
        %10500 = vmatmul.bf16.gmra.mxu0 %v10327
        %v10501 = vpop.f32.mrf.mxu0
        %v10502 = vadd.f32 0.0, %v10501
        %v10503 = vpop.f32.mrf.mxu0
        %v10504 = vadd.f32 0.0, %v10503
        %10505 = vmatmul.bf16.gmra.mxu0 %v10329
        %v10506 = vpop.f32.mrf.mxu0
        %v10507 = vadd.f32 0.0, %v10506
        %v10508 = vpop.f32.mrf.mxu0
        %v10509 = vadd.f32 0.0, %v10508
        %10510 = vmatmul.bf16.gmra.mxu0 %v10331
        %v10511 = vpop.f32.mrf.mxu0
        %v10512 = vadd.f32 0.0, %v10511
        %v10513 = vpop.f32.mrf.mxu0
        %v10514 = vadd.f32 0.0, %v10513
        %10515 = vmatmul.bf16.gmra.mxu0 %v10330
        %v10516 = vpop.f32.mrf.mxu0
        %v10517 = vadd.f32 0.0, %v10516
        %v10518 = vpop.f32.mrf.mxu0
        %10519 = vdwg.mxu0
        %v10520 = vadd.f32 %v10076, %v10412
        %v10521 = vadd.f32 %v10077, %v10414
        %v10522 = vadd.f32 %v10078, %v10417
        %v10523 = vadd.f32 %v10079, %v10419
        %v10524 = vadd.f32 %v10080, %v10422
        %v10525 = vadd.f32 %v10081, %v10424
        %v10526 = vadd.f32 %v10082, %v10427
        %v10527 = vadd.f32 %v10083, %v10429
        %v10528 = vadd.f32 %v10084, %v10432
        %v10529 = vadd.f32 %v10085, %v10434
        %v10530 = vadd.f32 %v10086, %v10437
        %v10531 = vadd.f32 %v10087, %v10439
        %v10532 = vadd.f32 %v10088, %v10442
        %v10533 = vadd.f32 %v10089, %v10444
        %v10534 = vadd.f32 %v10090, %v10447
        %v10535 = vadd.f32 %v10091, %v10449
        %v10536 = vadd.f32 %v10092, %v10452
        %v10537 = vadd.f32 %v10093, %v10454
        %v10538 = vadd.f32 %v10094, %v10457
        %v10539 = vadd.f32 %v10095, %v10459
        %v10540 = vadd.f32 %v10096, %v10462
        %v10541 = vadd.f32 %v10097, %v10464
        %v10542 = vadd.f32 %v10098, %v10467
        %v10543 = vadd.f32 %v10099, %v10469
        %v10544 = vadd.f32 %v10100, %v10472
        %v10545 = vadd.f32 %v10101, %v10474
        %v10546 = vadd.f32 %v10102, %v10477
        %v10547 = vadd.f32 %v10103, %v10479
        %v10548 = vadd.f32 %v10104, %v10482
        %v10549 = vadd.f32 %v10105, %v10484
        %v10550 = vadd.f32 %v10106, %v10487
        %v10551 = vadd.f32 %v10107, %v10489
        %v10552 = vadd.f32 %v10108, %v10492
        %v10553 = vadd.f32 %v10109, %v10494
        %v10554 = vadd.f32 %v10110, %v10497
        %v10555 = vadd.f32 %v10111, %v10499
        %v10556 = vadd.f32 %v10112, %v10502
        %v10557 = vadd.f32 %v10113, %v10504
        %v10558 = vadd.f32 %v10114, %v10507
        %v10559 = vadd.f32 %v10115, %v10509
        %v10560 = vadd.f32 %v10116, %v10512
        %v10561 = vadd.f32 %v10117, %v10514
        %v10562 = vadd.f32 %v10118, %v10517
        %vm10606 = vcmask 1043456
        %v10607 = vrot.slane %v10520, 4
        %v10608 = vrot.slane %v10521, 4
        %v10609 = vsel %vm10606, %v10607, %v10608
        %v10610 = vrot.slane %v10522, 4
        %v10611 = vsel %vm10606, %v10608, %v10610
        %v10612 = vrot.slane %v10523, 4
        %v10613 = vsel %vm10606, %v10610, %v10612
        %v10614 = vrot.slane %v10524, 4
        %v10615 = vsel %vm10606, %v10612, %v10614
        %v10616 = vrot.slane %v10525, 4
        %v10617 = vsel %vm10606, %v10614, %v10616
        %v10618 = vrot.slane %v10526, 4
        %v10619 = vsel %vm10606, %v10616, %v10618
        %v10620 = vrot.slane %v10527, 4
        %v10621 = vsel %vm10606, %v10618, %v10620
        %v10622 = vrot.slane %v10528, 4
        %v10623 = vsel %vm10606, %v10620, %v10622
        %v10624 = vrot.slane %v10529, 4
        %v10625 = vsel %vm10606, %v10622, %v10624
        %v10626 = vrot.slane %v10530, 4
        %v10627 = vsel %vm10606, %v10624, %v10626
        %v10628 = vrot.slane %v10531, 4
        %v10629 = vsel %vm10606, %v10626, %v10628
        %v10630 = vrot.slane %v10532, 4
        %v10631 = vsel %vm10606, %v10628, %v10630
        %v10632 = vrot.slane %v10533, 4
        %v10633 = vsel %vm10606, %v10630, %v10632
        %v10634 = vrot.slane %v10534, 4
        %v10635 = vsel %vm10606, %v10632, %v10634
        %v10636 = vrot.slane %v10535, 4
        %v10637 = vsel %vm10606, %v10634, %v10636
        %v10638 = vrot.slane %v10536, 4
        %v10639 = vsel %vm10606, %v10636, %v10638
        %v10640 = vrot.slane %v10537, 4
        %v10641 = vsel %vm10606, %v10638, %v10640
        %v10642 = vrot.slane %v10538, 4
        %v10643 = vsel %vm10606, %v10640, %v10642
        %v10644 = vrot.slane %v10539, 4
        %v10645 = vsel %vm10606, %v10642, %v10644
        %v10646 = vrot.slane %v10540, 4
        %v10647 = vsel %vm10606, %v10644, %v10646
        %v10648 = vrot.slane %v10541, 4
        %v10649 = vsel %vm10606, %v10646, %v10648
        %v10650 = vrot.slane %v10542, 4
        %v10651 = vsel %vm10606, %v10648, %v10650
        %v10652 = vrot.slane %v10543, 4
        %v10653 = vsel %vm10606, %v10650, %v10652
        %v10654 = vrot.slane %v10544, 4
        %v10655 = vsel %vm10606, %v10652, %v10654
        %v10656 = vrot.slane %v10545, 4
        %v10657 = vsel %vm10606, %v10654, %v10656
        %v10658 = vrot.slane %v10546, 4
        %v10659 = vsel %vm10606, %v10656, %v10658
        %v10660 = vrot.slane %v10547, 4
        %v10661 = vsel %vm10606, %v10658, %v10660
        %v10662 = vrot.slane %v10548, 4
        %v10663 = vsel %vm10606, %v10660, %v10662
        %v10664 = vrot.slane %v10549, 4
        %v10665 = vsel %vm10606, %v10662, %v10664
        %v10666 = vrot.slane %v10550, 4
        %v10667 = vsel %vm10606, %v10664, %v10666
        %v10668 = vrot.slane %v10551, 4
        %v10669 = vsel %vm10606, %v10666, %v10668
        %v10670 = vrot.slane %v10552, 4
        %v10671 = vsel %vm10606, %v10668, %v10670
        %v10672 = vrot.slane %v10553, 4
        %v10673 = vsel %vm10606, %v10670, %v10672
        %v10674 = vrot.slane %v10554, 4
        %v10675 = vsel %vm10606, %v10672, %v10674
        %v10676 = vrot.slane %v10555, 4
        %v10677 = vsel %vm10606, %v10674, %v10676
        %v10678 = vrot.slane %v10556, 4
        %v10679 = vsel %vm10606, %v10676, %v10678
        %v10680 = vrot.slane %v10557, 4
        %v10681 = vsel %vm10606, %v10678, %v10680
        %v10682 = vrot.slane %v10558, 4
        %v10683 = vsel %vm10606, %v10680, %v10682
        %v10684 = vrot.slane %v10559, 4
        %v10685 = vsel %vm10606, %v10682, %v10684
        %v10686 = vrot.slane %v10560, 4
        %v10687 = vsel %vm10606, %v10684, %v10686
        %v10688 = vrot.slane %v10561, 4
        %v10689 = vsel %vm10606, %v10686, %v10688
        %v10690 = vrot.slane %v10562, 4
        %v10691 = vsel %vm10606, %v10688, %v10690
        %v10734 = vmax.f32 %v10520, %v10609
        %v10735 = vmax.f32 %v10521, %v10611
        %v10736 = vmax.f32 %v10522, %v10613
        %v10737 = vmax.f32 %v10523, %v10615
        %v10738 = vmax.f32 %v10524, %v10617
        %v10739 = vmax.f32 %v10525, %v10619
        %v10740 = vmax.f32 %v10526, %v10621
        %v10741 = vmax.f32 %v10527, %v10623
        %v10742 = vmax.f32 %v10528, %v10625
        %v10743 = vmax.f32 %v10529, %v10627
        %v10744 = vmax.f32 %v10530, %v10629
        %v10745 = vmax.f32 %v10531, %v10631
        %v10746 = vmax.f32 %v10532, %v10633
        %v10747 = vmax.f32 %v10533, %v10635
        %v10748 = vmax.f32 %v10534, %v10637
        %v10749 = vmax.f32 %v10535, %v10639
        %v10750 = vmax.f32 %v10536, %v10641
        %v10751 = vmax.f32 %v10537, %v10643
        %v10752 = vmax.f32 %v10538, %v10645
        %v10753 = vmax.f32 %v10539, %v10647
        %v10754 = vmax.f32 %v10540, %v10649
        %v10755 = vmax.f32 %v10541, %v10651
        %v10756 = vmax.f32 %v10542, %v10653
        %v10757 = vmax.f32 %v10543, %v10655
        %v10758 = vmax.f32 %v10544, %v10657
        %v10759 = vmax.f32 %v10545, %v10659
        %v10760 = vmax.f32 %v10546, %v10661
        %v10761 = vmax.f32 %v10547, %v10663
        %v10762 = vmax.f32 %v10548, %v10665
        %v10763 = vmax.f32 %v10549, %v10667
        %v10764 = vmax.f32 %v10550, %v10669
        %v10765 = vmax.f32 %v10551, %v10671
        %v10766 = vmax.f32 %v10552, %v10673
        %v10767 = vmax.f32 %v10553, %v10675
        %v10768 = vmax.f32 %v10554, %v10677
        %v10769 = vmax.f32 %v10555, %v10679
        %v10770 = vmax.f32 %v10556, %v10681
        %v10771 = vmax.f32 %v10557, %v10683
        %v10772 = vmax.f32 %v10558, %v10685
        %v10773 = vmax.f32 %v10559, %v10687
        %v10774 = vmax.f32 %v10560, %v10689
        %v10775 = vmax.f32 %v10561, %v10691
        %v10776 = vld [vmem:[%s7] sm:$0x1]
        %v10778 = vperm.slane %v10776, 0
        %v10780 = vadd.f32 %v10734, %v10778
        %v10781 = vadd.f32 %v10735, %v10778
        %v10782 = vadd.f32 %v10736, %v10778
        %v10783 = vadd.f32 %v10737, %v10778
        %v10784 = vadd.f32 %v10738, %v10778
        %v10785 = vadd.f32 %v10739, %v10778
        %v10786 = vadd.f32 %v10740, %v10778
        %v10787 = vadd.f32 %v10741, %v10778
        %v10788 = vadd.f32 %v10742, %v10778
        %v10789 = vadd.f32 %v10743, %v10778
        %v10790 = vadd.f32 %v10744, %v10778
        %v10791 = vadd.f32 %v10745, %v10778
        %v10792 = vadd.f32 %v10746, %v10778
        %v10793 = vadd.f32 %v10747, %v10778
        %v10794 = vadd.f32 %v10748, %v10778
        %v10795 = vadd.f32 %v10749, %v10778
        %v10796 = vadd.f32 %v10750, %v10778
        %v10797 = vadd.f32 %v10751, %v10778
        %v10798 = vadd.f32 %v10752, %v10778
        %v10799 = vadd.f32 %v10753, %v10778
        %v10800 = vadd.f32 %v10754, %v10778
        %v10801 = vadd.f32 %v10755, %v10778
        %v10802 = vadd.f32 %v10756, %v10778
        %v10803 = vadd.f32 %v10757, %v10778
        %v10804 = vadd.f32 %v10758, %v10778
        %v10805 = vadd.f32 %v10759, %v10778
        %v10806 = vadd.f32 %v10760, %v10778
        %v10807 = vadd.f32 %v10761, %v10778
        %v10808 = vadd.f32 %v10762, %v10778
        %v10809 = vadd.f32 %v10763, %v10778
        %v10810 = vadd.f32 %v10764, %v10778
        %v10811 = vadd.f32 %v10765, %v10778
        %v10812 = vadd.f32 %v10766, %v10778
        %v10813 = vadd.f32 %v10767, %v10778
        %v10814 = vadd.f32 %v10768, %v10778
        %v10815 = vadd.f32 %v10769, %v10778
        %v10816 = vadd.f32 %v10770, %v10778
        %v10817 = vadd.f32 %v10771, %v10778
        %v10818 = vadd.f32 %v10772, %v10778
        %v10819 = vadd.f32 %v10773, %v10778
        %v10820 = vadd.f32 %v10774, %v10778
        %v10821 = vadd.f32 %v10775, %v10778
        %v10822 = vmax.f32 %v10780, 0.0
        %v10823 = vmax.f32 %v10781, 0.0
        %v10824 = vmax.f32 %v10782, 0.0
        %v10825 = vmax.f32 %v10783, 0.0
        %v10826 = vmax.f32 %v10784, 0.0
        %v10827 = vmax.f32 %v10785, 0.0
        %v10828 = vmax.f32 %v10786, 0.0
        %v10829 = vmax.f32 %v10787, 0.0
        %v10830 = vmax.f32 %v10788, 0.0
        %v10831 = vmax.f32 %v10789, 0.0
        %v10832 = vmax.f32 %v10790, 0.0
        %v10833 = vmax.f32 %v10791, 0.0
        %v10834 = vmax.f32 %v10792, 0.0
        %v10835 = vmax.f32 %v10793, 0.0
        %v10836 = vmax.f32 %v10794, 0.0
        %v10837 = vmax.f32 %v10795, 0.0
        %v10838 = vmax.f32 %v10796, 0.0
        %v10839 = vmax.f32 %v10797, 0.0
        %v10840 = vmax.f32 %v10798, 0.0
        %v10841 = vmax.f32 %v10799, 0.0
        %v10842 = vmax.f32 %v10800, 0.0
        %v10843 = vmax.f32 %v10801, 0.0
        %v10844 = vmax.f32 %v10802, 0.0
        %v10845 = vmax.f32 %v10803, 0.0
        %v10846 = vmax.f32 %v10804, 0.0
        %v10847 = vmax.f32 %v10805, 0.0
        %v10848 = vmax.f32 %v10806, 0.0
        %v10849 = vmax.f32 %v10807, 0.0
        %v10850 = vmax.f32 %v10808, 0.0
        %v10851 = vmax.f32 %v10809, 0.0
        %v10852 = vmax.f32 %v10810, 0.0
        %v10853 = vmax.f32 %v10811, 0.0
        %v10854 = vmax.f32 %v10812, 0.0
        %v10855 = vmax.f32 %v10813, 0.0
        %v10856 = vmax.f32 %v10814, 0.0
        %v10857 = vmax.f32 %v10815, 0.0
        %v10858 = vmax.f32 %v10816, 0.0
        %v10859 = vmax.f32 %v10817, 0.0
        %v10860 = vmax.f32 %v10818, 0.0
        %v10861 = vmax.f32 %v10819, 0.0
        %v10862 = vmax.f32 %v10820, 0.0
        %v10863 = vmax.f32 %v10821, 0.0
        %v10864 = vmul.f32 %v10822, %v694
        %v10865 = vmul.f32 %v10823, %v699
        %v10866 = vmul.f32 %v10824, %v704
        %v10867 = vmul.f32 %v10825, %v709
        %v10868 = vmul.f32 %v10826, %v714
        %v10869 = vmul.f32 %v10827, %v719
        %v10870 = vmul.f32 %v10828, %v724
        %v10871 = vmul.f32 %v10829, %v729
        %v10872 = vmul.f32 %v10830, %v734
        %v10873 = vmul.f32 %v10831, %v739
        %v10874 = vmul.f32 %v10832, %v744
        %v10875 = vmul.f32 %v10833, %v749
        %v10876 = vmul.f32 %v10834, %v754
        %v10877 = vmul.f32 %v10835, %v759
        %v10878 = vmul.f32 %v10836, %v764
        %v10879 = vmul.f32 %v10837, %v769
        %v10880 = vmul.f32 %v10838, %v774
        %v10881 = vmul.f32 %v10839, %v779
        %v10882 = vmul.f32 %v10840, %v784
        %v10883 = vmul.f32 %v10841, %v789
        %v10884 = vmul.f32 %v10842, %v794
        %v10885 = vmul.f32 %v10843, %v799
        %v10886 = vmul.f32 %v10844, %v804
        %v10887 = vmul.f32 %v10845, %v809
        %v10888 = vmul.f32 %v10846, %v814
        %v10889 = vmul.f32 %v10847, %v819
        %v10890 = vmul.f32 %v10848, %v824
        %v10891 = vmul.f32 %v10849, %v829
        %v10892 = vmul.f32 %v10850, %v834
        %v10893 = vmul.f32 %v10851, %v839
        %v10894 = vmul.f32 %v10852, %v844
        %v10895 = vmul.f32 %v10853, %v849
        %v10896 = vmul.f32 %v10854, %v854
        %v10897 = vmul.f32 %v10855, %v859
        %v10898 = vmul.f32 %v10856, %v864
        %v10899 = vmul.f32 %v10857, %v869
        %v10900 = vmul.f32 %v10858, %v874
        %v10901 = vmul.f32 %v10859, %v879
        %v10902 = vmul.f32 %v10860, %v884
        %v10903 = vmul.f32 %v10861, %v889
        %v10904 = vmul.f32 %v10862, %v894
        %v10905 = vmul.f32 %v10863, %v899
        %v10906 = vpack.c.bf16 %v10864, %v10864
        %v10907 = vpack.c.bf16 %v10865, %v10865
        %v10908 = vpack.c.bf16 %v10866, %v10866
        %v10909 = vpack.c.bf16 %v10867, %v10867
        %v10910 = vpack.c.bf16 %v10868, %v10868
        %v10911 = vpack.c.bf16 %v10869, %v10869
        %v10912 = vpack.c.bf16 %v10870, %v10870
        %v10913 = vpack.c.bf16 %v10871, %v10871
        %v10914 = vpack.c.bf16 %v10872, %v10872
        %v10915 = vpack.c.bf16 %v10873, %v10873
        %v10916 = vpack.c.bf16 %v10874, %v10874
        %v10917 = vpack.c.bf16 %v10875, %v10875
        %v10918 = vpack.c.bf16 %v10876, %v10876
        %v10919 = vpack.c.bf16 %v10877, %v10877
        %v10920 = vpack.c.bf16 %v10878, %v10878
        %v10921 = vpack.c.bf16 %v10879, %v10879
        %v10922 = vpack.c.bf16 %v10880, %v10880
        %v10923 = vpack.c.bf16 %v10881, %v10881
        %v10924 = vpack.c.bf16 %v10882, %v10882
        %v10925 = vpack.c.bf16 %v10883, %v10883
        %v10926 = vpack.c.bf16 %v10884, %v10884
        %v10927 = vpack.c.bf16 %v10885, %v10885
        %v10928 = vpack.c.bf16 %v10886, %v10886
        %v10929 = vpack.c.bf16 %v10887, %v10887
        %v10930 = vpack.c.bf16 %v10888, %v10888
        %v10931 = vpack.c.bf16 %v10889, %v10889
        %v10932 = vpack.c.bf16 %v10890, %v10890
        %v10933 = vpack.c.bf16 %v10891, %v10891
        %v10934 = vpack.c.bf16 %v10892, %v10892
        %v10935 = vpack.c.bf16 %v10893, %v10893
        %v10936 = vpack.c.bf16 %v10894, %v10894
        %v10937 = vpack.c.bf16 %v10895, %v10895
        %v10938 = vpack.c.bf16 %v10896, %v10896
        %v10939 = vpack.c.bf16 %v10897, %v10897
        %v10940 = vpack.c.bf16 %v10898, %v10898
        %v10941 = vpack.c.bf16 %v10899, %v10899
        %v10942 = vpack.c.bf16 %v10900, %v10900
        %v10943 = vpack.c.bf16 %v10901, %v10901
        %v10944 = vpack.c.bf16 %v10902, %v10902
        %v10945 = vpack.c.bf16 %v10903, %v10903
        %v10946 = vpack.c.bf16 %v10904, %v10904
        %v10947 = vpack.c.bf16 %v10905, %v10905
        %10948 = vst [vmem:[#allocation2 + $0x8] sm:$0xf] %v10906
        %10949 = vst [vmem:[#allocation2 + $0xc] sm:$0xf] %v10907
        %10950 = vst [vmem:[#allocation2 + $0x10] sm:$0xf] %v10908
        %10951 = vst [vmem:[#allocation2 + $0x14] sm:$0xf] %v10909
        %10952 = vst [vmem:[#allocation2 + $0x18] sm:$0xf] %v10910
        %10953 = vst [vmem:[#allocation2 + $0x1c] sm:$0xf] %v10911
        %10954 = vst [vmem:[#allocation2 + $0x20] sm:$0xf] %v10912
        %10955 = vst [vmem:[#allocation2 + $0x24] sm:$0xf] %v10913
        %10956 = vst [vmem:[#allocation2 + $0x28] sm:$0xf] %v10914
        %10957 = vst [vmem:[#allocation2 + $0x2c] sm:$0xf] %v10915
        %10958 = vst [vmem:[#allocation2 + $0x30] sm:$0xf] %v10916
        %10959 = vst [vmem:[#allocation2 + $0x34] sm:$0xf] %v10917
        %10960 = vst [vmem:[#allocation2 + $0x38] sm:$0xf] %v10918
        %10961 = vst [vmem:[#allocation2 + $0x3c] sm:$0xf] %v10919
        %10962 = vst [vmem:[#allocation2 + $0x40] sm:$0xf] %v10920
        %10963 = vst [vmem:[#allocation2 + $0x44] sm:$0xf] %v10921
        %10964 = vst [vmem:[#allocation2 + $0x48] sm:$0xf] %v10922
        %10965 = vst [vmem:[#allocation2 + $0x4c] sm:$0xf] %v10923
        %10966 = vst [vmem:[#allocation2 + $0x50] sm:$0xf] %v10924
        %10967 = vst [vmem:[#allocation2 + $0x54] sm:$0xf] %v10925
        %10968 = vst [vmem:[#allocation2 + $0x58] sm:$0xf] %v10926
        %10969 = vst [vmem:[#allocation2 + $0x5c] sm:$0xf] %v10927
        %10970 = vst [vmem:[#allocation2 + $0x60] sm:$0xf] %v10928
        %10971 = vst [vmem:[#allocation2 + $0x64] sm:$0xf] %v10929
        %10972 = vst [vmem:[#allocation2 + $0x68] sm:$0xf] %v10930
        %10973 = vst [vmem:[#allocation2 + $0x6c] sm:$0xf] %v10931
        %10974 = vst [vmem:[#allocation2 + $0x70] sm:$0xf] %v10932
        %10975 = vst [vmem:[#allocation2 + $0x74] sm:$0xf] %v10933
        %10976 = vst [vmem:[#allocation2 + $0x78] sm:$0xf] %v10934
        %10977 = vst [vmem:[#allocation2 + $0x7c] sm:$0xf] %v10935
        %10978 = vst [vmem:[#allocation2 + $0x80] sm:$0xf] %v10936
        %10979 = vst [vmem:[#allocation2 + $0x84] sm:$0xf] %v10937
        %10980 = vst [vmem:[#allocation2 + $0x88] sm:$0xf] %v10938
        %10981 = vst [vmem:[#allocation2 + $0x8c] sm:$0xf] %v10939
        %10982 = vst [vmem:[#allocation2 + $0x90] sm:$0xf] %v10940
        %10983 = vst [vmem:[#allocation2 + $0x94] sm:$0xf] %v10941
        %10984 = vst [vmem:[#allocation2 + $0x98] sm:$0xf] %v10942
        %10985 = vst [vmem:[#allocation2 + $0x9c] sm:$0xf] %v10943
        %10986 = vst [vmem:[#allocation2 + $0xa0] sm:$0xf] %v10944
        %10987 = vst [vmem:[#allocation2 + $0xa4] sm:$0xf] %v10945
        %10988 = vst [vmem:[#allocation2 + $0xa8] sm:$0xf] %v10946
        %10989 = vst [vmem:[#allocation2 + $0xac] sm:$0xf] %v10947
        %v10990 = vld [vmem:[%s8] sm:$0xf]
        %v10991 = vld [vmem:[%s8 + $0x4] sm:$0xf]
        %v10992 = vld [vmem:[%s8 + $0x8] sm:$0xf]
        %v10993 = vld [vmem:[%s8 + $0xc] sm:$0xf]
        %v10994 = vld [vmem:[%s8 + $0x10] sm:$0xf]
        %v10995 = vld [vmem:[%s8 + $0x14] sm:$0xf]
        %10996 = vst [vmem:[#allocation3] sm:$0xf] %v10990
        %10997 = vst [vmem:[#allocation3 + $0x4] sm:$0xf] %v10991
        %10998 = vst [vmem:[#allocation3 + $0x40] sm:$0xf] %v10992
        %10999 = vst [vmem:[#allocation3 + $0x44] sm:$0xf] %v10993
        %11000 = vst [vmem:[#allocation3 + $0x80] sm:$0xf] %v10994
        %11001 = vst [vmem:[#allocation3 + $0x84] sm:$0xf] %v10995
        %v11002 = vld [vmem:[#allocation2 + $0x4] sm:$0xf]
        %v11003 = vld [vmem:[#allocation2 + $0x8] sm:$0xf]
        %v11004 = vld [vmem:[#allocation2 + $0xc] sm:$0xf]
        %v11005 = vld [vmem:[#allocation2 + $0x10] sm:$0xf]
        %v11006 = vld [vmem:[#allocation2 + $0x14] sm:$0xf]
        %v11007 = vld [vmem:[#allocation2 + $0x18] sm:$0xf]
        %v11008 = vld [vmem:[#allocation2 + $0x1c] sm:$0xf]
        %v11009 = vld [vmem:[#allocation2 + $0x20] sm:$0xf]
        %v11010 = vld [vmem:[#allocation2 + $0x24] sm:$0xf]
        %v11011 = vld [vmem:[#allocation2 + $0x28] sm:$0xf]
        %v11012 = vld [vmem:[#allocation2 + $0x2c] sm:$0xf]
        %v11013 = vld [vmem:[#allocation2 + $0x30] sm:$0xf]
        %v11014 = vld [vmem:[#allocation2 + $0x34] sm:$0xf]
        %v11015 = vld [vmem:[#allocation2 + $0x38] sm:$0xf]
        %v11016 = vld [vmem:[#allocation2 + $0x3c] sm:$0xf]
        %v11017 = vld [vmem:[#allocation2 + $0x40] sm:$0xf]
        %v11018 = vld [vmem:[#allocation2 + $0x44] sm:$0xf]
        %v11019 = vld [vmem:[#allocation2 + $0x48] sm:$0xf]
        %v11020 = vld [vmem:[#allocation2 + $0x4c] sm:$0xf]
        %v11021 = vld [vmem:[#allocation2 + $0x50] sm:$0xf]
        %v11022 = vld [vmem:[#allocation2 + $0x54] sm:$0xf]
        %v11023 = vld [vmem:[#allocation2 + $0x58] sm:$0xf]
        %v11024 = vld [vmem:[#allocation2 + $0x5c] sm:$0xf]
        %v11025 = vld [vmem:[#allocation2 + $0x60] sm:$0xf]
        %v11026 = vld [vmem:[#allocation2 + $0x64] sm:$0xf]
        %v11027 = vld [vmem:[#allocation2 + $0x68] sm:$0xf]
        %v11028 = vld [vmem:[#allocation2 + $0x6c] sm:$0xf]
        %v11029 = vld [vmem:[#allocation2 + $0x70] sm:$0xf]
        %v11030 = vld [vmem:[#allocation2 + $0x74] sm:$0xf]
        %v11031 = vld [vmem:[#allocation2 + $0x78] sm:$0xf]
        %v11032 = vld [vmem:[#allocation2 + $0x7c] sm:$0xf]
        %v11033 = vld [vmem:[#allocation2 + $0x80] sm:$0xf]
        %v11034 = vld [vmem:[#allocation2 + $0x84] sm:$0xf]
        %v11035 = vld [vmem:[#allocation2 + $0x88] sm:$0xf]
        %v11036 = vld [vmem:[#allocation2 + $0x8c] sm:$0xf]
        %v11037 = vld [vmem:[#allocation2 + $0x90] sm:$0xf]
        %v11038 = vld [vmem:[#allocation2 + $0x94] sm:$0xf]
        %v11039 = vld [vmem:[#allocation2 + $0x98] sm:$0xf]
        %v11040 = vld [vmem:[#allocation2 + $0x9c] sm:$0xf]
        %v11041 = vld [vmem:[#allocation2 + $0xa0] sm:$0xf]
        %v11042 = vld [vmem:[#allocation2 + $0xa4] sm:$0xf]
        %v11043 = vld [vmem:[#allocation2 + $0xa8] sm:$0xf]
        %v11044 = vld [vmem:[#allocation2 + $0xac] sm:$0xf]
        %v11045 = vld [vmem:[#allocation3] sm:$0xf]
        %v11046 = vld [vmem:[#allocation3 + $0x4] sm:$0xf]
        %v11047 = vld [vmem:[#allocation3 + $0x8] sm:$0xf]
        %v11048 = vld [vmem:[#allocation3 + $0xc] sm:$0xf]
        %v11049 = vld [vmem:[#allocation3 + $0x10] sm:$0xf]
        %v11050 = vld [vmem:[#allocation3 + $0x14] sm:$0xf]
        %v11051 = vld [vmem:[#allocation3 + $0x18] sm:$0xf]
        %v11052 = vld [vmem:[#allocation3 + $0x1c] sm:$0xf]
        %v11053 = vld [vmem:[#allocation3 + $0x20] sm:$0xf]
        %v11054 = vld [vmem:[#allocation3 + $0x24] sm:$0xf]
        %v11055 = vld [vmem:[#allocation3 + $0x28] sm:$0xf]
        %v11056 = vld [vmem:[#allocation3 + $0x2c] sm:$0xf]
        %v11057 = vld [vmem:[#allocation3 + $0x30] sm:$0xf]
        %v11058 = vld [vmem:[#allocation3 + $0x34] sm:$0xf]
        %v11059 = vld [vmem:[#allocation3 + $0x38] sm:$0xf]
        %v11060 = vld [vmem:[#allocation3 + $0x3c] sm:$0xf]
        %v11061 = vld [vmem:[#allocation2 + $0xb0] sm:$0xf]
        %v11062 = vld [vmem:[%s997] sm:$0xf]
        %v11063 = vld [vmem:[%s997 + $0x4] sm:$0xf]
        %v11064 = vld [vmem:[%s997 + $0x8] sm:$0xf]
        %v11065 = vld [vmem:[%s997 + $0xc] sm:$0xf]
        %v11066 = vld [vmem:[%s997 + $0x10] sm:$0xf]
        %v11067 = vld [vmem:[%s997 + $0x14] sm:$0xf]
        %v11068 = vld [vmem:[%s997 + $0x18] sm:$0xf]
        %v11069 = vld [vmem:[%s997 + $0x1c] sm:$0xf]
        %v11070 = vld [vmem:[%s997 + $0x20] sm:$0xf]
        %v11071 = vld [vmem:[%s997 + $0x24] sm:$0xf]
        %v11072 = vld [vmem:[%s997 + $0x28] sm:$0xf]
        %v11073 = vld [vmem:[%s997 + $0x2c] sm:$0xf]
        %v11074 = vld [vmem:[%s997 + $0x30] sm:$0xf]
        %v11075 = vld [vmem:[%s997 + $0x34] sm:$0xf]
        %v11076 = vld [vmem:[%s997 + $0x38] sm:$0xf]
        %v11077 = vld [vmem:[%s997 + $0x3c] sm:$0xf]
        %v11121 = vunpack.c.l.b16 %v11003
        %v11122 = vunpack.c.l.b16 %v11004
        %v11123 = vunpack.c.l.b16 %v11005
        %v11124 = vunpack.c.l.b16 %v11006
        %v11125 = vunpack.c.l.b16 %v11007
        %v11126 = vunpack.c.l.b16 %v11008
        %v11127 = vunpack.c.l.b16 %v11009
        %v11128 = vunpack.c.l.b16 %v11010
        %v11129 = vunpack.c.l.b16 %v11011
        %v11130 = vunpack.c.l.b16 %v11012
        %v11131 = vunpack.c.l.b16 %v11013
        %v11132 = vunpack.c.l.b16 %v11014
        %v11133 = vunpack.c.l.b16 %v11015
        %v11134 = vunpack.c.l.b16 %v11016
        %v11135 = vunpack.c.l.b16 %v11017
        %v11136 = vunpack.c.l.b16 %v11018
        %v11137 = vunpack.c.l.b16 %v11019
        %v11138 = vunpack.c.l.b16 %v11020
        %v11139 = vunpack.c.l.b16 %v11021
        %v11140 = vunpack.c.l.b16 %v11022
        %v11141 = vunpack.c.l.b16 %v11023
        %v11142 = vunpack.c.l.b16 %v11024
        %v11143 = vunpack.c.l.b16 %v11025
        %v11144 = vunpack.c.l.b16 %v11026
        %v11145 = vunpack.c.l.b16 %v11027
        %v11146 = vunpack.c.l.b16 %v11028
        %v11147 = vunpack.c.l.b16 %v11029
        %v11148 = vunpack.c.l.b16 %v11030
        %v11149 = vunpack.c.l.b16 %v11031
        %v11150 = vunpack.c.l.b16 %v11032
        %v11151 = vunpack.c.l.b16 %v11033
        %v11152 = vunpack.c.l.b16 %v11034
        %v11153 = vunpack.c.l.b16 %v11035
        %v11154 = vunpack.c.l.b16 %v11036
        %v11155 = vunpack.c.l.b16 %v11037
        %v11156 = vunpack.c.l.b16 %v11038
        %v11157 = vunpack.c.l.b16 %v11039
        %v11158 = vunpack.c.l.b16 %v11040
        %v11159 = vunpack.c.l.b16 %v11041
        %v11160 = vunpack.c.l.b16 %v11042
        %v11161 = vunpack.c.l.b16 %v11043
        %v11162 = vunpack.c.l.b16 %v11044
        %v11163 = vunpack.c.l.b16 %v11061
        %v11164 = vpack.c.b16 %v11122, %v11121
        %v11165 = vpack.c.b16 %v11124, %v11123
        %v11166 = vpack.c.b16 %v11126, %v11125
        %v11167 = vpack.c.b16 %v11128, %v11127
        %v11168 = vpack.c.b16 %v11130, %v11129
        %v11169 = vpack.c.b16 %v11132, %v11131
        %v11170 = vpack.c.b16 %v11134, %v11133
        %v11171 = vpack.c.b16 %v11136, %v11135
        %v11172 = vpack.c.b16 %v11138, %v11137
        %v11173 = vpack.c.b16 %v11140, %v11139
        %v11174 = vpack.c.b16 %v11142, %v11141
        %v11175 = vpack.c.b16 %v11144, %v11143
        %v11176 = vpack.c.b16 %v11146, %v11145
        %v11177 = vpack.c.b16 %v11148, %v11147
        %v11178 = vpack.c.b16 %v11150, %v11149
        %v11179 = vpack.c.b16 %v11152, %v11151
        %v11180 = vpack.c.b16 %v11154, %v11153
        %v11181 = vpack.c.b16 %v11156, %v11155
        %v11182 = vpack.c.b16 %v11158, %v11157
        %v11183 = vpack.c.b16 %v11160, %v11159
        %v11184 = vpack.c.b16 %v11162, %v11161
        %v11185 = vpack.c.b16 %v11163, %v11163
        %v11224 = vunpack.c.l.b16 %v11062
        %v11225 = vunpack.c.l.b16 %v11063
        %v11226 = vunpack.c.l.b16 %v11064
        %v11227 = vunpack.c.l.b16 %v11065
        %v11228 = vunpack.c.l.b16 %v11066
        %v11229 = vunpack.c.l.b16 %v11067
        %v11230 = vunpack.c.l.b16 %v11068
        %v11231 = vunpack.c.l.b16 %v11069
        %v11232 = vunpack.c.l.b16 %v11070
        %v11233 = vunpack.c.l.b16 %v11071
        %v11234 = vunpack.c.l.b16 %v11072
        %v11235 = vunpack.c.l.b16 %v11073
        %v11236 = vunpack.c.l.b16 %v11074
        %v11237 = vunpack.c.l.b16 %v11075
        %v11238 = vunpack.c.l.b16 %v11076
        %v11239 = vunpack.c.l.b16 %v11077
        %v11240 = vpack.c.b16 %v11225, %v11224
        %v11241 = vpack.c.b16 %v11227, %v11226
        %v11242 = vpack.c.b16 %v11229, %v11228
        %v11243 = vpack.c.b16 %v11231, %v11230
        %v11244 = vpack.c.b16 %v11233, %v11232
        %v11245 = vpack.c.b16 %v11235, %v11234
        %v11246 = vpack.c.b16 %v11237, %v11236
        %v11247 = vpack.c.b16 %v11239, %v11238
        %11256 = vmatpush.bf16.msra.mxu0 %v11247
        %11257 = vmatpush.bf16.msra.mxu0 %v11246
        %11258 = vmatpush.bf16.msra.mxu0 %v11245
        %11259 = vmatpush.bf16.msra.mxu0 %v11244
        %11260 = vmatpush.bf16.msra.mxu0 %v11243
        %11261 = vmatpush.bf16.msra.mxu0 %v11242
        %11262 = vmatpush.bf16.msra.mxu0 %v11241
        %11263 = vmatpush.bf16.msra.mxu0 %v11240
        %11264 = vmatmul.bf16.gmra.mxu0 %v11164
        %v11265 = vpop.f32.mrf.mxu0
        %v11266 = vadd.f32 0.0, %v11265
        %v11267 = vpop.f32.mrf.mxu0
        %v11268 = vadd.f32 0.0, %v11267
        %11269 = vmatmul.bf16.gmra.mxu0 %v11165
        %v11270 = vpop.f32.mrf.mxu0
        %v11271 = vadd.f32 0.0, %v11270
        %v11272 = vpop.f32.mrf.mxu0
        %v11273 = vadd.f32 0.0, %v11272
        %11274 = vmatmul.bf16.gmra.mxu0 %v11166
        %v11275 = vpop.f32.mrf.mxu0
        %v11276 = vadd.f32 0.0, %v11275
        %v11277 = vpop.f32.mrf.mxu0
        %v11278 = vadd.f32 0.0, %v11277
        %11279 = vmatmul.bf16.gmra.mxu0 %v11167
        %v11280 = vpop.f32.mrf.mxu0
        %v11281 = vadd.f32 0.0, %v11280
        %v11282 = vpop.f32.mrf.mxu0
        %v11283 = vadd.f32 0.0, %v11282
        %11284 = vmatmul.bf16.gmra.mxu0 %v11168
        %v11285 = vpop.f32.mrf.mxu0
        %v11286 = vadd.f32 0.0, %v11285
        %v11287 = vpop.f32.mrf.mxu0
        %v11288 = vadd.f32 0.0, %v11287
        %11289 = vmatmul.bf16.gmra.mxu0 %v11169
        %v11290 = vpop.f32.mrf.mxu0
        %v11291 = vadd.f32 0.0, %v11290
        %v11292 = vpop.f32.mrf.mxu0
        %v11293 = vadd.f32 0.0, %v11292
        %11294 = vmatmul.bf16.gmra.mxu0 %v11170
        %v11295 = vpop.f32.mrf.mxu0
        %v11296 = vadd.f32 0.0, %v11295
        %v11297 = vpop.f32.mrf.mxu0
        %v11298 = vadd.f32 0.0, %v11297
        %11299 = vmatmul.bf16.gmra.mxu0 %v11171
        %v11300 = vpop.f32.mrf.mxu0
        %v11301 = vadd.f32 0.0, %v11300
        %v11302 = vpop.f32.mrf.mxu0
        %v11303 = vadd.f32 0.0, %v11302
        %11304 = vmatmul.bf16.gmra.mxu0 %v11172
        %v11305 = vpop.f32.mrf.mxu0
        %v11306 = vadd.f32 0.0, %v11305
        %v11307 = vpop.f32.mrf.mxu0
        %v11308 = vadd.f32 0.0, %v11307
        %11309 = vmatmul.bf16.gmra.mxu0 %v11173
        %v11310 = vpop.f32.mrf.mxu0
        %v11311 = vadd.f32 0.0, %v11310
        %v11312 = vpop.f32.mrf.mxu0
        %v11313 = vadd.f32 0.0, %v11312
        %11314 = vmatmul.bf16.gmra.mxu0 %v11174
        %v11315 = vpop.f32.mrf.mxu0
        %v11316 = vadd.f32 0.0, %v11315
        %v11317 = vpop.f32.mrf.mxu0
        %v11318 = vadd.f32 0.0, %v11317
        %11319 = vmatmul.bf16.gmra.mxu0 %v11175
        %v11320 = vpop.f32.mrf.mxu0
        %v11321 = vadd.f32 0.0, %v11320
        %v11322 = vpop.f32.mrf.mxu0
        %v11323 = vadd.f32 0.0, %v11322
        %11324 = vmatmul.bf16.gmra.mxu0 %v11176
        %v11325 = vpop.f32.mrf.mxu0
        %v11326 = vadd.f32 0.0, %v11325
        %v11327 = vpop.f32.mrf.mxu0
        %v11328 = vadd.f32 0.0, %v11327
        %11329 = vmatmul.bf16.gmra.mxu0 %v11177
        %v11330 = vpop.f32.mrf.mxu0
        %v11331 = vadd.f32 0.0, %v11330
        %v11332 = vpop.f32.mrf.mxu0
        %v11333 = vadd.f32 0.0, %v11332
        %11334 = vmatmul.bf16.gmra.mxu0 %v11178
        %v11335 = vpop.f32.mrf.mxu0
        %v11336 = vadd.f32 0.0, %v11335
        %v11337 = vpop.f32.mrf.mxu0
        %v11338 = vadd.f32 0.0, %v11337
        %11339 = vmatmul.bf16.gmra.mxu0 %v11179
        %v11340 = vpop.f32.mrf.mxu0
        %v11341 = vadd.f32 0.0, %v11340
        %v11342 = vpop.f32.mrf.mxu0
        %v11343 = vadd.f32 0.0, %v11342
        %11344 = vmatmul.bf16.gmra.mxu0 %v11180
        %v11345 = vpop.f32.mrf.mxu0
        %v11346 = vadd.f32 0.0, %v11345
        %v11347 = vpop.f32.mrf.mxu0
        %v11348 = vadd.f32 0.0, %v11347
        %11349 = vmatmul.bf16.gmra.mxu0 %v11181
        %v11350 = vpop.f32.mrf.mxu0
        %v11351 = vadd.f32 0.0, %v11350
        %v11352 = vpop.f32.mrf.mxu0
        %v11353 = vadd.f32 0.0, %v11352
        %11354 = vmatmul.bf16.gmra.mxu0 %v11182
        %v11355 = vpop.f32.mrf.mxu0
        %v11356 = vadd.f32 0.0, %v11355
        %v11357 = vpop.f32.mrf.mxu0
        %v11358 = vadd.f32 0.0, %v11357
        %11359 = vmatmul.bf16.gmra.mxu0 %v11183
        %v11360 = vpop.f32.mrf.mxu0
        %v11361 = vadd.f32 0.0, %v11360
        %v11362 = vpop.f32.mrf.mxu0
        %v11363 = vadd.f32 0.0, %v11362
        %11364 = vmatmul.bf16.gmra.mxu0 %v11184
        %v11365 = vpop.f32.mrf.mxu0
        %v11366 = vadd.f32 0.0, %v11365
        %v11367 = vpop.f32.mrf.mxu0
        %v11368 = vadd.f32 0.0, %v11367
        %11369 = vmatmul.bf16.gmra.mxu0 %v11185
        %v11370 = vpop.f32.mrf.mxu0
        %v11371 = vadd.f32 0.0, %v11370
        %v11372 = vpop.f32.mrf.mxu0
        %11373 = vdwg.mxu0
        %v11375 = vunpack.c.l.b16 %v11002
        %v11376 = vpack.c.b16 %v11121, %v11375
        %v11377 = vpack.c.b16 %v11123, %v11122
        %v11378 = vpack.c.b16 %v11125, %v11124
        %v11379 = vpack.c.b16 %v11127, %v11126
        %v11380 = vpack.c.b16 %v11129, %v11128
        %v11381 = vpack.c.b16 %v11131, %v11130
        %v11382 = vpack.c.b16 %v11133, %v11132
        %v11383 = vpack.c.b16 %v11135, %v11134
        %v11384 = vpack.c.b16 %v11137, %v11136
        %v11385 = vpack.c.b16 %v11139, %v11138
        %v11386 = vpack.c.b16 %v11141, %v11140
        %v11387 = vpack.c.b16 %v11143, %v11142
        %v11388 = vpack.c.b16 %v11145, %v11144
        %v11389 = vpack.c.b16 %v11147, %v11146
        %v11390 = vpack.c.b16 %v11149, %v11148
        %v11391 = vpack.c.b16 %v11151, %v11150
        %v11392 = vpack.c.b16 %v11153, %v11152
        %v11393 = vpack.c.b16 %v11155, %v11154
        %v11394 = vpack.c.b16 %v11157, %v11156
        %v11395 = vpack.c.b16 %v11159, %v11158
        %v11396 = vpack.c.b16 %v11161, %v11160
        %v11397 = vpack.c.b16 %v11162, %v11162
        %v11436 = vunpack.c.l.b16 %v11045
        %v11437 = vunpack.c.l.b16 %v11046
        %v11438 = vunpack.c.l.b16 %v11047
        %v11439 = vunpack.c.l.b16 %v11048
        %v11440 = vunpack.c.l.b16 %v11049
        %v11441 = vunpack.c.l.b16 %v11050
        %v11442 = vunpack.c.l.b16 %v11051
        %v11443 = vunpack.c.l.b16 %v11052
        %v11444 = vunpack.c.l.b16 %v11053
        %v11445 = vunpack.c.l.b16 %v11054
        %v11446 = vunpack.c.l.b16 %v11055
        %v11447 = vunpack.c.l.b16 %v11056
        %v11448 = vunpack.c.l.b16 %v11057
        %v11449 = vunpack.c.l.b16 %v11058
        %v11450 = vunpack.c.l.b16 %v11059
        %v11451 = vunpack.c.l.b16 %v11060
        %v11452 = vpack.c.b16 %v11437, %v11436
        %v11453 = vpack.c.b16 %v11439, %v11438
        %v11454 = vpack.c.b16 %v11441, %v11440
        %v11455 = vpack.c.b16 %v11443, %v11442
        %v11456 = vpack.c.b16 %v11445, %v11444
        %v11457 = vpack.c.b16 %v11447, %v11446
        %v11458 = vpack.c.b16 %v11449, %v11448
        %v11459 = vpack.c.b16 %v11451, %v11450
        %11468 = vmatpush.bf16.msra.mxu0 %v11459
        %11469 = vmatpush.bf16.msra.mxu0 %v11458
        %11470 = vmatpush.bf16.msra.mxu0 %v11457
        %11471 = vmatpush.bf16.msra.mxu0 %v11456
        %11472 = vmatpush.bf16.msra.mxu0 %v11455
        %11473 = vmatpush.bf16.msra.mxu0 %v11454
        %11474 = vmatpush.bf16.msra.mxu0 %v11453
        %11475 = vmatpush.bf16.msra.mxu0 %v11452
        %11476 = vmatmul.bf16.gmra.mxu0 %v11376
        %v11477 = vpop.f32.mrf.mxu0
        %v11478 = vadd.f32 %v11266, %v11477
        %v11479 = vpop.f32.mrf.mxu0
        %v11480 = vadd.f32 %v11268, %v11479
        %11481 = vmatmul.bf16.gmra.mxu0 %v11377
        %v11482 = vpop.f32.mrf.mxu0
        %v11483 = vadd.f32 %v11271, %v11482
        %v11484 = vpop.f32.mrf.mxu0
        %v11485 = vadd.f32 %v11273, %v11484
        %11486 = vmatmul.bf16.gmra.mxu0 %v11378
        %v11487 = vpop.f32.mrf.mxu0
        %v11488 = vadd.f32 %v11276, %v11487
        %v11489 = vpop.f32.mrf.mxu0
        %v11490 = vadd.f32 %v11278, %v11489
        %11491 = vmatmul.bf16.gmra.mxu0 %v11379
        %v11492 = vpop.f32.mrf.mxu0
        %v11493 = vadd.f32 %v11281, %v11492
        %v11494 = vpop.f32.mrf.mxu0
        %v11495 = vadd.f32 %v11283, %v11494
        %11496 = vmatmul.bf16.gmra.mxu0 %v11380
        %v11497 = vpop.f32.mrf.mxu0
        %v11498 = vadd.f32 %v11286, %v11497
        %v11499 = vpop.f32.mrf.mxu0
        %v11500 = vadd.f32 %v11288, %v11499
        %11501 = vmatmul.bf16.gmra.mxu0 %v11381
        %v11502 = vpop.f32.mrf.mxu0
        %v11503 = vadd.f32 %v11291, %v11502
        %v11504 = vpop.f32.mrf.mxu0
        %v11505 = vadd.f32 %v11293, %v11504
        %11506 = vmatmul.bf16.gmra.mxu0 %v11382
        %v11507 = vpop.f32.mrf.mxu0
        %v11508 = vadd.f32 %v11296, %v11507
        %v11509 = vpop.f32.mrf.mxu0
        %v11510 = vadd.f32 %v11298, %v11509
        %11511 = vmatmul.bf16.gmra.mxu0 %v11383
        %v11512 = vpop.f32.mrf.mxu0
        %v11513 = vadd.f32 %v11301, %v11512
        %v11514 = vpop.f32.mrf.mxu0
        %v11515 = vadd.f32 %v11303, %v11514
        %11516 = vmatmul.bf16.gmra.mxu0 %v11384
        %v11517 = vpop.f32.mrf.mxu0
        %v11518 = vadd.f32 %v11306, %v11517
        %v11519 = vpop.f32.mrf.mxu0
        %v11520 = vadd.f32 %v11308, %v11519
        %11521 = vmatmul.bf16.gmra.mxu0 %v11385
        %v11522 = vpop.f32.mrf.mxu0
        %v11523 = vadd.f32 %v11311, %v11522
        %v11524 = vpop.f32.mrf.mxu0
        %v11525 = vadd.f32 %v11313, %v11524
        %11526 = vmatmul.bf16.gmra.mxu0 %v11386
        %v11527 = vpop.f32.mrf.mxu0
        %v11528 = vadd.f32 %v11316, %v11527
        %v11529 = vpop.f32.mrf.mxu0
        %v11530 = vadd.f32 %v11318, %v11529
        %11531 = vmatmul.bf16.gmra.mxu0 %v11387
        %v11532 = vpop.f32.mrf.mxu0
        %v11533 = vadd.f32 %v11321, %v11532
        %v11534 = vpop.f32.mrf.mxu0
        %v11535 = vadd.f32 %v11323, %v11534
        %11536 = vmatmul.bf16.gmra.mxu0 %v11388
        %v11537 = vpop.f32.mrf.mxu0
        %v11538 = vadd.f32 %v11326, %v11537
        %v11539 = vpop.f32.mrf.mxu0
        %v11540 = vadd.f32 %v11328, %v11539
        %11541 = vmatmul.bf16.gmra.mxu0 %v11389
        %v11542 = vpop.f32.mrf.mxu0
        %v11543 = vadd.f32 %v11331, %v11542
        %v11544 = vpop.f32.mrf.mxu0
        %v11545 = vadd.f32 %v11333, %v11544
        %11546 = vmatmul.bf16.gmra.mxu0 %v11390
        %v11547 = vpop.f32.mrf.mxu0
        %v11548 = vadd.f32 %v11336, %v11547
        %v11549 = vpop.f32.mrf.mxu0
        %v11550 = vadd.f32 %v11338, %v11549
        %11551 = vmatmul.bf16.gmra.mxu0 %v11391
        %v11552 = vpop.f32.mrf.mxu0
        %v11553 = vadd.f32 %v11341, %v11552
        %v11554 = vpop.f32.mrf.mxu0
        %v11555 = vadd.f32 %v11343, %v11554
        %11556 = vmatmul.bf16.gmra.mxu0 %v11392
        %v11557 = vpop.f32.mrf.mxu0
        %v11558 = vadd.f32 %v11346, %v11557
        %v11559 = vpop.f32.mrf.mxu0
        %v11560 = vadd.f32 %v11348, %v11559
        %11561 = vmatmul.bf16.gmra.mxu0 %v11393
        %v11562 = vpop.f32.mrf.mxu0
        %v11563 = vadd.f32 %v11351, %v11562
        %v11564 = vpop.f32.mrf.mxu0
        %v11565 = vadd.f32 %v11353, %v11564
        %11566 = vmatmul.bf16.gmra.mxu0 %v11394
        %v11567 = vpop.f32.mrf.mxu0
        %v11568 = vadd.f32 %v11356, %v11567
        %v11569 = vpop.f32.mrf.mxu0
        %v11570 = vadd.f32 %v11358, %v11569
        %11571 = vmatmul.bf16.gmra.mxu0 %v11395
        %v11572 = vpop.f32.mrf.mxu0
        %v11573 = vadd.f32 %v11361, %v11572
        %v11574 = vpop.f32.mrf.mxu0
        %v11575 = vadd.f32 %v11363, %v11574
        %11576 = vmatmul.bf16.gmra.mxu0 %v11396
        %v11577 = vpop.f32.mrf.mxu0
        %v11578 = vadd.f32 %v11366, %v11577
        %v11579 = vpop.f32.mrf.mxu0
        %v11580 = vadd.f32 %v11368, %v11579
        %11581 = vmatmul.bf16.gmra.mxu0 %v11397
        %v11582 = vpop.f32.mrf.mxu0
        %v11583 = vadd.f32 %v11371, %v11582
        %v11584 = vpop.f32.mrf.mxu0
        %11585 = vdwg.mxu0
        %v11586 = vld [vmem:[#allocation2 + $0xc] sm:$0xf]
        %v11587 = vld [vmem:[#allocation2 + $0x10] sm:$0xf]
        %v11588 = vld [vmem:[#allocation2 + $0x14] sm:$0xf]
        %v11589 = vld [vmem:[#allocation2 + $0x18] sm:$0xf]
        %v11590 = vld [vmem:[#allocation2 + $0x1c] sm:$0xf]
        %v11591 = vld [vmem:[#allocation2 + $0x20] sm:$0xf]
        %v11592 = vld [vmem:[#allocation2 + $0x24] sm:$0xf]
        %v11593 = vld [vmem:[#allocation2 + $0x28] sm:$0xf]
        %v11594 = vld [vmem:[#allocation2 + $0x2c] sm:$0xf]
        %v11595 = vld [vmem:[#allocation2 + $0x30] sm:$0xf]
        %v11596 = vld [vmem:[#allocation2 + $0x34] sm:$0xf]
        %v11597 = vld [vmem:[#allocation2 + $0x38] sm:$0xf]
        %v11598 = vld [vmem:[#allocation2 + $0x3c] sm:$0xf]
        %v11599 = vld [vmem:[#allocation2 + $0x40] sm:$0xf]
        %v11600 = vld [vmem:[#allocation2 + $0x44] sm:$0xf]
        %v11601 = vld [vmem:[#allocation2 + $0x48] sm:$0xf]
        %v11602 = vld [vmem:[#allocation2 + $0x4c] sm:$0xf]
        %v11603 = vld [vmem:[#allocation2 + $0x50] sm:$0xf]
        %v11604 = vld [vmem:[#allocation2 + $0x54] sm:$0xf]
        %v11605 = vld [vmem:[#allocation2 + $0x58] sm:$0xf]
        %v11606 = vld [vmem:[#allocation2 + $0x5c] sm:$0xf]
        %v11607 = vld [vmem:[#allocation2 + $0x60] sm:$0xf]
        %v11608 = vld [vmem:[#allocation2 + $0x64] sm:$0xf]
        %v11609 = vld [vmem:[#allocation2 + $0x68] sm:$0xf]
        %v11610 = vld [vmem:[#allocation2 + $0x6c] sm:$0xf]
        %v11611 = vld [vmem:[#allocation2 + $0x70] sm:$0xf]
        %v11612 = vld [vmem:[#allocation2 + $0x74] sm:$0xf]
        %v11613 = vld [vmem:[#allocation2 + $0x78] sm:$0xf]
        %v11614 = vld [vmem:[#allocation2 + $0x7c] sm:$0xf]
        %v11615 = vld [vmem:[#allocation2 + $0x80] sm:$0xf]
        %v11616 = vld [vmem:[#allocation2 + $0x84] sm:$0xf]
        %v11617 = vld [vmem:[#allocation2 + $0x88] sm:$0xf]
        %v11618 = vld [vmem:[#allocation2 + $0x8c] sm:$0xf]
        %v11619 = vld [vmem:[#allocation2 + $0x90] sm:$0xf]
        %v11620 = vld [vmem:[#allocation2 + $0x94] sm:$0xf]
        %v11621 = vld [vmem:[#allocation2 + $0x98] sm:$0xf]
        %v11622 = vld [vmem:[#allocation2 + $0x9c] sm:$0xf]
        %v11623 = vld [vmem:[#allocation2 + $0xa0] sm:$0xf]
        %v11624 = vld [vmem:[#allocation2 + $0xa4] sm:$0xf]
        %v11625 = vld [vmem:[#allocation2 + $0xa8] sm:$0xf]
        %v11626 = vld [vmem:[#allocation2 + $0xac] sm:$0xf]
        %v11627 = vld [vmem:[#allocation2 + $0xb0] sm:$0xf]
        %v11628 = vld [vmem:[#allocation2 + $0xb4] sm:$0xf]
        %v11629 = vld [vmem:[%s1764] sm:$0xf]
        %v11630 = vld [vmem:[%s1764 + $0x4] sm:$0xf]
        %v11631 = vld [vmem:[%s1764 + $0x8] sm:$0xf]
        %v11632 = vld [vmem:[%s1764 + $0xc] sm:$0xf]
        %v11633 = vld [vmem:[%s1764 + $0x10] sm:$0xf]
        %v11634 = vld [vmem:[%s1764 + $0x14] sm:$0xf]
        %v11635 = vld [vmem:[%s1764 + $0x18] sm:$0xf]
        %v11636 = vld [vmem:[%s1764 + $0x1c] sm:$0xf]
        %v11637 = vld [vmem:[%s1764 + $0x20] sm:$0xf]
        %v11638 = vld [vmem:[%s1764 + $0x24] sm:$0xf]
        %v11639 = vld [vmem:[%s1764 + $0x28] sm:$0xf]
        %v11640 = vld [vmem:[%s1764 + $0x2c] sm:$0xf]
        %v11641 = vld [vmem:[%s1764 + $0x30] sm:$0xf]
        %v11642 = vld [vmem:[%s1764 + $0x34] sm:$0xf]
        %v11643 = vld [vmem:[%s1764 + $0x38] sm:$0xf]
        %v11644 = vld [vmem:[%s1764 + $0x3c] sm:$0xf]
        %v11688 = vunpack.c.l.b16 %v11586
        %v11689 = vunpack.c.l.b16 %v11587
        %v11690 = vunpack.c.l.b16 %v11588
        %v11691 = vunpack.c.l.b16 %v11589
        %v11692 = vunpack.c.l.b16 %v11590
        %v11693 = vunpack.c.l.b16 %v11591
        %v11694 = vunpack.c.l.b16 %v11592
        %v11695 = vunpack.c.l.b16 %v11593
        %v11696 = vunpack.c.l.b16 %v11594
        %v11697 = vunpack.c.l.b16 %v11595
        %v11698 = vunpack.c.l.b16 %v11596
        %v11699 = vunpack.c.l.b16 %v11597
        %v11700 = vunpack.c.l.b16 %v11598
        %v11701 = vunpack.c.l.b16 %v11599
        %v11702 = vunpack.c.l.b16 %v11600
        %v11703 = vunpack.c.l.b16 %v11601
        %v11704 = vunpack.c.l.b16 %v11602
        %v11705 = vunpack.c.l.b16 %v11603
        %v11706 = vunpack.c.l.b16 %v11604
        %v11707 = vunpack.c.l.b16 %v11605
        %v11708 = vunpack.c.l.b16 %v11606
        %v11709 = vunpack.c.l.b16 %v11607
        %v11710 = vunpack.c.l.b16 %v11608
        %v11711 = vunpack.c.l.b16 %v11609
        %v11712 = vunpack.c.l.b16 %v11610
        %v11713 = vunpack.c.l.b16 %v11611
        %v11714 = vunpack.c.l.b16 %v11612
        %v11715 = vunpack.c.l.b16 %v11613
        %v11716 = vunpack.c.l.b16 %v11614
        %v11717 = vunpack.c.l.b16 %v11615
        %v11718 = vunpack.c.l.b16 %v11616
        %v11719 = vunpack.c.l.b16 %v11617
        %v11720 = vunpack.c.l.b16 %v11618
        %v11721 = vunpack.c.l.b16 %v11619
        %v11722 = vunpack.c.l.b16 %v11620
        %v11723 = vunpack.c.l.b16 %v11621
        %v11724 = vunpack.c.l.b16 %v11622
        %v11725 = vunpack.c.l.b16 %v11623
        %v11726 = vunpack.c.l.b16 %v11624
        %v11727 = vunpack.c.l.b16 %v11625
        %v11728 = vunpack.c.l.b16 %v11626
        %v11729 = vunpack.c.l.b16 %v11627
        %v11730 = vunpack.c.l.b16 %v11628
        %v11731 = vpack.c.b16 %v11689, %v11688
        %v11732 = vpack.c.b16 %v11691, %v11690
        %v11733 = vpack.c.b16 %v11693, %v11692
        %v11734 = vpack.c.b16 %v11695, %v11694
        %v11735 = vpack.c.b16 %v11697, %v11696
        %v11736 = vpack.c.b16 %v11699, %v11698
        %v11737 = vpack.c.b16 %v11701, %v11700
        %v11738 = vpack.c.b16 %v11703, %v11702
        %v11739 = vpack.c.b16 %v11705, %v11704
        %v11740 = vpack.c.b16 %v11707, %v11706
        %v11741 = vpack.c.b16 %v11709, %v11708
        %v11742 = vpack.c.b16 %v11711, %v11710
        %v11743 = vpack.c.b16 %v11713, %v11712
        %v11744 = vpack.c.b16 %v11715, %v11714
        %v11745 = vpack.c.b16 %v11717, %v11716
        %v11746 = vpack.c.b16 %v11719, %v11718
        %v11747 = vpack.c.b16 %v11721, %v11720
        %v11748 = vpack.c.b16 %v11723, %v11722
        %v11749 = vpack.c.b16 %v11725, %v11724
        %v11750 = vpack.c.b16 %v11727, %v11726
        %v11751 = vpack.c.b16 %v11729, %v11728
        %v11752 = vpack.c.b16 %v11730, %v11730
        %v11791 = vunpack.c.l.b16 %v11629
        %v11792 = vunpack.c.l.b16 %v11630
        %v11793 = vunpack.c.l.b16 %v11631
        %v11794 = vunpack.c.l.b16 %v11632
        %v11795 = vunpack.c.l.b16 %v11633
        %v11796 = vunpack.c.l.b16 %v11634
        %v11797 = vunpack.c.l.b16 %v11635
        %v11798 = vunpack.c.l.b16 %v11636
        %v11799 = vunpack.c.l.b16 %v11637
        %v11800 = vunpack.c.l.b16 %v11638
        %v11801 = vunpack.c.l.b16 %v11639
        %v11802 = vunpack.c.l.b16 %v11640
        %v11803 = vunpack.c.l.b16 %v11641
        %v11804 = vunpack.c.l.b16 %v11642
        %v11805 = vunpack.c.l.b16 %v11643
        %v11806 = vunpack.c.l.b16 %v11644
        %v11807 = vpack.c.b16 %v11792, %v11791
        %v11808 = vpack.c.b16 %v11794, %v11793
        %v11809 = vpack.c.b16 %v11796, %v11795
        %v11810 = vpack.c.b16 %v11798, %v11797
        %v11811 = vpack.c.b16 %v11800, %v11799
        %v11812 = vpack.c.b16 %v11802, %v11801
        %v11813 = vpack.c.b16 %v11804, %v11803
        %v11814 = vpack.c.b16 %v11806, %v11805
        %11823 = vmatpush.bf16.msra.mxu0 %v11814
        %11824 = vmatpush.bf16.msra.mxu0 %v11813
        %11825 = vmatpush.bf16.msra.mxu0 %v11812
        %11826 = vmatpush.bf16.msra.mxu0 %v11811
        %11827 = vmatpush.bf16.msra.mxu0 %v11810
        %11828 = vmatpush.bf16.msra.mxu0 %v11809
        %11829 = vmatpush.bf16.msra.mxu0 %v11808
        %11830 = vmatpush.bf16.msra.mxu0 %v11807
        %11831 = vmatmul.bf16.gmra.mxu0 %v11731
        %v11832 = vpop.f32.mrf.mxu0
        %v11833 = vadd.f32 0.0, %v11832
        %v11834 = vpop.f32.mrf.mxu0
        %v11835 = vadd.f32 0.0, %v11834
        %11836 = vmatmul.bf16.gmra.mxu0 %v11732
        %v11837 = vpop.f32.mrf.mxu0
        %v11838 = vadd.f32 0.0, %v11837
        %v11839 = vpop.f32.mrf.mxu0
        %v11840 = vadd.f32 0.0, %v11839
        %11841 = vmatmul.bf16.gmra.mxu0 %v11733
        %v11842 = vpop.f32.mrf.mxu0
        %v11843 = vadd.f32 0.0, %v11842
        %v11844 = vpop.f32.mrf.mxu0
        %v11845 = vadd.f32 0.0, %v11844
        %11846 = vmatmul.bf16.gmra.mxu0 %v11734
        %v11847 = vpop.f32.mrf.mxu0
        %v11848 = vadd.f32 0.0, %v11847
        %v11849 = vpop.f32.mrf.mxu0
        %v11850 = vadd.f32 0.0, %v11849
        %11851 = vmatmul.bf16.gmra.mxu0 %v11735
        %v11852 = vpop.f32.mrf.mxu0
        %v11853 = vadd.f32 0.0, %v11852
        %v11854 = vpop.f32.mrf.mxu0
        %v11855 = vadd.f32 0.0, %v11854
        %11856 = vmatmul.bf16.gmra.mxu0 %v11736
        %v11857 = vpop.f32.mrf.mxu0
        %v11858 = vadd.f32 0.0, %v11857
        %v11859 = vpop.f32.mrf.mxu0
        %v11860 = vadd.f32 0.0, %v11859
        %11861 = vmatmul.bf16.gmra.mxu0 %v11737
        %v11862 = vpop.f32.mrf.mxu0
        %v11863 = vadd.f32 0.0, %v11862
        %v11864 = vpop.f32.mrf.mxu0
        %v11865 = vadd.f32 0.0, %v11864
        %11866 = vmatmul.bf16.gmra.mxu0 %v11738
        %v11867 = vpop.f32.mrf.mxu0
        %v11868 = vadd.f32 0.0, %v11867
        %v11869 = vpop.f32.mrf.mxu0
        %v11870 = vadd.f32 0.0, %v11869
        %11871 = vmatmul.bf16.gmra.mxu0 %v11739
        %v11872 = vpop.f32.mrf.mxu0
        %v11873 = vadd.f32 0.0, %v11872
        %v11874 = vpop.f32.mrf.mxu0
        %v11875 = vadd.f32 0.0, %v11874
        %11876 = vmatmul.bf16.gmra.mxu0 %v11740
        %v11877 = vpop.f32.mrf.mxu0
        %v11878 = vadd.f32 0.0, %v11877
        %v11879 = vpop.f32.mrf.mxu0
        %v11880 = vadd.f32 0.0, %v11879
        %11881 = vmatmul.bf16.gmra.mxu0 %v11741
        %v11882 = vpop.f32.mrf.mxu0
        %v11883 = vadd.f32 0.0, %v11882
        %v11884 = vpop.f32.mrf.mxu0
        %v11885 = vadd.f32 0.0, %v11884
        %11886 = vmatmul.bf16.gmra.mxu0 %v11742
        %v11887 = vpop.f32.mrf.mxu0
        %v11888 = vadd.f32 0.0, %v11887
        %v11889 = vpop.f32.mrf.mxu0
        %v11890 = vadd.f32 0.0, %v11889
        %11891 = vmatmul.bf16.gmra.mxu0 %v11743
        %v11892 = vpop.f32.mrf.mxu0
        %v11893 = vadd.f32 0.0, %v11892
        %v11894 = vpop.f32.mrf.mxu0
        %v11895 = vadd.f32 0.0, %v11894
        %11896 = vmatmul.bf16.gmra.mxu0 %v11744
        %v11897 = vpop.f32.mrf.mxu0
        %v11898 = vadd.f32 0.0, %v11897
        %v11899 = vpop.f32.mrf.mxu0
        %v11900 = vadd.f32 0.0, %v11899
        %11901 = vmatmul.bf16.gmra.mxu0 %v11745
        %v11902 = vpop.f32.mrf.mxu0
        %v11903 = vadd.f32 0.0, %v11902
        %v11904 = vpop.f32.mrf.mxu0
        %v11905 = vadd.f32 0.0, %v11904
        %11906 = vmatmul.bf16.gmra.mxu0 %v11746
        %v11907 = vpop.f32.mrf.mxu0
        %v11908 = vadd.f32 0.0, %v11907
        %v11909 = vpop.f32.mrf.mxu0
        %v11910 = vadd.f32 0.0, %v11909
        %11911 = vmatmul.bf16.gmra.mxu0 %v11747
        %v11912 = vpop.f32.mrf.mxu0
        %v11913 = vadd.f32 0.0, %v11912
        %v11914 = vpop.f32.mrf.mxu0
        %v11915 = vadd.f32 0.0, %v11914
        %11916 = vmatmul.bf16.gmra.mxu0 %v11748
        %v11917 = vpop.f32.mrf.mxu0
        %v11918 = vadd.f32 0.0, %v11917
        %v11919 = vpop.f32.mrf.mxu0
        %v11920 = vadd.f32 0.0, %v11919
        %11921 = vmatmul.bf16.gmra.mxu0 %v11749
        %v11922 = vpop.f32.mrf.mxu0
        %v11923 = vadd.f32 0.0, %v11922
        %v11924 = vpop.f32.mrf.mxu0
        %v11925 = vadd.f32 0.0, %v11924
        %11926 = vmatmul.bf16.gmra.mxu0 %v11750
        %v11927 = vpop.f32.mrf.mxu0
        %v11928 = vadd.f32 0.0, %v11927
        %v11929 = vpop.f32.mrf.mxu0
        %v11930 = vadd.f32 0.0, %v11929
        %11931 = vmatmul.bf16.gmra.mxu0 %v11751
        %v11932 = vpop.f32.mrf.mxu0
        %v11933 = vadd.f32 0.0, %v11932
        %v11934 = vpop.f32.mrf.mxu0
        %v11935 = vadd.f32 0.0, %v11934
        %11936 = vmatmul.bf16.gmra.mxu0 %v11752
        %v11937 = vpop.f32.mrf.mxu0
        %v11938 = vadd.f32 0.0, %v11937
        %v11939 = vpop.f32.mrf.mxu0
        %11940 = vdwg.mxu0
        %v11941 = vadd.f32 %v11478, %v11833
        %v11942 = vadd.f32 %v11480, %v11835
        %v11943 = vadd.f32 %v11483, %v11838
        %v11944 = vadd.f32 %v11485, %v11840
        %v11945 = vadd.f32 %v11488, %v11843
        %v11946 = vadd.f32 %v11490, %v11845
        %v11947 = vadd.f32 %v11493, %v11848
        %v11948 = vadd.f32 %v11495, %v11850
        %v11949 = vadd.f32 %v11498, %v11853
        %v11950 = vadd.f32 %v11500, %v11855
        %v11951 = vadd.f32 %v11503, %v11858
        %v11952 = vadd.f32 %v11505, %v11860
        %v11953 = vadd.f32 %v11508, %v11863
        %v11954 = vadd.f32 %v11510, %v11865
        %v11955 = vadd.f32 %v11513, %v11868
        %v11956 = vadd.f32 %v11515, %v11870
        %v11957 = vadd.f32 %v11518, %v11873
        %v11958 = vadd.f32 %v11520, %v11875
        %v11959 = vadd.f32 %v11523, %v11878
        %v11960 = vadd.f32 %v11525, %v11880
        %v11961 = vadd.f32 %v11528, %v11883
        %v11962 = vadd.f32 %v11530, %v11885
        %v11963 = vadd.f32 %v11533, %v11888
        %v11964 = vadd.f32 %v11535, %v11890
        %v11965 = vadd.f32 %v11538, %v11893
        %v11966 = vadd.f32 %v11540, %v11895
        %v11967 = vadd.f32 %v11543, %v11898
        %v11968 = vadd.f32 %v11545, %v11900
        %v11969 = vadd.f32 %v11548, %v11903
        %v11970 = vadd.f32 %v11550, %v11905
        %v11971 = vadd.f32 %v11553, %v11908
        %v11972 = vadd.f32 %v11555, %v11910
        %v11973 = vadd.f32 %v11558, %v11913
        %v11974 = vadd.f32 %v11560, %v11915
        %v11975 = vadd.f32 %v11563, %v11918
        %v11976 = vadd.f32 %v11565, %v11920
        %v11977 = vadd.f32 %v11568, %v11923
        %v11978 = vadd.f32 %v11570, %v11925
        %v11979 = vadd.f32 %v11573, %v11928
        %v11980 = vadd.f32 %v11575, %v11930
        %v11981 = vadd.f32 %v11578, %v11933
        %v11982 = vadd.f32 %v11580, %v11935
        %v11983 = vadd.f32 %v11583, %v11938
        %v11984 = vmax.f32 %v11941, %v11942
        %v11985 = vmax.f32 %v11942, %v11943
        %v11986 = vmax.f32 %v11943, %v11944
        %v11987 = vmax.f32 %v11944, %v11945
        %v11988 = vmax.f32 %v11945, %v11946
        %v11989 = vmax.f32 %v11946, %v11947
        %v11990 = vmax.f32 %v11947, %v11948
        %v11991 = vmax.f32 %v11948, %v11949
        %v11992 = vmax.f32 %v11949, %v11950
        %v11993 = vmax.f32 %v11950, %v11951
        %v11994 = vmax.f32 %v11951, %v11952
        %v11995 = vmax.f32 %v11952, %v11953
        %v11996 = vmax.f32 %v11953, %v11954
        %v11997 = vmax.f32 %v11954, %v11955
        %v11998 = vmax.f32 %v11955, %v11956
        %v11999 = vmax.f32 %v11956, %v11957
        %v12000 = vmax.f32 %v11957, %v11958
        %v12001 = vmax.f32 %v11958, %v11959
        %v12002 = vmax.f32 %v11959, %v11960
        %v12003 = vmax.f32 %v11960, %v11961
        %v12004 = vmax.f32 %v11961, %v11962
        %v12005 = vmax.f32 %v11962, %v11963
        %v12006 = vmax.f32 %v11963, %v11964
        %v12007 = vmax.f32 %v11964, %v11965
        %v12008 = vmax.f32 %v11965, %v11966
        %v12009 = vmax.f32 %v11966, %v11967
        %v12010 = vmax.f32 %v11967, %v11968
        %v12011 = vmax.f32 %v11968, %v11969
        %v12012 = vmax.f32 %v11969, %v11970
        %v12013 = vmax.f32 %v11970, %v11971
        %v12014 = vmax.f32 %v11971, %v11972
        %v12015 = vmax.f32 %v11972, %v11973
        %v12016 = vmax.f32 %v11973, %v11974
        %v12017 = vmax.f32 %v11974, %v11975
        %v12018 = vmax.f32 %v11975, %v11976
        %v12019 = vmax.f32 %v11976, %v11977
        %v12020 = vmax.f32 %v11977, %v11978
        %v12021 = vmax.f32 %v11978, %v11979
        %v12022 = vmax.f32 %v11979, %v11980
        %v12023 = vmax.f32 %v11980, %v11981
        %v12024 = vmax.f32 %v11981, %v11982
        %v12025 = vmax.f32 %v11982, %v11983
        %v12026 = vld [vmem:[%s9] sm:$0x1]
        %v12028 = vperm.slane %v12026, 0
        %v12030 = vadd.f32 %v11984, %v12028
        %v12031 = vadd.f32 %v11985, %v12028
        %v12032 = vadd.f32 %v11986, %v12028
        %v12033 = vadd.f32 %v11987, %v12028
        %v12034 = vadd.f32 %v11988, %v12028
        %v12035 = vadd.f32 %v11989, %v12028
        %v12036 = vadd.f32 %v11990, %v12028
        %v12037 = vadd.f32 %v11991, %v12028
        %v12038 = vadd.f32 %v11992, %v12028
        %v12039 = vadd.f32 %v11993, %v12028
        %v12040 = vadd.f32 %v11994, %v12028
        %v12041 = vadd.f32 %v11995, %v12028
        %v12042 = vadd.f32 %v11996, %v12028
        %v12043 = vadd.f32 %v11997, %v12028
        %v12044 = vadd.f32 %v11998, %v12028
        %v12045 = vadd.f32 %v11999, %v12028
        %v12046 = vadd.f32 %v12000, %v12028
        %v12047 = vadd.f32 %v12001, %v12028
        %v12048 = vadd.f32 %v12002, %v12028
        %v12049 = vadd.f32 %v12003, %v12028
        %v12050 = vadd.f32 %v12004, %v12028
        %v12051 = vadd.f32 %v12005, %v12028
        %v12052 = vadd.f32 %v12006, %v12028
        %v12053 = vadd.f32 %v12007, %v12028
        %v12054 = vadd.f32 %v12008, %v12028
        %v12055 = vadd.f32 %v12009, %v12028
        %v12056 = vadd.f32 %v12010, %v12028
        %v12057 = vadd.f32 %v12011, %v12028
        %v12058 = vadd.f32 %v12012, %v12028
        %v12059 = vadd.f32 %v12013, %v12028
        %v12060 = vadd.f32 %v12014, %v12028
        %v12061 = vadd.f32 %v12015, %v12028
        %v12062 = vadd.f32 %v12016, %v12028
        %v12063 = vadd.f32 %v12017, %v12028
        %v12064 = vadd.f32 %v12018, %v12028
        %v12065 = vadd.f32 %v12019, %v12028
        %v12066 = vadd.f32 %v12020, %v12028
        %v12067 = vadd.f32 %v12021, %v12028
        %v12068 = vadd.f32 %v12022, %v12028
        %v12069 = vadd.f32 %v12023, %v12028
        %v12070 = vadd.f32 %v12024, %v12028
        %v12071 = vadd.f32 %v12025, %v12028
        %v12072 = vmax.f32 %v12030, 0.0
        %v12073 = vmax.f32 %v12031, 0.0
        %v12074 = vmax.f32 %v12032, 0.0
        %v12075 = vmax.f32 %v12033, 0.0
        %v12076 = vmax.f32 %v12034, 0.0
        %v12077 = vmax.f32 %v12035, 0.0
        %v12078 = vmax.f32 %v12036, 0.0
        %v12079 = vmax.f32 %v12037, 0.0
        %v12080 = vmax.f32 %v12038, 0.0
        %v12081 = vmax.f32 %v12039, 0.0
        %v12082 = vmax.f32 %v12040, 0.0
        %v12083 = vmax.f32 %v12041, 0.0
        %v12084 = vmax.f32 %v12042, 0.0
        %v12085 = vmax.f32 %v12043, 0.0
        %v12086 = vmax.f32 %v12044, 0.0
        %v12087 = vmax.f32 %v12045, 0.0
        %v12088 = vmax.f32 %v12046, 0.0
        %v12089 = vmax.f32 %v12047, 0.0
        %v12090 = vmax.f32 %v12048, 0.0
        %v12091 = vmax.f32 %v12049, 0.0
        %v12092 = vmax.f32 %v12050, 0.0
        %v12093 = vmax.f32 %v12051, 0.0
        %v12094 = vmax.f32 %v12052, 0.0
        %v12095 = vmax.f32 %v12053, 0.0
        %v12096 = vmax.f32 %v12054, 0.0
        %v12097 = vmax.f32 %v12055, 0.0
        %v12098 = vmax.f32 %v12056, 0.0
        %v12099 = vmax.f32 %v12057, 0.0
        %v12100 = vmax.f32 %v12058, 0.0
        %v12101 = vmax.f32 %v12059, 0.0
        %v12102 = vmax.f32 %v12060, 0.0
        %v12103 = vmax.f32 %v12061, 0.0
        %v12104 = vmax.f32 %v12062, 0.0
        %v12105 = vmax.f32 %v12063, 0.0
        %v12106 = vmax.f32 %v12064, 0.0
        %v12107 = vmax.f32 %v12065, 0.0
        %v12108 = vmax.f32 %v12066, 0.0
        %v12109 = vmax.f32 %v12067, 0.0
        %v12110 = vmax.f32 %v12068, 0.0
        %v12111 = vmax.f32 %v12069, 0.0
        %v12112 = vmax.f32 %v12070, 0.0
        %v12113 = vmax.f32 %v12071, 0.0
        %v12114 = vmul.f32 %v12072, %v694
        %v12115 = vmul.f32 %v12073, %v699
        %v12116 = vmul.f32 %v12074, %v704
        %v12117 = vmul.f32 %v12075, %v709
        %v12118 = vmul.f32 %v12076, %v714
        %v12119 = vmul.f32 %v12077, %v719
        %v12120 = vmul.f32 %v12078, %v724
        %v12121 = vmul.f32 %v12079, %v729
        %v12122 = vmul.f32 %v12080, %v734
        %v12123 = vmul.f32 %v12081, %v739
        %v12124 = vmul.f32 %v12082, %v744
        %v12125 = vmul.f32 %v12083, %v749
        %v12126 = vmul.f32 %v12084, %v754
        %v12127 = vmul.f32 %v12085, %v759
        %v12128 = vmul.f32 %v12086, %v764
        %v12129 = vmul.f32 %v12087, %v769
        %v12130 = vmul.f32 %v12088, %v774
        %v12131 = vmul.f32 %v12089, %v779
        %v12132 = vmul.f32 %v12090, %v784
        %v12133 = vmul.f32 %v12091, %v789
        %v12134 = vmul.f32 %v12092, %v794
        %v12135 = vmul.f32 %v12093, %v799
        %v12136 = vmul.f32 %v12094, %v804
        %v12137 = vmul.f32 %v12095, %v809
        %v12138 = vmul.f32 %v12096, %v814
        %v12139 = vmul.f32 %v12097, %v819
        %v12140 = vmul.f32 %v12098, %v824
        %v12141 = vmul.f32 %v12099, %v829
        %v12142 = vmul.f32 %v12100, %v834
        %v12143 = vmul.f32 %v12101, %v839
        %v12144 = vmul.f32 %v12102, %v844
        %v12145 = vmul.f32 %v12103, %v849
        %v12146 = vmul.f32 %v12104, %v854
        %v12147 = vmul.f32 %v12105, %v859
        %v12148 = vmul.f32 %v12106, %v864
        %v12149 = vmul.f32 %v12107, %v869
        %v12150 = vmul.f32 %v12108, %v874
        %v12151 = vmul.f32 %v12109, %v879
        %v12152 = vmul.f32 %v12110, %v884
        %v12153 = vmul.f32 %v12111, %v889
        %v12154 = vmul.f32 %v12112, %v894
        %v12155 = vmul.f32 %v12113, %v899
        %12156 = vst [vmem:[%s353] sm:$0xff] %v12114
        %12157 = vst [vmem:[%s353 + $0x8] sm:$0xff] %v12115
        %12158 = vst [vmem:[%s353 + $0x10] sm:$0xff] %v12116
        %12159 = vst [vmem:[%s353 + $0x18] sm:$0xff] %v12117
        %12160 = vst [vmem:[%s353 + $0x20] sm:$0xff] %v12118
        %12161 = vst [vmem:[%s353 + $0x28] sm:$0xff] %v12119
        %12162 = vst [vmem:[%s353 + $0x30] sm:$0xff] %v12120
        %12163 = vst [vmem:[%s353 + $0x38] sm:$0xff] %v12121
        %12164 = vst [vmem:[%s353 + $0x40] sm:$0xff] %v12122
        %12165 = vst [vmem:[%s353 + $0x48] sm:$0xff] %v12123
        %12166 = vst [vmem:[%s353 + $0x50] sm:$0xff] %v12124
        %12167 = vst [vmem:[%s353 + $0x58] sm:$0xff] %v12125
        %12168 = vst [vmem:[%s353 + $0x60] sm:$0xff] %v12126
        %12169 = vst [vmem:[%s353 + $0x68] sm:$0xff] %v12127
        %12170 = vst [vmem:[%s353 + $0x70] sm:$0xff] %v12128
        %12171 = vst [vmem:[%s353 + $0x78] sm:$0xff] %v12129
        %12172 = vst [vmem:[%s353 + $0x80] sm:$0xff] %v12130
        %12173 = vst [vmem:[%s353 + $0x88] sm:$0xff] %v12131
        %12174 = vst [vmem:[%s353 + $0x90] sm:$0xff] %v12132
        %12175 = vst [vmem:[%s353 + $0x98] sm:$0xff] %v12133
        %12176 = vst [vmem:[%s353 + $0xa0] sm:$0xff] %v12134
        %12177 = vst [vmem:[%s353 + $0xa8] sm:$0xff] %v12135
        %12178 = vst [vmem:[%s353 + $0xb0] sm:$0xff] %v12136
        %12179 = vst [vmem:[%s353 + $0xb8] sm:$0xff] %v12137
        %12180 = vst [vmem:[%s353 + $0xc0] sm:$0xff] %v12138
        %12181 = vst [vmem:[%s353 + $0xc8] sm:$0xff] %v12139
        %12182 = vst [vmem:[%s353 + $0xd0] sm:$0xff] %v12140
        %12183 = vst [vmem:[%s353 + $0xd8] sm:$0xff] %v12141
        %12184 = vst [vmem:[%s353 + $0xe0] sm:$0xff] %v12142
        %12185 = vst [vmem:[%s353 + $0xe8] sm:$0xff] %v12143
        %12186 = vst [vmem:[%s353 + $0xf0] sm:$0xff] %v12144
        %12187 = vst [vmem:[%s353 + $0xf8] sm:$0xff] %v12145
        %12188 = vst [vmem:[%s353 + $0x100] sm:$0xff] %v12146
        %12189 = vst [vmem:[%s353 + $0x108] sm:$0xff] %v12147
        %12190 = vst [vmem:[%s353 + $0x110] sm:$0xff] %v12148
        %12191 = vst [vmem:[%s353 + $0x118] sm:$0xff] %v12149
        %12192 = vst [vmem:[%s353 + $0x120] sm:$0xff] %v12150
        %12193 = vst [vmem:[%s353 + $0x128] sm:$0xff] %v12151
        %12194 = vst [vmem:[%s353 + $0x130] sm:$0xff] %v12152
        %12195 = vst [vmem:[%s353 + $0x138] sm:$0xff] %v12153
        %12196 = vst [vmem:[%s353 + $0x140] sm:$0xff] %v12154
        %12197 = vst [vmem:[%s353 + $0x148] sm:$0xff] %v12155
        %s12198 = sand.u32 %s247, 1
        %s12199 = scalar_lea.sflag [#allocation5], %s12198
        %s12200 = sand.u32 %s247, 1
        %s12201 = smul.addr %s12200, 336
        %s12202 = scalar_lea.vmem [#allocation4], %s12201
        // Predicated region
        $region61: #{tpu_custom_call.1} parent=59 // pred_check
          %p12203 = pneg %p257
        $region62: #{tpu_custom_call.1} parent=59 // pred_check_branch
          %12205 = sbr.rel (%p12203) target = $region64
        $region63: #{tpu_custom_call.1} parent=59 // pred_region
          %s12206 = smul.u32 42, %s24
          %12208 = vsyncadd %s12199, 0
          %s12209 = smul.addr %s12206, 8
          %s12210 = scalar_lea.hbm %s10, %s12209
          %s12211 = sshll.u32 %s12202, 4
          %s12212 = int_to_ptr.vmem [resolvable:$true] %s12211
          %s12213 = sshll.u32 %s12210, 4
          %s12214 = int_to_ptr.hbm [resolvable:$true] %s12213
          %12219 = dma.vmem_to_hbm [thread:$0]  %s12212, 5376, %s12214, %s12199, 128, 128, 8
        $region64: #{tpu_custom_call.1} parent=59 // pred_fallthru
          _
      $region60: #{tpu_custom_call.1} parent=5 // pred_fallthru
        _
      %p12220 = scmp.le.s32.totalorder 2, %s19
      // Predicated region
      $region65: #{tpu_custom_call.1} parent=5 // pred_check
        %p12221 = pneg %p12220
      $region66: #{tpu_custom_call.1} parent=5 // pred_check_branch
        %12223 = sbr.rel (%p12221) target = $region68
      $region67: #{tpu_custom_call.1} parent=5 // pred_region
        %s12224 = ssub.s32 %s19, 2
        // Predicated region
        $region69: #{tpu_custom_call.1} parent=67 // pred_check
          %p12225 = pneg %p263
        $region70: #{tpu_custom_call.1} parent=67 // pred_check_branch
          %12227 = sbr.rel (%p12225) target = $region72
        $region71: #{tpu_custom_call.1} parent=67 // pred_region
          %s12228 = sand.u32 %s248, 1
          %s12229 = scalar_lea.sflag [#allocation5], %s12228
          %s12230 = sand.u32 %s248, 1
          %s12231 = smul.addr %s12230, 336
          %s12232 = scalar_lea.vmem [#allocation4], %s12231
          %12234 = dma.done %s12229, 5376
        $region72: #{tpu_custom_call.1} parent=67 // pred_fallthru
          _
      $region68: #{tpu_custom_call.1} parent=5 // pred_fallthru
        _
    $region6: #{tpu_custom_call.1} parent=1 // loop_footer
      %s23 = sadd.s32 1, %s19
    $region7: #{tpu_custom_call.1} parent=1 // loop_footer_branch
      %18 = sbr.rel target = $region3
    $region8: #{tpu_custom_call.1} parent=1 // loop_exit
      _
    %12235 = vsyncpa [#allocation5], 1
    %s12236 = scalar_lea.sflag [#allocation5], 1
    %12237 = vsyncpa %s12236, 1

</llo_original>
